<compile_context>
chip_gen: v6e
topology: v6e:2x2x1
jax: 0.10.0
libtpu: 0.0.40
codegen_flags: <defaults>
</compile_context>

<pallas_src>
import functools

import jax
import jax.numpy as jnp
from jax import lax
from jax.experimental import pallas as pl
from jax.experimental.pallas import tpu as pltpu


_LN_EPS = 1e-5  # PyTorch nn.LayerNorm default


def _layernorm(v, gamma, beta):
    mu = jnp.mean(v, axis=-1, keepdims=True)
    vc = v - mu
    var = jnp.mean(vc * vc, axis=-1, keepdims=True)
    return vc * lax.rsqrt(var + _LN_EPS) * gamma + beta


def _gelu_tanh(v):
    # TODO(synk): PyTorch nn.GELU default is the exact erf form; the tanh
    # approximation (max |diff| ~1e-3) is used here for robust Mosaic lowering.
    c = 0.7978845608028654  # sqrt(2/pi)
    return 0.5 * v * (1.0 + jnp.tanh(c * (v + 0.044715 * v * v * v)))


def _block_kernel(x_ref, k_ref, v_ref,
                  wq_ref, wproj_ref, bproj_ref,
                  g1_ref, b1_ref, g2_ref, b2_ref,
                  wfc1_ref, bfc1_ref, wfc2_ref, bfc2_ref,
                  o_ref, *, num_heads):
    f32 = jnp.float32
    bf16 = jnp.bfloat16

    x = x_ref[0]                              # (TN, C) f32 decoder tile
    tn, C = x.shape
    hd = C // num_heads

    # ---- norm1 + q projection (bf16 operands -> MXU, f32 accumulate) ----
    xn = _layernorm(x, g1_ref[...], b1_ref[...])
    # softmax scale is already folded into Wq in the wrapper
    q = jnp.dot(xn.astype(bf16), wq_ref[...], preferred_element_type=f32)  # (TN, C)

    # (TN, C) -> (H, TN, hd) bf16; k/v arrive pre-split per head from wrapper.
    q_h = jnp.transpose(q.reshape(tn, num_heads, hd), (1, 0, 2)).astype(bf16)
    k_h = k_ref[0]                            # (H, Ny, hd) bf16
    v_h = v_ref[0]                            # (H, Ny, hd) bf16

    # ---- head-batched attention, everything stays in vregs ----
    # contract last dims of q/k (no per-head k transpose), batch over heads
    s = lax.dot_general(q_h, k_h, (((2,), (2,)), ((0,), (0,))),
                        preferred_element_type=f32)        # (H, TN, Ny) f32
    m = jnp.max(s, axis=-1, keepdims=True)
    e = jnp.exp(s - m)
    denom = jnp.sum(e, axis=-1, keepdims=True)
    p = e * pl.reciprocal(denom, approx=True)              # f32 softmax (EUP recip)
    o_h = lax.dot_general(p.astype(bf16), v_h, (((2,), (1,)), ((0,), (0,))),
                          preferred_element_type=f32)      # (H, TN, hd) f32

    # merge heads in registers -> single K=C output-projection matmul
    attn = jnp.transpose(o_h, (1, 0, 2)).reshape(tn, C)
    attn_out = jnp.dot(attn.astype(bf16), wproj_ref[...],
                       preferred_element_type=f32) + bproj_ref[...]

    x1 = x + attn_out                          # residual 1 (f32)

    # ---- MLP ----
    xn2 = _layernorm(x1, g2_ref[...], b2_ref[...])
    hmid = jnp.dot(xn2.astype(bf16), wfc1_ref[...],
                   preferred_element_type=f32) + bfc1_ref[...]
    hmid = _gelu_tanh(hmid)
    mlp_out = jnp.dot(hmid.astype(bf16), wfc2_ref[...],
                      preferred_element_type=f32) + bfc2_ref[...]

    o_ref[0] = (x1 + mlp_out).astype(o_ref.dtype)          # residual 2


def _run_pallas(x, k, v, wq, wproj, bproj, g1, b1, g2, b2,
                wfc1, bfc1, wfc2, bfc2, *, num_heads, tile_n, vmem_limit,
                weight_pipeline_mode):
    B, N, C = x.shape
    H, Ny, hd = k.shape[1:]
    Dh = wfc1.shape[1]
    n_tiles = N // tile_n

    def wspec(shape):
        # Constant-index weight/bias blocks: same block every grid step.
        idx = lambda b, j: (0,) * len(shape)
        if weight_pipeline_mode is None:
            return pl.BlockSpec(shape, idx)
        return pl.BlockSpec(shape, idx, pipeline_mode=weight_pipeline_mode)

    kernel = functools.partial(_block_kernel, num_heads=num_heads)

    return pl.pallas_call(
        kernel,
        out_shape=jax.ShapeDtypeStruct((B, N, C), x.dtype),
        grid_spec=pltpu.PrefetchScalarGridSpec(
            num_scalar_prefetch=0,
            grid=(B, n_tiles),
            in_specs=[
                pl.BlockSpec((1, tile_n, C), lambda b, j: (b, j, 0)),   # x tile
                pl.BlockSpec((1, H, Ny, hd), lambda b, j: (b, 0, 0, 0)),  # k (per-b)
                pl.BlockSpec((1, H, Ny, hd), lambda b, j: (b, 0, 0, 0)),  # v (per-b)
                wspec((C, C)),       # Wq (softmax scale pre-folded)
                wspec((C, C)),       # Wproj
                wspec((1, C)),       # proj bias
                wspec((1, C)),       # norm1 gamma
                wspec((1, C)),       # norm1 beta
                wspec((1, C)),       # norm2 gamma
                wspec((1, C)),       # norm2 beta
                wspec((C, Dh)),      # mlp fc1
                wspec((1, Dh)),      # fc1 bias
                wspec((Dh, C)),      # mlp fc2
                wspec((1, C)),       # fc2 bias
            ],
            out_specs=pl.BlockSpec((1, tile_n, C), lambda b, j: (b, j, 0)),
        ),
        compiler_params=pltpu.CompilerParams(
            # kv is precomputed in the wrapper, so no per-b cached state in the
            # kernel -> both axes can shard across TensorCores (v7x megacore).
            dimension_semantics=("parallel", "parallel"),
            vmem_limit_bytes=vmem_limit,
        ),
    )(x, k, v, wq, wproj, bproj, g1, b1, g2, b2, wfc1, bfc1, wfc2, bfc2)


def cross_attention_block(x, y, params, *, num_heads, tile_n=None):
    """Fused CrossAttentionBlock forward.

    x: (B, N, C) decoder features (f32); y: (B, Ny, Ce) encoder features.
    params: Linear weights already transposed to (in, out).
    """
    B, N, C = x.shape
    _, Ny, Ce = y.shape
    assert C % num_heads == 0
    hd = C // num_heads
    scale = hd ** (-0.5)
    Dh = params["fc1_t"].shape[1]

    if tile_n is None:
        # Amortizes per-grid-step overhead; sweep {128, 256, 512} on v6e,
        # keep <= 256 on v5e.
        tile_n = min(N, 256)
    assert N % tile_n == 0, "N must be divisible by the query tile size"

    f32, bf16 = jnp.float32, jnp.bfloat16

    # Weights -> bf16 MXU operands; softmax scale folded into Wq (free).
    wq = (params["wq_t"].astype(f32) * scale).astype(bf16)
    wproj = params["wproj_t"].astype(bf16)
    wfc1 = params["fc1_t"].astype(bf16)
    wfc2 = params["fc2_t"].astype(bf16)

    # Small per-channel vectors stay f32 (VPU math).
    bproj = params["bproj"].reshape(1, C).astype(f32)
    g1 = params["norm1_g"].reshape(1, C).astype(f32)
    b1 = params["norm1_b"].reshape(1, C).astype(f32)
    g2 = params["norm2_g"].reshape(1, C).astype(f32)
    b2 = params["norm2_b"].reshape(1, C).astype(f32)
    bfc1 = params["fc1_b"].reshape(1, Dh).astype(f32)
    bfc2 = params["fc2_b"].reshape(1, C).astype(f32)

    # ---- KV projection hoisted out of the kernel: done once per call as a
    # plain XLA matmul (it only depends on b, not on the query tile).  Heads
    # are split here too, so the kernel does zero k/v relayout work.
    kv = y.astype(f32) @ params["wkv_t"].astype(f32)                # (B, Ny, 2C)
    k = kv[..., :C].reshape(B, Ny, num_heads, hd).transpose(0, 2, 1, 3).astype(bf16)
    v = kv[..., C:].reshape(B, Ny, num_heads, hd).transpose(0, 2, 1, 3).astype(bf16)

    # Generation-aware scoped-VMEM limit: 64 MiB on 128-MiB parts (v5e/v6e),
    # half of physical (32 MiB) on v7x's 64-MiB part.
    try:
        vmem_cap = pltpu.get_tpu_info().vmem_capacity_bytes
    except Exception:
        vmem_cap = 128 * 1024 * 1024
    vmem_limit = int(min(64 * 1024 * 1024, vmem_cap // 2))

    args = (x, k, v, wq, wproj, bproj, g1, b1, g2, b2, wfc1, bfc1, wfc2, bfc2)
    kwargs = dict(num_heads=num_heads, tile_n=tile_n, vmem_limit=vmem_limit)
    try:
        # Single-buffer the constant-index weight blocks (VMEM headroom, v7x).
        return _run_pallas(*args, weight_pipeline_mode=pl.Buffered(1), **kwargs)
    except Exception:
        # Fallback if this Pallas build does not support BlockSpec pipeline_mode.
        return _run_pallas(*args, weight_pipeline_mode=None, **kwargs)


def cross_attention_block_ref(x, y, params, *, num_heads):
    """Pure-JAX (f32) reference mirroring the PyTorch forward."""
    B, N, C = x.shape
    Ny = y.shape[1]
    hd = C // num_heads
    scale = hd ** (-0.5)

    def ln(v, g, b):
        mu = v.mean(-1, keepdims=True)
        var = ((v - mu) ** 2).mean(-1, keepdims=True)
        return (v - mu) / jnp.sqrt(var + _LN_EPS) * g + b

    # cross attention
    xn = ln(x, params["norm1_g"], params["norm1_b"])
    q = xn @ params["wq_t"]
    kv = y @ params["wkv_t"]
    k, v = kv[..., :C], kv[..., C:]
    q = q.reshape(B, N, num_heads, hd).transpose(0, 2, 1, 3)
    k = k.reshape(B, Ny, num_heads, hd).transpose(0, 2, 1, 3)
    v = v.reshape(B, Ny, num_heads, hd).transpose(0, 2, 1, 3)
    attn = jnp.einsum("bhnd,bhmd->bhnm", q, k) * scale
    attn = jax.nn.softmax(attn, axis=-1)
    o = jnp.einsum("bhnm,bhmd->bhnd", attn, v)
    o = o.transpose(0, 2, 1, 3).reshape(B, N, C)
    x1 = x + (o @ params["wproj_t"] + params["bproj"])

    # MLP
    xn2 = ln(x1, params["norm2_g"], params["norm2_b"])
    h = _gelu_tanh(xn2 @ params["fc1_t"] + params["fc1_b"])
    return x1 + (h @ params["fc2_t"] + params["fc2_b"])


if __name__ == "__main__":
    # Small shapes consistent with the module: batch=2, decoder seq N=8,
    # encoder seq Ny=16, decoder_dim=128, encoder_dim=256, heads=8, mlp_ratio=4.
    # (Channel dims are multiples of 128 -> lane-dense stores/loads.)
    B, N, Ny = 2, 8, 16
    C, Ce = 128, 256
    num_heads = 8
    Dh = 4 * C

    key = jax.random.PRNGKey(0)
    ks = jax.random.split(key, 14)
    x = jax.random.normal(ks[0], (B, N, C), jnp.float32)
    y = jax.random.normal(ks[1], (B, Ny, Ce), jnp.float32)

    params = {
        # PyTorch Linear weights are (out, in); stored here already transposed
        # to (in, out) so the kernel hot path is plain row-major matmuls.
        "wq_t":    jax.random.normal(ks[2], (C, C), jnp.float32) * 0.05,
        "wkv_t":   jax.random.normal(ks[3], (Ce, 2 * C), jnp.float32) * 0.05,
        "wproj_t": jax.random.normal(ks[4], (C, C), jnp.float32) * 0.05,
        "bproj":   jax.random.normal(ks[5], (C,), jnp.float32) * 0.05,
        "norm1_g": 1.0 + 0.1 * jax.random.normal(ks[6], (C,), jnp.float32),
        "norm1_b": 0.1 * jax.random.normal(ks[7], (C,), jnp.float32),
        "norm2_g": 1.0 + 0.1 * jax.random.normal(ks[8], (C,), jnp.float32),
        "norm2_b": 0.1 * jax.random.normal(ks[9], (C,), jnp.float32),
        "fc1_t":   jax.random.normal(ks[10], (C, Dh), jnp.float32) * 0.05,
        "fc1_b":   jax.random.normal(ks[11], (Dh,), jnp.float32) * 0.05,
        "fc2_t":   jax.random.normal(ks[12], (Dh, C), jnp.float32) * 0.05,
        "fc2_b":   jax.random.normal(ks[13], (C,), jnp.float32) * 0.05,
    }

    out = cross_attention_block(x, y, params, num_heads=num_heads)
    out = jax.block_until_ready(out)

    ref = cross_attention_block_ref(x, y, params, num_heads=num_heads)
    err = float(jnp.max(jnp.abs(out - ref)))
    # bf16 MXU operands + EUP approx reciprocal vs. the pure-f32 reference.
    if not jnp.allclose(out, ref, atol=3e-2, rtol=3e-2):
        raise AssertionError(
            f"Pallas kernel mismatch vs reference (max abs err {err:.3e})")
    print("KERNEL_OK")
</pallas_src>

<mosaic_0001>
module attributes {stable_mosaic.version = 11 : i64} {
  func.func @_block_kernel(%arg0: i32, %arg1: i32, %arg2: memref<1x8x128xf32, #tpu.memory_space<vmem>>, %arg3: memref<1x8x16x16xbf16, #tpu.memory_space<vmem>>, %arg4: memref<1x8x16x16xbf16, #tpu.memory_space<vmem>>, %arg5: memref<128x128xbf16, #tpu.memory_space<vmem>>, %arg6: memref<128x128xbf16, #tpu.memory_space<vmem>>, %arg7: memref<1x128xf32, #tpu.memory_space<vmem>>, %arg8: memref<1x128xf32, #tpu.memory_space<vmem>>, %arg9: memref<1x128xf32, #tpu.memory_space<vmem>>, %arg10: memref<1x128xf32, #tpu.memory_space<vmem>>, %arg11: memref<1x128xf32, #tpu.memory_space<vmem>>, %arg12: memref<128x512xbf16, #tpu.memory_space<vmem>>, %arg13: memref<1x512xf32, #tpu.memory_space<vmem>>, %arg14: memref<512x128xbf16, #tpu.memory_space<vmem>>, %arg15: memref<1x128xf32, #tpu.memory_space<vmem>>, %arg16: memref<1x8x128xf32, #tpu.memory_space<vmem>>) attributes {dimension_semantics = [#tpu.dimension_semantics<parallel>, #tpu.dimension_semantics<parallel>], iteration_bounds = array<i64: 2, 1>, scalar_prefetch = 0 : i64, scratch_operands = 0 : i64, tpu.core_type = #tpu.core_type<tc>, window_params = [{transform_indices = @transform_0, window_bounds = array<i64: 1, 8, 128>}, {transform_indices = @transform_1, window_bounds = array<i64: 1, 8, 16, 16>}, {transform_indices = @transform_2, window_bounds = array<i64: 1, 8, 16, 16>}, {pipeline_mode = #tpu.pipeline_mode<synchronous>, transform_indices = @transform_3, window_bounds = array<i64: 128, 128>}, {pipeline_mode = #tpu.pipeline_mode<synchronous>, transform_indices = @transform_4, window_bounds = array<i64: 128, 128>}, {pipeline_mode = #tpu.pipeline_mode<synchronous>, transform_indices = @transform_5, window_bounds = array<i64: 1, 128>}, {pipeline_mode = #tpu.pipeline_mode<synchronous>, transform_indices = @transform_6, window_bounds = array<i64: 1, 128>}, {pipeline_mode = #tpu.pipeline_mode<synchronous>, transform_indices = @transform_7, window_bounds = array<i64: 1, 128>}, {pipeline_mode = #tpu.pipeline_mode<synchronous>, transform_indices = @transform_8, window_bounds = array<i64: 1, 128>}, {pipeline_mode = #tpu.pipeline_mode<synchronous>, transform_indices = @transform_9, window_bounds = array<i64: 1, 128>}, {pipeline_mode = #tpu.pipeline_mode<synchronous>, transform_indices = @transform_10, window_bounds = array<i64: 128, 512>}, {pipeline_mode = #tpu.pipeline_mode<synchronous>, transform_indices = @transform_11, window_bounds = array<i64: 1, 512>}, {pipeline_mode = #tpu.pipeline_mode<synchronous>, transform_indices = @transform_12, window_bounds = array<i64: 512, 128>}, {pipeline_mode = #tpu.pipeline_mode<synchronous>, transform_indices = @transform_13, window_bounds = array<i64: 1, 128>}, {transform_indices = @transform_14, window_bounds = array<i64: 1, 8, 128>}]} {
    %c0 = arith.constant 0 : index
    %c0_0 = arith.constant 0 : index
    %c0_1 = arith.constant 0 : index
    %0 = vector.load %arg2[%c0, %c0_0, %c0_1] : memref<1x8x128xf32, #tpu.memory_space<vmem>>, vector<1x8x128xf32>
    %1 = vector.shape_cast %0 : vector<1x8x128xf32> to vector<8x128xf32>
    %c0_2 = arith.constant 0 : index
    %c0_3 = arith.constant 0 : index
    %2 = vector.load %arg8[%c0_2, %c0_3] : memref<1x128xf32, #tpu.memory_space<vmem>>, vector<1x128xf32>
    %c0_4 = arith.constant 0 : index
    %c0_5 = arith.constant 0 : index
    %3 = vector.load %arg9[%c0_4, %c0_5] : memref<1x128xf32, #tpu.memory_space<vmem>>, vector<1x128xf32>
    %cst = arith.constant dense<0.000000e+00> : vector<8xf32>
    %4 = vector.multi_reduction <add>, %1, %cst [1] : vector<8x128xf32> to vector<8xf32>
    %5 = vector.shape_cast %4 : vector<8xf32> to vector<8x1xf32>
    %cst_6 = arith.constant 1.280000e+02 : f32
    %6 = vector.broadcast %cst_6 : f32 to vector<8x1xf32>
    %7 = arith.divf %5, %6 : vector<8x1xf32>
    %8 = vector.broadcast %7 : vector<8x1xf32> to vector<8x128xf32>
    %9 = arith.subf %1, %8 : vector<8x128xf32>
    %10 = arith.mulf %9, %9 : vector<8x128xf32>
    %cst_7 = arith.constant dense<0.000000e+00> : vector<8xf32>
    %11 = vector.multi_reduction <add>, %10, %cst_7 [1] : vector<8x128xf32> to vector<8xf32>
    %12 = vector.shape_cast %11 : vector<8xf32> to vector<8x1xf32>
    %cst_8 = arith.constant 1.280000e+02 : f32
    %13 = vector.broadcast %cst_8 : f32 to vector<8x1xf32>
    %14 = arith.divf %12, %13 : vector<8x1xf32>
    %cst_9 = arith.constant 9.99999974E-6 : f32
    %15 = vector.broadcast %cst_9 : f32 to vector<8x1xf32>
    %16 = arith.addf %14, %15 : vector<8x1xf32>
    %17 = math.rsqrt %16 : vector<8x1xf32>
    %18 = vector.broadcast %17 : vector<8x1xf32> to vector<8x128xf32>
    %19 = arith.mulf %9, %18 : vector<8x128xf32>
    %20 = vector.broadcast %2 : vector<1x128xf32> to vector<8x128xf32>
    %21 = arith.mulf %19, %20 : vector<8x128xf32>
    %22 = vector.broadcast %3 : vector<1x128xf32> to vector<8x128xf32>
    %23 = arith.addf %21, %22 : vector<8x128xf32>
    %24 = arith.truncf %23 : vector<8x128xf32> to vector<8x128xbf16>
    %c0_10 = arith.constant 0 : index
    %c0_11 = arith.constant 0 : index
    %25 = vector.load %arg5[%c0_10, %c0_11] : memref<128x128xbf16, #tpu.memory_space<vmem>>, vector<128x128xbf16>
    %cst_12 = arith.constant dense<0.000000e+00> : vector<8x128xf32>
    %26 = tpu.matmul %24, %25, %cst_12 {dimension_numbers = #tpu.dot_dimension_numbers<[1], [0], [0], [1], [0, 0, 1, 1], [], []>} : vector<8x128xbf16>, vector<128x128xbf16>, vector<8x128xf32> -> vector<8x128xf32>
    %27 = vector.shape_cast %26 : vector<8x128xf32> to vector<8x8x16xf32>
    %28 = tpu.transpose %27, [1, 0, 2] : vector<8x8x16xf32> -> vector<8x8x16xf32>
    %29 = arith.truncf %28 : vector<8x8x16xf32> to vector<8x8x16xbf16>
    %c0_13 = arith.constant 0 : index
    %c0_14 = arith.constant 0 : index
    %c0_15 = arith.constant 0 : index
    %c0_16 = arith.constant 0 : index
    %30 = vector.load %arg3[%c0_13, %c0_14, %c0_15, %c0_16] : memref<1x8x16x16xbf16, #tpu.memory_space<vmem>>, vector<1x8x16x16xbf16>
    %31 = vector.shape_cast %30 : vector<1x8x16x16xbf16> to vector<8x16x16xbf16>
    %c0_17 = arith.constant 0 : index
    %c0_18 = arith.constant 0 : index
    %c0_19 = arith.constant 0 : index
    %c0_20 = arith.constant 0 : index
    %32 = vector.load %arg4[%c0_17, %c0_18, %c0_19, %c0_20] : memref<1x8x16x16xbf16, #tpu.memory_space<vmem>>, vector<1x8x16x16xbf16>
    %33 = vector.shape_cast %32 : vector<1x8x16x16xbf16> to vector<8x16x16xbf16>
    %cst_21 = arith.constant dense<0.000000e+00> : vector<8x8x16xf32>
    %34 = tpu.matmul %29, %31, %cst_21 {dimension_numbers = #tpu.dot_dimension_numbers<[2], [2], [1], [1], [0, 0, 0, 1, 1, 1], [0], [0]>} : vector<8x8x16xbf16>, vector<8x16x16xbf16>, vector<8x8x16xf32> -> vector<8x8x16xf32>
    %cst_22 = arith.constant dense<0xFF800000> : vector<8x8xf32>
    %35 = vector.multi_reduction <maximumf>, %34, %cst_22 [2] : vector<8x8x16xf32> to vector<8x8xf32>
    %36 = vector.shape_cast %35 : vector<8x8xf32> to vector<8x8x1xf32>
    %37 = vector.broadcast %36 : vector<8x8x1xf32> to vector<8x8x16xf32>
    %38 = arith.subf %34, %37 : vector<8x8x16xf32>
    %39 = math.exp %38 : vector<8x8x16xf32>
    %cst_23 = arith.constant dense<0.000000e+00> : vector<8x8xf32>
    %40 = vector.multi_reduction <add>, %39, %cst_23 [2] : vector<8x8x16xf32> to vector<8x8xf32>
    %41 = vector.shape_cast %40 : vector<8x8xf32> to vector<8x8x1xf32>
    %42 = tpu.reciprocal %41 {approx = true} : vector<8x8x1xf32> -> vector<8x8x1xf32>
    %43 = vector.broadcast %42 : vector<8x8x1xf32> to vector<8x8x16xf32>
    %44 = arith.mulf %39, %43 : vector<8x8x16xf32>
    %45 = arith.truncf %44 : vector<8x8x16xf32> to vector<8x8x16xbf16>
    %cst_24 = arith.constant dense<0.000000e+00> : vector<8x8x16xf32>
    %46 = tpu.matmul %45, %33, %cst_24 {dimension_numbers = #tpu.dot_dimension_numbers<[2], [1], [1], [2], [0, 0, 0, 1, 1, 2], [0], [0]>} : vector<8x8x16xbf16>, vector<8x16x16xbf16>, vector<8x8x16xf32> -> vector<8x8x16xf32>
    %47 = tpu.transpose %46, [1, 0, 2] : vector<8x8x16xf32> -> vector<8x8x16xf32>
    %48 = vector.shape_cast %47 : vector<8x8x16xf32> to vector<8x128xf32>
    %49 = arith.truncf %48 : vector<8x128xf32> to vector<8x128xbf16>
    %c0_25 = arith.constant 0 : index
    %c0_26 = arith.constant 0 : index
    %50 = vector.load %arg6[%c0_25, %c0_26] : memref<128x128xbf16, #tpu.memory_space<vmem>>, vector<128x128xbf16>
    %cst_27 = arith.constant dense<0.000000e+00> : vector<8x128xf32>
    %51 = tpu.matmul %49, %50, %cst_27 {dimension_numbers = #tpu.dot_dimension_numbers<[1], [0], [0], [1], [0, 0, 1, 1], [], []>} : vector<8x128xbf16>, vector<128x128xbf16>, vector<8x128xf32> -> vector<8x128xf32>
    %c0_28 = arith.constant 0 : index
    %c0_29 = arith.constant 0 : index
    %52 = vector.load %arg7[%c0_28, %c0_29] : memref<1x128xf32, #tpu.memory_space<vmem>>, vector<1x128xf32>
    %53 = vector.broadcast %52 : vector<1x128xf32> to vector<8x128xf32>
    %54 = arith.addf %51, %53 : vector<8x128xf32>
    %55 = arith.addf %1, %54 : vector<8x128xf32>
    %c0_30 = arith.constant 0 : index
    %c0_31 = arith.constant 0 : index
    %56 = vector.load %arg10[%c0_30, %c0_31] : memref<1x128xf32, #tpu.memory_space<vmem>>, vector<1x128xf32>
    %c0_32 = arith.constant 0 : index
    %c0_33 = arith.constant 0 : index
    %57 = vector.load %arg11[%c0_32, %c0_33] : memref<1x128xf32, #tpu.memory_space<vmem>>, vector<1x128xf32>
    %cst_34 = arith.constant dense<0.000000e+00> : vector<8xf32>
    %58 = vector.multi_reduction <add>, %55, %cst_34 [1] : vector<8x128xf32> to vector<8xf32>
    %59 = vector.shape_cast %58 : vector<8xf32> to vector<8x1xf32>
    %cst_35 = arith.constant 1.280000e+02 : f32
    %60 = vector.broadcast %cst_35 : f32 to vector<8x1xf32>
    %61 = arith.divf %59, %60 : vector<8x1xf32>
    %62 = vector.broadcast %61 : vector<8x1xf32> to vector<8x128xf32>
    %63 = arith.subf %55, %62 : vector<8x128xf32>
    %64 = arith.mulf %63, %63 : vector<8x128xf32>
    %cst_36 = arith.constant dense<0.000000e+00> : vector<8xf32>
    %65 = vector.multi_reduction <add>, %64, %cst_36 [1] : vector<8x128xf32> to vector<8xf32>
    %66 = vector.shape_cast %65 : vector<8xf32> to vector<8x1xf32>
    %cst_37 = arith.constant 1.280000e+02 : f32
    %67 = vector.broadcast %cst_37 : f32 to vector<8x1xf32>
    %68 = arith.divf %66, %67 : vector<8x1xf32>
    %cst_38 = arith.constant 9.99999974E-6 : f32
    %69 = vector.broadcast %cst_38 : f32 to vector<8x1xf32>
    %70 = arith.addf %68, %69 : vector<8x1xf32>
    %71 = math.rsqrt %70 : vector<8x1xf32>
    %72 = vector.broadcast %71 : vector<8x1xf32> to vector<8x128xf32>
    %73 = arith.mulf %63, %72 : vector<8x128xf32>
    %74 = vector.broadcast %56 : vector<1x128xf32> to vector<8x128xf32>
    %75 = arith.mulf %73, %74 : vector<8x128xf32>
    %76 = vector.broadcast %57 : vector<1x128xf32> to vector<8x128xf32>
    %77 = arith.addf %75, %76 : vector<8x128xf32>
    %78 = arith.truncf %77 : vector<8x128xf32> to vector<8x128xbf16>
    %c0_39 = arith.constant 0 : index
    %c0_40 = arith.constant 0 : index
    %79 = vector.load %arg12[%c0_39, %c0_40] : memref<128x512xbf16, #tpu.memory_space<vmem>>, vector<128x512xbf16>
    %cst_41 = arith.constant dense<0.000000e+00> : vector<8x512xf32>
    %80 = tpu.matmul %78, %79, %cst_41 {dimension_numbers = #tpu.dot_dimension_numbers<[1], [0], [0], [1], [0, 0, 1, 1], [], []>} : vector<8x128xbf16>, vector<128x512xbf16>, vector<8x512xf32> -> vector<8x512xf32>
    %c0_42 = arith.constant 0 : index
    %c0_43 = arith.constant 0 : index
    %81 = vector.load %arg13[%c0_42, %c0_43] : memref<1x512xf32, #tpu.memory_space<vmem>>, vector<1x512xf32>
    %82 = vector.broadcast %81 : vector<1x512xf32> to vector<8x512xf32>
    %83 = arith.addf %80, %82 : vector<8x512xf32>
    %cst_44 = arith.constant 5.000000e-01 : f32
    %84 = vector.broadcast %cst_44 : f32 to vector<8x512xf32>
    %85 = arith.mulf %84, %83 : vector<8x512xf32>
    %cst_45 = arith.constant 4.471500e-02 : f32
    %86 = vector.broadcast %cst_45 : f32 to vector<8x512xf32>
    %87 = arith.mulf %86, %83 : vector<8x512xf32>
    %88 = arith.mulf %87, %83 : vector<8x512xf32>
    %89 = arith.mulf %88, %83 : vector<8x512xf32>
    %90 = arith.addf %83, %89 : vector<8x512xf32>
    %cst_46 = arith.constant 0.797884583 : f32
    %91 = vector.broadcast %cst_46 : f32 to vector<8x512xf32>
    %92 = arith.mulf %91, %90 : vector<8x512xf32>
    %93 = math.tanh %92 : vector<8x512xf32>
    %cst_47 = arith.constant 1.000000e+00 : f32
    %94 = vector.broadcast %cst_47 : f32 to vector<8x512xf32>
    %95 = arith.addf %94, %93 : vector<8x512xf32>
    %96 = arith.mulf %85, %95 : vector<8x512xf32>
    %97 = arith.truncf %96 : vector<8x512xf32> to vector<8x512xbf16>
    %c0_48 = arith.constant 0 : index
    %c0_49 = arith.constant 0 : index
    %98 = vector.load %arg14[%c0_48, %c0_49] : memref<512x128xbf16, #tpu.memory_space<vmem>>, vector<512x128xbf16>
    %cst_50 = arith.constant dense<0.000000e+00> : vector<8x128xf32>
    %99 = tpu.matmul %97, %98, %cst_50 {dimension_numbers = #tpu.dot_dimension_numbers<[1], [0], [0], [1], [0, 0, 1, 1], [], []>} : vector<8x512xbf16>, vector<512x128xbf16>, vector<8x128xf32> -> vector<8x128xf32>
    %c0_51 = arith.constant 0 : index
    %c0_52 = arith.constant 0 : index
    %100 = vector.load %arg15[%c0_51, %c0_52] : memref<1x128xf32, #tpu.memory_space<vmem>>, vector<1x128xf32>
    %101 = vector.broadcast %100 : vector<1x128xf32> to vector<8x128xf32>
    %102 = arith.addf %99, %101 : vector<8x128xf32>
    %103 = arith.addf %55, %102 : vector<8x128xf32>
    %c0_53 = arith.constant 0 : index
    %c0_54 = arith.constant 0 : index
    %c0_55 = arith.constant 0 : index
    %104 = vector.load %arg16[%c0_53, %c0_54, %c0_55] : memref<1x8x128xf32, #tpu.memory_space<vmem>>, vector<1x8x128xf32>
    %105 = vector.shape_cast %104 : vector<1x8x128xf32> to vector<8x128xf32>
    %106 = vector.shape_cast %103 : vector<8x128xf32> to vector<1x8x128xf32>
    tpu.vector_store %arg16[%c0_53, %c0_54, %c0_55], %106 {strides = array<i32>} : memref<1x8x128xf32, #tpu.memory_space<vmem>>, vector<1x8x128xf32>,
    return
  }
  func.func @transform_0(%arg0: i32, %arg1: i32) -> (i32, i32, i32) {
    %c0_i32 = arith.constant 0 : i32
    %c0_i32_0 = arith.constant 0 : i32
    return %arg0, %arg1, %c0_i32 : i32, i32, i32
  }
  func.func @transform_1(%arg0: i32, %arg1: i32) -> (i32, i32, i32, i32) {
    %c0_i32 = arith.constant 0 : i32
    %c0_i32_0 = arith.constant 0 : i32
    %c0_i32_1 = arith.constant 0 : i32
    %c0_i32_2 = arith.constant 0 : i32
    return %arg0, %c0_i32, %c0_i32_0, %c0_i32_1 : i32, i32, i32, i32
  }
  func.func @transform_2(%arg0: i32, %arg1: i32) -> (i32, i32, i32, i32) {
    %c0_i32 = arith.constant 0 : i32
    %c0_i32_0 = arith.constant 0 : i32
    %c0_i32_1 = arith.constant 0 : i32
    %c0_i32_2 = arith.constant 0 : i32
    return %arg0, %c0_i32, %c0_i32_0, %c0_i32_1 : i32, i32, i32, i32
  }
  func.func @transform_3(%arg0: i32, %arg1: i32) -> (i32, i32) {
    %c0_i32 = arith.constant 0 : i32
    %c0_i32_0 = arith.constant 0 : i32
    %c0_i32_1 = arith.constant 0 : i32
    return %c0_i32, %c0_i32_0 : i32, i32
  }
  func.func @transform_4(%arg0: i32, %arg1: i32) -> (i32, i32) {
    %c0_i32 = arith.constant 0 : i32
    %c0_i32_0 = arith.constant 0 : i32
    %c0_i32_1 = arith.constant 0 : i32
    return %c0_i32, %c0_i32_0 : i32, i32
  }
  func.func @transform_5(%arg0: i32, %arg1: i32) -> (i32, i32) {
    %c0_i32 = arith.constant 0 : i32
    %c0_i32_0 = arith.constant 0 : i32
    %c0_i32_1 = arith.constant 0 : i32
    return %c0_i32, %c0_i32_0 : i32, i32
  }
  func.func @transform_6(%arg0: i32, %arg1: i32) -> (i32, i32) {
    %c0_i32 = arith.constant 0 : i32
    %c0_i32_0 = arith.constant 0 : i32
    %c0_i32_1 = arith.constant 0 : i32
    return %c0_i32, %c0_i32_0 : i32, i32
  }
  func.func @transform_7(%arg0: i32, %arg1: i32) -> (i32, i32) {
    %c0_i32 = arith.constant 0 : i32
    %c0_i32_0 = arith.constant 0 : i32
    %c0_i32_1 = arith.constant 0 : i32
    return %c0_i32, %c0_i32_0 : i32, i32
  }
  func.func @transform_8(%arg0: i32, %arg1: i32) -> (i32, i32) {
    %c0_i32 = arith.constant 0 : i32
    %c0_i32_0 = arith.constant 0 : i32
    %c0_i32_1 = arith.constant 0 : i32
    return %c0_i32, %c0_i32_0 : i32, i32
  }
  func.func @transform_9(%arg0: i32, %arg1: i32) -> (i32, i32) {
    %c0_i32 = arith.constant 0 : i32
    %c0_i32_0 = arith.constant 0 : i32
    %c0_i32_1 = arith.constant 0 : i32
    return %c0_i32, %c0_i32_0 : i32, i32
  }
  func.func @transform_10(%arg0: i32, %arg1: i32) -> (i32, i32) {
    %c0_i32 = arith.constant 0 : i32
    %c0_i32_0 = arith.constant 0 : i32
    %c0_i32_1 = arith.constant 0 : i32
    return %c0_i32, %c0_i32_0 : i32, i32
  }
  func.func @transform_11(%arg0: i32, %arg1: i32) -> (i32, i32) {
    %c0_i32 = arith.constant 0 : i32
    %c0_i32_0 = arith.constant 0 : i32
    %c0_i32_1 = arith.constant 0 : i32
    return %c0_i32, %c0_i32_0 : i32, i32
  }
  func.func @transform_12(%arg0: i32, %arg1: i32) -> (i32, i32) {
    %c0_i32 = arith.constant 0 : i32
    %c0_i32_0 = arith.constant 0 : i32
    %c0_i32_1 = arith.constant 0 : i32
    return %c0_i32, %c0_i32_0 : i32, i32
  }
  func.func @transform_13(%arg0: i32, %arg1: i32) -> (i32, i32) {
    %c0_i32 = arith.constant 0 : i32
    %c0_i32_0 = arith.constant 0 : i32
    %c0_i32_1 = arith.constant 0 : i32
    return %c0_i32, %c0_i32_0 : i32, i32
  }
  func.func @transform_14(%arg0: i32, %arg1: i32) -> (i32, i32, i32) {
    %c0_i32 = arith.constant 0 : i32
    %c0_i32_0 = arith.constant 0 : i32
    return %arg0, %arg1, %c0_i32 : i32, i32, i32
  }
}

module attributes {stable_mosaic.version = 11 : i64} {
  func.func @_block_kernel(%arg0: i32, %arg1: i32, %arg2: memref<1x8x128xf32, #tpu.memory_space<vmem>>, %arg3: memref<1x8x16x16xbf16, #tpu.memory_space<vmem>>, %arg4: memref<1x8x16x16xbf16, #tpu.memory_space<vmem>>, %arg5: memref<128x128xbf16, #tpu.memory_space<vmem>>, %arg6: memref<128x128xbf16, #tpu.memory_space<vmem>>, %arg7: memref<1x128xf32, #tpu.memory_space<vmem>>, %arg8: memref<1x128xf32, #tpu.memory_space<vmem>>, %arg9: memref<1x128xf32, #tpu.memory_space<vmem>>, %arg10: memref<1x128xf32, #tpu.memory_space<vmem>>, %arg11: memref<1x128xf32, #tpu.memory_space<vmem>>, %arg12: memref<128x512xbf16, #tpu.memory_space<vmem>>, %arg13: memref<1x512xf32, #tpu.memory_space<vmem>>, %arg14: memref<512x128xbf16, #tpu.memory_space<vmem>>, %arg15: memref<1x128xf32, #tpu.memory_space<vmem>>, %arg16: memref<1x8x128xf32, #tpu.memory_space<vmem>>) attributes {dimension_semantics = [#tpu.dimension_semantics<parallel>, #tpu.dimension_semantics<parallel>], iteration_bounds = array<i64: 2, 1>, scalar_prefetch = 0 : i64, scratch_operands = 0 : i64, tpu.core_type = #tpu.core_type<tc>, window_params = [{transform_indices = @transform_0, window_bounds = array<i64: 1, 8, 128>}, {transform_indices = @transform_1, window_bounds = array<i64: 1, 8, 16, 16>}, {transform_indices = @transform_2, window_bounds = array<i64: 1, 8, 16, 16>}, {pipeline_mode = #tpu.pipeline_mode<synchronous>, transform_indices = @transform_3, window_bounds = array<i64: 128, 128>}, {pipeline_mode = #tpu.pipeline_mode<synchronous>, transform_indices = @transform_4, window_bounds = array<i64: 128, 128>}, {pipeline_mode = #tpu.pipeline_mode<synchronous>, transform_indices = @transform_5, window_bounds = array<i64: 1, 128>}, {pipeline_mode = #tpu.pipeline_mode<synchronous>, transform_indices = @transform_6, window_bounds = array<i64: 1, 128>}, {pipeline_mode = #tpu.pipeline_mode<synchronous>, transform_indices = @transform_7, window_bounds = array<i64: 1, 128>}, {pipeline_mode = #tpu.pipeline_mode<synchronous>, transform_indices = @transform_8, window_bounds = array<i64: 1, 128>}, {pipeline_mode = #tpu.pipeline_mode<synchronous>, transform_indices = @transform_9, window_bounds = array<i64: 1, 128>}, {pipeline_mode = #tpu.pipeline_mode<synchronous>, transform_indices = @transform_10, window_bounds = array<i64: 128, 512>}, {pipeline_mode = #tpu.pipeline_mode<synchronous>, transform_indices = @transform_11, window_bounds = array<i64: 1, 512>}, {pipeline_mode = #tpu.pipeline_mode<synchronous>, transform_indices = @transform_12, window_bounds = array<i64: 512, 128>}, {pipeline_mode = #tpu.pipeline_mode<synchronous>, transform_indices = @transform_13, window_bounds = array<i64: 1, 128>}, {transform_indices = @transform_14, window_bounds = array<i64: 1, 8, 128>}]} {
    %c0 = arith.constant 0 : index
    %c0_0 = arith.constant 0 : index
    %c0_1 = arith.constant 0 : index
    %0 = vector.load %arg2[%c0, %c0_0, %c0_1] : memref<1x8x128xf32, #tpu.memory_space<vmem>>, vector<1x8x128xf32>
    %1 = vector.shape_cast %0 : vector<1x8x128xf32> to vector<8x128xf32>
    %c0_2 = arith.constant 0 : index
    %c0_3 = arith.constant 0 : index
    %2 = vector.load %arg8[%c0_2, %c0_3] : memref<1x128xf32, #tpu.memory_space<vmem>>, vector<1x128xf32>
    %c0_4 = arith.constant 0 : index
    %c0_5 = arith.constant 0 : index
    %3 = vector.load %arg9[%c0_4, %c0_5] : memref<1x128xf32, #tpu.memory_space<vmem>>, vector<1x128xf32>
    %cst = arith.constant dense<0.000000e+00> : vector<8xf32>
    %4 = vector.multi_reduction <add>, %1, %cst [1] : vector<8x128xf32> to vector<8xf32>
    %5 = vector.shape_cast %4 : vector<8xf32> to vector<8x1xf32>
    %cst_6 = arith.constant 1.280000e+02 : f32
    %6 = vector.broadcast %cst_6 : f32 to vector<8x1xf32>
    %7 = arith.divf %5, %6 : vector<8x1xf32>
    %8 = vector.broadcast %7 : vector<8x1xf32> to vector<8x128xf32>
    %9 = arith.subf %1, %8 : vector<8x128xf32>
    %10 = arith.mulf %9, %9 : vector<8x128xf32>
    %cst_7 = arith.constant dense<0.000000e+00> : vector<8xf32>
    %11 = vector.multi_reduction <add>, %10, %cst_7 [1] : vector<8x128xf32> to vector<8xf32>
    %12 = vector.shape_cast %11 : vector<8xf32> to vector<8x1xf32>
    %cst_8 = arith.constant 1.280000e+02 : f32
    %13 = vector.broadcast %cst_8 : f32 to vector<8x1xf32>
    %14 = arith.divf %12, %13 : vector<8x1xf32>
    %cst_9 = arith.constant 9.99999974E-6 : f32
    %15 = vector.broadcast %cst_9 : f32 to vector<8x1xf32>
    %16 = arith.addf %14, %15 : vector<8x1xf32>
    %17 = math.rsqrt %16 : vector<8x1xf32>
    %18 = vector.broadcast %17 : vector<8x1xf32> to vector<8x128xf32>
    %19 = arith.mulf %9, %18 : vector<8x128xf32>
    %20 = vector.broadcast %2 : vector<1x128xf32> to vector<8x128xf32>
    %21 = arith.mulf %19, %20 : vector<8x128xf32>
    %22 = vector.broadcast %3 : vector<1x128xf32> to vector<8x128xf32>
    %23 = arith.addf %21, %22 : vector<8x128xf32>
    %24 = arith.truncf %23 : vector<8x128xf32> to vector<8x128xbf16>
    %c0_10 = arith.constant 0 : index
    %c0_11 = arith.constant 0 : index
    %25 = vector.load %arg5[%c0_10, %c0_11] : memref<128x128xbf16, #tpu.memory_space<vmem>>, vector<128x128xbf16>
    %cst_12 = arith.constant dense<0.000000e+00> : vector<8x128xf32>
    %26 = tpu.matmul %24, %25, %cst_12 {dimension_numbers = #tpu.dot_dimension_numbers<[1], [0], [0], [1], [0, 0, 1, 1], [], []>} : vector<8x128xbf16>, vector<128x128xbf16>, vector<8x128xf32> -> vector<8x128xf32>
    %27 = vector.shape_cast %26 : vector<8x128xf32> to vector<8x8x16xf32>
    %28 = tpu.transpose %27, [1, 0, 2] : vector<8x8x16xf32> -> vector<8x8x16xf32>
    %29 = arith.truncf %28 : vector<8x8x16xf32> to vector<8x8x16xbf16>
    %c0_13 = arith.constant 0 : index
    %c0_14 = arith.constant 0 : index
    %c0_15 = arith.constant 0 : index
    %c0_16 = arith.constant 0 : index
    %30 = vector.load %arg3[%c0_13, %c0_14, %c0_15, %c0_16] : memref<1x8x16x16xbf16, #tpu.memory_space<vmem>>, vector<1x8x16x16xbf16>
    %31 = vector.shape_cast %30 : vector<1x8x16x16xbf16> to vector<8x16x16xbf16>
    %c0_17 = arith.constant 0 : index
    %c0_18 = arith.constant 0 : index
    %c0_19 = arith.constant 0 : index
    %c0_20 = arith.constant 0 : index
    %32 = vector.load %arg4[%c0_17, %c0_18, %c0_19, %c0_20] : memref<1x8x16x16xbf16, #tpu.memory_space<vmem>>, vector<1x8x16x16xbf16>
    %33 = vector.shape_cast %32 : vector<1x8x16x16xbf16> to vector<8x16x16xbf16>
    %cst_21 = arith.constant dense<0.000000e+00> : vector<8x8x16xf32>
    %34 = tpu.matmul %29, %31, %cst_21 {dimension_numbers = #tpu.dot_dimension_numbers<[2], [2], [1], [1], [0, 0, 0, 1, 1, 1], [0], [0]>} : vector<8x8x16xbf16>, vector<8x16x16xbf16>, vector<8x8x16xf32> -> vector<8x8x16xf32>
    %cst_22 = arith.constant dense<0xFF800000> : vector<8x8xf32>
    %35 = vector.multi_reduction <maximumf>, %34, %cst_22 [2] : vector<8x8x16xf32> to vector<8x8xf32>
    %36 = vector.shape_cast %35 : vector<8x8xf32> to vector<8x8x1xf32>
    %37 = vector.broadcast %36 : vector<8x8x1xf32> to vector<8x8x16xf32>
    %38 = arith.subf %34, %37 : vector<8x8x16xf32>
    %39 = math.exp %38 : vector<8x8x16xf32>
    %cst_23 = arith.constant dense<0.000000e+00> : vector<8x8xf32>
    %40 = vector.multi_reduction <add>, %39, %cst_23 [2] : vector<8x8x16xf32> to vector<8x8xf32>
    %41 = vector.shape_cast %40 : vector<8x8xf32> to vector<8x8x1xf32>
    %42 = tpu.reciprocal %41 {approx = true} : vector<8x8x1xf32> -> vector<8x8x1xf32>
    %43 = vector.broadcast %42 : vector<8x8x1xf32> to vector<8x8x16xf32>
    %44 = arith.mulf %39, %43 : vector<8x8x16xf32>
    %45 = arith.truncf %44 : vector<8x8x16xf32> to vector<8x8x16xbf16>
    %cst_24 = arith.constant dense<0.000000e+00> : vector<8x8x16xf32>
    %46 = tpu.matmul %45, %33, %cst_24 {dimension_numbers = #tpu.dot_dimension_numbers<[2], [1], [1], [2], [0, 0, 0, 1, 1, 2], [0], [0]>} : vector<8x8x16xbf16>, vector<8x16x16xbf16>, vector<8x8x16xf32> -> vector<8x8x16xf32>
    %47 = tpu.transpose %46, [1, 0, 2] : vector<8x8x16xf32> -> vector<8x8x16xf32>
    %48 = vector.shape_cast %47 : vector<8x8x16xf32> to vector<8x128xf32>
    %49 = arith.truncf %48 : vector<8x128xf32> to vector<8x128xbf16>
    %c0_25 = arith.constant 0 : index
    %c0_26 = arith.constant 0 : index
    %50 = vector.load %arg6[%c0_25, %c0_26] : memref<128x128xbf16, #tpu.memory_space<vmem>>, vector<128x128xbf16>
    %cst_27 = arith.constant dense<0.000000e+00> : vector<8x128xf32>
    %51 = tpu.matmul %49, %50, %cst_27 {dimension_numbers = #tpu.dot_dimension_numbers<[1], [0], [0], [1], [0, 0, 1, 1], [], []>} : vector<8x128xbf16>, vector<128x128xbf16>, vector<8x128xf32> -> vector<8x128xf32>
    %c0_28 = arith.constant 0 : index
    %c0_29 = arith.constant 0 : index
    %52 = vector.load %arg7[%c0_28, %c0_29] : memref<1x128xf32, #tpu.memory_space<vmem>>, vector<1x128xf32>
    %53 = vector.broadcast %52 : vector<1x128xf32> to vector<8x128xf32>
    %54 = arith.addf %51, %53 : vector<8x128xf32>
    %55 = arith.addf %1, %54 : vector<8x128xf32>
    %c0_30 = arith.constant 0 : index
    %c0_31 = arith.constant 0 : index
    %56 = vector.load %arg10[%c0_30, %c0_31] : memref<1x128xf32, #tpu.memory_space<vmem>>, vector<1x128xf32>
    %c0_32 = arith.constant 0 : index
    %c0_33 = arith.constant 0 : index
    %57 = vector.load %arg11[%c0_32, %c0_33] : memref<1x128xf32, #tpu.memory_space<vmem>>, vector<1x128xf32>
    %cst_34 = arith.constant dense<0.000000e+00> : vector<8xf32>
    %58 = vector.multi_reduction <add>, %55, %cst_34 [1] : vector<8x128xf32> to vector<8xf32>
    %59 = vector.shape_cast %58 : vector<8xf32> to vector<8x1xf32>
    %cst_35 = arith.constant 1.280000e+02 : f32
    %60 = vector.broadcast %cst_35 : f32 to vector<8x1xf32>
    %61 = arith.divf %59, %60 : vector<8x1xf32>
    %62 = vector.broadcast %61 : vector<8x1xf32> to vector<8x128xf32>
    %63 = arith.subf %55, %62 : vector<8x128xf32>
    %64 = arith.mulf %63, %63 : vector<8x128xf32>
    %cst_36 = arith.constant dense<0.000000e+00> : vector<8xf32>
    %65 = vector.multi_reduction <add>, %64, %cst_36 [1] : vector<8x128xf32> to vector<8xf32>
    %66 = vector.shape_cast %65 : vector<8xf32> to vector<8x1xf32>
    %cst_37 = arith.constant 1.280000e+02 : f32
    %67 = vector.broadcast %cst_37 : f32 to vector<8x1xf32>
    %68 = arith.divf %66, %67 : vector<8x1xf32>
    %cst_38 = arith.constant 9.99999974E-6 : f32
    %69 = vector.broadcast %cst_38 : f32 to vector<8x1xf32>
    %70 = arith.addf %68, %69 : vector<8x1xf32>
    %71 = math.rsqrt %70 : vector<8x1xf32>
    %72 = vector.broadcast %71 : vector<8x1xf32> to vector<8x128xf32>
    %73 = arith.mulf %63, %72 : vector<8x128xf32>
    %74 = vector.broadcast %56 : vector<1x128xf32> to vector<8x128xf32>
    %75 = arith.mulf %73, %74 : vector<8x128xf32>
    %76 = vector.broadcast %57 : vector<1x128xf32> to vector<8x128xf32>
    %77 = arith.addf %75, %76 : vector<8x128xf32>
    %78 = arith.truncf %77 : vector<8x128xf32> to vector<8x128xbf16>
    %c0_39 = arith.constant 0 : index
    %c0_40 = arith.constant 0 : index
    %79 = vector.load %arg12[%c0_39, %c0_40] : memref<128x512xbf16, #tpu.memory_space<vmem>>, vector<128x512xbf16>
    %cst_41 = arith.constant dense<0.000000e+00> : vector<8x512xf32>
    %80 = tpu.matmul %78, %79, %cst_41 {dimension_numbers = #tpu.dot_dimension_numbers<[1], [0], [0], [1], [0, 0, 1, 1], [], []>} : vector<8x128xbf16>, vector<128x512xbf16>, vector<8x512xf32> -> vector<8x512xf32>
    %c0_42 = arith.constant 0 : index
    %c0_43 = arith.constant 0 : index
    %81 = vector.load %arg13[%c0_42, %c0_43] : memref<1x512xf32, #tpu.memory_space<vmem>>, vector<1x512xf32>
    %82 = vector.broadcast %81 : vector<1x512xf32> to vector<8x512xf32>
    %83 = arith.addf %80, %82 : vector<8x512xf32>
    %cst_44 = arith.constant 5.000000e-01 : f32
    %84 = vector.broadcast %cst_44 : f32 to vector<8x512xf32>
    %85 = arith.mulf %84, %83 : vector<8x512xf32>
    %cst_45 = arith.constant 4.471500e-02 : f32
    %86 = vector.broadcast %cst_45 : f32 to vector<8x512xf32>
    %87 = arith.mulf %86, %83 : vector<8x512xf32>
    %88 = arith.mulf %87, %83 : vector<8x512xf32>
    %89 = arith.mulf %88, %83 : vector<8x512xf32>
    %90 = arith.addf %83, %89 : vector<8x512xf32>
    %cst_46 = arith.constant 0.797884583 : f32
    %91 = vector.broadcast %cst_46 : f32 to vector<8x512xf32>
    %92 = arith.mulf %91, %90 : vector<8x512xf32>
    %93 = math.tanh %92 : vector<8x512xf32>
    %cst_47 = arith.constant 1.000000e+00 : f32
    %94 = vector.broadcast %cst_47 : f32 to vector<8x512xf32>
    %95 = arith.addf %94, %93 : vector<8x512xf32>
    %96 = arith.mulf %85, %95 : vector<8x512xf32>
    %97 = arith.truncf %96 : vector<8x512xf32> to vector<8x512xbf16>
    %c0_48 = arith.constant 0 : index
    %c0_49 = arith.constant 0 : index
    %98 = vector.load %arg14[%c0_48, %c0_49] : memref<512x128xbf16, #tpu.memory_space<vmem>>, vector<512x128xbf16>
    %cst_50 = arith.constant dense<0.000000e+00> : vector<8x128xf32>
    %99 = tpu.matmul %97, %98, %cst_50 {dimension_numbers = #tpu.dot_dimension_numbers<[1], [0], [0], [1], [0, 0, 1, 1], [], []>} : vector<8x512xbf16>, vector<512x128xbf16>, vector<8x128xf32> -> vector<8x128xf32>
    %c0_51 = arith.constant 0 : index
    %c0_52 = arith.constant 0 : index
    %100 = vector.load %arg15[%c0_51, %c0_52] : memref<1x128xf32, #tpu.memory_space<vmem>>, vector<1x128xf32>
    %101 = vector.broadcast %100 : vector<1x128xf32> to vector<8x128xf32>
    %102 = arith.addf %99, %101 : vector<8x128xf32>
    %103 = arith.addf %55, %102 : vector<8x128xf32>
    %c0_53 = arith.constant 0 : index
    %c0_54 = arith.constant 0 : index
    %c0_55 = arith.constant 0 : index
    %104 = vector.load %arg16[%c0_53, %c0_54, %c0_55] : memref<1x8x128xf32, #tpu.memory_space<vmem>>, vector<1x8x128xf32>
    %105 = vector.shape_cast %104 : vector<1x8x128xf32> to vector<8x128xf32>
    %106 = vector.shape_cast %103 : vector<8x128xf32> to vector<1x8x128xf32>
    tpu.vector_store %arg16[%c0_53, %c0_54, %c0_55], %106 {strides = array<i32>} : memref<1x8x128xf32, #tpu.memory_space<vmem>>, vector<1x8x128xf32>,
    return
  }
  func.func @transform_0(%arg0: i32, %arg1: i32) -> (i32, i32, i32) {
    %c0_i32 = arith.constant 0 : i32
    %c0_i32_0 = arith.constant 0 : i32
    return %arg0, %arg1, %c0_i32 : i32, i32, i32
  }
  func.func @transform_1(%arg0: i32, %arg1: i32) -> (i32, i32, i32, i32) {
    %c0_i32 = arith.constant 0 : i32
    %c0_i32_0 = arith.constant 0 : i32
    %c0_i32_1 = arith.constant 0 : i32
    %c0_i32_2 = arith.constant 0 : i32
    return %arg0, %c0_i32, %c0_i32_0, %c0_i32_1 : i32, i32, i32, i32
  }
  func.func @transform_2(%arg0: i32, %arg1: i32) -> (i32, i32, i32, i32) {
    %c0_i32 = arith.constant 0 : i32
    %c0_i32_0 = arith.constant 0 : i32
    %c0_i32_1 = arith.constant 0 : i32
    %c0_i32_2 = arith.constant 0 : i32
    return %arg0, %c0_i32, %c0_i32_0, %c0_i32_1 : i32, i32, i32, i32
  }
  func.func @transform_3(%arg0: i32, %arg1: i32) -> (i32, i32) {
    %c0_i32 = arith.constant 0 : i32
    %c0_i32_0 = arith.constant 0 : i32
    %c0_i32_1 = arith.constant 0 : i32
    return %c0_i32, %c0_i32_0 : i32, i32
  }
  func.func @transform_4(%arg0: i32, %arg1: i32) -> (i32, i32) {
    %c0_i32 = arith.constant 0 : i32
    %c0_i32_0 = arith.constant 0 : i32
    %c0_i32_1 = arith.constant 0 : i32
    return %c0_i32, %c0_i32_0 : i32, i32
  }
  func.func @transform_5(%arg0: i32, %arg1: i32) -> (i32, i32) {
    %c0_i32 = arith.constant 0 : i32
    %c0_i32_0 = arith.constant 0 : i32
    %c0_i32_1 = arith.constant 0 : i32
    return %c0_i32, %c0_i32_0 : i32, i32
  }
  func.func @transform_6(%arg0: i32, %arg1: i32) -> (i32, i32) {
    %c0_i32 = arith.constant 0 : i32
    %c0_i32_0 = arith.constant 0 : i32
    %c0_i32_1 = arith.constant 0 : i32
    return %c0_i32, %c0_i32_0 : i32, i32
  }
  func.func @transform_7(%arg0: i32, %arg1: i32) -> (i32, i32) {
    %c0_i32 = arith.constant 0 : i32
    %c0_i32_0 = arith.constant 0 : i32
    %c0_i32_1 = arith.constant 0 : i32
    return %c0_i32, %c0_i32_0 : i32, i32
  }
  func.func @transform_8(%arg0: i32, %arg1: i32) -> (i32, i32) {
    %c0_i32 = arith.constant 0 : i32
    %c0_i32_0 = arith.constant 0 : i32
    %c0_i32_1 = arith.constant 0 : i32
    return %c0_i32, %c0_i32_0 : i32, i32
  }
  func.func @transform_9(%arg0: i32, %arg1: i32) -> (i32, i32) {
    %c0_i32 = arith.constant 0 : i32
    %c0_i32_0 = arith.constant 0 : i32
    %c0_i32_1 = arith.constant 0 : i32
    return %c0_i32, %c0_i32_0 : i32, i32
  }
  func.func @transform_10(%arg0: i32, %arg1: i32) -> (i32, i32) {
    %c0_i32 = arith.constant 0 : i32
    %c0_i32_0 = arith.constant 0 : i32
    %c0_i32_1 = arith.constant 0 : i32
    return %c0_i32, %c0_i32_0 : i32, i32
  }
  func.func @transform_11(%arg0: i32, %arg1: i32) -> (i32, i32) {
    %c0_i32 = arith.constant 0 : i32
    %c0_i32_0 = arith.constant 0 : i32
    %c0_i32_1 = arith.constant 0 : i32
    return %c0_i32, %c0_i32_0 : i32, i32
  }
  func.func @transform_12(%arg0: i32, %arg1: i32) -> (i32, i32) {
    %c0_i32 = arith.constant 0 : i32
    %c0_i32_0 = arith.constant 0 : i32
    %c0_i32_1 = arith.constant 0 : i32
    return %c0_i32, %c0_i32_0 : i32, i32
  }
  func.func @transform_13(%arg0: i32, %arg1: i32) -> (i32, i32) {
    %c0_i32 = arith.constant 0 : i32
    %c0_i32_0 = arith.constant 0 : i32
    %c0_i32_1 = arith.constant 0 : i32
    return %c0_i32, %c0_i32_0 : i32, i32
  }
  func.func @transform_14(%arg0: i32, %arg1: i32) -> (i32, i32, i32) {
    %c0_i32 = arith.constant 0 : i32
    %c0_i32_0 = arith.constant 0 : i32
    return %arg0, %arg1, %c0_i32 : i32, i32, i32
  }
}

</mosaic_0001>

<llo_original>
// kernel: tpu_custom_call.1
$region0: #{tpu_custom_call.1}
  #allocation0 [shape = 'u32[]', space=smem, size = 0x4, offset = 0x4, fixed_abs, tag = 'smem constant byte address 0x4 - core index']
  #allocation1 [shape = 'u32[144,128]{1,0:T(1,128)}', space=vmem, size = 0x12000, scoped, tag = 'internal scratch']
  %s0 = inlined_call_operand.hbm [shape: f32[2,8,128], index: 0, kind: input, shape index: {}]
  %s1 = inlined_call_operand.hbm [shape: bf16[2,8,16,16], index: 1, kind: input, shape index: {}]
  %s2 = inlined_call_operand.hbm [shape: bf16[2,8,16,16], index: 2, kind: input, shape index: {}]
  %s3 = inlined_call_operand.hbm [shape: bf16[128,128], index: 3, kind: input, shape index: {}]
  %s4 = inlined_call_operand.hbm [shape: bf16[128,128], index: 4, kind: input, shape index: {}]
  %s5 = inlined_call_operand.vmem [shape: f32[1,128], index: 5, kind: input, shape index: {}]
  %s6 = inlined_call_operand.vmem [shape: f32[1,128], index: 6, kind: input, shape index: {}]
  %s7 = inlined_call_operand.vmem [shape: f32[1,128], index: 7, kind: input, shape index: {}]
  %s8 = inlined_call_operand.vmem [shape: f32[1,128], index: 8, kind: input, shape index: {}]
  %s9 = inlined_call_operand.vmem [shape: f32[1,128], index: 9, kind: input, shape index: {}]
  %s10 = inlined_call_operand.hbm [shape: bf16[128,512], index: 10, kind: input, shape index: {}]
  %s11 = inlined_call_operand.vmem [shape: f32[1,512], index: 11, kind: input, shape index: {}]
  %s12 = inlined_call_operand.hbm [shape: bf16[512,128], index: 12, kind: input, shape index: {}]
  %s13 = inlined_call_operand.vmem [shape: f32[1,128], index: 13, kind: input, shape index: {}]
  %s14 = inlined_call_operand.hbm [shape: f32[2,8,128], index: 14, kind: output, shape index: {}]
  %s15 = sld [smem:[#allocation0]]
  $region117: #{tpu_custom_call.1} parent=0
    _
  %s17 = ssub.s32 1, %s15
  %s18 = scalar_select 0, %s17, %s15
  $region1: #{tpu_custom_call.1} parent=0
    #allocation2 [shape = 'u8[8192]{0}', space=vmem, size = 0x2000, scoped, tag = 'input window, operand 0']
    #allocation3 [shape = 's32[2]{0}', space=sflag, size = 0x8, scoped, tag = 'scoped memory for tpu_custom_call.1']
    #allocation4 [shape = 's32[2]{0}', space=sflag, size = 0x8, scoped, tag = 'scoped memory for tpu_custom_call.1']
    #allocation5 [shape = 'u8[65536]{0}', space=vmem, size = 0x10000, scoped, tag = 'input window, operand 1']
    #allocation6 [shape = 's32[2]{0}', space=sflag, size = 0x8, scoped, tag = 'scoped memory for tpu_custom_call.1']
    #allocation7 [shape = 'u8[65536]{0}', space=vmem, size = 0x10000, scoped, tag = 'input window, operand 2']
    #allocation8 [shape = 'u8[32768]{0}', space=vmem, size = 0x8000, scoped, tag = 'input window, operand 3, single buffered']
    #allocation9 [shape = 's32[1]{0}', space=sflag, size = 0x4, scoped, tag = 'scoped memory for tpu_custom_call.1']
    #allocation10 [shape = 'u8[32768]{0}', space=vmem, size = 0x8000, scoped, tag = 'input window, operand 4, single buffered']
    #allocation11 [shape = 'u8[131072]{0}', space=vmem, size = 0x20000, scoped, tag = 'input window, operand 10, single buffered']
    #allocation12 [shape = 's32[1]{0}', space=sflag, size = 0x4, scoped, tag = 'scoped memory for tpu_custom_call.1']
    #allocation13 [shape = 'u8[131072]{0}', space=vmem, size = 0x20000, scoped, tag = 'input window, operand 12, single buffered']
    #allocation14 [shape = 'u8[8192]{0}', space=vmem, size = 0x2000, scoped, tag = 'output window, operand 0']
    %19 = vsyncpa [#allocation3], 0
    %s20 = scalar_lea.sflag [#allocation3], 1
    %21 = vsyncpa %s20, 0
    %22 = vsyncpa [#allocation6], 0
    %s23 = scalar_lea.sflag [#allocation6], 1
    %24 = vsyncpa %s23, 0
    %25 = vsyncpa [#allocation9], 0
    %26 = vsyncpa [#allocation12], 0
    %27 = vsyncpa [#allocation4], 0
    %s28 = scalar_lea.sflag [#allocation4], 1
    %29 = vsyncpa %s28, 0
    loop: start=0, step=1, limit=4
    $region2: #{tpu_custom_call.1} parent=1 // loop_pre_header
      _
    $region3: #{tpu_custom_call.1} parent=1 // loop_header
      %s31 = sphi 0, %s35
      %p32 = scmp.ge.s32.totalorder %s31, 4
      %s38 = sphi 0, %s50
      %s39 = sphi 0, %s46
      %s40 = sphi 0, %s38
      %s41 = sphi 0, %s39
      %s42 = sphi 0, %s40
      %s43 = sphi 0, %s41
      %s55 = sphi 0, %s57
      %s58 = sphi 0, %s55
      %s59 = sphi 0, %s58
      %s75 = sphi 0, %s59
      %s81 = sphi 0, %s83
      %s84 = sphi 0, %s81
      %s85 = sphi 0, %s84
      %s101 = sphi 0, %s85
      %s107 = sphi 0, %s109
      %s110 = sphi 0, %s107
      %s111 = sphi 0, %s110
      %s127 = sphi 0, %s111
      %s131 = sphi 0, %s131
      %s133 = sphi 0, %s131
      %s134 = sphi 0, %s133
      %s148 = sphi 0, %s134
      %s152 = sphi 0, %s152
      %s154 = sphi 0, %s152
      %s155 = sphi 0, %s154
      %s169 = sphi 0, %s155
      %s173 = sphi 0, %s173
      %s175 = sphi 0, %s173
      %s176 = sphi 0, %s175
      %s190 = sphi 0, %s176
      %s194 = sphi 0, %s194
      %s196 = sphi 0, %s194
      %s197 = sphi 0, %s196
      %s211 = sphi 0, %s197
      %s215 = sphi 0, %s215
      %s217 = sphi 0, %s215
      %s218 = sphi 0, %s217
      %s232 = sphi 0, %s218
      %s236 = sphi 0, %s236
      %s238 = sphi 0, %s236
      %s239 = sphi 0, %s238
      %s253 = sphi 0, %s239
      %s257 = sphi 0, %s257
      %s259 = sphi 0, %s257
      %s260 = sphi 0, %s259
      %s274 = sphi 0, %s260
      %s278 = sphi 0, %s278
      %s280 = sphi 0, %s278
      %s281 = sphi 0, %s280
      %s295 = sphi 0, %s281
      %s299 = sphi 0, %s299
      %s301 = sphi 0, %s299
      %s302 = sphi 0, %s301
      %s316 = sphi 0, %s302
      %s320 = sphi 0, %s320
      %s322 = sphi 0, %s320
      %s323 = sphi 0, %s322
      %s337 = sphi 0, %s323
      %s341 = sphi 0, %s341
      %s343 = sphi 0, %s341
      %s344 = sphi 0, %s343
      %s358 = sphi 0, %s344
      %s366 = sphi 0, %s368
      %s369 = sphi 0, %s366
      %s370 = sphi 0, %s369
      %s386 = sphi 0, %s370
    $region4: #{tpu_custom_call.1} parent=1 // loop_header_branch
      %34 = sbr.rel (%p32) target = $region8
    $region5: #{tpu_custom_call.1} parent=1 // loop_body
      %s36 = ssub.s32 %s31, 1
      %s37 = ssub.s32 %s31, 2
      %s44 = sadd.s32 1, %s39
      %p45 = scmp.ge.s32.totalorder %s44, 1
      %s46 = scalar_select %p45, 0, %s44
      %s47 = sadd.s32 1, %s38
      %s48 = scalar_select %p45, %s47, %s38
      %p49 = scmp.ge.s32.totalorder %s48, 2
      %s50 = scalar_select %p49, 0, %s48
      %s51 = ssub.s32 %s38, %s50
      %s52 = ssub.s32 %s39, %s46
      %s53 = sor.u32 %s51, %s52
      %p54 = scmp.eq.s32.totalorder %s53, 0
      %s56 = sadd.s32 %s55, 1
      %s57 = scalar_select %p54, %s55, %s56
      %p60 = pneg %p54
      %p61 = scmp.eq.s32.totalorder %s31, 1
      %p62 = por %p60, %p61
      %p63 = scmp.ne.s32.totalorder %s55, %s58
      %p64 = scmp.eq.s32.totalorder %s31, 0
      %p65 = por %p63, %p64
      %p66 = scmp.ne.s32.totalorder %s55, %s58
      %p67 = scmp.eq.s32.totalorder %s36, 1
      %p68 = por %p66, %p67
      %p69 = scmp.ne.s32.totalorder %s58, %s59
      %p70 = scmp.eq.s32.totalorder %s36, 0
      %p71 = por %p69, %p70
      %p72 = scmp.ne.s32.totalorder %s58, %s59
      %p73 = scmp.eq.s32.totalorder %s37, 1
      %p74 = por %p72, %p73
      %p76 = scmp.ne.s32.totalorder %s59, %s75
      %p77 = scmp.eq.s32.totalorder %s37, 0
      %p78 = por %p76, %p77
      %s79 = ssub.s32 %s38, %s50
      %p80 = scmp.eq.s32.totalorder %s79, 0
      %s82 = sadd.s32 %s81, 1
      %s83 = scalar_select %p80, %s81, %s82
      %p86 = pneg %p80
      %p87 = scmp.eq.s32.totalorder %s31, 1
      %p88 = por %p86, %p87
      %p89 = scmp.ne.s32.totalorder %s81, %s84
      %p90 = scmp.eq.s32.totalorder %s31, 0
      %p91 = por %p89, %p90
      %p92 = scmp.ne.s32.totalorder %s81, %s84
      %p93 = scmp.eq.s32.totalorder %s36, 1
      %p94 = por %p92, %p93
      %p95 = scmp.ne.s32.totalorder %s84, %s85
      %p96 = scmp.eq.s32.totalorder %s36, 0
      %p97 = por %p95, %p96
      %p98 = scmp.ne.s32.totalorder %s84, %s85
      %p99 = scmp.eq.s32.totalorder %s37, 1
      %p100 = por %p98, %p99
      %p102 = scmp.ne.s32.totalorder %s85, %s101
      %p103 = scmp.eq.s32.totalorder %s37, 0
      %p104 = por %p102, %p103
      %s105 = ssub.s32 %s38, %s50
      %p106 = scmp.eq.s32.totalorder %s105, 0
      %s108 = sadd.s32 %s107, 1
      %s109 = scalar_select %p106, %s107, %s108
      %p112 = pneg %p106
      %p113 = scmp.eq.s32.totalorder %s31, 1
      %p114 = por %p112, %p113
      %p115 = scmp.ne.s32.totalorder %s107, %s110
      %p116 = scmp.eq.s32.totalorder %s31, 0
      %p117 = por %p115, %p116
      %p118 = scmp.ne.s32.totalorder %s107, %s110
      %p119 = scmp.eq.s32.totalorder %s36, 1
      %p120 = por %p118, %p119
      %p121 = scmp.ne.s32.totalorder %s110, %s111
      %p122 = scmp.eq.s32.totalorder %s36, 0
      %p123 = por %p121, %p122
      %p124 = scmp.ne.s32.totalorder %s110, %s111
      %p125 = scmp.eq.s32.totalorder %s37, 1
      %p126 = por %p124, %p125
      %p128 = scmp.ne.s32.totalorder %s111, %s127
      %p129 = scmp.eq.s32.totalorder %s37, 0
      %p130 = por %p128, %p129
      %s132 = sadd.s32 %s131, 1
      %p135 = scmp.eq.s32.totalorder %s31, 1
      %p136 = scmp.ne.s32.totalorder %s131, %s133
      %p137 = scmp.eq.s32.totalorder %s31, 0
      %p138 = por %p136, %p137
      %p139 = scmp.ne.s32.totalorder %s131, %s133
      %p140 = scmp.eq.s32.totalorder %s36, 1
      %p141 = por %p139, %p140
      %p142 = scmp.ne.s32.totalorder %s133, %s134
      %p143 = scmp.eq.s32.totalorder %s36, 0
      %p144 = por %p142, %p143
      %p145 = scmp.ne.s32.totalorder %s133, %s134
      %p146 = scmp.eq.s32.totalorder %s37, 1
      %p147 = por %p145, %p146
      %p149 = scmp.ne.s32.totalorder %s134, %s148
      %p150 = scmp.eq.s32.totalorder %s37, 0
      %p151 = por %p149, %p150
      %s153 = sadd.s32 %s152, 1
      %p156 = scmp.eq.s32.totalorder %s31, 1
      %p157 = scmp.ne.s32.totalorder %s152, %s154
      %p158 = scmp.eq.s32.totalorder %s31, 0
      %p159 = por %p157, %p158
      %p160 = scmp.ne.s32.totalorder %s152, %s154
      %p161 = scmp.eq.s32.totalorder %s36, 1
      %p162 = por %p160, %p161
      %p163 = scmp.ne.s32.totalorder %s154, %s155
      %p164 = scmp.eq.s32.totalorder %s36, 0
      %p165 = por %p163, %p164
      %p166 = scmp.ne.s32.totalorder %s154, %s155
      %p167 = scmp.eq.s32.totalorder %s37, 1
      %p168 = por %p166, %p167
      %p170 = scmp.ne.s32.totalorder %s155, %s169
      %p171 = scmp.eq.s32.totalorder %s37, 0
      %p172 = por %p170, %p171
      %s174 = sadd.s32 %s173, 1
      %p177 = scmp.eq.s32.totalorder %s31, 1
      %p178 = scmp.ne.s32.totalorder %s173, %s175
      %p179 = scmp.eq.s32.totalorder %s31, 0
      %p180 = por %p178, %p179
      %p181 = scmp.ne.s32.totalorder %s173, %s175
      %p182 = scmp.eq.s32.totalorder %s36, 1
      %p183 = por %p181, %p182
      %p184 = scmp.ne.s32.totalorder %s175, %s176
      %p185 = scmp.eq.s32.totalorder %s36, 0
      %p186 = por %p184, %p185
      %p187 = scmp.ne.s32.totalorder %s175, %s176
      %p188 = scmp.eq.s32.totalorder %s37, 1
      %p189 = por %p187, %p188
      %p191 = scmp.ne.s32.totalorder %s176, %s190
      %p192 = scmp.eq.s32.totalorder %s37, 0
      %p193 = por %p191, %p192
      %s195 = sadd.s32 %s194, 1
      %p198 = scmp.eq.s32.totalorder %s31, 1
      %p199 = scmp.ne.s32.totalorder %s194, %s196
      %p200 = scmp.eq.s32.totalorder %s31, 0
      %p201 = por %p199, %p200
      %p202 = scmp.ne.s32.totalorder %s194, %s196
      %p203 = scmp.eq.s32.totalorder %s36, 1
      %p204 = por %p202, %p203
      %p205 = scmp.ne.s32.totalorder %s196, %s197
      %p206 = scmp.eq.s32.totalorder %s36, 0
      %p207 = por %p205, %p206
      %p208 = scmp.ne.s32.totalorder %s196, %s197
      %p209 = scmp.eq.s32.totalorder %s37, 1
      %p210 = por %p208, %p209
      %p212 = scmp.ne.s32.totalorder %s197, %s211
      %p213 = scmp.eq.s32.totalorder %s37, 0
      %p214 = por %p212, %p213
      %s216 = sadd.s32 %s215, 1
      %p219 = scmp.eq.s32.totalorder %s31, 1
      %p220 = scmp.ne.s32.totalorder %s215, %s217
      %p221 = scmp.eq.s32.totalorder %s31, 0
      %p222 = por %p220, %p221
      %p223 = scmp.ne.s32.totalorder %s215, %s217
      %p224 = scmp.eq.s32.totalorder %s36, 1
      %p225 = por %p223, %p224
      %p226 = scmp.ne.s32.totalorder %s217, %s218
      %p227 = scmp.eq.s32.totalorder %s36, 0
      %p228 = por %p226, %p227
      %p229 = scmp.ne.s32.totalorder %s217, %s218
      %p230 = scmp.eq.s32.totalorder %s37, 1
      %p231 = por %p229, %p230
      %p233 = scmp.ne.s32.totalorder %s218, %s232
      %p234 = scmp.eq.s32.totalorder %s37, 0
      %p235 = por %p233, %p234
      %s237 = sadd.s32 %s236, 1
      %p240 = scmp.eq.s32.totalorder %s31, 1
      %p241 = scmp.ne.s32.totalorder %s236, %s238
      %p242 = scmp.eq.s32.totalorder %s31, 0
      %p243 = por %p241, %p242
      %p244 = scmp.ne.s32.totalorder %s236, %s238
      %p245 = scmp.eq.s32.totalorder %s36, 1
      %p246 = por %p244, %p245
      %p247 = scmp.ne.s32.totalorder %s238, %s239
      %p248 = scmp.eq.s32.totalorder %s36, 0
      %p249 = por %p247, %p248
      %p250 = scmp.ne.s32.totalorder %s238, %s239
      %p251 = scmp.eq.s32.totalorder %s37, 1
      %p252 = por %p250, %p251
      %p254 = scmp.ne.s32.totalorder %s239, %s253
      %p255 = scmp.eq.s32.totalorder %s37, 0
      %p256 = por %p254, %p255
      %s258 = sadd.s32 %s257, 1
      %p261 = scmp.eq.s32.totalorder %s31, 1
      %p262 = scmp.ne.s32.totalorder %s257, %s259
      %p263 = scmp.eq.s32.totalorder %s31, 0
      %p264 = por %p262, %p263
      %p265 = scmp.ne.s32.totalorder %s257, %s259
      %p266 = scmp.eq.s32.totalorder %s36, 1
      %p267 = por %p265, %p266
      %p268 = scmp.ne.s32.totalorder %s259, %s260
      %p269 = scmp.eq.s32.totalorder %s36, 0
      %p270 = por %p268, %p269
      %p271 = scmp.ne.s32.totalorder %s259, %s260
      %p272 = scmp.eq.s32.totalorder %s37, 1
      %p273 = por %p271, %p272
      %p275 = scmp.ne.s32.totalorder %s260, %s274
      %p276 = scmp.eq.s32.totalorder %s37, 0
      %p277 = por %p275, %p276
      %s279 = sadd.s32 %s278, 1
      %p282 = scmp.eq.s32.totalorder %s31, 1
      %p283 = scmp.ne.s32.totalorder %s278, %s280
      %p284 = scmp.eq.s32.totalorder %s31, 0
      %p285 = por %p283, %p284
      %p286 = scmp.ne.s32.totalorder %s278, %s280
      %p287 = scmp.eq.s32.totalorder %s36, 1
      %p288 = por %p286, %p287
      %p289 = scmp.ne.s32.totalorder %s280, %s281
      %p290 = scmp.eq.s32.totalorder %s36, 0
      %p291 = por %p289, %p290
      %p292 = scmp.ne.s32.totalorder %s280, %s281
      %p293 = scmp.eq.s32.totalorder %s37, 1
      %p294 = por %p292, %p293
      %p296 = scmp.ne.s32.totalorder %s281, %s295
      %p297 = scmp.eq.s32.totalorder %s37, 0
      %p298 = por %p296, %p297
      %s300 = sadd.s32 %s299, 1
      %p303 = scmp.eq.s32.totalorder %s31, 1
      %p304 = scmp.ne.s32.totalorder %s299, %s301
      %p305 = scmp.eq.s32.totalorder %s31, 0
      %p306 = por %p304, %p305
      %p307 = scmp.ne.s32.totalorder %s299, %s301
      %p308 = scmp.eq.s32.totalorder %s36, 1
      %p309 = por %p307, %p308
      %p310 = scmp.ne.s32.totalorder %s301, %s302
      %p311 = scmp.eq.s32.totalorder %s36, 0
      %p312 = por %p310, %p311
      %p313 = scmp.ne.s32.totalorder %s301, %s302
      %p314 = scmp.eq.s32.totalorder %s37, 1
      %p315 = por %p313, %p314
      %p317 = scmp.ne.s32.totalorder %s302, %s316
      %p318 = scmp.eq.s32.totalorder %s37, 0
      %p319 = por %p317, %p318
      %s321 = sadd.s32 %s320, 1
      %p324 = scmp.eq.s32.totalorder %s31, 1
      %p325 = scmp.ne.s32.totalorder %s320, %s322
      %p326 = scmp.eq.s32.totalorder %s31, 0
      %p327 = por %p325, %p326
      %p328 = scmp.ne.s32.totalorder %s320, %s322
      %p329 = scmp.eq.s32.totalorder %s36, 1
      %p330 = por %p328, %p329
      %p331 = scmp.ne.s32.totalorder %s322, %s323
      %p332 = scmp.eq.s32.totalorder %s36, 0
      %p333 = por %p331, %p332
      %p334 = scmp.ne.s32.totalorder %s322, %s323
      %p335 = scmp.eq.s32.totalorder %s37, 1
      %p336 = por %p334, %p335
      %p338 = scmp.ne.s32.totalorder %s323, %s337
      %p339 = scmp.eq.s32.totalorder %s37, 0
      %p340 = por %p338, %p339
      %s342 = sadd.s32 %s341, 1
      %p345 = scmp.eq.s32.totalorder %s31, 1
      %p346 = scmp.ne.s32.totalorder %s341, %s343
      %p347 = scmp.eq.s32.totalorder %s31, 0
      %p348 = por %p346, %p347
      %p349 = scmp.ne.s32.totalorder %s341, %s343
      %p350 = scmp.eq.s32.totalorder %s36, 1
      %p351 = por %p349, %p350
      %p352 = scmp.ne.s32.totalorder %s343, %s344
      %p353 = scmp.eq.s32.totalorder %s36, 0
      %p354 = por %p352, %p353
      %p355 = scmp.ne.s32.totalorder %s343, %s344
      %p356 = scmp.eq.s32.totalorder %s37, 1
      %p357 = por %p355, %p356
      %p359 = scmp.ne.s32.totalorder %s344, %s358
      %p360 = scmp.eq.s32.totalorder %s37, 0
      %p361 = por %p359, %p360
      %s362 = ssub.s32 %s38, %s50
      %s363 = ssub.s32 %s39, %s46
      %s364 = sor.u32 %s362, %s363
      %p365 = scmp.eq.s32.totalorder %s364, 0
      %s367 = sadd.s32 %s366, 1
      %s368 = scalar_select %p365, %s366, %s367
      %p371 = pneg %p365
      %p372 = scmp.eq.s32.totalorder %s31, 1
      %p373 = por %p371, %p372
      %p374 = scmp.ne.s32.totalorder %s366, %s369
      %p375 = scmp.eq.s32.totalorder %s31, 0
      %p376 = por %p374, %p375
      %p377 = scmp.ne.s32.totalorder %s366, %s369
      %p378 = scmp.eq.s32.totalorder %s36, 1
      %p379 = por %p377, %p378
      %p380 = scmp.ne.s32.totalorder %s369, %s370
      %p381 = scmp.eq.s32.totalorder %s36, 0
      %p382 = por %p380, %p381
      %p383 = scmp.ne.s32.totalorder %s369, %s370
      %p384 = scmp.eq.s32.totalorder %s37, 1
      %p385 = por %p383, %p384
      %p387 = scmp.ne.s32.totalorder %s370, %s386
      %p388 = scmp.eq.s32.totalorder %s37, 0
      %p389 = por %p387, %p388
      %p390 = scmp.le.s32.totalorder 1, %s31
      %p391 = scmp.lt.s32.totalorder %s31, 3
      %p392 = pnand %p390, %p391
      %p393 = pneg %p392
      // Predicated region
      $region9: #{tpu_custom_call.1} parent=5 // pred_check
        _
      $region10: #{tpu_custom_call.1} parent=5 // pred_check_branch
        %395 = sbr.rel (%p392) target = $region12
      $region11: #{tpu_custom_call.1} parent=5 // pred_region
        %s396 = ssub.s32 %s31, 1
        // Predicated region
        $region13: #{tpu_custom_call.1} parent=11 // pred_check
          %p397 = pneg %p144
        $region14: #{tpu_custom_call.1} parent=11 // pred_check_branch
          %399 = sbr.rel (%p397) target = $region16
        $region15: #{tpu_custom_call.1} parent=11 // pred_region
          %s401 = ssub.s32 1024, 1024
          %402 = vsyncadd [#allocation9], %s401
          %s403 = sshll.u32 [#allocation8], 4
          %s404 = int_to_ptr.vmem [resolvable:$true] %s403
          %409 = dma.hbm_to_vmem [thread:$0]  %s3, 1024, %s404, [#allocation9], 64, 64, 4
        $region16: #{tpu_custom_call.1} parent=11 // pred_fallthru
          _
        // Predicated region
        $region17: #{tpu_custom_call.1} parent=11 // pred_check
          %p410 = pneg %p165
        $region18: #{tpu_custom_call.1} parent=11 // pred_check_branch
          %412 = sbr.rel (%p410) target = $region20
        $region19: #{tpu_custom_call.1} parent=11 // pred_region
          %s414 = ssub.s32 1024, 1024
          %415 = vsyncadd [#allocation9], %s414
          %s416 = sshll.u32 [#allocation10], 4
          %s417 = int_to_ptr.vmem [resolvable:$true] %s416
          %422 = dma.hbm_to_vmem [thread:$0]  %s4, 1024, %s417, [#allocation9], 64, 64, 4
        $region20: #{tpu_custom_call.1} parent=11 // pred_fallthru
          _
        // Predicated region
        $region21: #{tpu_custom_call.1} parent=11 // pred_check
          %p423 = pneg %p186
        $region22: #{tpu_custom_call.1} parent=11 // pred_check_branch
          %425 = sbr.rel (%p423) target = $region24
        $region23: #{tpu_custom_call.1} parent=11 // pred_region
          _
        $region24: #{tpu_custom_call.1} parent=11 // pred_fallthru
          _
        // Predicated region
        $region25: #{tpu_custom_call.1} parent=11 // pred_check
          %p426 = pneg %p207
        $region26: #{tpu_custom_call.1} parent=11 // pred_check_branch
          %428 = sbr.rel (%p426) target = $region28
        $region27: #{tpu_custom_call.1} parent=11 // pred_region
          _
        $region28: #{tpu_custom_call.1} parent=11 // pred_fallthru
          _
        // Predicated region
        $region29: #{tpu_custom_call.1} parent=11 // pred_check
          %p429 = pneg %p228
        $region30: #{tpu_custom_call.1} parent=11 // pred_check_branch
          %431 = sbr.rel (%p429) target = $region32
        $region31: #{tpu_custom_call.1} parent=11 // pred_region
          _
        $region32: #{tpu_custom_call.1} parent=11 // pred_fallthru
          _
        // Predicated region
        $region33: #{tpu_custom_call.1} parent=11 // pred_check
          %p432 = pneg %p249
        $region34: #{tpu_custom_call.1} parent=11 // pred_check_branch
          %434 = sbr.rel (%p432) target = $region36
        $region35: #{tpu_custom_call.1} parent=11 // pred_region
          _
        $region36: #{tpu_custom_call.1} parent=11 // pred_fallthru
          _
        // Predicated region
        $region37: #{tpu_custom_call.1} parent=11 // pred_check
          %p435 = pneg %p270
        $region38: #{tpu_custom_call.1} parent=11 // pred_check_branch
          %437 = sbr.rel (%p435) target = $region40
        $region39: #{tpu_custom_call.1} parent=11 // pred_region
          _
        $region40: #{tpu_custom_call.1} parent=11 // pred_fallthru
          _
        // Predicated region
        $region41: #{tpu_custom_call.1} parent=11 // pred_check
          %p438 = pneg %p291
        $region42: #{tpu_custom_call.1} parent=11 // pred_check_branch
          %440 = sbr.rel (%p438) target = $region44
        $region43: #{tpu_custom_call.1} parent=11 // pred_region
          %s442 = ssub.s32 4096, 4096
          %443 = vsyncadd [#allocation12], %s442
          %s444 = sshll.u32 [#allocation11], 4
          %s445 = int_to_ptr.vmem [resolvable:$true] %s444
          %450 = dma.hbm_to_vmem [thread:$0]  %s10, 4096, %s445, [#allocation12], 256, 256, 16
        $region44: #{tpu_custom_call.1} parent=11 // pred_fallthru
          _
        // Predicated region
        $region45: #{tpu_custom_call.1} parent=11 // pred_check
          %p451 = pneg %p312
        $region46: #{tpu_custom_call.1} parent=11 // pred_check_branch
          %453 = sbr.rel (%p451) target = $region48
        $region47: #{tpu_custom_call.1} parent=11 // pred_region
          _
        $region48: #{tpu_custom_call.1} parent=11 // pred_fallthru
          _
        // Predicated region
        $region49: #{tpu_custom_call.1} parent=11 // pred_check
          %p454 = pneg %p333
        $region50: #{tpu_custom_call.1} parent=11 // pred_check_branch
          %456 = sbr.rel (%p454) target = $region52
        $region51: #{tpu_custom_call.1} parent=11 // pred_region
          %s458 = ssub.s32 4096, 4096
          %459 = vsyncadd [#allocation12], %s458
          %s460 = sshll.u32 [#allocation13], 4
          %s461 = int_to_ptr.vmem [resolvable:$true] %s460
          %466 = dma.hbm_to_vmem [thread:$0]  %s12, 4096, %s461, [#allocation12], 64, 64, 4
        $region52: #{tpu_custom_call.1} parent=11 // pred_fallthru
          _
        // Predicated region
        $region53: #{tpu_custom_call.1} parent=11 // pred_check
          %p467 = pneg %p354
        $region54: #{tpu_custom_call.1} parent=11 // pred_check_branch
          %469 = sbr.rel (%p467) target = $region56
        $region55: #{tpu_custom_call.1} parent=11 // pred_region
          _
        $region56: #{tpu_custom_call.1} parent=11 // pred_fallthru
          _
      $region12: #{tpu_custom_call.1} parent=5 // pred_fallthru
        _
      %p470 = scmp.lt.s32.totalorder %s31, 2
      // Predicated region
      $region57: #{tpu_custom_call.1} parent=5 // pred_check
        %p471 = pneg %p470
      $region58: #{tpu_custom_call.1} parent=5 // pred_check_branch
        %473 = sbr.rel (%p471) target = $region60
      $region59: #{tpu_custom_call.1} parent=5 // pred_region
        // Predicated region
        $region61: #{tpu_custom_call.1} parent=59 // pred_check
          %p474 = pneg %p65
        $region62: #{tpu_custom_call.1} parent=59 // pred_check_branch
          %476 = sbr.rel (%p474) target = $region64
        $region63: #{tpu_custom_call.1} parent=59 // pred_region
          %s477 = sand.u32 %s55, 1
          %s478 = scalar_lea.sflag [#allocation3], %s477
          %s479 = sand.u32 %s55, 1
          %s480 = smul.addr %s479, 8
          %s481 = scalar_lea.vmem [#allocation2], %s480
          %s483 = ssub.s32 128, 128
          %484 = vsyncadd %s478, %s483
          %s485 = sadd.s32 %s39, %s38
          %s486 = smul.addr %s485, 128
          %s487 = scalar_lea.hbm %s0, %s486
          %s489 = sshll.u32 %s481, 4
          %s490 = int_to_ptr.vmem [resolvable:$true] %s489
          %492 = dma.hbm_to_vmem [thread:$0]  %s487, 128, %s490, %s478
        $region64: #{tpu_custom_call.1} parent=59 // pred_fallthru
          _
        // Predicated region
        $region65: #{tpu_custom_call.1} parent=59 // pred_check
          %p493 = pneg %p91
        $region66: #{tpu_custom_call.1} parent=59 // pred_check_branch
          %495 = sbr.rel (%p493) target = $region68
        $region67: #{tpu_custom_call.1} parent=59 // pred_region
          %s496 = sand.u32 %s31, 1
          %s497 = scalar_lea.sflag [#allocation6], %s496
          %s498 = sand.u32 %s81, 1
          %s499 = smul.addr %s498, 64
          %s500 = scalar_lea.vmem [#allocation5], %s499
          %s502 = ssub.s32 1024, 1024
          %503 = vsyncadd %s497, %s502
          %s504 = smul.addr %s38, 16
          %s505 = smul.addr %s504, 64
          %s506 = scalar_lea.hbm %s1, %s505
          %s507 = sshll.u32 %s500, 4
          %s508 = int_to_ptr.vmem [resolvable:$true] %s507
          %513 = dma.hbm_to_vmem [thread:$0]  %s506, 1024, %s508, %s497, 64, 64, 4
        $region68: #{tpu_custom_call.1} parent=59 // pred_fallthru
          _
        // Predicated region
        $region69: #{tpu_custom_call.1} parent=59 // pred_check
          %p514 = pneg %p117
        $region70: #{tpu_custom_call.1} parent=59 // pred_check_branch
          %516 = sbr.rel (%p514) target = $region72
        $region71: #{tpu_custom_call.1} parent=59 // pred_region
          %s517 = sand.u32 %s31, 1
          %s518 = scalar_lea.sflag [#allocation6], %s517
          %s519 = sand.u32 %s107, 1
          %s520 = smul.addr %s519, 64
          %s521 = scalar_lea.vmem [#allocation7], %s520
          %s523 = ssub.s32 1024, 1024
          %524 = vsyncadd %s518, %s523
          %s525 = smul.addr %s38, 16
          %s526 = smul.addr %s525, 64
          %s527 = scalar_lea.hbm %s2, %s526
          %s528 = sshll.u32 %s521, 4
          %s529 = int_to_ptr.vmem [resolvable:$true] %s528
          %534 = dma.hbm_to_vmem [thread:$0]  %s527, 1024, %s529, %s518, 64, 64, 4
        $region72: #{tpu_custom_call.1} parent=59 // pred_fallthru
          _
      $region60: #{tpu_custom_call.1} parent=5 // pred_fallthru
        _
      %p535 = scmp.le.s32.totalorder 1, %s31
      %p536 = scmp.lt.s32.totalorder %s31, 3
      %p537 = pnand %p535, %p536
      %p538 = pneg %p537
      // Predicated region
      $region73: #{tpu_custom_call.1} parent=5 // pred_check
        _
      $region74: #{tpu_custom_call.1} parent=5 // pred_check_branch
        %540 = sbr.rel (%p537) target = $region76
      $region75: #{tpu_custom_call.1} parent=5 // pred_region
        %s541 = ssub.s32 %s31, 1
        %s542 = sand.u32 %s58, 1
        %s543 = scalar_lea.sflag [#allocation3], %s542
        %s544 = sand.u32 %s58, 1
        %s545 = smul.addr %s544, 8
        %s546 = scalar_lea.vmem [#allocation2], %s545
        // Predicated region
        $region77: #{tpu_custom_call.1} parent=75 // pred_check
          %p547 = pneg %p71
        $region78: #{tpu_custom_call.1} parent=75 // pred_check_branch
          %549 = sbr.rel (%p547) target = $region80
        $region79: #{tpu_custom_call.1} parent=75 // pred_region
          %550 = dma.done %s543, 128
        $region80: #{tpu_custom_call.1} parent=75 // pred_fallthru
          _
        %s551 = sand.u32 %s36, 1
        %s552 = scalar_lea.sflag [#allocation6], %s551
        %s553 = sand.u32 %s84, 1
        %s554 = smul.addr %s553, 64
        %s555 = scalar_lea.vmem [#allocation5], %s554
        // Predicated region
        $region81: #{tpu_custom_call.1} parent=75 // pred_check
          %p556 = pneg %p97
        $region82: #{tpu_custom_call.1} parent=75 // pred_check_branch
          %558 = sbr.rel (%p556) target = $region84
        $region83: #{tpu_custom_call.1} parent=75 // pred_region
          %559 = dma.done %s552, 1024
        $region84: #{tpu_custom_call.1} parent=75 // pred_fallthru
          _
        %s560 = sand.u32 %s36, 1
        %s561 = scalar_lea.sflag [#allocation6], %s560
        %s562 = sand.u32 %s110, 1
        %s563 = smul.addr %s562, 64
        %s564 = scalar_lea.vmem [#allocation7], %s563
        // Predicated region
        $region85: #{tpu_custom_call.1} parent=75 // pred_check
          %p565 = pneg %p123
        $region86: #{tpu_custom_call.1} parent=75 // pred_check_branch
          %567 = sbr.rel (%p565) target = $region88
        $region87: #{tpu_custom_call.1} parent=75 // pred_region
          %568 = dma.done %s561, 1024
        $region88: #{tpu_custom_call.1} parent=75 // pred_fallthru
          _
        // Predicated region
        $region89: #{tpu_custom_call.1} parent=75 // pred_check
          %p569 = pneg %p144
        $region90: #{tpu_custom_call.1} parent=75 // pred_check_branch
          %571 = sbr.rel (%p569) target = $region92
        $region91: #{tpu_custom_call.1} parent=75 // pred_region
          %572 = dma.done [#allocation9], 1024
        $region92: #{tpu_custom_call.1} parent=75 // pred_fallthru
          _
        // Predicated region
        $region93: #{tpu_custom_call.1} parent=75 // pred_check
          %p573 = pneg %p165
        $region94: #{tpu_custom_call.1} parent=75 // pred_check_branch
          %575 = sbr.rel (%p573) target = $region96
        $region95: #{tpu_custom_call.1} parent=75 // pred_region
          %576 = dma.done [#allocation9], 1024
        $region96: #{tpu_custom_call.1} parent=75 // pred_fallthru
          _
        // Predicated region
        $region97: #{tpu_custom_call.1} parent=75 // pred_check
          %p577 = pneg %p291
        $region98: #{tpu_custom_call.1} parent=75 // pred_check_branch
          %579 = sbr.rel (%p577) target = $region100
        $region99: #{tpu_custom_call.1} parent=75 // pred_region
          %580 = dma.done [#allocation12], 4096
        $region100: #{tpu_custom_call.1} parent=75 // pred_fallthru
          _
        // Predicated region
        $region101: #{tpu_custom_call.1} parent=75 // pred_check
          %p581 = pneg %p333
        $region102: #{tpu_custom_call.1} parent=75 // pred_check_branch
          %583 = sbr.rel (%p581) target = $region104
        $region103: #{tpu_custom_call.1} parent=75 // pred_region
          %584 = dma.done [#allocation12], 4096
        $region104: #{tpu_custom_call.1} parent=75 // pred_fallthru
          _
        %s585 = sand.u32 %s58, 1
        %s586 = scalar_lea.sflag [#allocation3], %s585
        %s587 = sand.u32 %s58, 1
        %s588 = smul.addr %s587, 8
        %s589 = scalar_lea.vmem [#allocation2], %s588
        %p590 = pneg %p71
        %p591 = pneg %p68
        %s592 = sand.u32 %s36, 1
        %s593 = scalar_lea.sflag [#allocation6], %s592
        %s594 = sand.u32 %s84, 1
        %s595 = smul.addr %s594, 64
        %s596 = scalar_lea.vmem [#allocation5], %s595
        %p597 = pneg %p97
        %p598 = pneg %p94
        %s599 = sand.u32 %s36, 1
        %s600 = scalar_lea.sflag [#allocation6], %s599
        %s601 = sand.u32 %s110, 1
        %s602 = smul.addr %s601, 64
        %s603 = scalar_lea.vmem [#allocation7], %s602
        %p604 = pneg %p123
        %p605 = pneg %p120
        %p606 = pneg %p144
        %p607 = pneg %p141
        %p608 = pneg %p165
        %p609 = pneg %p162
        %p610 = pneg %p186
        %p611 = pneg %p183
        %p612 = pneg %p207
        %p613 = pneg %p204
        %p614 = pneg %p228
        %p615 = pneg %p225
        %p616 = pneg %p249
        %p617 = pneg %p246
        %p618 = pneg %p270
        %p619 = pneg %p267
        %p620 = pneg %p291
        %p621 = pneg %p288
        %p622 = pneg %p312
        %p623 = pneg %p309
        %p624 = pneg %p333
        %p625 = pneg %p330
        %p626 = pneg %p354
        %p627 = pneg %p351
        %p628 = pneg %p382
        %p629 = pneg %p379
        %s630 = sand.u32 %s369, 1
        %s631 = scalar_lea.sflag [#allocation4], %s630
        %s632 = sand.u32 %s369, 1
        %s633 = smul.addr %s632, 8
        %s634 = scalar_lea.vmem [#allocation14], %s633
        %v636 = vld [vmem:[%s546] sm:$0xff]
        %v637 = vld [vmem:[%s6] sm:$0x1]
        %v638 = vld [vmem:[%s7] sm:$0x1]
        %639 = vadd.xlane.f32.xlu0 %v636
        %v640 = vpop.xlane.xlu0 %639
        %v641 = vrcp.pop 128.0
        %v642 = vmul.f32 %v640, %v641
        %v643 = vsub.f32 %v636, %v642
        %v644 = vmul.f32 %v643, %v643
        %645 = vadd.xlane.f32.xlu0 %v644
        %v646 = vpop.xlane.xlu0 %645
        %v647 = vmul.f32 %v646, %v641
        %v648 = vadd.f32 %v647, 1e-05
        %v649 = vrsqrt.pop %v648
        %v650 = vmul.f32 %v643, %v649
        %v652 = vlaneseq
        %v653 = vshrl.u32 %v652, 7
        %v654 = vsub.s32 0, %v653
        %v655 = vrot.slane %v637, %v654
        %v657 = vmul.f32 %v650, %v655
        %v659 = vlaneseq
        %v660 = vshrl.u32 %v659, 7
        %v661 = vsub.s32 0, %v660
        %v662 = vrot.slane %v638, %v661
        %v664 = vadd.f32 %v657, %v662
        %v665 = vpack.c.bf16 %v664, %v664
        %v666 = vld [vmem:[#allocation8] sm:$0xf]
        %v667 = vld [vmem:[#allocation8 + $0x4] sm:$0xf]
        %v668 = vld [vmem:[#allocation8 + $0x8] sm:$0xf]
        %v669 = vld [vmem:[#allocation8 + $0xc] sm:$0xf]
        %v670 = vld [vmem:[#allocation8 + $0x10] sm:$0xf]
        %v671 = vld [vmem:[#allocation8 + $0x14] sm:$0xf]
        %v672 = vld [vmem:[#allocation8 + $0x18] sm:$0xf]
        %v673 = vld [vmem:[#allocation8 + $0x1c] sm:$0xf]
        %v674 = vld [vmem:[#allocation8 + $0x20] sm:$0xf]
        %v675 = vld [vmem:[#allocation8 + $0x24] sm:$0xf]
        %v676 = vld [vmem:[#allocation8 + $0x28] sm:$0xf]
        %v677 = vld [vmem:[#allocation8 + $0x2c] sm:$0xf]
        %v678 = vld [vmem:[#allocation8 + $0x30] sm:$0xf]
        %v679 = vld [vmem:[#allocation8 + $0x34] sm:$0xf]
        %v680 = vld [vmem:[#allocation8 + $0x38] sm:$0xf]
        %v681 = vld [vmem:[#allocation8 + $0x3c] sm:$0xf]
        %v698 = vunpack.c.l.b16 %v666
        %v699 = vunpack.c.l.b16 %v667
        %v700 = vunpack.c.l.b16 %v668
        %v701 = vunpack.c.l.b16 %v669
        %v702 = vunpack.c.l.b16 %v670
        %v703 = vunpack.c.l.b16 %v671
        %v704 = vunpack.c.l.b16 %v672
        %v705 = vunpack.c.l.b16 %v673
        %v706 = vunpack.c.l.b16 %v674
        %v707 = vunpack.c.l.b16 %v675
        %v708 = vunpack.c.l.b16 %v676
        %v709 = vunpack.c.l.b16 %v677
        %v710 = vunpack.c.l.b16 %v678
        %v711 = vunpack.c.l.b16 %v679
        %v712 = vunpack.c.l.b16 %v680
        %v713 = vunpack.c.l.b16 %v681
        %v714 = vpack.c.b16 %v699, %v698
        %v715 = vpack.c.b16 %v701, %v700
        %v716 = vpack.c.b16 %v703, %v702
        %v717 = vpack.c.b16 %v705, %v704
        %v718 = vpack.c.b16 %v707, %v706
        %v719 = vpack.c.b16 %v709, %v708
        %v720 = vpack.c.b16 %v711, %v710
        %v721 = vpack.c.b16 %v713, %v712
        %730 = vmatprep.subr.bf16.mxu0 0
        %731 = vmatpush1.bf16.msra.mxu0 %v721
        %732 = vmatprep.subr.bf16.mxu0 0
        %733 = vmatpush1.bf16.msra.mxu0 %v720
        %734 = vmatprep.subr.bf16.mxu0 0
        %735 = vmatpush1.bf16.msra.mxu0 %v719
        %736 = vmatprep.subr.bf16.mxu0 0
        %737 = vmatpush1.bf16.msra.mxu0 %v718
        %738 = vmatprep.subr.bf16.mxu0 0
        %739 = vmatpush1.bf16.msra.mxu0 %v717
        %740 = vmatprep.subr.bf16.mxu0 0
        %741 = vmatpush1.bf16.msra.mxu0 %v716
        %742 = vmatprep.subr.bf16.mxu0 0
        %743 = vmatpush1.bf16.msra.mxu0 %v715
        %744 = vmatprep.subr.bf16.mxu0 0
        %745 = vmatpush1.bf16.msra.mxu0 %v714
        %746 = vmatprep.subr.bf16.mxu0 0
        %747 = vmatpush2.bf16.msra.mxu0 0
        %748 = vmatprep.subr.bf16.mxu0 0
        %749 = vmatpush2.bf16.msra.mxu0 0
        %750 = vmatprep.subr.bf16.mxu0 0
        %751 = vmatpush2.bf16.msra.mxu0 0
        %752 = vmatprep.subr.bf16.mxu0 0
        %753 = vmatpush2.bf16.msra.mxu0 0
        %754 = vmatprep.subr.bf16.mxu0 0
        %755 = vmatpush2.bf16.msra.mxu0 0
        %756 = vmatprep.subr.bf16.mxu0 0
        %757 = vmatpush2.bf16.msra.mxu0 0
        %758 = vmatprep.subr.bf16.mxu0 0
        %759 = vmatpush2.bf16.msra.mxu0 0
        %760 = vmatprep.subr.bf16.mxu0 0
        %761 = vmatpush2.bf16.msra.mxu0 0
        %762 = vmatprep.mubr.bf16.mxu0 0
        %763 = vmatmul.mubr.bf16.gmra.mxu0 %v665
        %v764 = vpop.f32.mrf.mxu0
        %v765 = vadd.f32 0.0, %v764
        %v766 = vpop.f32.mrf.mxu0
        %v767 = vpop.f32.mrf.mxu0
        %v768 = vpop.f32.mrf.mxu0
        %769 = vdwg.mxu0
        %771 = vrot.lane.b32.xlu0 %v765, 112
        %v772 = vpop.permute.xlu0 %771
        %774 = vrot.lane.b32.xlu0 %v765, 96
        %v775 = vpop.permute.xlu0 %774
        %777 = vrot.lane.b32.xlu0 %v765, 80
        %v778 = vpop.permute.xlu0 %777
        %780 = vrot.lane.b32.xlu0 %v765, 64
        %v781 = vpop.permute.xlu0 %780
        %783 = vrot.lane.b32.xlu0 %v765, 48
        %v784 = vpop.permute.xlu0 %783
        %786 = vrot.lane.b32.xlu0 %v765, 32
        %v787 = vpop.permute.xlu0 %786
        %789 = vrot.lane.b32.xlu0 %v765, 16
        %v790 = vpop.permute.xlu0 %789
        %v792 = vcombine.low %v765, %v775
        %v793 = vcombine.high %v765, %v775
        %v795 = vunpack.c.l.s4 1983009808
        %v796 = vunpack.c.0.s8 %v795
        %v797 = vlaneseq
        %v798 = vshrl.u32 %v797, 7
        %v799 = vsub.s32 %v796, %v798
        %v800 = vrot.slane %v792, %v799
        %v802 = vunpack.c.l.s4 1983009808
        %v803 = vunpack.c.0.s8 %v802
        %v804 = vlaneseq
        %v805 = vshrl.u32 %v804, 7
        %v806 = vsub.s32 %v803, %v805
        %v807 = vrot.slane %v793, %v806
        %v808 = vcombine.low %v772, %v778
        %v809 = vcombine.high %v772, %v778
        %v811 = vunpack.c.l.s4 1983009808
        %v812 = vunpack.c.0.s8 %v811
        %v813 = vlaneseq
        %v814 = vshrl.u32 %v813, 7
        %v815 = vsub.s32 %v812, %v814
        %v816 = vrot.slane %v808, %v815
        %v818 = vunpack.c.l.s4 1983009808
        %v819 = vunpack.c.0.s8 %v818
        %v820 = vlaneseq
        %v821 = vshrl.u32 %v820, 7
        %v822 = vsub.s32 %v819, %v821
        %v823 = vrot.slane %v809, %v822
        %v824 = vcombine.low %v781, %v787
        %v825 = vcombine.high %v781, %v787
        %v827 = vunpack.c.l.s4 1983009808
        %v828 = vunpack.c.0.s8 %v827
        %v829 = vlaneseq
        %v830 = vshrl.u32 %v829, 7
        %v831 = vsub.s32 %v828, %v830
        %v832 = vrot.slane %v824, %v831
        %v834 = vunpack.c.l.s4 1983009808
        %v835 = vunpack.c.0.s8 %v834
        %v836 = vlaneseq
        %v837 = vshrl.u32 %v836, 7
        %v838 = vsub.s32 %v835, %v837
        %v839 = vrot.slane %v825, %v838
        %v840 = vcombine.low %v784, %v790
        %v841 = vcombine.high %v784, %v790
        %v843 = vunpack.c.l.s4 1983009808
        %v844 = vunpack.c.0.s8 %v843
        %v845 = vlaneseq
        %v846 = vshrl.u32 %v845, 7
        %v847 = vsub.s32 %v844, %v846
        %v848 = vrot.slane %v840, %v847
        %v850 = vunpack.c.l.s4 1983009808
        %v851 = vunpack.c.0.s8 %v850
        %v852 = vlaneseq
        %v853 = vshrl.u32 %v852, 7
        %v854 = vsub.s32 %v851, %v853
        %v855 = vrot.slane %v841, %v854
        %v856 = vcombine.low %v800, %v816
        %v857 = vcombine.high %v800, %v816
        %v859 = vunpack.c.l.s4 1934713408
        %v860 = vunpack.c.0.s8 %v859
        %v861 = vlaneseq
        %v862 = vshrl.u32 %v861, 7
        %v863 = vsub.s32 %v860, %v862
        %v864 = vrot.slane %v856, %v863
        %v866 = vunpack.c.l.s4 1934713408
        %v867 = vunpack.c.0.s8 %v866
        %v868 = vlaneseq
        %v869 = vshrl.u32 %v868, 7
        %v870 = vsub.s32 %v867, %v869
        %v871 = vrot.slane %v857, %v870
        %v872 = vcombine.low %v807, %v823
        %v873 = vcombine.high %v807, %v823
        %v875 = vunpack.c.l.s4 1934713408
        %v876 = vunpack.c.0.s8 %v875
        %v877 = vlaneseq
        %v878 = vshrl.u32 %v877, 7
        %v879 = vsub.s32 %v876, %v878
        %v880 = vrot.slane %v872, %v879
        %v882 = vunpack.c.l.s4 1934713408
        %v883 = vunpack.c.0.s8 %v882
        %v884 = vlaneseq
        %v885 = vshrl.u32 %v884, 7
        %v886 = vsub.s32 %v883, %v885
        %v887 = vrot.slane %v873, %v886
        %v888 = vcombine.low %v832, %v848
        %v889 = vcombine.high %v832, %v848
        %v891 = vunpack.c.l.s4 1934713408
        %v892 = vunpack.c.0.s8 %v891
        %v893 = vlaneseq
        %v894 = vshrl.u32 %v893, 7
        %v895 = vsub.s32 %v892, %v894
        %v896 = vrot.slane %v888, %v895
        %v898 = vunpack.c.l.s4 1934713408
        %v899 = vunpack.c.0.s8 %v898
        %v900 = vlaneseq
        %v901 = vshrl.u32 %v900, 7
        %v902 = vsub.s32 %v899, %v901
        %v903 = vrot.slane %v889, %v902
        %v904 = vcombine.low %v839, %v855
        %v905 = vcombine.high %v839, %v855
        %v907 = vunpack.c.l.s4 1934713408
        %v908 = vunpack.c.0.s8 %v907
        %v909 = vlaneseq
        %v910 = vshrl.u32 %v909, 7
        %v911 = vsub.s32 %v908, %v910
        %v912 = vrot.slane %v904, %v911
        %v914 = vunpack.c.l.s4 1934713408
        %v915 = vunpack.c.0.s8 %v914
        %v916 = vlaneseq
        %v917 = vshrl.u32 %v916, 7
        %v918 = vsub.s32 %v915, %v917
        %v919 = vrot.slane %v905, %v918
        %v920 = vcombine.low %v864, %v896
        %v921 = vcombine.high %v864, %v896
        %v922 = vcombine.low %v871, %v903
        %v923 = vcombine.high %v871, %v903
        %v924 = vcombine.low %v880, %v912
        %v925 = vcombine.high %v880, %v912
        %v926 = vcombine.low %v887, %v919
        %v927 = vcombine.high %v887, %v919
        %v928 = vcombine.low %v920, %v922
        %v929 = vcombine.high %v920, %v922
        %v931 = vunpack.c.l.s4 1983009808
        %v932 = vunpack.c.0.s8 %v931
        %v933 = vlaneseq
        %v934 = vshrl.u32 %v933, 7
        %v935 = vsub.s32 %v932, %v934
        %v936 = vrot.slane %v928, %v935
        %v938 = vunpack.c.l.s4 1983009808
        %v939 = vunpack.c.0.s8 %v938
        %v940 = vlaneseq
        %v941 = vshrl.u32 %v940, 7
        %v942 = vsub.s32 %v939, %v941
        %v943 = vrot.slane %v929, %v942
        %v944 = vcombine.low %v921, %v923
        %v945 = vcombine.high %v921, %v923
        %v947 = vunpack.c.l.s4 1983009808
        %v948 = vunpack.c.0.s8 %v947
        %v949 = vlaneseq
        %v950 = vshrl.u32 %v949, 7
        %v951 = vsub.s32 %v948, %v950
        %v952 = vrot.slane %v944, %v951
        %v954 = vunpack.c.l.s4 1983009808
        %v955 = vunpack.c.0.s8 %v954
        %v956 = vlaneseq
        %v957 = vshrl.u32 %v956, 7
        %v958 = vsub.s32 %v955, %v957
        %v959 = vrot.slane %v945, %v958
        %v960 = vcombine.low %v924, %v926
        %v961 = vcombine.high %v924, %v926
        %v963 = vunpack.c.l.s4 1983009808
        %v964 = vunpack.c.0.s8 %v963
        %v965 = vlaneseq
        %v966 = vshrl.u32 %v965, 7
        %v967 = vsub.s32 %v964, %v966
        %v968 = vrot.slane %v960, %v967
        %v970 = vunpack.c.l.s4 1983009808
        %v971 = vunpack.c.0.s8 %v970
        %v972 = vlaneseq
        %v973 = vshrl.u32 %v972, 7
        %v974 = vsub.s32 %v971, %v973
        %v975 = vrot.slane %v961, %v974
        %v976 = vcombine.low %v925, %v927
        %v977 = vcombine.high %v925, %v927
        %v979 = vunpack.c.l.s4 1983009808
        %v980 = vunpack.c.0.s8 %v979
        %v981 = vlaneseq
        %v982 = vshrl.u32 %v981, 7
        %v983 = vsub.s32 %v980, %v982
        %v984 = vrot.slane %v976, %v983
        %v986 = vunpack.c.l.s4 1983009808
        %v987 = vunpack.c.0.s8 %v986
        %v988 = vlaneseq
        %v989 = vshrl.u32 %v988, 7
        %v990 = vsub.s32 %v987, %v989
        %v991 = vrot.slane %v977, %v990
        %v992 = vcombine.low %v936, %v952
        %v993 = vcombine.high %v936, %v952
        %v995 = vunpack.c.l.s4 1934713408
        %v996 = vunpack.c.0.s8 %v995
        %v997 = vlaneseq
        %v998 = vshrl.u32 %v997, 7
        %v999 = vsub.s32 %v996, %v998
        %v1000 = vrot.slane %v992, %v999
        %v1002 = vunpack.c.l.s4 1934713408
        %v1003 = vunpack.c.0.s8 %v1002
        %v1004 = vlaneseq
        %v1005 = vshrl.u32 %v1004, 7
        %v1006 = vsub.s32 %v1003, %v1005
        %v1007 = vrot.slane %v993, %v1006
        %v1008 = vcombine.low %v943, %v959
        %v1009 = vcombine.high %v943, %v959
        %v1011 = vunpack.c.l.s4 1934713408
        %v1012 = vunpack.c.0.s8 %v1011
        %v1013 = vlaneseq
        %v1014 = vshrl.u32 %v1013, 7
        %v1015 = vsub.s32 %v1012, %v1014
        %v1016 = vrot.slane %v1008, %v1015
        %v1018 = vunpack.c.l.s4 1934713408
        %v1019 = vunpack.c.0.s8 %v1018
        %v1020 = vlaneseq
        %v1021 = vshrl.u32 %v1020, 7
        %v1022 = vsub.s32 %v1019, %v1021
        %v1023 = vrot.slane %v1009, %v1022
        %v1024 = vcombine.low %v968, %v984
        %v1025 = vcombine.high %v968, %v984
        %v1027 = vunpack.c.l.s4 1934713408
        %v1028 = vunpack.c.0.s8 %v1027
        %v1029 = vlaneseq
        %v1030 = vshrl.u32 %v1029, 7
        %v1031 = vsub.s32 %v1028, %v1030
        %v1032 = vrot.slane %v1024, %v1031
        %v1034 = vunpack.c.l.s4 1934713408
        %v1035 = vunpack.c.0.s8 %v1034
        %v1036 = vlaneseq
        %v1037 = vshrl.u32 %v1036, 7
        %v1038 = vsub.s32 %v1035, %v1037
        %v1039 = vrot.slane %v1025, %v1038
        %v1040 = vcombine.low %v975, %v991
        %v1041 = vcombine.high %v975, %v991
        %v1043 = vunpack.c.l.s4 1934713408
        %v1044 = vunpack.c.0.s8 %v1043
        %v1045 = vlaneseq
        %v1046 = vshrl.u32 %v1045, 7
        %v1047 = vsub.s32 %v1044, %v1046
        %v1048 = vrot.slane %v1040, %v1047
        %v1050 = vunpack.c.l.s4 1934713408
        %v1051 = vunpack.c.0.s8 %v1050
        %v1052 = vlaneseq
        %v1053 = vshrl.u32 %v1052, 7
        %v1054 = vsub.s32 %v1051, %v1053
        %v1055 = vrot.slane %v1041, %v1054
        %v1056 = vcombine.low %v1000, %v1032
        %v1057 = vcombine.high %v1000, %v1032
        %v1058 = vcombine.low %v1007, %v1039
        %v1059 = vcombine.high %v1007, %v1039
        %v1060 = vcombine.low %v1016, %v1048
        %v1061 = vcombine.high %v1016, %v1048
        %v1062 = vcombine.low %v1023, %v1055
        %v1063 = vcombine.high %v1023, %v1055
        %v1064 = vpack.c.bf16 %v1056, %v1056
        %v1065 = vpack.c.bf16 %v1057, %v1057
        %v1066 = vpack.c.bf16 %v1058, %v1058
        %v1067 = vpack.c.bf16 %v1059, %v1059
        %v1068 = vpack.c.bf16 %v1060, %v1060
        %v1069 = vpack.c.bf16 %v1061, %v1061
        %v1070 = vpack.c.bf16 %v1062, %v1062
        %v1071 = vpack.c.bf16 %v1063, %v1063
        %v1072 = vld [vmem:[%s555] sm:$0xf]
        %v1073 = vld [vmem:[%s555 + $0x4] sm:$0xf]
        %v1074 = vld [vmem:[%s555 + $0x8] sm:$0xf]
        %v1075 = vld [vmem:[%s555 + $0xc] sm:$0xf]
        %v1076 = vld [vmem:[%s555 + $0x10] sm:$0xf]
        %v1077 = vld [vmem:[%s555 + $0x14] sm:$0xf]
        %v1078 = vld [vmem:[%s555 + $0x18] sm:$0xf]
        %v1079 = vld [vmem:[%s555 + $0x1c] sm:$0xf]
        %v1080 = vld [vmem:[%s555 + $0x20] sm:$0xf]
        %v1081 = vld [vmem:[%s555 + $0x24] sm:$0xf]
        %v1082 = vld [vmem:[%s555 + $0x28] sm:$0xf]
        %v1083 = vld [vmem:[%s555 + $0x2c] sm:$0xf]
        %v1084 = vld [vmem:[%s555 + $0x30] sm:$0xf]
        %v1085 = vld [vmem:[%s555 + $0x34] sm:$0xf]
        %v1086 = vld [vmem:[%s555 + $0x38] sm:$0xf]
        %v1087 = vld [vmem:[%s555 + $0x3c] sm:$0xf]
        %v1088 = vld [vmem:[%s564] sm:$0xf]
        %v1089 = vld [vmem:[%s564 + $0x4] sm:$0xf]
        %v1090 = vld [vmem:[%s564 + $0x8] sm:$0xf]
        %v1091 = vld [vmem:[%s564 + $0xc] sm:$0xf]
        %v1092 = vld [vmem:[%s564 + $0x10] sm:$0xf]
        %v1093 = vld [vmem:[%s564 + $0x14] sm:$0xf]
        %v1094 = vld [vmem:[%s564 + $0x18] sm:$0xf]
        %v1095 = vld [vmem:[%s564 + $0x1c] sm:$0xf]
        %v1096 = vld [vmem:[%s564 + $0x20] sm:$0xf]
        %v1097 = vld [vmem:[%s564 + $0x24] sm:$0xf]
        %v1098 = vld [vmem:[%s564 + $0x28] sm:$0xf]
        %v1099 = vld [vmem:[%s564 + $0x2c] sm:$0xf]
        %v1100 = vld [vmem:[%s564 + $0x30] sm:$0xf]
        %v1101 = vld [vmem:[%s564 + $0x34] sm:$0xf]
        %v1102 = vld [vmem:[%s564 + $0x38] sm:$0xf]
        %v1103 = vld [vmem:[%s564 + $0x3c] sm:$0xf]
        %v1106 = vunpack.c.l.b16 %v1072
        %v1107 = vunpack.c.l.b16 %v1073
        %v1108 = vpack.c.b16 %v1107, %v1106
        %vm1109 = vcmask 130048
        %v1111 = vsel %vm1109, %v1064, 0
        %v1114 = vsel %vm1109, %v1108, 0
        %1116 = vmatprep.subr.bf16.mxu0 0
        %1117 = vmatpush1.bf16.xpose.msra.mxu0 0
        %1118 = vmatprep.subr.bf16.mxu0 0
        %1119 = vmatpush1.bf16.xpose.msra.mxu0 0
        %1120 = vmatprep.subr.bf16.mxu0 0
        %1121 = vmatpush1.bf16.xpose.msra.mxu0 0
        %1122 = vmatprep.subr.bf16.mxu0 0
        %1123 = vmatpush1.bf16.xpose.msra.mxu0 0
        %1124 = vmatprep.subr.bf16.mxu0 0
        %1125 = vmatpush1.bf16.xpose.msra.mxu0 0
        %1126 = vmatprep.subr.bf16.mxu0 0
        %1127 = vmatpush1.bf16.xpose.msra.mxu0 0
        %1128 = vmatprep.subr.bf16.mxu0 0
        %1129 = vmatpush1.bf16.xpose.msra.mxu0 0
        %1130 = vmatprep.subr.bf16.mxu0 0
        %1131 = vmatpush1.bf16.xpose.msra.mxu0 %v1114
        %1132 = vmatprep.subr.bf16.mxu0 0
        %1133 = vmatpush2.bf16.xpose.msra.mxu0 0
        %1134 = vmatprep.subr.bf16.mxu0 0
        %1135 = vmatpush2.bf16.xpose.msra.mxu0 0
        %1136 = vmatprep.subr.bf16.mxu0 0
        %1137 = vmatpush2.bf16.xpose.msra.mxu0 0
        %1138 = vmatprep.subr.bf16.mxu0 0
        %1139 = vmatpush2.bf16.xpose.msra.mxu0 0
        %1140 = vmatprep.subr.bf16.mxu0 0
        %1141 = vmatpush2.bf16.xpose.msra.mxu0 0
        %1142 = vmatprep.subr.bf16.mxu0 0
        %1143 = vmatpush2.bf16.xpose.msra.mxu0 0
        %1144 = vmatprep.subr.bf16.mxu0 0
        %1145 = vmatpush2.bf16.xpose.msra.mxu0 0
        %1146 = vmatprep.subr.bf16.mxu0 0
        %1147 = vmatpush2.bf16.xpose.msra.mxu0 0
        %1148 = vmatprep.mubr.bf16.mxu0 0
        %1149 = vmatmul.mubr.bf16.gmra.mxu0 %v1111
        %v1150 = vpop.f32.mrf.mxu0
        %v1151 = vadd.f32 0.0, %v1150
        %v1152 = vpop.f32.mrf.mxu0
        %v1153 = vpop.f32.mrf.mxu0
        %v1154 = vpop.f32.mrf.mxu0
        %1155 = vdwg.mxu0
        %v1158 = vunpack.c.l.b16 %v1074
        %v1159 = vunpack.c.l.b16 %v1075
        %v1160 = vpack.c.b16 %v1159, %v1158
        %v1162 = vsel %vm1109, %v1065, 0
        %v1165 = vsel %vm1109, %v1160, 0
        %1167 = vmatprep.subr.bf16.mxu0 0
        %1168 = vmatpush1.bf16.xpose.msra.mxu0 0
        %1169 = vmatprep.subr.bf16.mxu0 0
        %1170 = vmatpush1.bf16.xpose.msra.mxu0 0
        %1171 = vmatprep.subr.bf16.mxu0 0
        %1172 = vmatpush1.bf16.xpose.msra.mxu0 0
        %1173 = vmatprep.subr.bf16.mxu0 0
        %1174 = vmatpush1.bf16.xpose.msra.mxu0 0
        %1175 = vmatprep.subr.bf16.mxu0 0
        %1176 = vmatpush1.bf16.xpose.msra.mxu0 0
        %1177 = vmatprep.subr.bf16.mxu0 0
        %1178 = vmatpush1.bf16.xpose.msra.mxu0 0
        %1179 = vmatprep.subr.bf16.mxu0 0
        %1180 = vmatpush1.bf16.xpose.msra.mxu0 0
        %1181 = vmatprep.subr.bf16.mxu0 0
        %1182 = vmatpush1.bf16.xpose.msra.mxu0 %v1165
        %1183 = vmatprep.subr.bf16.mxu0 0
        %1184 = vmatpush2.bf16.xpose.msra.mxu0 0
        %1185 = vmatprep.subr.bf16.mxu0 0
        %1186 = vmatpush2.bf16.xpose.msra.mxu0 0
        %1187 = vmatprep.subr.bf16.mxu0 0
        %1188 = vmatpush2.bf16.xpose.msra.mxu0 0
        %1189 = vmatprep.subr.bf16.mxu0 0
        %1190 = vmatpush2.bf16.xpose.msra.mxu0 0
        %1191 = vmatprep.subr.bf16.mxu0 0
        %1192 = vmatpush2.bf16.xpose.msra.mxu0 0
        %1193 = vmatprep.subr.bf16.mxu0 0
        %1194 = vmatpush2.bf16.xpose.msra.mxu0 0
        %1195 = vmatprep.subr.bf16.mxu0 0
        %1196 = vmatpush2.bf16.xpose.msra.mxu0 0
        %1197 = vmatprep.subr.bf16.mxu0 0
        %1198 = vmatpush2.bf16.xpose.msra.mxu0 0
        %1199 = vmatprep.mubr.bf16.mxu0 0
        %1200 = vmatmul.mubr.bf16.gmra.mxu0 %v1162
        %v1201 = vpop.f32.mrf.mxu0
        %v1202 = vadd.f32 0.0, %v1201
        %v1203 = vpop.f32.mrf.mxu0
        %v1204 = vpop.f32.mrf.mxu0
        %v1205 = vpop.f32.mrf.mxu0
        %1206 = vdwg.mxu0
        %v1209 = vunpack.c.l.b16 %v1076
        %v1210 = vunpack.c.l.b16 %v1077
        %v1211 = vpack.c.b16 %v1210, %v1209
        %v1213 = vsel %vm1109, %v1066, 0
        %v1216 = vsel %vm1109, %v1211, 0
        %1218 = vmatprep.subr.bf16.mxu0 0
        %1219 = vmatpush1.bf16.xpose.msra.mxu0 0
        %1220 = vmatprep.subr.bf16.mxu0 0
        %1221 = vmatpush1.bf16.xpose.msra.mxu0 0
        %1222 = vmatprep.subr.bf16.mxu0 0
        %1223 = vmatpush1.bf16.xpose.msra.mxu0 0
        %1224 = vmatprep.subr.bf16.mxu0 0
        %1225 = vmatpush1.bf16.xpose.msra.mxu0 0
        %1226 = vmatprep.subr.bf16.mxu0 0
        %1227 = vmatpush1.bf16.xpose.msra.mxu0 0
        %1228 = vmatprep.subr.bf16.mxu0 0
        %1229 = vmatpush1.bf16.xpose.msra.mxu0 0
        %1230 = vmatprep.subr.bf16.mxu0 0
        %1231 = vmatpush1.bf16.xpose.msra.mxu0 0
        %1232 = vmatprep.subr.bf16.mxu0 0
        %1233 = vmatpush1.bf16.xpose.msra.mxu0 %v1216
        %1234 = vmatprep.subr.bf16.mxu0 0
        %1235 = vmatpush2.bf16.xpose.msra.mxu0 0
        %1236 = vmatprep.subr.bf16.mxu0 0
        %1237 = vmatpush2.bf16.xpose.msra.mxu0 0
        %1238 = vmatprep.subr.bf16.mxu0 0
        %1239 = vmatpush2.bf16.xpose.msra.mxu0 0
        %1240 = vmatprep.subr.bf16.mxu0 0
        %1241 = vmatpush2.bf16.xpose.msra.mxu0 0
        %1242 = vmatprep.subr.bf16.mxu0 0
        %1243 = vmatpush2.bf16.xpose.msra.mxu0 0
        %1244 = vmatprep.subr.bf16.mxu0 0
        %1245 = vmatpush2.bf16.xpose.msra.mxu0 0
        %1246 = vmatprep.subr.bf16.mxu0 0
        %1247 = vmatpush2.bf16.xpose.msra.mxu0 0
        %1248 = vmatprep.subr.bf16.mxu0 0
        %1249 = vmatpush2.bf16.xpose.msra.mxu0 0
        %1250 = vmatprep.mubr.bf16.mxu0 0
        %1251 = vmatmul.mubr.bf16.gmra.mxu0 %v1213
        %v1252 = vpop.f32.mrf.mxu0
        %v1253 = vadd.f32 0.0, %v1252
        %v1254 = vpop.f32.mrf.mxu0
        %v1255 = vpop.f32.mrf.mxu0
        %v1256 = vpop.f32.mrf.mxu0
        %1257 = vdwg.mxu0
        %v1260 = vunpack.c.l.b16 %v1078
        %v1261 = vunpack.c.l.b16 %v1079
        %v1262 = vpack.c.b16 %v1261, %v1260
        %v1264 = vsel %vm1109, %v1067, 0
        %v1267 = vsel %vm1109, %v1262, 0
        %1269 = vmatprep.subr.bf16.mxu0 0
        %1270 = vmatpush1.bf16.xpose.msra.mxu0 0
        %1271 = vmatprep.subr.bf16.mxu0 0
        %1272 = vmatpush1.bf16.xpose.msra.mxu0 0
        %1273 = vmatprep.subr.bf16.mxu0 0
        %1274 = vmatpush1.bf16.xpose.msra.mxu0 0
        %1275 = vmatprep.subr.bf16.mxu0 0
        %1276 = vmatpush1.bf16.xpose.msra.mxu0 0
        %1277 = vmatprep.subr.bf16.mxu0 0
        %1278 = vmatpush1.bf16.xpose.msra.mxu0 0
        %1279 = vmatprep.subr.bf16.mxu0 0
        %1280 = vmatpush1.bf16.xpose.msra.mxu0 0
        %1281 = vmatprep.subr.bf16.mxu0 0
        %1282 = vmatpush1.bf16.xpose.msra.mxu0 0
        %1283 = vmatprep.subr.bf16.mxu0 0
        %1284 = vmatpush1.bf16.xpose.msra.mxu0 %v1267
        %1285 = vmatprep.subr.bf16.mxu0 0
        %1286 = vmatpush2.bf16.xpose.msra.mxu0 0
        %1287 = vmatprep.subr.bf16.mxu0 0
        %1288 = vmatpush2.bf16.xpose.msra.mxu0 0
        %1289 = vmatprep.subr.bf16.mxu0 0
        %1290 = vmatpush2.bf16.xpose.msra.mxu0 0
        %1291 = vmatprep.subr.bf16.mxu0 0
        %1292 = vmatpush2.bf16.xpose.msra.mxu0 0
        %1293 = vmatprep.subr.bf16.mxu0 0
        %1294 = vmatpush2.bf16.xpose.msra.mxu0 0
        %1295 = vmatprep.subr.bf16.mxu0 0
        %1296 = vmatpush2.bf16.xpose.msra.mxu0 0
        %1297 = vmatprep.subr.bf16.mxu0 0
        %1298 = vmatpush2.bf16.xpose.msra.mxu0 0
        %1299 = vmatprep.subr.bf16.mxu0 0
        %1300 = vmatpush2.bf16.xpose.msra.mxu0 0
        %1301 = vmatprep.mubr.bf16.mxu0 0
        %1302 = vmatmul.mubr.bf16.gmra.mxu0 %v1264
        %v1303 = vpop.f32.mrf.mxu0
        %v1304 = vadd.f32 0.0, %v1303
        %v1305 = vpop.f32.mrf.mxu0
        %v1306 = vpop.f32.mrf.mxu0
        %v1307 = vpop.f32.mrf.mxu0
        %1308 = vdwg.mxu0
        %v1311 = vunpack.c.l.b16 %v1080
        %v1312 = vunpack.c.l.b16 %v1081
        %v1313 = vpack.c.b16 %v1312, %v1311
        %v1315 = vsel %vm1109, %v1068, 0
        %v1318 = vsel %vm1109, %v1313, 0
        %1320 = vmatprep.subr.bf16.mxu0 0
        %1321 = vmatpush1.bf16.xpose.msra.mxu0 0
        %1322 = vmatprep.subr.bf16.mxu0 0
        %1323 = vmatpush1.bf16.xpose.msra.mxu0 0
        %1324 = vmatprep.subr.bf16.mxu0 0
        %1325 = vmatpush1.bf16.xpose.msra.mxu0 0
        %1326 = vmatprep.subr.bf16.mxu0 0
        %1327 = vmatpush1.bf16.xpose.msra.mxu0 0
        %1328 = vmatprep.subr.bf16.mxu0 0
        %1329 = vmatpush1.bf16.xpose.msra.mxu0 0
        %1330 = vmatprep.subr.bf16.mxu0 0
        %1331 = vmatpush1.bf16.xpose.msra.mxu0 0
        %1332 = vmatprep.subr.bf16.mxu0 0
        %1333 = vmatpush1.bf16.xpose.msra.mxu0 0
        %1334 = vmatprep.subr.bf16.mxu0 0
        %1335 = vmatpush1.bf16.xpose.msra.mxu0 %v1318
        %1336 = vmatprep.subr.bf16.mxu0 0
        %1337 = vmatpush2.bf16.xpose.msra.mxu0 0
        %1338 = vmatprep.subr.bf16.mxu0 0
        %1339 = vmatpush2.bf16.xpose.msra.mxu0 0
        %1340 = vmatprep.subr.bf16.mxu0 0
        %1341 = vmatpush2.bf16.xpose.msra.mxu0 0
        %1342 = vmatprep.subr.bf16.mxu0 0
        %1343 = vmatpush2.bf16.xpose.msra.mxu0 0
        %1344 = vmatprep.subr.bf16.mxu0 0
        %1345 = vmatpush2.bf16.xpose.msra.mxu0 0
        %1346 = vmatprep.subr.bf16.mxu0 0
        %1347 = vmatpush2.bf16.xpose.msra.mxu0 0
        %1348 = vmatprep.subr.bf16.mxu0 0
        %1349 = vmatpush2.bf16.xpose.msra.mxu0 0
        %1350 = vmatprep.subr.bf16.mxu0 0
        %1351 = vmatpush2.bf16.xpose.msra.mxu0 0
        %1352 = vmatprep.mubr.bf16.mxu0 0
        %1353 = vmatmul.mubr.bf16.gmra.mxu0 %v1315
        %v1354 = vpop.f32.mrf.mxu0
        %v1355 = vadd.f32 0.0, %v1354
        %v1356 = vpop.f32.mrf.mxu0
        %v1357 = vpop.f32.mrf.mxu0
        %v1358 = vpop.f32.mrf.mxu0
        %1359 = vdwg.mxu0
        %v1362 = vunpack.c.l.b16 %v1082
        %v1363 = vunpack.c.l.b16 %v1083
        %v1364 = vpack.c.b16 %v1363, %v1362
        %v1366 = vsel %vm1109, %v1069, 0
        %v1369 = vsel %vm1109, %v1364, 0
        %1371 = vmatprep.subr.bf16.mxu0 0
        %1372 = vmatpush1.bf16.xpose.msra.mxu0 0
        %1373 = vmatprep.subr.bf16.mxu0 0
        %1374 = vmatpush1.bf16.xpose.msra.mxu0 0
        %1375 = vmatprep.subr.bf16.mxu0 0
        %1376 = vmatpush1.bf16.xpose.msra.mxu0 0
        %1377 = vmatprep.subr.bf16.mxu0 0
        %1378 = vmatpush1.bf16.xpose.msra.mxu0 0
        %1379 = vmatprep.subr.bf16.mxu0 0
        %1380 = vmatpush1.bf16.xpose.msra.mxu0 0
        %1381 = vmatprep.subr.bf16.mxu0 0
        %1382 = vmatpush1.bf16.xpose.msra.mxu0 0
        %1383 = vmatprep.subr.bf16.mxu0 0
        %1384 = vmatpush1.bf16.xpose.msra.mxu0 0
        %1385 = vmatprep.subr.bf16.mxu0 0
        %1386 = vmatpush1.bf16.xpose.msra.mxu0 %v1369
        %1387 = vmatprep.subr.bf16.mxu0 0
        %1388 = vmatpush2.bf16.xpose.msra.mxu0 0
        %1389 = vmatprep.subr.bf16.mxu0 0
        %1390 = vmatpush2.bf16.xpose.msra.mxu0 0
        %1391 = vmatprep.subr.bf16.mxu0 0
        %1392 = vmatpush2.bf16.xpose.msra.mxu0 0
        %1393 = vmatprep.subr.bf16.mxu0 0
        %1394 = vmatpush2.bf16.xpose.msra.mxu0 0
        %1395 = vmatprep.subr.bf16.mxu0 0
        %1396 = vmatpush2.bf16.xpose.msra.mxu0 0
        %1397 = vmatprep.subr.bf16.mxu0 0
        %1398 = vmatpush2.bf16.xpose.msra.mxu0 0
        %1399 = vmatprep.subr.bf16.mxu0 0
        %1400 = vmatpush2.bf16.xpose.msra.mxu0 0
        %1401 = vmatprep.subr.bf16.mxu0 0
        %1402 = vmatpush2.bf16.xpose.msra.mxu0 0
        %1403 = vmatprep.mubr.bf16.mxu0 0
        %1404 = vmatmul.mubr.bf16.gmra.mxu0 %v1366
        %v1405 = vpop.f32.mrf.mxu0
        %v1406 = vadd.f32 0.0, %v1405
        %v1407 = vpop.f32.mrf.mxu0
        %v1408 = vpop.f32.mrf.mxu0
        %v1409 = vpop.f32.mrf.mxu0
        %1410 = vdwg.mxu0
        %v1413 = vunpack.c.l.b16 %v1084
        %v1414 = vunpack.c.l.b16 %v1085
        %v1415 = vpack.c.b16 %v1414, %v1413
        %v1417 = vsel %vm1109, %v1070, 0
        %v1420 = vsel %vm1109, %v1415, 0
        %1422 = vmatprep.subr.bf16.mxu0 0
        %1423 = vmatpush1.bf16.xpose.msra.mxu0 0
        %1424 = vmatprep.subr.bf16.mxu0 0
        %1425 = vmatpush1.bf16.xpose.msra.mxu0 0
        %1426 = vmatprep.subr.bf16.mxu0 0
        %1427 = vmatpush1.bf16.xpose.msra.mxu0 0
        %1428 = vmatprep.subr.bf16.mxu0 0
        %1429 = vmatpush1.bf16.xpose.msra.mxu0 0
        %1430 = vmatprep.subr.bf16.mxu0 0
        %1431 = vmatpush1.bf16.xpose.msra.mxu0 0
        %1432 = vmatprep.subr.bf16.mxu0 0
        %1433 = vmatpush1.bf16.xpose.msra.mxu0 0
        %1434 = vmatprep.subr.bf16.mxu0 0
        %1435 = vmatpush1.bf16.xpose.msra.mxu0 0
        %1436 = vmatprep.subr.bf16.mxu0 0
        %1437 = vmatpush1.bf16.xpose.msra.mxu0 %v1420
        %1438 = vmatprep.subr.bf16.mxu0 0
        %1439 = vmatpush2.bf16.xpose.msra.mxu0 0
        %1440 = vmatprep.subr.bf16.mxu0 0
        %1441 = vmatpush2.bf16.xpose.msra.mxu0 0
        %1442 = vmatprep.subr.bf16.mxu0 0
        %1443 = vmatpush2.bf16.xpose.msra.mxu0 0
        %1444 = vmatprep.subr.bf16.mxu0 0
        %1445 = vmatpush2.bf16.xpose.msra.mxu0 0
        %1446 = vmatprep.subr.bf16.mxu0 0
        %1447 = vmatpush2.bf16.xpose.msra.mxu0 0
        %1448 = vmatprep.subr.bf16.mxu0 0
        %1449 = vmatpush2.bf16.xpose.msra.mxu0 0
        %1450 = vmatprep.subr.bf16.mxu0 0
        %1451 = vmatpush2.bf16.xpose.msra.mxu0 0
        %1452 = vmatprep.subr.bf16.mxu0 0
        %1453 = vmatpush2.bf16.xpose.msra.mxu0 0
        %1454 = vmatprep.mubr.bf16.mxu0 0
        %1455 = vmatmul.mubr.bf16.gmra.mxu0 %v1417
        %v1456 = vpop.f32.mrf.mxu0
        %v1457 = vadd.f32 0.0, %v1456
        %v1458 = vpop.f32.mrf.mxu0
        %v1459 = vpop.f32.mrf.mxu0
        %v1460 = vpop.f32.mrf.mxu0
        %1461 = vdwg.mxu0
        %v1464 = vunpack.c.l.b16 %v1086
        %v1465 = vunpack.c.l.b16 %v1087
        %v1466 = vpack.c.b16 %v1465, %v1464
        %v1468 = vsel %vm1109, %v1071, 0
        %v1471 = vsel %vm1109, %v1466, 0
        %1473 = vmatprep.subr.bf16.mxu0 0
        %1474 = vmatpush1.bf16.xpose.msra.mxu0 0
        %1475 = vmatprep.subr.bf16.mxu0 0
        %1476 = vmatpush1.bf16.xpose.msra.mxu0 0
        %1477 = vmatprep.subr.bf16.mxu0 0
        %1478 = vmatpush1.bf16.xpose.msra.mxu0 0
        %1479 = vmatprep.subr.bf16.mxu0 0
        %1480 = vmatpush1.bf16.xpose.msra.mxu0 0
        %1481 = vmatprep.subr.bf16.mxu0 0
        %1482 = vmatpush1.bf16.xpose.msra.mxu0 0
        %1483 = vmatprep.subr.bf16.mxu0 0
        %1484 = vmatpush1.bf16.xpose.msra.mxu0 0
        %1485 = vmatprep.subr.bf16.mxu0 0
        %1486 = vmatpush1.bf16.xpose.msra.mxu0 0
        %1487 = vmatprep.subr.bf16.mxu0 0
        %1488 = vmatpush1.bf16.xpose.msra.mxu0 %v1471
        %1489 = vmatprep.subr.bf16.mxu0 0
        %1490 = vmatpush2.bf16.xpose.msra.mxu0 0
        %1491 = vmatprep.subr.bf16.mxu0 0
        %1492 = vmatpush2.bf16.xpose.msra.mxu0 0
        %1493 = vmatprep.subr.bf16.mxu0 0
        %1494 = vmatpush2.bf16.xpose.msra.mxu0 0
        %1495 = vmatprep.subr.bf16.mxu0 0
        %1496 = vmatpush2.bf16.xpose.msra.mxu0 0
        %1497 = vmatprep.subr.bf16.mxu0 0
        %1498 = vmatpush2.bf16.xpose.msra.mxu0 0
        %1499 = vmatprep.subr.bf16.mxu0 0
        %1500 = vmatpush2.bf16.xpose.msra.mxu0 0
        %1501 = vmatprep.subr.bf16.mxu0 0
        %1502 = vmatpush2.bf16.xpose.msra.mxu0 0
        %1503 = vmatprep.subr.bf16.mxu0 0
        %1504 = vmatpush2.bf16.xpose.msra.mxu0 0
        %1505 = vmatprep.mubr.bf16.mxu0 0
        %1506 = vmatmul.mubr.bf16.gmra.mxu0 %v1468
        %v1507 = vpop.f32.mrf.mxu0
        %v1508 = vadd.f32 0.0, %v1507
        %v1509 = vpop.f32.mrf.mxu0
        %v1510 = vpop.f32.mrf.mxu0
        %v1511 = vpop.f32.mrf.mxu0
        %1512 = vdwg.mxu0
        %v1513 = vsel %vm1109, %v1151, -inf
        %1514 = vmax.xlane.f32.xlu0 %v1513
        %v1515 = vpop.xlane.xlu0 %1514
        %v1516 = vsel %vm1109, %v1202, -inf
        %1517 = vmax.xlane.f32.xlu0 %v1516
        %v1518 = vpop.xlane.xlu0 %1517
        %v1519 = vsel %vm1109, %v1253, -inf
        %1520 = vmax.xlane.f32.xlu0 %v1519
        %v1521 = vpop.xlane.xlu0 %1520
        %v1522 = vsel %vm1109, %v1304, -inf
        %1523 = vmax.xlane.f32.xlu0 %v1522
        %v1524 = vpop.xlane.xlu0 %1523
        %v1525 = vsel %vm1109, %v1355, -inf
        %1526 = vmax.xlane.f32.xlu0 %v1525
        %v1527 = vpop.xlane.xlu0 %1526
        %v1528 = vsel %vm1109, %v1406, -inf
        %1529 = vmax.xlane.f32.xlu0 %v1528
        %v1530 = vpop.xlane.xlu0 %1529
        %v1531 = vsel %vm1109, %v1457, -inf
        %1532 = vmax.xlane.f32.xlu0 %v1531
        %v1533 = vpop.xlane.xlu0 %1532
        %v1534 = vsel %vm1109, %v1508, -inf
        %1535 = vmax.xlane.f32.xlu0 %v1534
        %v1536 = vpop.xlane.xlu0 %1535
        %v1537 = vsub.f32 %v1151, %v1515
        %v1538 = vsub.f32 %v1202, %v1518
        %v1539 = vsub.f32 %v1253, %v1521
        %v1540 = vsub.f32 %v1304, %v1524
        %v1541 = vsub.f32 %v1355, %v1527
        %v1542 = vsub.f32 %v1406, %v1530
        %v1543 = vsub.f32 %v1457, %v1533
        %v1544 = vsub.f32 %v1508, %v1536
        %v1545 = vmul.f32 %v1537, 1.442695
        %v1546 = vpow.pop %v1545
        %v1547 = vmul.f32 %v1538, 1.442695
        %v1548 = vpow.pop %v1547
        %v1549 = vmul.f32 %v1539, 1.442695
        %v1550 = vpow.pop %v1549
        %v1551 = vmul.f32 %v1540, 1.442695
        %v1552 = vpow.pop %v1551
        %v1553 = vmul.f32 %v1541, 1.442695
        %v1554 = vpow.pop %v1553
        %v1555 = vmul.f32 %v1542, 1.442695
        %v1556 = vpow.pop %v1555
        %v1557 = vmul.f32 %v1543, 1.442695
        %v1558 = vpow.pop %v1557
        %v1559 = vmul.f32 %v1544, 1.442695
        %v1560 = vpow.pop %v1559
        %v1561 = vsel %vm1109, %v1546, 0.0
        %1562 = vadd.xlane.f32.xlu0 %v1561
        %v1563 = vpop.xlane.xlu0 %1562
        %v1564 = vsel %vm1109, %v1548, 0.0
        %1565 = vadd.xlane.f32.xlu0 %v1564
        %v1566 = vpop.xlane.xlu0 %1565
        %v1567 = vsel %vm1109, %v1550, 0.0
        %1568 = vadd.xlane.f32.xlu0 %v1567
        %v1569 = vpop.xlane.xlu0 %1568
        %v1570 = vsel %vm1109, %v1552, 0.0
        %1571 = vadd.xlane.f32.xlu0 %v1570
        %v1572 = vpop.xlane.xlu0 %1571
        %v1573 = vsel %vm1109, %v1554, 0.0
        %1574 = vadd.xlane.f32.xlu0 %v1573
        %v1575 = vpop.xlane.xlu0 %1574
        %v1576 = vsel %vm1109, %v1556, 0.0
        %1577 = vadd.xlane.f32.xlu0 %v1576
        %v1578 = vpop.xlane.xlu0 %1577
        %v1579 = vsel %vm1109, %v1558, 0.0
        %1580 = vadd.xlane.f32.xlu0 %v1579
        %v1581 = vpop.xlane.xlu0 %1580
        %v1582 = vsel %vm1109, %v1560, 0.0
        %1583 = vadd.xlane.f32.xlu0 %v1582
        %v1584 = vpop.xlane.xlu0 %1583
        %v1585 = vrcp.pop %v1563
        %v1586 = vrcp.pop %v1566
        %v1587 = vrcp.pop %v1569
        %v1588 = vrcp.pop %v1572
        %v1589 = vrcp.pop %v1575
        %v1590 = vrcp.pop %v1578
        %v1591 = vrcp.pop %v1581
        %v1592 = vrcp.pop %v1584
        %v1593 = vmul.f32 %v1546, %v1585
        %v1594 = vmul.f32 %v1548, %v1586
        %v1595 = vmul.f32 %v1550, %v1587
        %v1596 = vmul.f32 %v1552, %v1588
        %v1597 = vmul.f32 %v1554, %v1589
        %v1598 = vmul.f32 %v1556, %v1590
        %v1599 = vmul.f32 %v1558, %v1591
        %v1600 = vmul.f32 %v1560, %v1592
        %v1601 = vpack.c.bf16 %v1593, %v1593
        %v1602 = vpack.c.bf16 %v1594, %v1594
        %v1603 = vpack.c.bf16 %v1595, %v1595
        %v1604 = vpack.c.bf16 %v1596, %v1596
        %v1605 = vpack.c.bf16 %v1597, %v1597
        %v1606 = vpack.c.bf16 %v1598, %v1598
        %v1607 = vpack.c.bf16 %v1599, %v1599
        %v1608 = vpack.c.bf16 %v1600, %v1600
        %v1611 = vunpack.c.l.b16 %v1088
        %v1612 = vunpack.c.l.b16 %v1089
        %v1613 = vpack.c.b16 %v1612, %v1611
        %v1616 = vsel %vm1109, %v1601, 0
        %1618 = vmatprep.subr.bf16.mxu0 0
        %1619 = vmatpush1.bf16.msra.mxu0 0
        %1620 = vmatprep.subr.bf16.mxu0 0
        %1621 = vmatpush1.bf16.msra.mxu0 0
        %1622 = vmatprep.subr.bf16.mxu0 0
        %1623 = vmatpush1.bf16.msra.mxu0 0
        %1624 = vmatprep.subr.bf16.mxu0 0
        %1625 = vmatpush1.bf16.msra.mxu0 0
        %1626 = vmatprep.subr.bf16.mxu0 0
        %1627 = vmatpush1.bf16.msra.mxu0 0
        %1628 = vmatprep.subr.bf16.mxu0 0
        %1629 = vmatpush1.bf16.msra.mxu0 0
        %1630 = vmatprep.subr.bf16.mxu0 0
        %1631 = vmatpush1.bf16.msra.mxu0 0
        %1632 = vmatprep.subr.bf16.mxu0 0
        %1633 = vmatpush1.bf16.msra.mxu0 %v1613
        %1634 = vmatprep.subr.bf16.mxu0 0
        %1635 = vmatpush2.bf16.msra.mxu0 0
        %1636 = vmatprep.subr.bf16.mxu0 0
        %1637 = vmatpush2.bf16.msra.mxu0 0
        %1638 = vmatprep.subr.bf16.mxu0 0
        %1639 = vmatpush2.bf16.msra.mxu0 0
        %1640 = vmatprep.subr.bf16.mxu0 0
        %1641 = vmatpush2.bf16.msra.mxu0 0
        %1642 = vmatprep.subr.bf16.mxu0 0
        %1643 = vmatpush2.bf16.msra.mxu0 0
        %1644 = vmatprep.subr.bf16.mxu0 0
        %1645 = vmatpush2.bf16.msra.mxu0 0
        %1646 = vmatprep.subr.bf16.mxu0 0
        %1647 = vmatpush2.bf16.msra.mxu0 0
        %1648 = vmatprep.subr.bf16.mxu0 0
        %1649 = vmatpush2.bf16.msra.mxu0 0
        %1650 = vmatprep.mubr.bf16.mxu0 0
        %1651 = vmatmul.mubr.bf16.gmra.mxu0 %v1616
        %v1652 = vpop.f32.mrf.mxu0
        %v1653 = vadd.f32 0.0, %v1652
        %v1654 = vpop.f32.mrf.mxu0
        %v1655 = vpop.f32.mrf.mxu0
        %v1656 = vpop.f32.mrf.mxu0
        %1657 = vdwg.mxu0
        %v1660 = vunpack.c.l.b16 %v1090
        %v1661 = vunpack.c.l.b16 %v1091
        %v1662 = vpack.c.b16 %v1661, %v1660
        %v1665 = vsel %vm1109, %v1602, 0
        %1667 = vmatprep.subr.bf16.mxu0 0
        %1668 = vmatpush1.bf16.msra.mxu0 0
        %1669 = vmatprep.subr.bf16.mxu0 0
        %1670 = vmatpush1.bf16.msra.mxu0 0
        %1671 = vmatprep.subr.bf16.mxu0 0
        %1672 = vmatpush1.bf16.msra.mxu0 0
        %1673 = vmatprep.subr.bf16.mxu0 0
        %1674 = vmatpush1.bf16.msra.mxu0 0
        %1675 = vmatprep.subr.bf16.mxu0 0
        %1676 = vmatpush1.bf16.msra.mxu0 0
        %1677 = vmatprep.subr.bf16.mxu0 0
        %1678 = vmatpush1.bf16.msra.mxu0 0
        %1679 = vmatprep.subr.bf16.mxu0 0
        %1680 = vmatpush1.bf16.msra.mxu0 0
        %1681 = vmatprep.subr.bf16.mxu0 0
        %1682 = vmatpush1.bf16.msra.mxu0 %v1662
        %1683 = vmatprep.subr.bf16.mxu0 0
        %1684 = vmatpush2.bf16.msra.mxu0 0
        %1685 = vmatprep.subr.bf16.mxu0 0
        %1686 = vmatpush2.bf16.msra.mxu0 0
        %1687 = vmatprep.subr.bf16.mxu0 0
        %1688 = vmatpush2.bf16.msra.mxu0 0
        %1689 = vmatprep.subr.bf16.mxu0 0
        %1690 = vmatpush2.bf16.msra.mxu0 0
        %1691 = vmatprep.subr.bf16.mxu0 0
        %1692 = vmatpush2.bf16.msra.mxu0 0
        %1693 = vmatprep.subr.bf16.mxu0 0
        %1694 = vmatpush2.bf16.msra.mxu0 0
        %1695 = vmatprep.subr.bf16.mxu0 0
        %1696 = vmatpush2.bf16.msra.mxu0 0
        %1697 = vmatprep.subr.bf16.mxu0 0
        %1698 = vmatpush2.bf16.msra.mxu0 0
        %1699 = vmatprep.mubr.bf16.mxu0 0
        %1700 = vmatmul.mubr.bf16.gmra.mxu0 %v1665
        %v1701 = vpop.f32.mrf.mxu0
        %v1702 = vadd.f32 0.0, %v1701
        %v1703 = vpop.f32.mrf.mxu0
        %v1704 = vpop.f32.mrf.mxu0
        %v1705 = vpop.f32.mrf.mxu0
        %1706 = vdwg.mxu0
        %v1709 = vunpack.c.l.b16 %v1092
        %v1710 = vunpack.c.l.b16 %v1093
        %v1711 = vpack.c.b16 %v1710, %v1709
        %v1714 = vsel %vm1109, %v1603, 0
        %1716 = vmatprep.subr.bf16.mxu0 0
        %1717 = vmatpush1.bf16.msra.mxu0 0
        %1718 = vmatprep.subr.bf16.mxu0 0
        %1719 = vmatpush1.bf16.msra.mxu0 0
        %1720 = vmatprep.subr.bf16.mxu0 0
        %1721 = vmatpush1.bf16.msra.mxu0 0
        %1722 = vmatprep.subr.bf16.mxu0 0
        %1723 = vmatpush1.bf16.msra.mxu0 0
        %1724 = vmatprep.subr.bf16.mxu0 0
        %1725 = vmatpush1.bf16.msra.mxu0 0
        %1726 = vmatprep.subr.bf16.mxu0 0
        %1727 = vmatpush1.bf16.msra.mxu0 0
        %1728 = vmatprep.subr.bf16.mxu0 0
        %1729 = vmatpush1.bf16.msra.mxu0 0
        %1730 = vmatprep.subr.bf16.mxu0 0
        %1731 = vmatpush1.bf16.msra.mxu0 %v1711
        %1732 = vmatprep.subr.bf16.mxu0 0
        %1733 = vmatpush2.bf16.msra.mxu0 0
        %1734 = vmatprep.subr.bf16.mxu0 0
        %1735 = vmatpush2.bf16.msra.mxu0 0
        %1736 = vmatprep.subr.bf16.mxu0 0
        %1737 = vmatpush2.bf16.msra.mxu0 0
        %1738 = vmatprep.subr.bf16.mxu0 0
        %1739 = vmatpush2.bf16.msra.mxu0 0
        %1740 = vmatprep.subr.bf16.mxu0 0
        %1741 = vmatpush2.bf16.msra.mxu0 0
        %1742 = vmatprep.subr.bf16.mxu0 0
        %1743 = vmatpush2.bf16.msra.mxu0 0
        %1744 = vmatprep.subr.bf16.mxu0 0
        %1745 = vmatpush2.bf16.msra.mxu0 0
        %1746 = vmatprep.subr.bf16.mxu0 0
        %1747 = vmatpush2.bf16.msra.mxu0 0
        %1748 = vmatprep.mubr.bf16.mxu0 0
        %1749 = vmatmul.mubr.bf16.gmra.mxu0 %v1714
        %v1750 = vpop.f32.mrf.mxu0
        %v1751 = vadd.f32 0.0, %v1750
        %v1752 = vpop.f32.mrf.mxu0
        %v1753 = vpop.f32.mrf.mxu0
        %v1754 = vpop.f32.mrf.mxu0
        %1755 = vdwg.mxu0
        %v1758 = vunpack.c.l.b16 %v1094
        %v1759 = vunpack.c.l.b16 %v1095
        %v1760 = vpack.c.b16 %v1759, %v1758
        %v1763 = vsel %vm1109, %v1604, 0
        %1765 = vmatprep.subr.bf16.mxu0 0
        %1766 = vmatpush1.bf16.msra.mxu0 0
        %1767 = vmatprep.subr.bf16.mxu0 0
        %1768 = vmatpush1.bf16.msra.mxu0 0
        %1769 = vmatprep.subr.bf16.mxu0 0
        %1770 = vmatpush1.bf16.msra.mxu0 0
        %1771 = vmatprep.subr.bf16.mxu0 0
        %1772 = vmatpush1.bf16.msra.mxu0 0
        %1773 = vmatprep.subr.bf16.mxu0 0
        %1774 = vmatpush1.bf16.msra.mxu0 0
        %1775 = vmatprep.subr.bf16.mxu0 0
        %1776 = vmatpush1.bf16.msra.mxu0 0
        %1777 = vmatprep.subr.bf16.mxu0 0
        %1778 = vmatpush1.bf16.msra.mxu0 0
        %1779 = vmatprep.subr.bf16.mxu0 0
        %1780 = vmatpush1.bf16.msra.mxu0 %v1760
        %1781 = vmatprep.subr.bf16.mxu0 0
        %1782 = vmatpush2.bf16.msra.mxu0 0
        %1783 = vmatprep.subr.bf16.mxu0 0
        %1784 = vmatpush2.bf16.msra.mxu0 0
        %1785 = vmatprep.subr.bf16.mxu0 0
        %1786 = vmatpush2.bf16.msra.mxu0 0
        %1787 = vmatprep.subr.bf16.mxu0 0
        %1788 = vmatpush2.bf16.msra.mxu0 0
        %1789 = vmatprep.subr.bf16.mxu0 0
        %1790 = vmatpush2.bf16.msra.mxu0 0
        %1791 = vmatprep.subr.bf16.mxu0 0
        %1792 = vmatpush2.bf16.msra.mxu0 0
        %1793 = vmatprep.subr.bf16.mxu0 0
        %1794 = vmatpush2.bf16.msra.mxu0 0
        %1795 = vmatprep.subr.bf16.mxu0 0
        %1796 = vmatpush2.bf16.msra.mxu0 0
        %1797 = vmatprep.mubr.bf16.mxu0 0
        %1798 = vmatmul.mubr.bf16.gmra.mxu0 %v1763
        %v1799 = vpop.f32.mrf.mxu0
        %v1800 = vadd.f32 0.0, %v1799
        %v1801 = vpop.f32.mrf.mxu0
        %v1802 = vpop.f32.mrf.mxu0
        %v1803 = vpop.f32.mrf.mxu0
        %1804 = vdwg.mxu0
        %v1807 = vunpack.c.l.b16 %v1096
        %v1808 = vunpack.c.l.b16 %v1097
        %v1809 = vpack.c.b16 %v1808, %v1807
        %v1812 = vsel %vm1109, %v1605, 0
        %1814 = vmatprep.subr.bf16.mxu0 0
        %1815 = vmatpush1.bf16.msra.mxu0 0
        %1816 = vmatprep.subr.bf16.mxu0 0
        %1817 = vmatpush1.bf16.msra.mxu0 0
        %1818 = vmatprep.subr.bf16.mxu0 0
        %1819 = vmatpush1.bf16.msra.mxu0 0
        %1820 = vmatprep.subr.bf16.mxu0 0
        %1821 = vmatpush1.bf16.msra.mxu0 0
        %1822 = vmatprep.subr.bf16.mxu0 0
        %1823 = vmatpush1.bf16.msra.mxu0 0
        %1824 = vmatprep.subr.bf16.mxu0 0
        %1825 = vmatpush1.bf16.msra.mxu0 0
        %1826 = vmatprep.subr.bf16.mxu0 0
        %1827 = vmatpush1.bf16.msra.mxu0 0
        %1828 = vmatprep.subr.bf16.mxu0 0
        %1829 = vmatpush1.bf16.msra.mxu0 %v1809
        %1830 = vmatprep.subr.bf16.mxu0 0
        %1831 = vmatpush2.bf16.msra.mxu0 0
        %1832 = vmatprep.subr.bf16.mxu0 0
        %1833 = vmatpush2.bf16.msra.mxu0 0
        %1834 = vmatprep.subr.bf16.mxu0 0
        %1835 = vmatpush2.bf16.msra.mxu0 0
        %1836 = vmatprep.subr.bf16.mxu0 0
        %1837 = vmatpush2.bf16.msra.mxu0 0
        %1838 = vmatprep.subr.bf16.mxu0 0
        %1839 = vmatpush2.bf16.msra.mxu0 0
        %1840 = vmatprep.subr.bf16.mxu0 0
        %1841 = vmatpush2.bf16.msra.mxu0 0
        %1842 = vmatprep.subr.bf16.mxu0 0
        %1843 = vmatpush2.bf16.msra.mxu0 0
        %1844 = vmatprep.subr.bf16.mxu0 0
        %1845 = vmatpush2.bf16.msra.mxu0 0
        %1846 = vmatprep.mubr.bf16.mxu0 0
        %1847 = vmatmul.mubr.bf16.gmra.mxu0 %v1812
        %v1848 = vpop.f32.mrf.mxu0
        %v1849 = vadd.f32 0.0, %v1848
        %v1850 = vpop.f32.mrf.mxu0
        %v1851 = vpop.f32.mrf.mxu0
        %v1852 = vpop.f32.mrf.mxu0
        %1853 = vdwg.mxu0
        %v1856 = vunpack.c.l.b16 %v1098
        %v1857 = vunpack.c.l.b16 %v1099
        %v1858 = vpack.c.b16 %v1857, %v1856
        %v1861 = vsel %vm1109, %v1606, 0
        %1863 = vmatprep.subr.bf16.mxu0 0
        %1864 = vmatpush1.bf16.msra.mxu0 0
        %1865 = vmatprep.subr.bf16.mxu0 0
        %1866 = vmatpush1.bf16.msra.mxu0 0
        %1867 = vmatprep.subr.bf16.mxu0 0
        %1868 = vmatpush1.bf16.msra.mxu0 0
        %1869 = vmatprep.subr.bf16.mxu0 0
        %1870 = vmatpush1.bf16.msra.mxu0 0
        %1871 = vmatprep.subr.bf16.mxu0 0
        %1872 = vmatpush1.bf16.msra.mxu0 0
        %1873 = vmatprep.subr.bf16.mxu0 0
        %1874 = vmatpush1.bf16.msra.mxu0 0
        %1875 = vmatprep.subr.bf16.mxu0 0
        %1876 = vmatpush1.bf16.msra.mxu0 0
        %1877 = vmatprep.subr.bf16.mxu0 0
        %1878 = vmatpush1.bf16.msra.mxu0 %v1858
        %1879 = vmatprep.subr.bf16.mxu0 0
        %1880 = vmatpush2.bf16.msra.mxu0 0
        %1881 = vmatprep.subr.bf16.mxu0 0
        %1882 = vmatpush2.bf16.msra.mxu0 0
        %1883 = vmatprep.subr.bf16.mxu0 0
        %1884 = vmatpush2.bf16.msra.mxu0 0
        %1885 = vmatprep.subr.bf16.mxu0 0
        %1886 = vmatpush2.bf16.msra.mxu0 0
        %1887 = vmatprep.subr.bf16.mxu0 0
        %1888 = vmatpush2.bf16.msra.mxu0 0
        %1889 = vmatprep.subr.bf16.mxu0 0
        %1890 = vmatpush2.bf16.msra.mxu0 0
        %1891 = vmatprep.subr.bf16.mxu0 0
        %1892 = vmatpush2.bf16.msra.mxu0 0
        %1893 = vmatprep.subr.bf16.mxu0 0
        %1894 = vmatpush2.bf16.msra.mxu0 0
        %1895 = vmatprep.mubr.bf16.mxu0 0
        %1896 = vmatmul.mubr.bf16.gmra.mxu0 %v1861
        %v1897 = vpop.f32.mrf.mxu0
        %v1898 = vadd.f32 0.0, %v1897
        %v1899 = vpop.f32.mrf.mxu0
        %v1900 = vpop.f32.mrf.mxu0
        %v1901 = vpop.f32.mrf.mxu0
        %1902 = vdwg.mxu0
        %v1905 = vunpack.c.l.b16 %v1100
        %v1906 = vunpack.c.l.b16 %v1101
        %v1907 = vpack.c.b16 %v1906, %v1905
        %v1910 = vsel %vm1109, %v1607, 0
        %1912 = vmatprep.subr.bf16.mxu0 0
        %1913 = vmatpush1.bf16.msra.mxu0 0
        %1914 = vmatprep.subr.bf16.mxu0 0
        %1915 = vmatpush1.bf16.msra.mxu0 0
        %1916 = vmatprep.subr.bf16.mxu0 0
        %1917 = vmatpush1.bf16.msra.mxu0 0
        %1918 = vmatprep.subr.bf16.mxu0 0
        %1919 = vmatpush1.bf16.msra.mxu0 0
        %1920 = vmatprep.subr.bf16.mxu0 0
        %1921 = vmatpush1.bf16.msra.mxu0 0
        %1922 = vmatprep.subr.bf16.mxu0 0
        %1923 = vmatpush1.bf16.msra.mxu0 0
        %1924 = vmatprep.subr.bf16.mxu0 0
        %1925 = vmatpush1.bf16.msra.mxu0 0
        %1926 = vmatprep.subr.bf16.mxu0 0
        %1927 = vmatpush1.bf16.msra.mxu0 %v1907
        %1928 = vmatprep.subr.bf16.mxu0 0
        %1929 = vmatpush2.bf16.msra.mxu0 0
        %1930 = vmatprep.subr.bf16.mxu0 0
        %1931 = vmatpush2.bf16.msra.mxu0 0
        %1932 = vmatprep.subr.bf16.mxu0 0
        %1933 = vmatpush2.bf16.msra.mxu0 0
        %1934 = vmatprep.subr.bf16.mxu0 0
        %1935 = vmatpush2.bf16.msra.mxu0 0
        %1936 = vmatprep.subr.bf16.mxu0 0
        %1937 = vmatpush2.bf16.msra.mxu0 0
        %1938 = vmatprep.subr.bf16.mxu0 0
        %1939 = vmatpush2.bf16.msra.mxu0 0
        %1940 = vmatprep.subr.bf16.mxu0 0
        %1941 = vmatpush2.bf16.msra.mxu0 0
        %1942 = vmatprep.subr.bf16.mxu0 0
        %1943 = vmatpush2.bf16.msra.mxu0 0
        %1944 = vmatprep.mubr.bf16.mxu0 0
        %1945 = vmatmul.mubr.bf16.gmra.mxu0 %v1910
        %v1946 = vpop.f32.mrf.mxu0
        %v1947 = vadd.f32 0.0, %v1946
        %v1948 = vpop.f32.mrf.mxu0
        %v1949 = vpop.f32.mrf.mxu0
        %v1950 = vpop.f32.mrf.mxu0
        %1951 = vdwg.mxu0
        %v1954 = vunpack.c.l.b16 %v1102
        %v1955 = vunpack.c.l.b16 %v1103
        %v1956 = vpack.c.b16 %v1955, %v1954
        %v1959 = vsel %vm1109, %v1608, 0
        %1961 = vmatprep.subr.bf16.mxu0 0
        %1962 = vmatpush1.bf16.msra.mxu0 0
        %1963 = vmatprep.subr.bf16.mxu0 0
        %1964 = vmatpush1.bf16.msra.mxu0 0
        %1965 = vmatprep.subr.bf16.mxu0 0
        %1966 = vmatpush1.bf16.msra.mxu0 0
        %1967 = vmatprep.subr.bf16.mxu0 0
        %1968 = vmatpush1.bf16.msra.mxu0 0
        %1969 = vmatprep.subr.bf16.mxu0 0
        %1970 = vmatpush1.bf16.msra.mxu0 0
        %1971 = vmatprep.subr.bf16.mxu0 0
        %1972 = vmatpush1.bf16.msra.mxu0 0
        %1973 = vmatprep.subr.bf16.mxu0 0
        %1974 = vmatpush1.bf16.msra.mxu0 0
        %1975 = vmatprep.subr.bf16.mxu0 0
        %1976 = vmatpush1.bf16.msra.mxu0 %v1956
        %1977 = vmatprep.subr.bf16.mxu0 0
        %1978 = vmatpush2.bf16.msra.mxu0 0
        %1979 = vmatprep.subr.bf16.mxu0 0
        %1980 = vmatpush2.bf16.msra.mxu0 0
        %1981 = vmatprep.subr.bf16.mxu0 0
        %1982 = vmatpush2.bf16.msra.mxu0 0
        %1983 = vmatprep.subr.bf16.mxu0 0
        %1984 = vmatpush2.bf16.msra.mxu0 0
        %1985 = vmatprep.subr.bf16.mxu0 0
        %1986 = vmatpush2.bf16.msra.mxu0 0
        %1987 = vmatprep.subr.bf16.mxu0 0
        %1988 = vmatpush2.bf16.msra.mxu0 0
        %1989 = vmatprep.subr.bf16.mxu0 0
        %1990 = vmatpush2.bf16.msra.mxu0 0
        %1991 = vmatprep.subr.bf16.mxu0 0
        %1992 = vmatpush2.bf16.msra.mxu0 0
        %1993 = vmatprep.mubr.bf16.mxu0 0
        %1994 = vmatmul.mubr.bf16.gmra.mxu0 %v1959
        %v1995 = vpop.f32.mrf.mxu0
        %v1996 = vadd.f32 0.0, %v1995
        %v1997 = vpop.f32.mrf.mxu0
        %v1998 = vpop.f32.mrf.mxu0
        %v1999 = vpop.f32.mrf.mxu0
        %2000 = vdwg.mxu0
        %v2001 = vcombine.low %v1653, %v1751
        %v2002 = vcombine.high %v1653, %v1751
        %v2004 = vunpack.c.l.s4 1983009808
        %v2005 = vunpack.c.0.s8 %v2004
        %v2006 = vlaneseq
        %v2007 = vshrl.u32 %v2006, 7
        %v2008 = vsub.s32 %v2005, %v2007
        %v2009 = vrot.slane %v2001, %v2008
        %v2011 = vunpack.c.l.s4 1983009808
        %v2012 = vunpack.c.0.s8 %v2011
        %v2013 = vlaneseq
        %v2014 = vshrl.u32 %v2013, 7
        %v2015 = vsub.s32 %v2012, %v2014
        %v2016 = vrot.slane %v2002, %v2015
        %v2017 = vcombine.low %v1702, %v1800
        %v2018 = vcombine.high %v1702, %v1800
        %v2020 = vunpack.c.l.s4 1983009808
        %v2021 = vunpack.c.0.s8 %v2020
        %v2022 = vlaneseq
        %v2023 = vshrl.u32 %v2022, 7
        %v2024 = vsub.s32 %v2021, %v2023
        %v2025 = vrot.slane %v2017, %v2024
        %v2027 = vunpack.c.l.s4 1983009808
        %v2028 = vunpack.c.0.s8 %v2027
        %v2029 = vlaneseq
        %v2030 = vshrl.u32 %v2029, 7
        %v2031 = vsub.s32 %v2028, %v2030
        %v2032 = vrot.slane %v2018, %v2031
        %v2033 = vcombine.low %v1849, %v1947
        %v2034 = vcombine.high %v1849, %v1947
        %v2036 = vunpack.c.l.s4 1983009808
        %v2037 = vunpack.c.0.s8 %v2036
        %v2038 = vlaneseq
        %v2039 = vshrl.u32 %v2038, 7
        %v2040 = vsub.s32 %v2037, %v2039
        %v2041 = vrot.slane %v2033, %v2040
        %v2043 = vunpack.c.l.s4 1983009808
        %v2044 = vunpack.c.0.s8 %v2043
        %v2045 = vlaneseq
        %v2046 = vshrl.u32 %v2045, 7
        %v2047 = vsub.s32 %v2044, %v2046
        %v2048 = vrot.slane %v2034, %v2047
        %v2049 = vcombine.low %v1898, %v1996
        %v2050 = vcombine.high %v1898, %v1996
        %v2052 = vunpack.c.l.s4 1983009808
        %v2053 = vunpack.c.0.s8 %v2052
        %v2054 = vlaneseq
        %v2055 = vshrl.u32 %v2054, 7
        %v2056 = vsub.s32 %v2053, %v2055
        %v2057 = vrot.slane %v2049, %v2056
        %v2059 = vunpack.c.l.s4 1983009808
        %v2060 = vunpack.c.0.s8 %v2059
        %v2061 = vlaneseq
        %v2062 = vshrl.u32 %v2061, 7
        %v2063 = vsub.s32 %v2060, %v2062
        %v2064 = vrot.slane %v2050, %v2063
        %v2065 = vcombine.low %v2009, %v2025
        %v2066 = vcombine.high %v2009, %v2025
        %v2068 = vunpack.c.l.s4 1934713408
        %v2069 = vunpack.c.0.s8 %v2068
        %v2070 = vlaneseq
        %v2071 = vshrl.u32 %v2070, 7
        %v2072 = vsub.s32 %v2069, %v2071
        %v2073 = vrot.slane %v2065, %v2072
        %v2075 = vunpack.c.l.s4 1934713408
        %v2076 = vunpack.c.0.s8 %v2075
        %v2077 = vlaneseq
        %v2078 = vshrl.u32 %v2077, 7
        %v2079 = vsub.s32 %v2076, %v2078
        %v2080 = vrot.slane %v2066, %v2079
        %v2081 = vcombine.low %v2016, %v2032
        %v2082 = vcombine.high %v2016, %v2032
        %v2084 = vunpack.c.l.s4 1934713408
        %v2085 = vunpack.c.0.s8 %v2084
        %v2086 = vlaneseq
        %v2087 = vshrl.u32 %v2086, 7
        %v2088 = vsub.s32 %v2085, %v2087
        %v2089 = vrot.slane %v2081, %v2088
        %v2091 = vunpack.c.l.s4 1934713408
        %v2092 = vunpack.c.0.s8 %v2091
        %v2093 = vlaneseq
        %v2094 = vshrl.u32 %v2093, 7
        %v2095 = vsub.s32 %v2092, %v2094
        %v2096 = vrot.slane %v2082, %v2095
        %v2097 = vcombine.low %v2041, %v2057
        %v2098 = vcombine.high %v2041, %v2057
        %v2100 = vunpack.c.l.s4 1934713408
        %v2101 = vunpack.c.0.s8 %v2100
        %v2102 = vlaneseq
        %v2103 = vshrl.u32 %v2102, 7
        %v2104 = vsub.s32 %v2101, %v2103
        %v2105 = vrot.slane %v2097, %v2104
        %v2107 = vunpack.c.l.s4 1934713408
        %v2108 = vunpack.c.0.s8 %v2107
        %v2109 = vlaneseq
        %v2110 = vshrl.u32 %v2109, 7
        %v2111 = vsub.s32 %v2108, %v2110
        %v2112 = vrot.slane %v2098, %v2111
        %v2113 = vcombine.low %v2048, %v2064
        %v2114 = vcombine.high %v2048, %v2064
        %v2116 = vunpack.c.l.s4 1934713408
        %v2117 = vunpack.c.0.s8 %v2116
        %v2118 = vlaneseq
        %v2119 = vshrl.u32 %v2118, 7
        %v2120 = vsub.s32 %v2117, %v2119
        %v2121 = vrot.slane %v2113, %v2120
        %v2123 = vunpack.c.l.s4 1934713408
        %v2124 = vunpack.c.0.s8 %v2123
        %v2125 = vlaneseq
        %v2126 = vshrl.u32 %v2125, 7
        %v2127 = vsub.s32 %v2124, %v2126
        %v2128 = vrot.slane %v2114, %v2127
        %v2129 = vcombine.low %v2073, %v2105
        %v2130 = vcombine.high %v2073, %v2105
        %v2131 = vcombine.low %v2080, %v2112
        %v2132 = vcombine.high %v2080, %v2112
        %v2133 = vcombine.low %v2089, %v2121
        %v2134 = vcombine.high %v2089, %v2121
        %v2135 = vcombine.low %v2096, %v2128
        %v2136 = vcombine.high %v2096, %v2128
        %v2137 = vcombine.low %v2129, %v2131
        %v2138 = vcombine.high %v2129, %v2131
        %v2140 = vunpack.c.l.s4 1983009808
        %v2141 = vunpack.c.0.s8 %v2140
        %v2142 = vlaneseq
        %v2143 = vshrl.u32 %v2142, 7
        %v2144 = vsub.s32 %v2141, %v2143
        %v2145 = vrot.slane %v2137, %v2144
        %v2147 = vunpack.c.l.s4 1983009808
        %v2148 = vunpack.c.0.s8 %v2147
        %v2149 = vlaneseq
        %v2150 = vshrl.u32 %v2149, 7
        %v2151 = vsub.s32 %v2148, %v2150
        %v2152 = vrot.slane %v2138, %v2151
        %v2153 = vcombine.low %v2130, %v2132
        %v2154 = vcombine.high %v2130, %v2132
        %v2156 = vunpack.c.l.s4 1983009808
        %v2157 = vunpack.c.0.s8 %v2156
        %v2158 = vlaneseq
        %v2159 = vshrl.u32 %v2158, 7
        %v2160 = vsub.s32 %v2157, %v2159
        %v2161 = vrot.slane %v2153, %v2160
        %v2163 = vunpack.c.l.s4 1983009808
        %v2164 = vunpack.c.0.s8 %v2163
        %v2165 = vlaneseq
        %v2166 = vshrl.u32 %v2165, 7
        %v2167 = vsub.s32 %v2164, %v2166
        %v2168 = vrot.slane %v2154, %v2167
        %v2169 = vcombine.low %v2133, %v2135
        %v2170 = vcombine.high %v2133, %v2135
        %v2172 = vunpack.c.l.s4 1983009808
        %v2173 = vunpack.c.0.s8 %v2172
        %v2174 = vlaneseq
        %v2175 = vshrl.u32 %v2174, 7
        %v2176 = vsub.s32 %v2173, %v2175
        %v2177 = vrot.slane %v2169, %v2176
        %v2179 = vunpack.c.l.s4 1983009808
        %v2180 = vunpack.c.0.s8 %v2179
        %v2181 = vlaneseq
        %v2182 = vshrl.u32 %v2181, 7
        %v2183 = vsub.s32 %v2180, %v2182
        %v2184 = vrot.slane %v2170, %v2183
        %v2185 = vcombine.low %v2134, %v2136
        %v2186 = vcombine.high %v2134, %v2136
        %v2188 = vunpack.c.l.s4 1983009808
        %v2189 = vunpack.c.0.s8 %v2188
        %v2190 = vlaneseq
        %v2191 = vshrl.u32 %v2190, 7
        %v2192 = vsub.s32 %v2189, %v2191
        %v2193 = vrot.slane %v2185, %v2192
        %v2195 = vunpack.c.l.s4 1983009808
        %v2196 = vunpack.c.0.s8 %v2195
        %v2197 = vlaneseq
        %v2198 = vshrl.u32 %v2197, 7
        %v2199 = vsub.s32 %v2196, %v2198
        %v2200 = vrot.slane %v2186, %v2199
        %v2201 = vcombine.low %v2145, %v2161
        %v2202 = vcombine.high %v2145, %v2161
        %v2204 = vunpack.c.l.s4 1934713408
        %v2205 = vunpack.c.0.s8 %v2204
        %v2206 = vlaneseq
        %v2207 = vshrl.u32 %v2206, 7
        %v2208 = vsub.s32 %v2205, %v2207
        %v2209 = vrot.slane %v2201, %v2208
        %v2211 = vunpack.c.l.s4 1934713408
        %v2212 = vunpack.c.0.s8 %v2211
        %v2213 = vlaneseq
        %v2214 = vshrl.u32 %v2213, 7
        %v2215 = vsub.s32 %v2212, %v2214
        %v2216 = vrot.slane %v2202, %v2215
        %v2217 = vcombine.low %v2152, %v2168
        %v2218 = vcombine.high %v2152, %v2168
        %v2220 = vunpack.c.l.s4 1934713408
        %v2221 = vunpack.c.0.s8 %v2220
        %v2222 = vlaneseq
        %v2223 = vshrl.u32 %v2222, 7
        %v2224 = vsub.s32 %v2221, %v2223
        %v2225 = vrot.slane %v2217, %v2224
        %v2227 = vunpack.c.l.s4 1934713408
        %v2228 = vunpack.c.0.s8 %v2227
        %v2229 = vlaneseq
        %v2230 = vshrl.u32 %v2229, 7
        %v2231 = vsub.s32 %v2228, %v2230
        %v2232 = vrot.slane %v2218, %v2231
        %v2233 = vcombine.low %v2177, %v2193
        %v2234 = vcombine.high %v2177, %v2193
        %v2236 = vunpack.c.l.s4 1934713408
        %v2237 = vunpack.c.0.s8 %v2236
        %v2238 = vlaneseq
        %v2239 = vshrl.u32 %v2238, 7
        %v2240 = vsub.s32 %v2237, %v2239
        %v2241 = vrot.slane %v2233, %v2240
        %v2243 = vunpack.c.l.s4 1934713408
        %v2244 = vunpack.c.0.s8 %v2243
        %v2245 = vlaneseq
        %v2246 = vshrl.u32 %v2245, 7
        %v2247 = vsub.s32 %v2244, %v2246
        %v2248 = vrot.slane %v2234, %v2247
        %v2249 = vcombine.low %v2184, %v2200
        %v2250 = vcombine.high %v2184, %v2200
        %v2252 = vunpack.c.l.s4 1934713408
        %v2253 = vunpack.c.0.s8 %v2252
        %v2254 = vlaneseq
        %v2255 = vshrl.u32 %v2254, 7
        %v2256 = vsub.s32 %v2253, %v2255
        %v2257 = vrot.slane %v2249, %v2256
        %v2259 = vunpack.c.l.s4 1934713408
        %v2260 = vunpack.c.0.s8 %v2259
        %v2261 = vlaneseq
        %v2262 = vshrl.u32 %v2261, 7
        %v2263 = vsub.s32 %v2260, %v2262
        %v2264 = vrot.slane %v2250, %v2263
        %v2265 = vcombine.low %v2209, %v2241
        %v2266 = vcombine.high %v2209, %v2241
        %v2267 = vcombine.low %v2216, %v2248
        %v2268 = vcombine.high %v2216, %v2248
        %v2269 = vcombine.low %v2225, %v2257
        %v2270 = vcombine.high %v2225, %v2257
        %v2271 = vcombine.low %v2232, %v2264
        %v2272 = vcombine.high %v2232, %v2264
        %2274 = vrot.lane.b32.xlu0 %v2266, 16
        %v2275 = vpop.permute.xlu0 %2274
        %2278 = vrot.lane.b32.xlu0 %v2267, 32
        %v2279 = vpop.permute.xlu0 %2278
        %2282 = vrot.lane.b32.xlu0 %v2268, 48
        %v2283 = vpop.permute.xlu0 %2282
        %2286 = vrot.lane.b32.xlu0 %v2269, 64
        %v2287 = vpop.permute.xlu0 %2286
        %2290 = vrot.lane.b32.xlu0 %v2270, 80
        %v2291 = vpop.permute.xlu0 %2290
        %2294 = vrot.lane.b32.xlu0 %v2271, 96
        %v2295 = vpop.permute.xlu0 %2294
        %2298 = vrot.lane.b32.xlu0 %v2272, 112
        %v2299 = vpop.permute.xlu0 %2298
        %v2301 = vsel %vm1109, %v2265, %v2275
        %vm2302 = vcmask 261120
        %v2303 = vsel %vm2302, %v2301, %v2279
        %vm2304 = vcmask 392192
        %v2305 = vsel %vm2304, %v2303, %v2283
        %vm2306 = vcmask 523264
        %v2307 = vsel %vm2306, %v2305, %v2287
        %vm2308 = vcmask 654336
        %v2309 = vsel %vm2308, %v2307, %v2291
        %vm2310 = vcmask 785408
        %v2311 = vsel %vm2310, %v2309, %v2295
        %vm2312 = vcmask 916480
        %v2313 = vsel %vm2312, %v2311, %v2299
        %v2314 = vpack.c.bf16 %v2313, %v2313
        %v2315 = vld [vmem:[#allocation10] sm:$0xf]
        %v2316 = vld [vmem:[#allocation10 + $0x4] sm:$0xf]
        %v2317 = vld [vmem:[#allocation10 + $0x8] sm:$0xf]
        %v2318 = vld [vmem:[#allocation10 + $0xc] sm:$0xf]
        %v2319 = vld [vmem:[#allocation10 + $0x10] sm:$0xf]
        %v2320 = vld [vmem:[#allocation10 + $0x14] sm:$0xf]
        %v2321 = vld [vmem:[#allocation10 + $0x18] sm:$0xf]
        %v2322 = vld [vmem:[#allocation10 + $0x1c] sm:$0xf]
        %v2323 = vld [vmem:[#allocation10 + $0x20] sm:$0xf]
        %v2324 = vld [vmem:[#allocation10 + $0x24] sm:$0xf]
        %v2325 = vld [vmem:[#allocation10 + $0x28] sm:$0xf]
        %v2326 = vld [vmem:[#allocation10 + $0x2c] sm:$0xf]
        %v2327 = vld [vmem:[#allocation10 + $0x30] sm:$0xf]
        %v2328 = vld [vmem:[#allocation10 + $0x34] sm:$0xf]
        %v2329 = vld [vmem:[#allocation10 + $0x38] sm:$0xf]
        %v2330 = vld [vmem:[#allocation10 + $0x3c] sm:$0xf]
        %v2331 = vld [vmem:[%s5] sm:$0x1]
        %v2333 = vlaneseq
        %v2334 = vshrl.u32 %v2333, 7
        %v2335 = vsub.s32 0, %v2334
        %v2336 = vrot.slane %v2331, %v2335
        %v2354 = vunpack.c.l.b16 %v2315
        %v2355 = vunpack.c.l.b16 %v2316
        %v2356 = vunpack.c.l.b16 %v2317
        %v2357 = vunpack.c.l.b16 %v2318
        %v2358 = vunpack.c.l.b16 %v2319
        %v2359 = vunpack.c.l.b16 %v2320
        %v2360 = vunpack.c.l.b16 %v2321
        %v2361 = vunpack.c.l.b16 %v2322
        %v2362 = vunpack.c.l.b16 %v2323
        %v2363 = vunpack.c.l.b16 %v2324
        %v2364 = vunpack.c.l.b16 %v2325
        %v2365 = vunpack.c.l.b16 %v2326
        %v2366 = vunpack.c.l.b16 %v2327
        %v2367 = vunpack.c.l.b16 %v2328
        %v2368 = vunpack.c.l.b16 %v2329
        %v2369 = vunpack.c.l.b16 %v2330
        %v2370 = vpack.c.b16 %v2355, %v2354
        %v2371 = vpack.c.b16 %v2357, %v2356
        %v2372 = vpack.c.b16 %v2359, %v2358
        %v2373 = vpack.c.b16 %v2361, %v2360
        %v2374 = vpack.c.b16 %v2363, %v2362
        %v2375 = vpack.c.b16 %v2365, %v2364
        %v2376 = vpack.c.b16 %v2367, %v2366
        %v2377 = vpack.c.b16 %v2369, %v2368
        %2386 = vmatprep.subr.bf16.mxu0 0
        %2387 = vmatpush1.bf16.msra.mxu0 %v2377
        %2388 = vmatprep.subr.bf16.mxu0 0
        %2389 = vmatpush1.bf16.msra.mxu0 %v2376
        %2390 = vmatprep.subr.bf16.mxu0 0
        %2391 = vmatpush1.bf16.msra.mxu0 %v2375
        %2392 = vmatprep.subr.bf16.mxu0 0
        %2393 = vmatpush1.bf16.msra.mxu0 %v2374
        %2394 = vmatprep.subr.bf16.mxu0 0
        %2395 = vmatpush1.bf16.msra.mxu0 %v2373
        %2396 = vmatprep.subr.bf16.mxu0 0
        %2397 = vmatpush1.bf16.msra.mxu0 %v2372
        %2398 = vmatprep.subr.bf16.mxu0 0
        %2399 = vmatpush1.bf16.msra.mxu0 %v2371
        %2400 = vmatprep.subr.bf16.mxu0 0
        %2401 = vmatpush1.bf16.msra.mxu0 %v2370
        %2402 = vmatprep.subr.bf16.mxu0 0
        %2403 = vmatpush2.bf16.msra.mxu0 0
        %2404 = vmatprep.subr.bf16.mxu0 0
        %2405 = vmatpush2.bf16.msra.mxu0 0
        %2406 = vmatprep.subr.bf16.mxu0 0
        %2407 = vmatpush2.bf16.msra.mxu0 0
        %2408 = vmatprep.subr.bf16.mxu0 0
        %2409 = vmatpush2.bf16.msra.mxu0 0
        %2410 = vmatprep.subr.bf16.mxu0 0
        %2411 = vmatpush2.bf16.msra.mxu0 0
        %2412 = vmatprep.subr.bf16.mxu0 0
        %2413 = vmatpush2.bf16.msra.mxu0 0
        %2414 = vmatprep.subr.bf16.mxu0 0
        %2415 = vmatpush2.bf16.msra.mxu0 0
        %2416 = vmatprep.subr.bf16.mxu0 0
        %2417 = vmatpush2.bf16.msra.mxu0 0
        %2418 = vmatprep.mubr.bf16.mxu0 0
        %2419 = vmatmul.mubr.bf16.gmra.mxu0 %v2314
        %v2420 = vpop.f32.mrf.mxu0
        %v2421 = vadd.f32 %v2336, %v2420
        %v2422 = vpop.f32.mrf.mxu0
        %v2423 = vpop.f32.mrf.mxu0
        %v2424 = vpop.f32.mrf.mxu0
        %2425 = vdwg.mxu0
        %v2426 = vadd.f32 %v636, %v2421
        %v2427 = vld [vmem:[%s8] sm:$0x1]
        %v2428 = vld [vmem:[%s9] sm:$0x1]
        %2429 = vadd.xlane.f32.xlu0 %v2426
        %v2430 = vpop.xlane.xlu0 %2429
        %v2431 = vmul.f32 %v2430, %v641
        %v2432 = vsub.f32 %v2426, %v2431
        %v2433 = vmul.f32 %v2432, %v2432
        %2434 = vadd.xlane.f32.xlu0 %v2433
        %v2435 = vpop.xlane.xlu0 %2434
        %v2436 = vmul.f32 %v2435, %v641
        %v2437 = vadd.f32 %v2436, 1e-05
        %v2438 = vrsqrt.pop %v2437
        %v2439 = vmul.f32 %v2432, %v2438
        %v2441 = vlaneseq
        %v2442 = vshrl.u32 %v2441, 7
        %v2443 = vsub.s32 0, %v2442
        %v2444 = vrot.slane %v2427, %v2443
        %v2446 = vmul.f32 %v2439, %v2444
        %v2448 = vlaneseq
        %v2449 = vshrl.u32 %v2448, 7
        %v2450 = vsub.s32 0, %v2449
        %v2451 = vrot.slane %v2428, %v2450
        %v2453 = vadd.f32 %v2446, %v2451
        %v2454 = vpack.c.bf16 %v2453, %v2453
        %v2455 = vld [vmem:[#allocation11] sm:$0xff]
        %v2456 = vld [vmem:[#allocation11 + $0x8] sm:$0xff]
        %v2457 = vld [vmem:[#allocation11 + $0x10] sm:$0xff]
        %v2458 = vld [vmem:[#allocation11 + $0x18] sm:$0xff]
        %v2459 = vld [vmem:[#allocation11 + $0x20] sm:$0xff]
        %v2460 = vld [vmem:[#allocation11 + $0x28] sm:$0xff]
        %v2461 = vld [vmem:[#allocation11 + $0x30] sm:$0xff]
        %v2462 = vld [vmem:[#allocation11 + $0x38] sm:$0xff]
        %v2463 = vld [vmem:[#allocation11 + $0x40] sm:$0xff]
        %v2464 = vld [vmem:[#allocation11 + $0x48] sm:$0xff]
        %v2465 = vld [vmem:[#allocation11 + $0x50] sm:$0xff]
        %v2466 = vld [vmem:[#allocation11 + $0x58] sm:$0xff]
        %v2467 = vld [vmem:[#allocation11 + $0x60] sm:$0xff]
        %v2468 = vld [vmem:[#allocation11 + $0x68] sm:$0xff]
        %v2469 = vld [vmem:[#allocation11 + $0x70] sm:$0xff]
        %v2470 = vld [vmem:[#allocation11 + $0x78] sm:$0xff]
        %v2471 = vld [vmem:[#allocation11 + $0x80] sm:$0xff]
        %v2472 = vld [vmem:[#allocation11 + $0x88] sm:$0xff]
        %v2473 = vld [vmem:[#allocation11 + $0x90] sm:$0xff]
        %v2474 = vld [vmem:[#allocation11 + $0x98] sm:$0xff]
        %v2475 = vld [vmem:[#allocation11 + $0xa0] sm:$0xff]
        %v2476 = vld [vmem:[#allocation11 + $0xa8] sm:$0xff]
        %v2477 = vld [vmem:[#allocation11 + $0xb0] sm:$0xff]
        %v2478 = vld [vmem:[#allocation11 + $0xb8] sm:$0xff]
        %v2479 = vld [vmem:[#allocation11 + $0xc0] sm:$0xff]
        %v2480 = vld [vmem:[#allocation11 + $0xc8] sm:$0xff]
        %v2481 = vld [vmem:[#allocation11 + $0xd0] sm:$0xff]
        %v2482 = vld [vmem:[#allocation11 + $0xd8] sm:$0xff]
        %v2483 = vld [vmem:[#allocation11 + $0xe0] sm:$0xff]
        %v2484 = vld [vmem:[#allocation11 + $0xe8] sm:$0xff]
        %v2485 = vld [vmem:[#allocation11 + $0xf0] sm:$0xff]
        %v2486 = vld [vmem:[#allocation11 + $0xf8] sm:$0xff]
        %v2487 = vld [vmem:[%s11] sm:$0xf]
        %v2489 = vlaneseq
        %v2490 = vshrl.u32 %v2489, 7
        %v2491 = vsub.s32 0, %v2490
        %v2492 = vrot.slane %v2487, %v2491
        %v2493 = vlaneseq
        %v2494 = vshrl.u32 %v2493, 7
        %v2495 = vsub.s32 1, %v2494
        %v2496 = vrot.slane %v2487, %v2495
        %v2497 = vlaneseq
        %v2498 = vshrl.u32 %v2497, 7
        %v2499 = vsub.s32 2, %v2498
        %v2500 = vrot.slane %v2487, %v2499
        %v2501 = vlaneseq
        %v2502 = vshrl.u32 %v2501, 7
        %v2503 = vsub.s32 3, %v2502
        %v2504 = vrot.slane %v2487, %v2503
        %v2541 = vunpack.c.l.b16 %v2455
        %v2542 = vunpack.c.h.b16 %v2455
        %v2543 = vunpack.c.l.b16 %v2456
        %v2544 = vunpack.c.h.b16 %v2456
        %v2545 = vunpack.c.l.b16 %v2457
        %v2546 = vunpack.c.h.b16 %v2457
        %v2547 = vunpack.c.l.b16 %v2458
        %v2548 = vunpack.c.h.b16 %v2458
        %v2549 = vunpack.c.l.b16 %v2459
        %v2550 = vunpack.c.h.b16 %v2459
        %v2551 = vunpack.c.l.b16 %v2460
        %v2552 = vunpack.c.h.b16 %v2460
        %v2553 = vunpack.c.l.b16 %v2461
        %v2554 = vunpack.c.h.b16 %v2461
        %v2555 = vunpack.c.l.b16 %v2462
        %v2556 = vunpack.c.h.b16 %v2462
        %v2557 = vunpack.c.l.b16 %v2463
        %v2558 = vunpack.c.h.b16 %v2463
        %v2559 = vunpack.c.l.b16 %v2464
        %v2560 = vunpack.c.h.b16 %v2464
        %v2561 = vunpack.c.l.b16 %v2465
        %v2562 = vunpack.c.h.b16 %v2465
        %v2563 = vunpack.c.l.b16 %v2466
        %v2564 = vunpack.c.h.b16 %v2466
        %v2565 = vunpack.c.l.b16 %v2467
        %v2566 = vunpack.c.h.b16 %v2467
        %v2567 = vunpack.c.l.b16 %v2468
        %v2568 = vunpack.c.h.b16 %v2468
        %v2569 = vunpack.c.l.b16 %v2469
        %v2570 = vunpack.c.h.b16 %v2469
        %v2571 = vunpack.c.l.b16 %v2470
        %v2572 = vunpack.c.h.b16 %v2470
        %v2573 = vunpack.c.l.b16 %v2471
        %v2574 = vunpack.c.h.b16 %v2471
        %v2575 = vunpack.c.l.b16 %v2472
        %v2576 = vunpack.c.h.b16 %v2472
        %v2577 = vunpack.c.l.b16 %v2473
        %v2578 = vunpack.c.h.b16 %v2473
        %v2579 = vunpack.c.l.b16 %v2474
        %v2580 = vunpack.c.h.b16 %v2474
        %v2581 = vunpack.c.l.b16 %v2475
        %v2582 = vunpack.c.h.b16 %v2475
        %v2583 = vunpack.c.l.b16 %v2476
        %v2584 = vunpack.c.h.b16 %v2476
        %v2585 = vunpack.c.l.b16 %v2477
        %v2586 = vunpack.c.h.b16 %v2477
        %v2587 = vunpack.c.l.b16 %v2478
        %v2588 = vunpack.c.h.b16 %v2478
        %v2589 = vunpack.c.l.b16 %v2479
        %v2590 = vunpack.c.h.b16 %v2479
        %v2591 = vunpack.c.l.b16 %v2480
        %v2592 = vunpack.c.h.b16 %v2480
        %v2593 = vunpack.c.l.b16 %v2481
        %v2594 = vunpack.c.h.b16 %v2481
        %v2595 = vunpack.c.l.b16 %v2482
        %v2596 = vunpack.c.h.b16 %v2482
        %v2597 = vunpack.c.l.b16 %v2483
        %v2598 = vunpack.c.h.b16 %v2483
        %v2599 = vunpack.c.l.b16 %v2484
        %v2600 = vunpack.c.h.b16 %v2484
        %v2601 = vunpack.c.l.b16 %v2485
        %v2602 = vunpack.c.h.b16 %v2485
        %v2603 = vunpack.c.l.b16 %v2486
        %v2604 = vunpack.c.h.b16 %v2486
        %v2605 = vpack.c.b16 %v2545, %v2541
        %v2606 = vpack.c.b16 %v2546, %v2542
        %v2607 = vpack.c.b16 %v2547, %v2543
        %v2608 = vpack.c.b16 %v2548, %v2544
        %v2609 = vpack.c.b16 %v2553, %v2549
        %v2610 = vpack.c.b16 %v2554, %v2550
        %v2611 = vpack.c.b16 %v2555, %v2551
        %v2612 = vpack.c.b16 %v2556, %v2552
        %v2613 = vpack.c.b16 %v2561, %v2557
        %v2614 = vpack.c.b16 %v2562, %v2558
        %v2615 = vpack.c.b16 %v2563, %v2559
        %v2616 = vpack.c.b16 %v2564, %v2560
        %v2617 = vpack.c.b16 %v2569, %v2565
        %v2618 = vpack.c.b16 %v2570, %v2566
        %v2619 = vpack.c.b16 %v2571, %v2567
        %v2620 = vpack.c.b16 %v2572, %v2568
        %v2621 = vpack.c.b16 %v2577, %v2573
        %v2622 = vpack.c.b16 %v2578, %v2574
        %v2623 = vpack.c.b16 %v2579, %v2575
        %v2624 = vpack.c.b16 %v2580, %v2576
        %v2625 = vpack.c.b16 %v2585, %v2581
        %v2626 = vpack.c.b16 %v2586, %v2582
        %v2627 = vpack.c.b16 %v2587, %v2583
        %v2628 = vpack.c.b16 %v2588, %v2584
        %v2629 = vpack.c.b16 %v2593, %v2589
        %v2630 = vpack.c.b16 %v2594, %v2590
        %v2631 = vpack.c.b16 %v2595, %v2591
        %v2632 = vpack.c.b16 %v2596, %v2592
        %v2633 = vpack.c.b16 %v2601, %v2597
        %v2634 = vpack.c.b16 %v2602, %v2598
        %v2635 = vpack.c.b16 %v2603, %v2599
        %v2636 = vpack.c.b16 %v2604, %v2600
        %2669 = vmatprep.subr.bf16.mxu0 %v2634
        %2670 = vmatpush1.bf16.msra.mxu0 %v2633
        %2671 = vmatprep.subr.bf16.mxu0 %v2630
        %2672 = vmatpush1.bf16.msra.mxu0 %v2629
        %2673 = vmatprep.subr.bf16.mxu0 %v2626
        %2674 = vmatpush1.bf16.msra.mxu0 %v2625
        %2675 = vmatprep.subr.bf16.mxu0 %v2622
        %2676 = vmatpush1.bf16.msra.mxu0 %v2621
        %2677 = vmatprep.subr.bf16.mxu0 %v2618
        %2678 = vmatpush1.bf16.msra.mxu0 %v2617
        %2679 = vmatprep.subr.bf16.mxu0 %v2614
        %2680 = vmatpush1.bf16.msra.mxu0 %v2613
        %2681 = vmatprep.subr.bf16.mxu0 %v2610
        %2682 = vmatpush1.bf16.msra.mxu0 %v2609
        %2683 = vmatprep.subr.bf16.mxu0 %v2606
        %2684 = vmatpush1.bf16.msra.mxu0 %v2605
        %2685 = vmatprep.subr.bf16.mxu0 0
        %2686 = vmatpush2.bf16.msra.mxu0 0
        %2687 = vmatprep.subr.bf16.mxu0 0
        %2688 = vmatpush2.bf16.msra.mxu0 0
        %2689 = vmatprep.subr.bf16.mxu0 0
        %2690 = vmatpush2.bf16.msra.mxu0 0
        %2691 = vmatprep.subr.bf16.mxu0 0
        %2692 = vmatpush2.bf16.msra.mxu0 0
        %2693 = vmatprep.subr.bf16.mxu0 0
        %2694 = vmatpush2.bf16.msra.mxu0 0
        %2695 = vmatprep.subr.bf16.mxu0 0
        %2696 = vmatpush2.bf16.msra.mxu0 0
        %2697 = vmatprep.subr.bf16.mxu0 0
        %2698 = vmatpush2.bf16.msra.mxu0 0
        %2699 = vmatprep.subr.bf16.mxu0 0
        %2700 = vmatpush2.bf16.msra.mxu0 0
        %2701 = vmatprep.mubr.bf16.mxu0 0
        %2702 = vmatmul.mubr.bf16.gmra.mxu0 %v2454
        %v2703 = vpop.f32.mrf.mxu0
        %v2704 = vadd.f32 %v2492, %v2703
        %v2705 = vpop.f32.mrf.mxu0
        %v2706 = vadd.f32 %v2496, %v2705
        %v2707 = vpop.f32.mrf.mxu0
        %v2708 = vpop.f32.mrf.mxu0
        %2709 = vdwg.mxu0
        %2710 = vmatprep.subr.bf16.mxu0 %v2636
        %2711 = vmatpush1.bf16.msra.mxu0 %v2635
        %2712 = vmatprep.subr.bf16.mxu0 %v2632
        %2713 = vmatpush1.bf16.msra.mxu0 %v2631
        %2714 = vmatprep.subr.bf16.mxu0 %v2628
        %2715 = vmatpush1.bf16.msra.mxu0 %v2627
        %2716 = vmatprep.subr.bf16.mxu0 %v2624
        %2717 = vmatpush1.bf16.msra.mxu0 %v2623
        %2718 = vmatprep.subr.bf16.mxu0 %v2620
        %2719 = vmatpush1.bf16.msra.mxu0 %v2619
        %2720 = vmatprep.subr.bf16.mxu0 %v2616
        %2721 = vmatpush1.bf16.msra.mxu0 %v2615
        %2722 = vmatprep.subr.bf16.mxu0 %v2612
        %2723 = vmatpush1.bf16.msra.mxu0 %v2611
        %2724 = vmatprep.subr.bf16.mxu0 %v2608
        %2725 = vmatpush1.bf16.msra.mxu0 %v2607
        %2726 = vmatprep.subr.bf16.mxu0 0
        %2727 = vmatpush2.bf16.msra.mxu0 0
        %2728 = vmatprep.subr.bf16.mxu0 0
        %2729 = vmatpush2.bf16.msra.mxu0 0
        %2730 = vmatprep.subr.bf16.mxu0 0
        %2731 = vmatpush2.bf16.msra.mxu0 0
        %2732 = vmatprep.subr.bf16.mxu0 0
        %2733 = vmatpush2.bf16.msra.mxu0 0
        %2734 = vmatprep.subr.bf16.mxu0 0
        %2735 = vmatpush2.bf16.msra.mxu0 0
        %2736 = vmatprep.subr.bf16.mxu0 0
        %2737 = vmatpush2.bf16.msra.mxu0 0
        %2738 = vmatprep.subr.bf16.mxu0 0
        %2739 = vmatpush2.bf16.msra.mxu0 0
        %2740 = vmatprep.subr.bf16.mxu0 0
        %2741 = vmatpush2.bf16.msra.mxu0 0
        %2742 = vmatprep.mubr.bf16.mxu0 0
        %2743 = vmatmul.mubr.bf16.gmra.mxu0 %v2454
        %v2744 = vpop.f32.mrf.mxu0
        %v2745 = vadd.f32 %v2500, %v2744
        %v2746 = vpop.f32.mrf.mxu0
        %v2747 = vadd.f32 %v2504, %v2746
        %v2748 = vpop.f32.mrf.mxu0
        %v2749 = vpop.f32.mrf.mxu0
        %2750 = vdwg.mxu0
        %v2751 = vmul.f32 %v2704, 0.5
        %v2752 = vmul.f32 %v2706, 0.5
        %v2753 = vmul.f32 %v2745, 0.5
        %v2754 = vmul.f32 %v2747, 0.5
        %v2755 = vmul.f32 %v2704, 0.044715
        %v2756 = vmul.f32 %v2706, 0.044715
        %v2757 = vmul.f32 %v2745, 0.044715
        %v2758 = vmul.f32 %v2747, 0.044715
        %v2759 = vmul.f32 %v2755, %v2704
        %v2760 = vmul.f32 %v2756, %v2706
        %v2761 = vmul.f32 %v2757, %v2745
        %v2762 = vmul.f32 %v2758, %v2747
        %v2763 = vmul.f32 %v2759, %v2704
        %v2764 = vmul.f32 %v2760, %v2706
        %v2765 = vmul.f32 %v2761, %v2745
        %v2766 = vmul.f32 %v2762, %v2747
        %v2767 = vadd.f32 %v2704, %v2763
        %v2768 = vadd.f32 %v2706, %v2764
        %v2769 = vadd.f32 %v2745, %v2765
        %v2770 = vadd.f32 %v2747, %v2766
        %v2771 = vmul.f32 %v2767, 0.7978846
        %v2772 = vmul.f32 %v2768, 0.7978846
        %v2773 = vmul.f32 %v2769, 0.7978846
        %v2774 = vmul.f32 %v2770, 0.7978846
        %v2775 = vtanh.pop %v2771
        %v2776 = vtanh.pop %v2772
        %v2777 = vtanh.pop %v2773
        %v2778 = vtanh.pop %v2774
        %v2779 = vadd.f32 %v2775, 1.0
        %v2780 = vadd.f32 %v2776, 1.0
        %v2781 = vadd.f32 %v2777, 1.0
        %v2782 = vadd.f32 %v2778, 1.0
        %v2783 = vmul.f32 %v2751, %v2779
        %v2784 = vmul.f32 %v2752, %v2780
        %v2785 = vmul.f32 %v2753, %v2781
        %v2786 = vmul.f32 %v2754, %v2782
        %v2787 = vpack.c.bf16 %v2783, %v2783
        %v2788 = vpack.c.bf16 %v2784, %v2784
        %v2789 = vpack.c.bf16 %v2785, %v2785
        %v2790 = vpack.c.bf16 %v2786, %v2786
        %v2791 = vld [vmem:[#allocation13] sm:$0xf]
        %v2792 = vld [vmem:[#allocation13 + $0x4] sm:$0xf]
        %v2793 = vld [vmem:[#allocation13 + $0x8] sm:$0xf]
        %v2794 = vld [vmem:[#allocation13 + $0xc] sm:$0xf]
        %v2795 = vld [vmem:[#allocation13 + $0x10] sm:$0xf]
        %v2796 = vld [vmem:[#allocation13 + $0x14] sm:$0xf]
        %v2797 = vld [vmem:[#allocation13 + $0x18] sm:$0xf]
        %v2798 = vld [vmem:[#allocation13 + $0x1c] sm:$0xf]
        %v2799 = vld [vmem:[#allocation13 + $0x20] sm:$0xf]
        %v2800 = vld [vmem:[#allocation13 + $0x24] sm:$0xf]
        %v2801 = vld [vmem:[#allocation13 + $0x28] sm:$0xf]
        %v2802 = vld [vmem:[#allocation13 + $0x2c] sm:$0xf]
        %v2803 = vld [vmem:[#allocation13 + $0x30] sm:$0xf]
        %v2804 = vld [vmem:[#allocation13 + $0x34] sm:$0xf]
        %v2805 = vld [vmem:[#allocation13 + $0x38] sm:$0xf]
        %v2806 = vld [vmem:[#allocation13 + $0x3c] sm:$0xf]
        %v2807 = vld [vmem:[#allocation13 + $0x40] sm:$0xf]
        %v2808 = vld [vmem:[#allocation13 + $0x44] sm:$0xf]
        %v2809 = vld [vmem:[#allocation13 + $0x48] sm:$0xf]
        %v2810 = vld [vmem:[#allocation13 + $0x4c] sm:$0xf]
        %v2811 = vld [vmem:[#allocation13 + $0x50] sm:$0xf]
        %v2812 = vld [vmem:[#allocation13 + $0x54] sm:$0xf]
        %v2813 = vld [vmem:[#allocation13 + $0x58] sm:$0xf]
        %v2814 = vld [vmem:[#allocation13 + $0x5c] sm:$0xf]
        %v2815 = vld [vmem:[#allocation13 + $0x60] sm:$0xf]
        %v2816 = vld [vmem:[#allocation13 + $0x64] sm:$0xf]
        %v2817 = vld [vmem:[#allocation13 + $0x68] sm:$0xf]
        %v2818 = vld [vmem:[#allocation13 + $0x6c] sm:$0xf]
        %v2819 = vld [vmem:[#allocation13 + $0x70] sm:$0xf]
        %v2820 = vld [vmem:[#allocation13 + $0x74] sm:$0xf]
        %v2821 = vld [vmem:[#allocation13 + $0x78] sm:$0xf]
        %v2822 = vld [vmem:[#allocation13 + $0x7c] sm:$0xf]
        %v2823 = vld [vmem:[#allocation13 + $0x80] sm:$0xf]
        %v2824 = vld [vmem:[#allocation13 + $0x84] sm:$0xf]
        %v2825 = vld [vmem:[#allocation13 + $0x88] sm:$0xf]
        %v2826 = vld [vmem:[#allocation13 + $0x8c] sm:$0xf]
        %v2827 = vld [vmem:[#allocation13 + $0x90] sm:$0xf]
        %v2828 = vld [vmem:[#allocation13 + $0x94] sm:$0xf]
        %v2829 = vld [vmem:[#allocation13 + $0x98] sm:$0xf]
        %v2830 = vld [vmem:[#allocation13 + $0x9c] sm:$0xf]
        %v2831 = vld [vmem:[#allocation13 + $0xa0] sm:$0xf]
        %v2832 = vld [vmem:[#allocation13 + $0xa4] sm:$0xf]
        %v2833 = vld [vmem:[#allocation13 + $0xa8] sm:$0xf]
        %v2834 = vld [vmem:[#allocation13 + $0xac] sm:$0xf]
        %v2835 = vld [vmem:[#allocation13 + $0xb0] sm:$0xf]
        %v2836 = vld [vmem:[#allocation13 + $0xb4] sm:$0xf]
        %v2837 = vld [vmem:[#allocation13 + $0xb8] sm:$0xf]
        %v2838 = vld [vmem:[#allocation13 + $0xbc] sm:$0xf]
        %v2839 = vld [vmem:[#allocation13 + $0xc0] sm:$0xf]
        %v2840 = vld [vmem:[#allocation13 + $0xc4] sm:$0xf]
        %v2841 = vld [vmem:[#allocation13 + $0xc8] sm:$0xf]
        %v2842 = vld [vmem:[#allocation13 + $0xcc] sm:$0xf]
        %v2843 = vld [vmem:[#allocation13 + $0xd0] sm:$0xf]
        %v2844 = vld [vmem:[#allocation13 + $0xd4] sm:$0xf]
        %v2845 = vld [vmem:[#allocation13 + $0xd8] sm:$0xf]
        %v2846 = vld [vmem:[#allocation13 + $0xdc] sm:$0xf]
        %v2847 = vld [vmem:[#allocation13 + $0xe0] sm:$0xf]
        %v2848 = vld [vmem:[#allocation13 + $0xe4] sm:$0xf]
        %v2849 = vld [vmem:[#allocation13 + $0xe8] sm:$0xf]
        %v2850 = vld [vmem:[#allocation13 + $0xec] sm:$0xf]
        %v2851 = vld [vmem:[#allocation13 + $0xf0] sm:$0xf]
        %v2852 = vld [vmem:[#allocation13 + $0xf4] sm:$0xf]
        %v2853 = vld [vmem:[#allocation13 + $0xf8] sm:$0xf]
        %v2854 = vld [vmem:[#allocation13 + $0xfc] sm:$0xf]
        %v2855 = vld [vmem:[%s13] sm:$0x1]
        %v2857 = vlaneseq
        %v2858 = vshrl.u32 %v2857, 7
        %v2859 = vsub.s32 0, %v2858
        %v2860 = vrot.slane %v2855, %v2859
        %v2926 = vunpack.c.l.b16 %v2791
        %v2927 = vunpack.c.l.b16 %v2792
        %v2928 = vunpack.c.l.b16 %v2793
        %v2929 = vunpack.c.l.b16 %v2794
        %v2930 = vunpack.c.l.b16 %v2795
        %v2931 = vunpack.c.l.b16 %v2796
        %v2932 = vunpack.c.l.b16 %v2797
        %v2933 = vunpack.c.l.b16 %v2798
        %v2934 = vunpack.c.l.b16 %v2799
        %v2935 = vunpack.c.l.b16 %v2800
        %v2936 = vunpack.c.l.b16 %v2801
        %v2937 = vunpack.c.l.b16 %v2802
        %v2938 = vunpack.c.l.b16 %v2803
        %v2939 = vunpack.c.l.b16 %v2804
        %v2940 = vunpack.c.l.b16 %v2805
        %v2941 = vunpack.c.l.b16 %v2806
        %v2942 = vunpack.c.l.b16 %v2807
        %v2943 = vunpack.c.l.b16 %v2808
        %v2944 = vunpack.c.l.b16 %v2809
        %v2945 = vunpack.c.l.b16 %v2810
        %v2946 = vunpack.c.l.b16 %v2811
        %v2947 = vunpack.c.l.b16 %v2812
        %v2948 = vunpack.c.l.b16 %v2813
        %v2949 = vunpack.c.l.b16 %v2814
        %v2950 = vunpack.c.l.b16 %v2815
        %v2951 = vunpack.c.l.b16 %v2816
        %v2952 = vunpack.c.l.b16 %v2817
        %v2953 = vunpack.c.l.b16 %v2818
        %v2954 = vunpack.c.l.b16 %v2819
        %v2955 = vunpack.c.l.b16 %v2820
        %v2956 = vunpack.c.l.b16 %v2821
        %v2957 = vunpack.c.l.b16 %v2822
        %v2958 = vunpack.c.l.b16 %v2823
        %v2959 = vunpack.c.l.b16 %v2824
        %v2960 = vunpack.c.l.b16 %v2825
        %v2961 = vunpack.c.l.b16 %v2826
        %v2962 = vunpack.c.l.b16 %v2827
        %v2963 = vunpack.c.l.b16 %v2828
        %v2964 = vunpack.c.l.b16 %v2829
        %v2965 = vunpack.c.l.b16 %v2830
        %v2966 = vunpack.c.l.b16 %v2831
        %v2967 = vunpack.c.l.b16 %v2832
        %v2968 = vunpack.c.l.b16 %v2833
        %v2969 = vunpack.c.l.b16 %v2834
        %v2970 = vunpack.c.l.b16 %v2835
        %v2971 = vunpack.c.l.b16 %v2836
        %v2972 = vunpack.c.l.b16 %v2837
        %v2973 = vunpack.c.l.b16 %v2838
        %v2974 = vunpack.c.l.b16 %v2839
        %v2975 = vunpack.c.l.b16 %v2840
        %v2976 = vunpack.c.l.b16 %v2841
        %v2977 = vunpack.c.l.b16 %v2842
        %v2978 = vunpack.c.l.b16 %v2843
        %v2979 = vunpack.c.l.b16 %v2844
        %v2980 = vunpack.c.l.b16 %v2845
        %v2981 = vunpack.c.l.b16 %v2846
        %v2982 = vunpack.c.l.b16 %v2847
        %v2983 = vunpack.c.l.b16 %v2848
        %v2984 = vunpack.c.l.b16 %v2849
        %v2985 = vunpack.c.l.b16 %v2850
        %v2986 = vunpack.c.l.b16 %v2851
        %v2987 = vunpack.c.l.b16 %v2852
        %v2988 = vunpack.c.l.b16 %v2853
        %v2989 = vunpack.c.l.b16 %v2854
        %v2990 = vpack.c.b16 %v2927, %v2926
        %v2991 = vpack.c.b16 %v2929, %v2928
        %v2992 = vpack.c.b16 %v2931, %v2930
        %v2993 = vpack.c.b16 %v2933, %v2932
        %v2994 = vpack.c.b16 %v2935, %v2934
        %v2995 = vpack.c.b16 %v2937, %v2936
        %v2996 = vpack.c.b16 %v2939, %v2938
        %v2997 = vpack.c.b16 %v2941, %v2940
        %v2998 = vpack.c.b16 %v2943, %v2942
        %v2999 = vpack.c.b16 %v2945, %v2944
        %v3000 = vpack.c.b16 %v2947, %v2946
        %v3001 = vpack.c.b16 %v2949, %v2948
        %v3002 = vpack.c.b16 %v2951, %v2950
        %v3003 = vpack.c.b16 %v2953, %v2952
        %v3004 = vpack.c.b16 %v2955, %v2954
        %v3005 = vpack.c.b16 %v2957, %v2956
        %v3006 = vpack.c.b16 %v2959, %v2958
        %v3007 = vpack.c.b16 %v2961, %v2960
        %v3008 = vpack.c.b16 %v2963, %v2962
        %v3009 = vpack.c.b16 %v2965, %v2964
        %v3010 = vpack.c.b16 %v2967, %v2966
        %v3011 = vpack.c.b16 %v2969, %v2968
        %v3012 = vpack.c.b16 %v2971, %v2970
        %v3013 = vpack.c.b16 %v2973, %v2972
        %v3014 = vpack.c.b16 %v2975, %v2974
        %v3015 = vpack.c.b16 %v2977, %v2976
        %v3016 = vpack.c.b16 %v2979, %v2978
        %v3017 = vpack.c.b16 %v2981, %v2980
        %v3018 = vpack.c.b16 %v2983, %v2982
        %v3019 = vpack.c.b16 %v2985, %v2984
        %v3020 = vpack.c.b16 %v2987, %v2986
        %v3021 = vpack.c.b16 %v2989, %v2988
        %3054 = vmatprep.subr.bf16.mxu0 0
        %3055 = vmatpush1.bf16.msra.mxu0 %v2997
        %3056 = vmatprep.subr.bf16.mxu0 0
        %3057 = vmatpush1.bf16.msra.mxu0 %v2996
        %3058 = vmatprep.subr.bf16.mxu0 0
        %3059 = vmatpush1.bf16.msra.mxu0 %v2995
        %3060 = vmatprep.subr.bf16.mxu0 0
        %3061 = vmatpush1.bf16.msra.mxu0 %v2994
        %3062 = vmatprep.subr.bf16.mxu0 0
        %3063 = vmatpush1.bf16.msra.mxu0 %v2993
        %3064 = vmatprep.subr.bf16.mxu0 0
        %3065 = vmatpush1.bf16.msra.mxu0 %v2992
        %3066 = vmatprep.subr.bf16.mxu0 0
        %3067 = vmatpush1.bf16.msra.mxu0 %v2991
        %3068 = vmatprep.subr.bf16.mxu0 0
        %3069 = vmatpush1.bf16.msra.mxu0 %v2990
        %3070 = vmatprep.subr.bf16.mxu0 0
        %3071 = vmatpush2.bf16.msra.mxu0 %v3005
        %3072 = vmatprep.subr.bf16.mxu0 0
        %3073 = vmatpush2.bf16.msra.mxu0 %v3004
        %3074 = vmatprep.subr.bf16.mxu0 0
        %3075 = vmatpush2.bf16.msra.mxu0 %v3003
        %3076 = vmatprep.subr.bf16.mxu0 0
        %3077 = vmatpush2.bf16.msra.mxu0 %v3002
        %3078 = vmatprep.subr.bf16.mxu0 0
        %3079 = vmatpush2.bf16.msra.mxu0 %v3001
        %3080 = vmatprep.subr.bf16.mxu0 0
        %3081 = vmatpush2.bf16.msra.mxu0 %v3000
        %3082 = vmatprep.subr.bf16.mxu0 0
        %3083 = vmatpush2.bf16.msra.mxu0 %v2999
        %3084 = vmatprep.subr.bf16.mxu0 0
        %3085 = vmatpush2.bf16.msra.mxu0 %v2998
        %3086 = vmatprep.mubr.bf16.mxu0 %v2788
        %3087 = vmatmul.mubr.bf16.gmra.mxu0 %v2787
        %v3088 = vpop.f32.mrf.mxu0
        %v3089 = vadd.f32 %v2860, %v3088
        %v3090 = vpop.f32.mrf.mxu0
        %v3091 = vpop.f32.mrf.mxu0
        %v3092 = vpop.f32.mrf.mxu0
        %3093 = vdwg.mxu0
        %3094 = vmatprep.subr.bf16.mxu0 0
        %3095 = vmatpush1.bf16.msra.mxu0 %v3013
        %3096 = vmatprep.subr.bf16.mxu0 0
        %3097 = vmatpush1.bf16.msra.mxu0 %v3012
        %3098 = vmatprep.subr.bf16.mxu0 0
        %3099 = vmatpush1.bf16.msra.mxu0 %v3011
        %3100 = vmatprep.subr.bf16.mxu0 0
        %3101 = vmatpush1.bf16.msra.mxu0 %v3010
        %3102 = vmatprep.subr.bf16.mxu0 0
        %3103 = vmatpush1.bf16.msra.mxu0 %v3009
        %3104 = vmatprep.subr.bf16.mxu0 0
        %3105 = vmatpush1.bf16.msra.mxu0 %v3008
        %3106 = vmatprep.subr.bf16.mxu0 0
        %3107 = vmatpush1.bf16.msra.mxu0 %v3007
        %3108 = vmatprep.subr.bf16.mxu0 0
        %3109 = vmatpush1.bf16.msra.mxu0 %v3006
        %3110 = vmatprep.subr.bf16.mxu0 0
        %3111 = vmatpush2.bf16.msra.mxu0 %v3021
        %3112 = vmatprep.subr.bf16.mxu0 0
        %3113 = vmatpush2.bf16.msra.mxu0 %v3020
        %3114 = vmatprep.subr.bf16.mxu0 0
        %3115 = vmatpush2.bf16.msra.mxu0 %v3019
        %3116 = vmatprep.subr.bf16.mxu0 0
        %3117 = vmatpush2.bf16.msra.mxu0 %v3018
        %3118 = vmatprep.subr.bf16.mxu0 0
        %3119 = vmatpush2.bf16.msra.mxu0 %v3017
        %3120 = vmatprep.subr.bf16.mxu0 0
        %3121 = vmatpush2.bf16.msra.mxu0 %v3016
        %3122 = vmatprep.subr.bf16.mxu0 0
        %3123 = vmatpush2.bf16.msra.mxu0 %v3015
        %3124 = vmatprep.subr.bf16.mxu0 0
        %3125 = vmatpush2.bf16.msra.mxu0 %v3014
        %3126 = vmatprep.mubr.bf16.mxu0 %v2790
        %3127 = vmatmul.mubr.bf16.gmra.mxu0 %v2789
        %v3128 = vpop.f32.mrf.mxu0
        %v3129 = vadd.f32 %v3089, %v3128
        %v3130 = vpop.f32.mrf.mxu0
        %v3131 = vpop.f32.mrf.mxu0
        %v3132 = vpop.f32.mrf.mxu0
        %3133 = vdwg.mxu0
        %v3134 = vadd.f32 %v2426, %v3129
        %3135 = vst [vmem:[%s634] sm:$0xff] %v3134
        %s3136 = sand.u32 %s369, 1
        %s3137 = scalar_lea.sflag [#allocation4], %s3136
        %s3138 = sand.u32 %s369, 1
        %s3139 = smul.addr %s3138, 8
        %s3140 = scalar_lea.vmem [#allocation14], %s3139
        // Predicated region
        $region105: #{tpu_custom_call.1} parent=75 // pred_check
          %p3141 = pneg %p379
        $region106: #{tpu_custom_call.1} parent=75 // pred_check_branch
          %3143 = sbr.rel (%p3141) target = $region108
        $region107: #{tpu_custom_call.1} parent=75 // pred_region
          %s3145 = ssub.s32 128, 128
          %3146 = vsyncadd %s3137, %s3145
          %s3147 = sadd.s32 %s41, %s40
          %s3148 = smul.addr %s3147, 128
          %s3149 = scalar_lea.hbm %s14, %s3148
          %s3151 = sshll.u32 %s3140, 4
          %s3152 = int_to_ptr.vmem [resolvable:$true] %s3151
          %3154 = dma.vmem_to_hbm [thread:$0]  %s3152, 128, %s3149, %s3137
        $region108: #{tpu_custom_call.1} parent=75 // pred_fallthru
          _
      $region76: #{tpu_custom_call.1} parent=5 // pred_fallthru
        _
      %p3155 = scmp.le.s32.totalorder 2, %s31
      // Predicated region
      $region109: #{tpu_custom_call.1} parent=5 // pred_check
        %p3156 = pneg %p3155
      $region110: #{tpu_custom_call.1} parent=5 // pred_check_branch
        %3158 = sbr.rel (%p3156) target = $region112
      $region111: #{tpu_custom_call.1} parent=5 // pred_region
        %s3159 = ssub.s32 %s31, 2
        // Predicated region
        $region113: #{tpu_custom_call.1} parent=111 // pred_check
          %p3160 = pneg %p385
        $region114: #{tpu_custom_call.1} parent=111 // pred_check_branch
          %3162 = sbr.rel (%p3160) target = $region116
        $region115: #{tpu_custom_call.1} parent=111 // pred_region
          %s3163 = sand.u32 %s370, 1
          %s3164 = scalar_lea.sflag [#allocation4], %s3163
          %s3165 = sand.u32 %s370, 1
          %s3166 = smul.addr %s3165, 8
          %s3167 = scalar_lea.vmem [#allocation14], %s3166
          %3168 = dma.done %s3164, 128
        $region116: #{tpu_custom_call.1} parent=111 // pred_fallthru
          _
      $region112: #{tpu_custom_call.1} parent=5 // pred_fallthru
        _
    $region6: #{tpu_custom_call.1} parent=1 // loop_footer
      %s35 = sadd.s32 1, %s31
    $region7: #{tpu_custom_call.1} parent=1 // loop_footer_branch
      %30 = sbr.rel target = $region3
    $region8: #{tpu_custom_call.1} parent=1 // loop_exit
      _
    %3169 = vsyncpa [#allocation3], 1
    %s3170 = scalar_lea.sflag [#allocation3], 1
    %3171 = vsyncpa %s3170, 1
    %3172 = vsyncpa [#allocation6], 1
    %s3173 = scalar_lea.sflag [#allocation6], 1
    %3174 = vsyncpa %s3173, 1
    %3175 = vsyncpa [#allocation9], 1
    %3176 = vsyncpa [#allocation12], 1
    %3177 = vsyncpa [#allocation4], 1
    %s3178 = scalar_lea.sflag [#allocation4], 1
    %3179 = vsyncpa %s3178, 1

// kernel: tpu_custom_call.1
$region0: #{tpu_custom_call.1}
  #allocation0 [shape = 'u32[]', space=smem, size = 0x4, offset = 0x4, fixed_abs, tag = 'smem constant byte address 0x4 - core index']
  #allocation1 [shape = 'u32[144,128]{1,0:T(1,128)}', space=vmem, size = 0x12000, scoped, tag = 'internal scratch']
  %s0 = inlined_call_operand.hbm [shape: f32[2,8,128], index: 0, kind: input, shape index: {}]
  %s1 = inlined_call_operand.hbm [shape: bf16[2,8,16,16], index: 1, kind: input, shape index: {}]
  %s2 = inlined_call_operand.hbm [shape: bf16[2,8,16,16], index: 2, kind: input, shape index: {}]
  %s3 = inlined_call_operand.hbm [shape: bf16[128,128], index: 3, kind: input, shape index: {}]
  %s4 = inlined_call_operand.hbm [shape: bf16[128,128], index: 4, kind: input, shape index: {}]
  %s5 = inlined_call_operand.vmem [shape: f32[1,128], index: 5, kind: input, shape index: {}]
  %s6 = inlined_call_operand.vmem [shape: f32[1,128], index: 6, kind: input, shape index: {}]
  %s7 = inlined_call_operand.vmem [shape: f32[1,128], index: 7, kind: input, shape index: {}]
  %s8 = inlined_call_operand.vmem [shape: f32[1,128], index: 8, kind: input, shape index: {}]
  %s9 = inlined_call_operand.vmem [shape: f32[1,128], index: 9, kind: input, shape index: {}]
  %s10 = inlined_call_operand.hbm [shape: bf16[128,512], index: 10, kind: input, shape index: {}]
  %s11 = inlined_call_operand.vmem [shape: f32[1,512], index: 11, kind: input, shape index: {}]
  %s12 = inlined_call_operand.hbm [shape: bf16[512,128], index: 12, kind: input, shape index: {}]
  %s13 = inlined_call_operand.vmem [shape: f32[1,128], index: 13, kind: input, shape index: {}]
  %s14 = inlined_call_operand.hbm [shape: f32[2,8,128], index: 14, kind: output, shape index: {}]
  %s15 = sld [smem:[#allocation0]]
  $region117: #{tpu_custom_call.1} parent=0
    _
  %s17 = ssub.s32 1, %s15
  %s18 = scalar_select 0, %s17, %s15
  $region1: #{tpu_custom_call.1} parent=0
    #allocation2 [shape = 'u8[8192]{0}', space=vmem, size = 0x2000, scoped, tag = 'input window, operand 0']
    #allocation3 [shape = 's32[2]{0}', space=sflag, size = 0x8, scoped, tag = 'scoped memory for tpu_custom_call.1']
    #allocation4 [shape = 's32[2]{0}', space=sflag, size = 0x8, scoped, tag = 'scoped memory for tpu_custom_call.1']
    #allocation5 [shape = 'u8[65536]{0}', space=vmem, size = 0x10000, scoped, tag = 'input window, operand 1']
    #allocation6 [shape = 's32[2]{0}', space=sflag, size = 0x8, scoped, tag = 'scoped memory for tpu_custom_call.1']
    #allocation7 [shape = 'u8[65536]{0}', space=vmem, size = 0x10000, scoped, tag = 'input window, operand 2']
    #allocation8 [shape = 'u8[32768]{0}', space=vmem, size = 0x8000, scoped, tag = 'input window, operand 3, single buffered']
    #allocation9 [shape = 's32[1]{0}', space=sflag, size = 0x4, scoped, tag = 'scoped memory for tpu_custom_call.1']
    #allocation10 [shape = 'u8[32768]{0}', space=vmem, size = 0x8000, scoped, tag = 'input window, operand 4, single buffered']
    #allocation11 [shape = 'u8[131072]{0}', space=vmem, size = 0x20000, scoped, tag = 'input window, operand 10, single buffered']
    #allocation12 [shape = 's32[1]{0}', space=sflag, size = 0x4, scoped, tag = 'scoped memory for tpu_custom_call.1']
    #allocation13 [shape = 'u8[131072]{0}', space=vmem, size = 0x20000, scoped, tag = 'input window, operand 12, single buffered']
    #allocation14 [shape = 'u8[8192]{0}', space=vmem, size = 0x2000, scoped, tag = 'output window, operand 0']
    %19 = vsyncpa [#allocation3], 0
    %s20 = scalar_lea.sflag [#allocation3], 1
    %21 = vsyncpa %s20, 0
    %22 = vsyncpa [#allocation6], 0
    %s23 = scalar_lea.sflag [#allocation6], 1
    %24 = vsyncpa %s23, 0
    %25 = vsyncpa [#allocation9], 0
    %26 = vsyncpa [#allocation12], 0
    %27 = vsyncpa [#allocation4], 0
    %s28 = scalar_lea.sflag [#allocation4], 1
    %29 = vsyncpa %s28, 0
    loop: start=0, step=1, limit=4
    $region2: #{tpu_custom_call.1} parent=1 // loop_pre_header
      _
    $region3: #{tpu_custom_call.1} parent=1 // loop_header
      %s31 = sphi 0, %s35
      %p32 = scmp.ge.s32.totalorder %s31, 4
      %s38 = sphi 0, %s50
      %s39 = sphi 0, %s46
      %s40 = sphi 0, %s38
      %s41 = sphi 0, %s39
      %s42 = sphi 0, %s40
      %s43 = sphi 0, %s41
      %s55 = sphi 0, %s57
      %s58 = sphi 0, %s55
      %s59 = sphi 0, %s58
      %s75 = sphi 0, %s59
      %s81 = sphi 0, %s83
      %s84 = sphi 0, %s81
      %s85 = sphi 0, %s84
      %s101 = sphi 0, %s85
      %s107 = sphi 0, %s109
      %s110 = sphi 0, %s107
      %s111 = sphi 0, %s110
      %s127 = sphi 0, %s111
      %s131 = sphi 0, %s131
      %s133 = sphi 0, %s131
      %s134 = sphi 0, %s133
      %s148 = sphi 0, %s134
      %s152 = sphi 0, %s152
      %s154 = sphi 0, %s152
      %s155 = sphi 0, %s154
      %s169 = sphi 0, %s155
      %s173 = sphi 0, %s173
      %s175 = sphi 0, %s173
      %s176 = sphi 0, %s175
      %s190 = sphi 0, %s176
      %s194 = sphi 0, %s194
      %s196 = sphi 0, %s194
      %s197 = sphi 0, %s196
      %s211 = sphi 0, %s197
      %s215 = sphi 0, %s215
      %s217 = sphi 0, %s215
      %s218 = sphi 0, %s217
      %s232 = sphi 0, %s218
      %s236 = sphi 0, %s236
      %s238 = sphi 0, %s236
      %s239 = sphi 0, %s238
      %s253 = sphi 0, %s239
      %s257 = sphi 0, %s257
      %s259 = sphi 0, %s257
      %s260 = sphi 0, %s259
      %s274 = sphi 0, %s260
      %s278 = sphi 0, %s278
      %s280 = sphi 0, %s278
      %s281 = sphi 0, %s280
      %s295 = sphi 0, %s281
      %s299 = sphi 0, %s299
      %s301 = sphi 0, %s299
      %s302 = sphi 0, %s301
      %s316 = sphi 0, %s302
      %s320 = sphi 0, %s320
      %s322 = sphi 0, %s320
      %s323 = sphi 0, %s322
      %s337 = sphi 0, %s323
      %s341 = sphi 0, %s341
      %s343 = sphi 0, %s341
      %s344 = sphi 0, %s343
      %s358 = sphi 0, %s344
      %s366 = sphi 0, %s368
      %s369 = sphi 0, %s366
      %s370 = sphi 0, %s369
      %s386 = sphi 0, %s370
    $region4: #{tpu_custom_call.1} parent=1 // loop_header_branch
      %34 = sbr.rel (%p32) target = $region8
    $region5: #{tpu_custom_call.1} parent=1 // loop_body
      %s36 = ssub.s32 %s31, 1
      %s37 = ssub.s32 %s31, 2
      %s44 = sadd.s32 1, %s39
      %p45 = scmp.ge.s32.totalorder %s44, 1
      %s46 = scalar_select %p45, 0, %s44
      %s47 = sadd.s32 1, %s38
      %s48 = scalar_select %p45, %s47, %s38
      %p49 = scmp.ge.s32.totalorder %s48, 2
      %s50 = scalar_select %p49, 0, %s48
      %s51 = ssub.s32 %s38, %s50
      %s52 = ssub.s32 %s39, %s46
      %s53 = sor.u32 %s51, %s52
      %p54 = scmp.eq.s32.totalorder %s53, 0
      %s56 = sadd.s32 %s55, 1
      %s57 = scalar_select %p54, %s55, %s56
      %p60 = pneg %p54
      %p61 = scmp.eq.s32.totalorder %s31, 1
      %p62 = por %p60, %p61
      %p63 = scmp.ne.s32.totalorder %s55, %s58
      %p64 = scmp.eq.s32.totalorder %s31, 0
      %p65 = por %p63, %p64
      %p66 = scmp.ne.s32.totalorder %s55, %s58
      %p67 = scmp.eq.s32.totalorder %s36, 1
      %p68 = por %p66, %p67
      %p69 = scmp.ne.s32.totalorder %s58, %s59
      %p70 = scmp.eq.s32.totalorder %s36, 0
      %p71 = por %p69, %p70
      %p72 = scmp.ne.s32.totalorder %s58, %s59
      %p73 = scmp.eq.s32.totalorder %s37, 1
      %p74 = por %p72, %p73
      %p76 = scmp.ne.s32.totalorder %s59, %s75
      %p77 = scmp.eq.s32.totalorder %s37, 0
      %p78 = por %p76, %p77
      %s79 = ssub.s32 %s38, %s50
      %p80 = scmp.eq.s32.totalorder %s79, 0
      %s82 = sadd.s32 %s81, 1
      %s83 = scalar_select %p80, %s81, %s82
      %p86 = pneg %p80
      %p87 = scmp.eq.s32.totalorder %s31, 1
      %p88 = por %p86, %p87
      %p89 = scmp.ne.s32.totalorder %s81, %s84
      %p90 = scmp.eq.s32.totalorder %s31, 0
      %p91 = por %p89, %p90
      %p92 = scmp.ne.s32.totalorder %s81, %s84
      %p93 = scmp.eq.s32.totalorder %s36, 1
      %p94 = por %p92, %p93
      %p95 = scmp.ne.s32.totalorder %s84, %s85
      %p96 = scmp.eq.s32.totalorder %s36, 0
      %p97 = por %p95, %p96
      %p98 = scmp.ne.s32.totalorder %s84, %s85
      %p99 = scmp.eq.s32.totalorder %s37, 1
      %p100 = por %p98, %p99
      %p102 = scmp.ne.s32.totalorder %s85, %s101
      %p103 = scmp.eq.s32.totalorder %s37, 0
      %p104 = por %p102, %p103
      %s105 = ssub.s32 %s38, %s50
      %p106 = scmp.eq.s32.totalorder %s105, 0
      %s108 = sadd.s32 %s107, 1
      %s109 = scalar_select %p106, %s107, %s108
      %p112 = pneg %p106
      %p113 = scmp.eq.s32.totalorder %s31, 1
      %p114 = por %p112, %p113
      %p115 = scmp.ne.s32.totalorder %s107, %s110
      %p116 = scmp.eq.s32.totalorder %s31, 0
      %p117 = por %p115, %p116
      %p118 = scmp.ne.s32.totalorder %s107, %s110
      %p119 = scmp.eq.s32.totalorder %s36, 1
      %p120 = por %p118, %p119
      %p121 = scmp.ne.s32.totalorder %s110, %s111
      %p122 = scmp.eq.s32.totalorder %s36, 0
      %p123 = por %p121, %p122
      %p124 = scmp.ne.s32.totalorder %s110, %s111
      %p125 = scmp.eq.s32.totalorder %s37, 1
      %p126 = por %p124, %p125
      %p128 = scmp.ne.s32.totalorder %s111, %s127
      %p129 = scmp.eq.s32.totalorder %s37, 0
      %p130 = por %p128, %p129
      %s132 = sadd.s32 %s131, 1
      %p135 = scmp.eq.s32.totalorder %s31, 1
      %p136 = scmp.ne.s32.totalorder %s131, %s133
      %p137 = scmp.eq.s32.totalorder %s31, 0
      %p138 = por %p136, %p137
      %p139 = scmp.ne.s32.totalorder %s131, %s133
      %p140 = scmp.eq.s32.totalorder %s36, 1
      %p141 = por %p139, %p140
      %p142 = scmp.ne.s32.totalorder %s133, %s134
      %p143 = scmp.eq.s32.totalorder %s36, 0
      %p144 = por %p142, %p143
      %p145 = scmp.ne.s32.totalorder %s133, %s134
      %p146 = scmp.eq.s32.totalorder %s37, 1
      %p147 = por %p145, %p146
      %p149 = scmp.ne.s32.totalorder %s134, %s148
      %p150 = scmp.eq.s32.totalorder %s37, 0
      %p151 = por %p149, %p150
      %s153 = sadd.s32 %s152, 1
      %p156 = scmp.eq.s32.totalorder %s31, 1
      %p157 = scmp.ne.s32.totalorder %s152, %s154
      %p158 = scmp.eq.s32.totalorder %s31, 0
      %p159 = por %p157, %p158
      %p160 = scmp.ne.s32.totalorder %s152, %s154
      %p161 = scmp.eq.s32.totalorder %s36, 1
      %p162 = por %p160, %p161
      %p163 = scmp.ne.s32.totalorder %s154, %s155
      %p164 = scmp.eq.s32.totalorder %s36, 0
      %p165 = por %p163, %p164
      %p166 = scmp.ne.s32.totalorder %s154, %s155
      %p167 = scmp.eq.s32.totalorder %s37, 1
      %p168 = por %p166, %p167
      %p170 = scmp.ne.s32.totalorder %s155, %s169
      %p171 = scmp.eq.s32.totalorder %s37, 0
      %p172 = por %p170, %p171
      %s174 = sadd.s32 %s173, 1
      %p177 = scmp.eq.s32.totalorder %s31, 1
      %p178 = scmp.ne.s32.totalorder %s173, %s175
      %p179 = scmp.eq.s32.totalorder %s31, 0
      %p180 = por %p178, %p179
      %p181 = scmp.ne.s32.totalorder %s173, %s175
      %p182 = scmp.eq.s32.totalorder %s36, 1
      %p183 = por %p181, %p182
      %p184 = scmp.ne.s32.totalorder %s175, %s176
      %p185 = scmp.eq.s32.totalorder %s36, 0
      %p186 = por %p184, %p185
      %p187 = scmp.ne.s32.totalorder %s175, %s176
      %p188 = scmp.eq.s32.totalorder %s37, 1
      %p189 = por %p187, %p188
      %p191 = scmp.ne.s32.totalorder %s176, %s190
      %p192 = scmp.eq.s32.totalorder %s37, 0
      %p193 = por %p191, %p192
      %s195 = sadd.s32 %s194, 1
      %p198 = scmp.eq.s32.totalorder %s31, 1
      %p199 = scmp.ne.s32.totalorder %s194, %s196
      %p200 = scmp.eq.s32.totalorder %s31, 0
      %p201 = por %p199, %p200
      %p202 = scmp.ne.s32.totalorder %s194, %s196
      %p203 = scmp.eq.s32.totalorder %s36, 1
      %p204 = por %p202, %p203
      %p205 = scmp.ne.s32.totalorder %s196, %s197
      %p206 = scmp.eq.s32.totalorder %s36, 0
      %p207 = por %p205, %p206
      %p208 = scmp.ne.s32.totalorder %s196, %s197
      %p209 = scmp.eq.s32.totalorder %s37, 1
      %p210 = por %p208, %p209
      %p212 = scmp.ne.s32.totalorder %s197, %s211
      %p213 = scmp.eq.s32.totalorder %s37, 0
      %p214 = por %p212, %p213
      %s216 = sadd.s32 %s215, 1
      %p219 = scmp.eq.s32.totalorder %s31, 1
      %p220 = scmp.ne.s32.totalorder %s215, %s217
      %p221 = scmp.eq.s32.totalorder %s31, 0
      %p222 = por %p220, %p221
      %p223 = scmp.ne.s32.totalorder %s215, %s217
      %p224 = scmp.eq.s32.totalorder %s36, 1
      %p225 = por %p223, %p224
      %p226 = scmp.ne.s32.totalorder %s217, %s218
      %p227 = scmp.eq.s32.totalorder %s36, 0
      %p228 = por %p226, %p227
      %p229 = scmp.ne.s32.totalorder %s217, %s218
      %p230 = scmp.eq.s32.totalorder %s37, 1
      %p231 = por %p229, %p230
      %p233 = scmp.ne.s32.totalorder %s218, %s232
      %p234 = scmp.eq.s32.totalorder %s37, 0
      %p235 = por %p233, %p234
      %s237 = sadd.s32 %s236, 1
      %p240 = scmp.eq.s32.totalorder %s31, 1
      %p241 = scmp.ne.s32.totalorder %s236, %s238
      %p242 = scmp.eq.s32.totalorder %s31, 0
      %p243 = por %p241, %p242
      %p244 = scmp.ne.s32.totalorder %s236, %s238
      %p245 = scmp.eq.s32.totalorder %s36, 1
      %p246 = por %p244, %p245
      %p247 = scmp.ne.s32.totalorder %s238, %s239
      %p248 = scmp.eq.s32.totalorder %s36, 0
      %p249 = por %p247, %p248
      %p250 = scmp.ne.s32.totalorder %s238, %s239
      %p251 = scmp.eq.s32.totalorder %s37, 1
      %p252 = por %p250, %p251
      %p254 = scmp.ne.s32.totalorder %s239, %s253
      %p255 = scmp.eq.s32.totalorder %s37, 0
      %p256 = por %p254, %p255
      %s258 = sadd.s32 %s257, 1
      %p261 = scmp.eq.s32.totalorder %s31, 1
      %p262 = scmp.ne.s32.totalorder %s257, %s259
      %p263 = scmp.eq.s32.totalorder %s31, 0
      %p264 = por %p262, %p263
      %p265 = scmp.ne.s32.totalorder %s257, %s259
      %p266 = scmp.eq.s32.totalorder %s36, 1
      %p267 = por %p265, %p266
      %p268 = scmp.ne.s32.totalorder %s259, %s260
      %p269 = scmp.eq.s32.totalorder %s36, 0
      %p270 = por %p268, %p269
      %p271 = scmp.ne.s32.totalorder %s259, %s260
      %p272 = scmp.eq.s32.totalorder %s37, 1
      %p273 = por %p271, %p272
      %p275 = scmp.ne.s32.totalorder %s260, %s274
      %p276 = scmp.eq.s32.totalorder %s37, 0
      %p277 = por %p275, %p276
      %s279 = sadd.s32 %s278, 1
      %p282 = scmp.eq.s32.totalorder %s31, 1
      %p283 = scmp.ne.s32.totalorder %s278, %s280
      %p284 = scmp.eq.s32.totalorder %s31, 0
      %p285 = por %p283, %p284
      %p286 = scmp.ne.s32.totalorder %s278, %s280
      %p287 = scmp.eq.s32.totalorder %s36, 1
      %p288 = por %p286, %p287
      %p289 = scmp.ne.s32.totalorder %s280, %s281
      %p290 = scmp.eq.s32.totalorder %s36, 0
      %p291 = por %p289, %p290
      %p292 = scmp.ne.s32.totalorder %s280, %s281
      %p293 = scmp.eq.s32.totalorder %s37, 1
      %p294 = por %p292, %p293
      %p296 = scmp.ne.s32.totalorder %s281, %s295
      %p297 = scmp.eq.s32.totalorder %s37, 0
      %p298 = por %p296, %p297
      %s300 = sadd.s32 %s299, 1
      %p303 = scmp.eq.s32.totalorder %s31, 1
      %p304 = scmp.ne.s32.totalorder %s299, %s301
      %p305 = scmp.eq.s32.totalorder %s31, 0
      %p306 = por %p304, %p305
      %p307 = scmp.ne.s32.totalorder %s299, %s301
      %p308 = scmp.eq.s32.totalorder %s36, 1
      %p309 = por %p307, %p308
      %p310 = scmp.ne.s32.totalorder %s301, %s302
      %p311 = scmp.eq.s32.totalorder %s36, 0
      %p312 = por %p310, %p311
      %p313 = scmp.ne.s32.totalorder %s301, %s302
      %p314 = scmp.eq.s32.totalorder %s37, 1
      %p315 = por %p313, %p314
      %p317 = scmp.ne.s32.totalorder %s302, %s316
      %p318 = scmp.eq.s32.totalorder %s37, 0
      %p319 = por %p317, %p318
      %s321 = sadd.s32 %s320, 1
      %p324 = scmp.eq.s32.totalorder %s31, 1
      %p325 = scmp.ne.s32.totalorder %s320, %s322
      %p326 = scmp.eq.s32.totalorder %s31, 0
      %p327 = por %p325, %p326
      %p328 = scmp.ne.s32.totalorder %s320, %s322
      %p329 = scmp.eq.s32.totalorder %s36, 1
      %p330 = por %p328, %p329
      %p331 = scmp.ne.s32.totalorder %s322, %s323
      %p332 = scmp.eq.s32.totalorder %s36, 0
      %p333 = por %p331, %p332
      %p334 = scmp.ne.s32.totalorder %s322, %s323
      %p335 = scmp.eq.s32.totalorder %s37, 1
      %p336 = por %p334, %p335
      %p338 = scmp.ne.s32.totalorder %s323, %s337
      %p339 = scmp.eq.s32.totalorder %s37, 0
      %p340 = por %p338, %p339
      %s342 = sadd.s32 %s341, 1
      %p345 = scmp.eq.s32.totalorder %s31, 1
      %p346 = scmp.ne.s32.totalorder %s341, %s343
      %p347 = scmp.eq.s32.totalorder %s31, 0
      %p348 = por %p346, %p347
      %p349 = scmp.ne.s32.totalorder %s341, %s343
      %p350 = scmp.eq.s32.totalorder %s36, 1
      %p351 = por %p349, %p350
      %p352 = scmp.ne.s32.totalorder %s343, %s344
      %p353 = scmp.eq.s32.totalorder %s36, 0
      %p354 = por %p352, %p353
      %p355 = scmp.ne.s32.totalorder %s343, %s344
      %p356 = scmp.eq.s32.totalorder %s37, 1
      %p357 = por %p355, %p356
      %p359 = scmp.ne.s32.totalorder %s344, %s358
      %p360 = scmp.eq.s32.totalorder %s37, 0
      %p361 = por %p359, %p360
      %s362 = ssub.s32 %s38, %s50
      %s363 = ssub.s32 %s39, %s46
      %s364 = sor.u32 %s362, %s363
      %p365 = scmp.eq.s32.totalorder %s364, 0
      %s367 = sadd.s32 %s366, 1
      %s368 = scalar_select %p365, %s366, %s367
      %p371 = pneg %p365
      %p372 = scmp.eq.s32.totalorder %s31, 1
      %p373 = por %p371, %p372
      %p374 = scmp.ne.s32.totalorder %s366, %s369
      %p375 = scmp.eq.s32.totalorder %s31, 0
      %p376 = por %p374, %p375
      %p377 = scmp.ne.s32.totalorder %s366, %s369
      %p378 = scmp.eq.s32.totalorder %s36, 1
      %p379 = por %p377, %p378
      %p380 = scmp.ne.s32.totalorder %s369, %s370
      %p381 = scmp.eq.s32.totalorder %s36, 0
      %p382 = por %p380, %p381
      %p383 = scmp.ne.s32.totalorder %s369, %s370
      %p384 = scmp.eq.s32.totalorder %s37, 1
      %p385 = por %p383, %p384
      %p387 = scmp.ne.s32.totalorder %s370, %s386
      %p388 = scmp.eq.s32.totalorder %s37, 0
      %p389 = por %p387, %p388
      %p390 = scmp.le.s32.totalorder 1, %s31
      %p391 = scmp.lt.s32.totalorder %s31, 3
      %p392 = pnand %p390, %p391
      %p393 = pneg %p392
      // Predicated region
      $region9: #{tpu_custom_call.1} parent=5 // pred_check
        _
      $region10: #{tpu_custom_call.1} parent=5 // pred_check_branch
        %395 = sbr.rel (%p392) target = $region12
      $region11: #{tpu_custom_call.1} parent=5 // pred_region
        %s396 = ssub.s32 %s31, 1
        // Predicated region
        $region13: #{tpu_custom_call.1} parent=11 // pred_check
          %p397 = pneg %p144
        $region14: #{tpu_custom_call.1} parent=11 // pred_check_branch
          %399 = sbr.rel (%p397) target = $region16
        $region15: #{tpu_custom_call.1} parent=11 // pred_region
          %s401 = ssub.s32 1024, 1024
          %402 = vsyncadd [#allocation9], %s401
          %s403 = sshll.u32 [#allocation8], 4
          %s404 = int_to_ptr.vmem [resolvable:$true] %s403
          %409 = dma.hbm_to_vmem [thread:$0]  %s3, 1024, %s404, [#allocation9], 64, 64, 4
        $region16: #{tpu_custom_call.1} parent=11 // pred_fallthru
          _
        // Predicated region
        $region17: #{tpu_custom_call.1} parent=11 // pred_check
          %p410 = pneg %p165
        $region18: #{tpu_custom_call.1} parent=11 // pred_check_branch
          %412 = sbr.rel (%p410) target = $region20
        $region19: #{tpu_custom_call.1} parent=11 // pred_region
          %s414 = ssub.s32 1024, 1024
          %415 = vsyncadd [#allocation9], %s414
          %s416 = sshll.u32 [#allocation10], 4
          %s417 = int_to_ptr.vmem [resolvable:$true] %s416
          %422 = dma.hbm_to_vmem [thread:$0]  %s4, 1024, %s417, [#allocation9], 64, 64, 4
        $region20: #{tpu_custom_call.1} parent=11 // pred_fallthru
          _
        // Predicated region
        $region21: #{tpu_custom_call.1} parent=11 // pred_check
          %p423 = pneg %p186
        $region22: #{tpu_custom_call.1} parent=11 // pred_check_branch
          %425 = sbr.rel (%p423) target = $region24
        $region23: #{tpu_custom_call.1} parent=11 // pred_region
          _
        $region24: #{tpu_custom_call.1} parent=11 // pred_fallthru
          _
        // Predicated region
        $region25: #{tpu_custom_call.1} parent=11 // pred_check
          %p426 = pneg %p207
        $region26: #{tpu_custom_call.1} parent=11 // pred_check_branch
          %428 = sbr.rel (%p426) target = $region28
        $region27: #{tpu_custom_call.1} parent=11 // pred_region
          _
        $region28: #{tpu_custom_call.1} parent=11 // pred_fallthru
          _
        // Predicated region
        $region29: #{tpu_custom_call.1} parent=11 // pred_check
          %p429 = pneg %p228
        $region30: #{tpu_custom_call.1} parent=11 // pred_check_branch
          %431 = sbr.rel (%p429) target = $region32
        $region31: #{tpu_custom_call.1} parent=11 // pred_region
          _
        $region32: #{tpu_custom_call.1} parent=11 // pred_fallthru
          _
        // Predicated region
        $region33: #{tpu_custom_call.1} parent=11 // pred_check
          %p432 = pneg %p249
        $region34: #{tpu_custom_call.1} parent=11 // pred_check_branch
          %434 = sbr.rel (%p432) target = $region36
        $region35: #{tpu_custom_call.1} parent=11 // pred_region
          _
        $region36: #{tpu_custom_call.1} parent=11 // pred_fallthru
          _
        // Predicated region
        $region37: #{tpu_custom_call.1} parent=11 // pred_check
          %p435 = pneg %p270
        $region38: #{tpu_custom_call.1} parent=11 // pred_check_branch
          %437 = sbr.rel (%p435) target = $region40
        $region39: #{tpu_custom_call.1} parent=11 // pred_region
          _
        $region40: #{tpu_custom_call.1} parent=11 // pred_fallthru
          _
        // Predicated region
        $region41: #{tpu_custom_call.1} parent=11 // pred_check
          %p438 = pneg %p291
        $region42: #{tpu_custom_call.1} parent=11 // pred_check_branch
          %440 = sbr.rel (%p438) target = $region44
        $region43: #{tpu_custom_call.1} parent=11 // pred_region
          %s442 = ssub.s32 4096, 4096
          %443 = vsyncadd [#allocation12], %s442
          %s444 = sshll.u32 [#allocation11], 4
          %s445 = int_to_ptr.vmem [resolvable:$true] %s444
          %450 = dma.hbm_to_vmem [thread:$0]  %s10, 4096, %s445, [#allocation12], 256, 256, 16
        $region44: #{tpu_custom_call.1} parent=11 // pred_fallthru
          _
        // Predicated region
        $region45: #{tpu_custom_call.1} parent=11 // pred_check
          %p451 = pneg %p312
        $region46: #{tpu_custom_call.1} parent=11 // pred_check_branch
          %453 = sbr.rel (%p451) target = $region48
        $region47: #{tpu_custom_call.1} parent=11 // pred_region
          _
        $region48: #{tpu_custom_call.1} parent=11 // pred_fallthru
          _
        // Predicated region
        $region49: #{tpu_custom_call.1} parent=11 // pred_check
          %p454 = pneg %p333
        $region50: #{tpu_custom_call.1} parent=11 // pred_check_branch
          %456 = sbr.rel (%p454) target = $region52
        $region51: #{tpu_custom_call.1} parent=11 // pred_region
          %s458 = ssub.s32 4096, 4096
          %459 = vsyncadd [#allocation12], %s458
          %s460 = sshll.u32 [#allocation13], 4
          %s461 = int_to_ptr.vmem [resolvable:$true] %s460
          %466 = dma.hbm_to_vmem [thread:$0]  %s12, 4096, %s461, [#allocation12], 64, 64, 4
        $region52: #{tpu_custom_call.1} parent=11 // pred_fallthru
          _
        // Predicated region
        $region53: #{tpu_custom_call.1} parent=11 // pred_check
          %p467 = pneg %p354
        $region54: #{tpu_custom_call.1} parent=11 // pred_check_branch
          %469 = sbr.rel (%p467) target = $region56
        $region55: #{tpu_custom_call.1} parent=11 // pred_region
          _
        $region56: #{tpu_custom_call.1} parent=11 // pred_fallthru
          _
      $region12: #{tpu_custom_call.1} parent=5 // pred_fallthru
        _
      %p470 = scmp.lt.s32.totalorder %s31, 2
      // Predicated region
      $region57: #{tpu_custom_call.1} parent=5 // pred_check
        %p471 = pneg %p470
      $region58: #{tpu_custom_call.1} parent=5 // pred_check_branch
        %473 = sbr.rel (%p471) target = $region60
      $region59: #{tpu_custom_call.1} parent=5 // pred_region
        // Predicated region
        $region61: #{tpu_custom_call.1} parent=59 // pred_check
          %p474 = pneg %p65
        $region62: #{tpu_custom_call.1} parent=59 // pred_check_branch
          %476 = sbr.rel (%p474) target = $region64
        $region63: #{tpu_custom_call.1} parent=59 // pred_region
          %s477 = sand.u32 %s55, 1
          %s478 = scalar_lea.sflag [#allocation3], %s477
          %s479 = sand.u32 %s55, 1
          %s480 = smul.addr %s479, 8
          %s481 = scalar_lea.vmem [#allocation2], %s480
          %s483 = ssub.s32 128, 128
          %484 = vsyncadd %s478, %s483
          %s485 = sadd.s32 %s39, %s38
          %s486 = smul.addr %s485, 128
          %s487 = scalar_lea.hbm %s0, %s486
          %s489 = sshll.u32 %s481, 4
          %s490 = int_to_ptr.vmem [resolvable:$true] %s489
          %492 = dma.hbm_to_vmem [thread:$0]  %s487, 128, %s490, %s478
        $region64: #{tpu_custom_call.1} parent=59 // pred_fallthru
          _
        // Predicated region
        $region65: #{tpu_custom_call.1} parent=59 // pred_check
          %p493 = pneg %p91
        $region66: #{tpu_custom_call.1} parent=59 // pred_check_branch
          %495 = sbr.rel (%p493) target = $region68
        $region67: #{tpu_custom_call.1} parent=59 // pred_region
          %s496 = sand.u32 %s31, 1
          %s497 = scalar_lea.sflag [#allocation6], %s496
          %s498 = sand.u32 %s81, 1
          %s499 = smul.addr %s498, 64
          %s500 = scalar_lea.vmem [#allocation5], %s499
          %s502 = ssub.s32 1024, 1024
          %503 = vsyncadd %s497, %s502
          %s504 = smul.addr %s38, 16
          %s505 = smul.addr %s504, 64
          %s506 = scalar_lea.hbm %s1, %s505
          %s507 = sshll.u32 %s500, 4
          %s508 = int_to_ptr.vmem [resolvable:$true] %s507
          %513 = dma.hbm_to_vmem [thread:$0]  %s506, 1024, %s508, %s497, 64, 64, 4
        $region68: #{tpu_custom_call.1} parent=59 // pred_fallthru
          _
        // Predicated region
        $region69: #{tpu_custom_call.1} parent=59 // pred_check
          %p514 = pneg %p117
        $region70: #{tpu_custom_call.1} parent=59 // pred_check_branch
          %516 = sbr.rel (%p514) target = $region72
        $region71: #{tpu_custom_call.1} parent=59 // pred_region
          %s517 = sand.u32 %s31, 1
          %s518 = scalar_lea.sflag [#allocation6], %s517
          %s519 = sand.u32 %s107, 1
          %s520 = smul.addr %s519, 64
          %s521 = scalar_lea.vmem [#allocation7], %s520
          %s523 = ssub.s32 1024, 1024
          %524 = vsyncadd %s518, %s523
          %s525 = smul.addr %s38, 16
          %s526 = smul.addr %s525, 64
          %s527 = scalar_lea.hbm %s2, %s526
          %s528 = sshll.u32 %s521, 4
          %s529 = int_to_ptr.vmem [resolvable:$true] %s528
          %534 = dma.hbm_to_vmem [thread:$0]  %s527, 1024, %s529, %s518, 64, 64, 4
        $region72: #{tpu_custom_call.1} parent=59 // pred_fallthru
          _
      $region60: #{tpu_custom_call.1} parent=5 // pred_fallthru
        _
      %p535 = scmp.le.s32.totalorder 1, %s31
      %p536 = scmp.lt.s32.totalorder %s31, 3
      %p537 = pnand %p535, %p536
      %p538 = pneg %p537
      // Predicated region
      $region73: #{tpu_custom_call.1} parent=5 // pred_check
        _
      $region74: #{tpu_custom_call.1} parent=5 // pred_check_branch
        %540 = sbr.rel (%p537) target = $region76
      $region75: #{tpu_custom_call.1} parent=5 // pred_region
        %s541 = ssub.s32 %s31, 1
        %s542 = sand.u32 %s58, 1
        %s543 = scalar_lea.sflag [#allocation3], %s542
        %s544 = sand.u32 %s58, 1
        %s545 = smul.addr %s544, 8
        %s546 = scalar_lea.vmem [#allocation2], %s545
        // Predicated region
        $region77: #{tpu_custom_call.1} parent=75 // pred_check
          %p547 = pneg %p71
        $region78: #{tpu_custom_call.1} parent=75 // pred_check_branch
          %549 = sbr.rel (%p547) target = $region80
        $region79: #{tpu_custom_call.1} parent=75 // pred_region
          %550 = dma.done %s543, 128
        $region80: #{tpu_custom_call.1} parent=75 // pred_fallthru
          _
        %s551 = sand.u32 %s36, 1
        %s552 = scalar_lea.sflag [#allocation6], %s551
        %s553 = sand.u32 %s84, 1
        %s554 = smul.addr %s553, 64
        %s555 = scalar_lea.vmem [#allocation5], %s554
        // Predicated region
        $region81: #{tpu_custom_call.1} parent=75 // pred_check
          %p556 = pneg %p97
        $region82: #{tpu_custom_call.1} parent=75 // pred_check_branch
          %558 = sbr.rel (%p556) target = $region84
        $region83: #{tpu_custom_call.1} parent=75 // pred_region
          %559 = dma.done %s552, 1024
        $region84: #{tpu_custom_call.1} parent=75 // pred_fallthru
          _
        %s560 = sand.u32 %s36, 1
        %s561 = scalar_lea.sflag [#allocation6], %s560
        %s562 = sand.u32 %s110, 1
        %s563 = smul.addr %s562, 64
        %s564 = scalar_lea.vmem [#allocation7], %s563
        // Predicated region
        $region85: #{tpu_custom_call.1} parent=75 // pred_check
          %p565 = pneg %p123
        $region86: #{tpu_custom_call.1} parent=75 // pred_check_branch
          %567 = sbr.rel (%p565) target = $region88
        $region87: #{tpu_custom_call.1} parent=75 // pred_region
          %568 = dma.done %s561, 1024
        $region88: #{tpu_custom_call.1} parent=75 // pred_fallthru
          _
        // Predicated region
        $region89: #{tpu_custom_call.1} parent=75 // pred_check
          %p569 = pneg %p144
        $region90: #{tpu_custom_call.1} parent=75 // pred_check_branch
          %571 = sbr.rel (%p569) target = $region92
        $region91: #{tpu_custom_call.1} parent=75 // pred_region
          %572 = dma.done [#allocation9], 1024
        $region92: #{tpu_custom_call.1} parent=75 // pred_fallthru
          _
        // Predicated region
        $region93: #{tpu_custom_call.1} parent=75 // pred_check
          %p573 = pneg %p165
        $region94: #{tpu_custom_call.1} parent=75 // pred_check_branch
          %575 = sbr.rel (%p573) target = $region96
        $region95: #{tpu_custom_call.1} parent=75 // pred_region
          %576 = dma.done [#allocation9], 1024
        $region96: #{tpu_custom_call.1} parent=75 // pred_fallthru
          _
        // Predicated region
        $region97: #{tpu_custom_call.1} parent=75 // pred_check
          %p577 = pneg %p291
        $region98: #{tpu_custom_call.1} parent=75 // pred_check_branch
          %579 = sbr.rel (%p577) target = $region100
        $region99: #{tpu_custom_call.1} parent=75 // pred_region
          %580 = dma.done [#allocation12], 4096
        $region100: #{tpu_custom_call.1} parent=75 // pred_fallthru
          _
        // Predicated region
        $region101: #{tpu_custom_call.1} parent=75 // pred_check
          %p581 = pneg %p333
        $region102: #{tpu_custom_call.1} parent=75 // pred_check_branch
          %583 = sbr.rel (%p581) target = $region104
        $region103: #{tpu_custom_call.1} parent=75 // pred_region
          %584 = dma.done [#allocation12], 4096
        $region104: #{tpu_custom_call.1} parent=75 // pred_fallthru
          _
        %s585 = sand.u32 %s58, 1
        %s586 = scalar_lea.sflag [#allocation3], %s585
        %s587 = sand.u32 %s58, 1
        %s588 = smul.addr %s587, 8
        %s589 = scalar_lea.vmem [#allocation2], %s588
        %p590 = pneg %p71
        %p591 = pneg %p68
        %s592 = sand.u32 %s36, 1
        %s593 = scalar_lea.sflag [#allocation6], %s592
        %s594 = sand.u32 %s84, 1
        %s595 = smul.addr %s594, 64
        %s596 = scalar_lea.vmem [#allocation5], %s595
        %p597 = pneg %p97
        %p598 = pneg %p94
        %s599 = sand.u32 %s36, 1
        %s600 = scalar_lea.sflag [#allocation6], %s599
        %s601 = sand.u32 %s110, 1
        %s602 = smul.addr %s601, 64
        %s603 = scalar_lea.vmem [#allocation7], %s602
        %p604 = pneg %p123
        %p605 = pneg %p120
        %p606 = pneg %p144
        %p607 = pneg %p141
        %p608 = pneg %p165
        %p609 = pneg %p162
        %p610 = pneg %p186
        %p611 = pneg %p183
        %p612 = pneg %p207
        %p613 = pneg %p204
        %p614 = pneg %p228
        %p615 = pneg %p225
        %p616 = pneg %p249
        %p617 = pneg %p246
        %p618 = pneg %p270
        %p619 = pneg %p267
        %p620 = pneg %p291
        %p621 = pneg %p288
        %p622 = pneg %p312
        %p623 = pneg %p309
        %p624 = pneg %p333
        %p625 = pneg %p330
        %p626 = pneg %p354
        %p627 = pneg %p351
        %p628 = pneg %p382
        %p629 = pneg %p379
        %s630 = sand.u32 %s369, 1
        %s631 = scalar_lea.sflag [#allocation4], %s630
        %s632 = sand.u32 %s369, 1
        %s633 = smul.addr %s632, 8
        %s634 = scalar_lea.vmem [#allocation14], %s633
        %v636 = vld [vmem:[%s546] sm:$0xff]
        %v637 = vld [vmem:[%s6] sm:$0x1]
        %v638 = vld [vmem:[%s7] sm:$0x1]
        %639 = vadd.xlane.f32.xlu0 %v636
        %v640 = vpop.xlane.xlu0 %639
        %v641 = vrcp.pop 128.0
        %v642 = vmul.f32 %v640, %v641
        %v643 = vsub.f32 %v636, %v642
        %v644 = vmul.f32 %v643, %v643
        %645 = vadd.xlane.f32.xlu0 %v644
        %v646 = vpop.xlane.xlu0 %645
        %v647 = vmul.f32 %v646, %v641
        %v648 = vadd.f32 %v647, 1e-05
        %v649 = vrsqrt.pop %v648
        %v650 = vmul.f32 %v643, %v649
        %v652 = vlaneseq
        %v653 = vshrl.u32 %v652, 7
        %v654 = vsub.s32 0, %v653
        %v655 = vrot.slane %v637, %v654
        %v657 = vmul.f32 %v650, %v655
        %v659 = vlaneseq
        %v660 = vshrl.u32 %v659, 7
        %v661 = vsub.s32 0, %v660
        %v662 = vrot.slane %v638, %v661
        %v664 = vadd.f32 %v657, %v662
        %v665 = vpack.c.bf16 %v664, %v664
        %v666 = vld [vmem:[#allocation8] sm:$0xf]
        %v667 = vld [vmem:[#allocation8 + $0x4] sm:$0xf]
        %v668 = vld [vmem:[#allocation8 + $0x8] sm:$0xf]
        %v669 = vld [vmem:[#allocation8 + $0xc] sm:$0xf]
        %v670 = vld [vmem:[#allocation8 + $0x10] sm:$0xf]
        %v671 = vld [vmem:[#allocation8 + $0x14] sm:$0xf]
        %v672 = vld [vmem:[#allocation8 + $0x18] sm:$0xf]
        %v673 = vld [vmem:[#allocation8 + $0x1c] sm:$0xf]
        %v674 = vld [vmem:[#allocation8 + $0x20] sm:$0xf]
        %v675 = vld [vmem:[#allocation8 + $0x24] sm:$0xf]
        %v676 = vld [vmem:[#allocation8 + $0x28] sm:$0xf]
        %v677 = vld [vmem:[#allocation8 + $0x2c] sm:$0xf]
        %v678 = vld [vmem:[#allocation8 + $0x30] sm:$0xf]
        %v679 = vld [vmem:[#allocation8 + $0x34] sm:$0xf]
        %v680 = vld [vmem:[#allocation8 + $0x38] sm:$0xf]
        %v681 = vld [vmem:[#allocation8 + $0x3c] sm:$0xf]
        %v698 = vunpack.c.l.b16 %v666
        %v699 = vunpack.c.l.b16 %v667
        %v700 = vunpack.c.l.b16 %v668
        %v701 = vunpack.c.l.b16 %v669
        %v702 = vunpack.c.l.b16 %v670
        %v703 = vunpack.c.l.b16 %v671
        %v704 = vunpack.c.l.b16 %v672
        %v705 = vunpack.c.l.b16 %v673
        %v706 = vunpack.c.l.b16 %v674
        %v707 = vunpack.c.l.b16 %v675
        %v708 = vunpack.c.l.b16 %v676
        %v709 = vunpack.c.l.b16 %v677
        %v710 = vunpack.c.l.b16 %v678
        %v711 = vunpack.c.l.b16 %v679
        %v712 = vunpack.c.l.b16 %v680
        %v713 = vunpack.c.l.b16 %v681
        %v714 = vpack.c.b16 %v699, %v698
        %v715 = vpack.c.b16 %v701, %v700
        %v716 = vpack.c.b16 %v703, %v702
        %v717 = vpack.c.b16 %v705, %v704
        %v718 = vpack.c.b16 %v707, %v706
        %v719 = vpack.c.b16 %v709, %v708
        %v720 = vpack.c.b16 %v711, %v710
        %v721 = vpack.c.b16 %v713, %v712
        %730 = vmatprep.subr.bf16.mxu0 0
        %731 = vmatpush1.bf16.msra.mxu0 %v721
        %732 = vmatprep.subr.bf16.mxu0 0
        %733 = vmatpush1.bf16.msra.mxu0 %v720
        %734 = vmatprep.subr.bf16.mxu0 0
        %735 = vmatpush1.bf16.msra.mxu0 %v719
        %736 = vmatprep.subr.bf16.mxu0 0
        %737 = vmatpush1.bf16.msra.mxu0 %v718
        %738 = vmatprep.subr.bf16.mxu0 0
        %739 = vmatpush1.bf16.msra.mxu0 %v717
        %740 = vmatprep.subr.bf16.mxu0 0
        %741 = vmatpush1.bf16.msra.mxu0 %v716
        %742 = vmatprep.subr.bf16.mxu0 0
        %743 = vmatpush1.bf16.msra.mxu0 %v715
        %744 = vmatprep.subr.bf16.mxu0 0
        %745 = vmatpush1.bf16.msra.mxu0 %v714
        %746 = vmatprep.subr.bf16.mxu0 0
        %747 = vmatpush2.bf16.msra.mxu0 0
        %748 = vmatprep.subr.bf16.mxu0 0
        %749 = vmatpush2.bf16.msra.mxu0 0
        %750 = vmatprep.subr.bf16.mxu0 0
        %751 = vmatpush2.bf16.msra.mxu0 0
        %752 = vmatprep.subr.bf16.mxu0 0
        %753 = vmatpush2.bf16.msra.mxu0 0
        %754 = vmatprep.subr.bf16.mxu0 0
        %755 = vmatpush2.bf16.msra.mxu0 0
        %756 = vmatprep.subr.bf16.mxu0 0
        %757 = vmatpush2.bf16.msra.mxu0 0
        %758 = vmatprep.subr.bf16.mxu0 0
        %759 = vmatpush2.bf16.msra.mxu0 0
        %760 = vmatprep.subr.bf16.mxu0 0
        %761 = vmatpush2.bf16.msra.mxu0 0
        %762 = vmatprep.mubr.bf16.mxu0 0
        %763 = vmatmul.mubr.bf16.gmra.mxu0 %v665
        %v764 = vpop.f32.mrf.mxu0
        %v765 = vadd.f32 0.0, %v764
        %v766 = vpop.f32.mrf.mxu0
        %v767 = vpop.f32.mrf.mxu0
        %v768 = vpop.f32.mrf.mxu0
        %769 = vdwg.mxu0
        %771 = vrot.lane.b32.xlu0 %v765, 112
        %v772 = vpop.permute.xlu0 %771
        %774 = vrot.lane.b32.xlu0 %v765, 96
        %v775 = vpop.permute.xlu0 %774
        %777 = vrot.lane.b32.xlu0 %v765, 80
        %v778 = vpop.permute.xlu0 %777
        %780 = vrot.lane.b32.xlu0 %v765, 64
        %v781 = vpop.permute.xlu0 %780
        %783 = vrot.lane.b32.xlu0 %v765, 48
        %v784 = vpop.permute.xlu0 %783
        %786 = vrot.lane.b32.xlu0 %v765, 32
        %v787 = vpop.permute.xlu0 %786
        %789 = vrot.lane.b32.xlu0 %v765, 16
        %v790 = vpop.permute.xlu0 %789
        %v792 = vcombine.low %v765, %v775
        %v793 = vcombine.high %v765, %v775
        %v795 = vunpack.c.l.s4 1983009808
        %v796 = vunpack.c.0.s8 %v795
        %v797 = vlaneseq
        %v798 = vshrl.u32 %v797, 7
        %v799 = vsub.s32 %v796, %v798
        %v800 = vrot.slane %v792, %v799
        %v802 = vunpack.c.l.s4 1983009808
        %v803 = vunpack.c.0.s8 %v802
        %v804 = vlaneseq
        %v805 = vshrl.u32 %v804, 7
        %v806 = vsub.s32 %v803, %v805
        %v807 = vrot.slane %v793, %v806
        %v808 = vcombine.low %v772, %v778
        %v809 = vcombine.high %v772, %v778
        %v811 = vunpack.c.l.s4 1983009808
        %v812 = vunpack.c.0.s8 %v811
        %v813 = vlaneseq
        %v814 = vshrl.u32 %v813, 7
        %v815 = vsub.s32 %v812, %v814
        %v816 = vrot.slane %v808, %v815
        %v818 = vunpack.c.l.s4 1983009808
        %v819 = vunpack.c.0.s8 %v818
        %v820 = vlaneseq
        %v821 = vshrl.u32 %v820, 7
        %v822 = vsub.s32 %v819, %v821
        %v823 = vrot.slane %v809, %v822
        %v824 = vcombine.low %v781, %v787
        %v825 = vcombine.high %v781, %v787
        %v827 = vunpack.c.l.s4 1983009808
        %v828 = vunpack.c.0.s8 %v827
        %v829 = vlaneseq
        %v830 = vshrl.u32 %v829, 7
        %v831 = vsub.s32 %v828, %v830
        %v832 = vrot.slane %v824, %v831
        %v834 = vunpack.c.l.s4 1983009808
        %v835 = vunpack.c.0.s8 %v834
        %v836 = vlaneseq
        %v837 = vshrl.u32 %v836, 7
        %v838 = vsub.s32 %v835, %v837
        %v839 = vrot.slane %v825, %v838
        %v840 = vcombine.low %v784, %v790
        %v841 = vcombine.high %v784, %v790
        %v843 = vunpack.c.l.s4 1983009808
        %v844 = vunpack.c.0.s8 %v843
        %v845 = vlaneseq
        %v846 = vshrl.u32 %v845, 7
        %v847 = vsub.s32 %v844, %v846
        %v848 = vrot.slane %v840, %v847
        %v850 = vunpack.c.l.s4 1983009808
        %v851 = vunpack.c.0.s8 %v850
        %v852 = vlaneseq
        %v853 = vshrl.u32 %v852, 7
        %v854 = vsub.s32 %v851, %v853
        %v855 = vrot.slane %v841, %v854
        %v856 = vcombine.low %v800, %v816
        %v857 = vcombine.high %v800, %v816
        %v859 = vunpack.c.l.s4 1934713408
        %v860 = vunpack.c.0.s8 %v859
        %v861 = vlaneseq
        %v862 = vshrl.u32 %v861, 7
        %v863 = vsub.s32 %v860, %v862
        %v864 = vrot.slane %v856, %v863
        %v866 = vunpack.c.l.s4 1934713408
        %v867 = vunpack.c.0.s8 %v866
        %v868 = vlaneseq
        %v869 = vshrl.u32 %v868, 7
        %v870 = vsub.s32 %v867, %v869
        %v871 = vrot.slane %v857, %v870
        %v872 = vcombine.low %v807, %v823
        %v873 = vcombine.high %v807, %v823
        %v875 = vunpack.c.l.s4 1934713408
        %v876 = vunpack.c.0.s8 %v875
        %v877 = vlaneseq
        %v878 = vshrl.u32 %v877, 7
        %v879 = vsub.s32 %v876, %v878
        %v880 = vrot.slane %v872, %v879
        %v882 = vunpack.c.l.s4 1934713408
        %v883 = vunpack.c.0.s8 %v882
        %v884 = vlaneseq
        %v885 = vshrl.u32 %v884, 7
        %v886 = vsub.s32 %v883, %v885
        %v887 = vrot.slane %v873, %v886
        %v888 = vcombine.low %v832, %v848
        %v889 = vcombine.high %v832, %v848
        %v891 = vunpack.c.l.s4 1934713408
        %v892 = vunpack.c.0.s8 %v891
        %v893 = vlaneseq
        %v894 = vshrl.u32 %v893, 7
        %v895 = vsub.s32 %v892, %v894
        %v896 = vrot.slane %v888, %v895
        %v898 = vunpack.c.l.s4 1934713408
        %v899 = vunpack.c.0.s8 %v898
        %v900 = vlaneseq
        %v901 = vshrl.u32 %v900, 7
        %v902 = vsub.s32 %v899, %v901
        %v903 = vrot.slane %v889, %v902
        %v904 = vcombine.low %v839, %v855
        %v905 = vcombine.high %v839, %v855
        %v907 = vunpack.c.l.s4 1934713408
        %v908 = vunpack.c.0.s8 %v907
        %v909 = vlaneseq
        %v910 = vshrl.u32 %v909, 7
        %v911 = vsub.s32 %v908, %v910
        %v912 = vrot.slane %v904, %v911
        %v914 = vunpack.c.l.s4 1934713408
        %v915 = vunpack.c.0.s8 %v914
        %v916 = vlaneseq
        %v917 = vshrl.u32 %v916, 7
        %v918 = vsub.s32 %v915, %v917
        %v919 = vrot.slane %v905, %v918
        %v920 = vcombine.low %v864, %v896
        %v921 = vcombine.high %v864, %v896
        %v922 = vcombine.low %v871, %v903
        %v923 = vcombine.high %v871, %v903
        %v924 = vcombine.low %v880, %v912
        %v925 = vcombine.high %v880, %v912
        %v926 = vcombine.low %v887, %v919
        %v927 = vcombine.high %v887, %v919
        %v928 = vcombine.low %v920, %v922
        %v929 = vcombine.high %v920, %v922
        %v931 = vunpack.c.l.s4 1983009808
        %v932 = vunpack.c.0.s8 %v931
        %v933 = vlaneseq
        %v934 = vshrl.u32 %v933, 7
        %v935 = vsub.s32 %v932, %v934
        %v936 = vrot.slane %v928, %v935
        %v938 = vunpack.c.l.s4 1983009808
        %v939 = vunpack.c.0.s8 %v938
        %v940 = vlaneseq
        %v941 = vshrl.u32 %v940, 7
        %v942 = vsub.s32 %v939, %v941
        %v943 = vrot.slane %v929, %v942
        %v944 = vcombine.low %v921, %v923
        %v945 = vcombine.high %v921, %v923
        %v947 = vunpack.c.l.s4 1983009808
        %v948 = vunpack.c.0.s8 %v947
        %v949 = vlaneseq
        %v950 = vshrl.u32 %v949, 7
        %v951 = vsub.s32 %v948, %v950
        %v952 = vrot.slane %v944, %v951
        %v954 = vunpack.c.l.s4 1983009808
        %v955 = vunpack.c.0.s8 %v954
        %v956 = vlaneseq
        %v957 = vshrl.u32 %v956, 7
        %v958 = vsub.s32 %v955, %v957
        %v959 = vrot.slane %v945, %v958
        %v960 = vcombine.low %v924, %v926
        %v961 = vcombine.high %v924, %v926
        %v963 = vunpack.c.l.s4 1983009808
        %v964 = vunpack.c.0.s8 %v963
        %v965 = vlaneseq
        %v966 = vshrl.u32 %v965, 7
        %v967 = vsub.s32 %v964, %v966
        %v968 = vrot.slane %v960, %v967
        %v970 = vunpack.c.l.s4 1983009808
        %v971 = vunpack.c.0.s8 %v970
        %v972 = vlaneseq
        %v973 = vshrl.u32 %v972, 7
        %v974 = vsub.s32 %v971, %v973
        %v975 = vrot.slane %v961, %v974
        %v976 = vcombine.low %v925, %v927
        %v977 = vcombine.high %v925, %v927
        %v979 = vunpack.c.l.s4 1983009808
        %v980 = vunpack.c.0.s8 %v979
        %v981 = vlaneseq
        %v982 = vshrl.u32 %v981, 7
        %v983 = vsub.s32 %v980, %v982
        %v984 = vrot.slane %v976, %v983
        %v986 = vunpack.c.l.s4 1983009808
        %v987 = vunpack.c.0.s8 %v986
        %v988 = vlaneseq
        %v989 = vshrl.u32 %v988, 7
        %v990 = vsub.s32 %v987, %v989
        %v991 = vrot.slane %v977, %v990
        %v992 = vcombine.low %v936, %v952
        %v993 = vcombine.high %v936, %v952
        %v995 = vunpack.c.l.s4 1934713408
        %v996 = vunpack.c.0.s8 %v995
        %v997 = vlaneseq
        %v998 = vshrl.u32 %v997, 7
        %v999 = vsub.s32 %v996, %v998
        %v1000 = vrot.slane %v992, %v999
        %v1002 = vunpack.c.l.s4 1934713408
        %v1003 = vunpack.c.0.s8 %v1002
        %v1004 = vlaneseq
        %v1005 = vshrl.u32 %v1004, 7
        %v1006 = vsub.s32 %v1003, %v1005
        %v1007 = vrot.slane %v993, %v1006
        %v1008 = vcombine.low %v943, %v959
        %v1009 = vcombine.high %v943, %v959
        %v1011 = vunpack.c.l.s4 1934713408
        %v1012 = vunpack.c.0.s8 %v1011
        %v1013 = vlaneseq
        %v1014 = vshrl.u32 %v1013, 7
        %v1015 = vsub.s32 %v1012, %v1014
        %v1016 = vrot.slane %v1008, %v1015
        %v1018 = vunpack.c.l.s4 1934713408
        %v1019 = vunpack.c.0.s8 %v1018
        %v1020 = vlaneseq
        %v1021 = vshrl.u32 %v1020, 7
        %v1022 = vsub.s32 %v1019, %v1021
        %v1023 = vrot.slane %v1009, %v1022
        %v1024 = vcombine.low %v968, %v984
        %v1025 = vcombine.high %v968, %v984
        %v1027 = vunpack.c.l.s4 1934713408
        %v1028 = vunpack.c.0.s8 %v1027
        %v1029 = vlaneseq
        %v1030 = vshrl.u32 %v1029, 7
        %v1031 = vsub.s32 %v1028, %v1030
        %v1032 = vrot.slane %v1024, %v1031
        %v1034 = vunpack.c.l.s4 1934713408
        %v1035 = vunpack.c.0.s8 %v1034
        %v1036 = vlaneseq
        %v1037 = vshrl.u32 %v1036, 7
        %v1038 = vsub.s32 %v1035, %v1037
        %v1039 = vrot.slane %v1025, %v1038
        %v1040 = vcombine.low %v975, %v991
        %v1041 = vcombine.high %v975, %v991
        %v1043 = vunpack.c.l.s4 1934713408
        %v1044 = vunpack.c.0.s8 %v1043
        %v1045 = vlaneseq
        %v1046 = vshrl.u32 %v1045, 7
        %v1047 = vsub.s32 %v1044, %v1046
        %v1048 = vrot.slane %v1040, %v1047
        %v1050 = vunpack.c.l.s4 1934713408
        %v1051 = vunpack.c.0.s8 %v1050
        %v1052 = vlaneseq
        %v1053 = vshrl.u32 %v1052, 7
        %v1054 = vsub.s32 %v1051, %v1053
        %v1055 = vrot.slane %v1041, %v1054
        %v1056 = vcombine.low %v1000, %v1032
        %v1057 = vcombine.high %v1000, %v1032
        %v1058 = vcombine.low %v1007, %v1039
        %v1059 = vcombine.high %v1007, %v1039
        %v1060 = vcombine.low %v1016, %v1048
        %v1061 = vcombine.high %v1016, %v1048
        %v1062 = vcombine.low %v1023, %v1055
        %v1063 = vcombine.high %v1023, %v1055
        %v1064 = vpack.c.bf16 %v1056, %v1056
        %v1065 = vpack.c.bf16 %v1057, %v1057
        %v1066 = vpack.c.bf16 %v1058, %v1058
        %v1067 = vpack.c.bf16 %v1059, %v1059
        %v1068 = vpack.c.bf16 %v1060, %v1060
        %v1069 = vpack.c.bf16 %v1061, %v1061
        %v1070 = vpack.c.bf16 %v1062, %v1062
        %v1071 = vpack.c.bf16 %v1063, %v1063
        %v1072 = vld [vmem:[%s555] sm:$0xf]
        %v1073 = vld [vmem:[%s555 + $0x4] sm:$0xf]
        %v1074 = vld [vmem:[%s555 + $0x8] sm:$0xf]
        %v1075 = vld [vmem:[%s555 + $0xc] sm:$0xf]
        %v1076 = vld [vmem:[%s555 + $0x10] sm:$0xf]
        %v1077 = vld [vmem:[%s555 + $0x14] sm:$0xf]
        %v1078 = vld [vmem:[%s555 + $0x18] sm:$0xf]
        %v1079 = vld [vmem:[%s555 + $0x1c] sm:$0xf]
        %v1080 = vld [vmem:[%s555 + $0x20] sm:$0xf]
        %v1081 = vld [vmem:[%s555 + $0x24] sm:$0xf]
        %v1082 = vld [vmem:[%s555 + $0x28] sm:$0xf]
        %v1083 = vld [vmem:[%s555 + $0x2c] sm:$0xf]
        %v1084 = vld [vmem:[%s555 + $0x30] sm:$0xf]
        %v1085 = vld [vmem:[%s555 + $0x34] sm:$0xf]
        %v1086 = vld [vmem:[%s555 + $0x38] sm:$0xf]
        %v1087 = vld [vmem:[%s555 + $0x3c] sm:$0xf]
        %v1088 = vld [vmem:[%s564] sm:$0xf]
        %v1089 = vld [vmem:[%s564 + $0x4] sm:$0xf]
        %v1090 = vld [vmem:[%s564 + $0x8] sm:$0xf]
        %v1091 = vld [vmem:[%s564 + $0xc] sm:$0xf]
        %v1092 = vld [vmem:[%s564 + $0x10] sm:$0xf]
        %v1093 = vld [vmem:[%s564 + $0x14] sm:$0xf]
        %v1094 = vld [vmem:[%s564 + $0x18] sm:$0xf]
        %v1095 = vld [vmem:[%s564 + $0x1c] sm:$0xf]
        %v1096 = vld [vmem:[%s564 + $0x20] sm:$0xf]
        %v1097 = vld [vmem:[%s564 + $0x24] sm:$0xf]
        %v1098 = vld [vmem:[%s564 + $0x28] sm:$0xf]
        %v1099 = vld [vmem:[%s564 + $0x2c] sm:$0xf]
        %v1100 = vld [vmem:[%s564 + $0x30] sm:$0xf]
        %v1101 = vld [vmem:[%s564 + $0x34] sm:$0xf]
        %v1102 = vld [vmem:[%s564 + $0x38] sm:$0xf]
        %v1103 = vld [vmem:[%s564 + $0x3c] sm:$0xf]
        %v1106 = vunpack.c.l.b16 %v1072
        %v1107 = vunpack.c.l.b16 %v1073
        %v1108 = vpack.c.b16 %v1107, %v1106
        %vm1109 = vcmask 130048
        %v1111 = vsel %vm1109, %v1064, 0
        %v1114 = vsel %vm1109, %v1108, 0
        %1116 = vmatprep.subr.bf16.mxu0 0
        %1117 = vmatpush1.bf16.xpose.msra.mxu0 0
        %1118 = vmatprep.subr.bf16.mxu0 0
        %1119 = vmatpush1.bf16.xpose.msra.mxu0 0
        %1120 = vmatprep.subr.bf16.mxu0 0
        %1121 = vmatpush1.bf16.xpose.msra.mxu0 0
        %1122 = vmatprep.subr.bf16.mxu0 0
        %1123 = vmatpush1.bf16.xpose.msra.mxu0 0
        %1124 = vmatprep.subr.bf16.mxu0 0
        %1125 = vmatpush1.bf16.xpose.msra.mxu0 0
        %1126 = vmatprep.subr.bf16.mxu0 0
        %1127 = vmatpush1.bf16.xpose.msra.mxu0 0
        %1128 = vmatprep.subr.bf16.mxu0 0
        %1129 = vmatpush1.bf16.xpose.msra.mxu0 0
        %1130 = vmatprep.subr.bf16.mxu0 0
        %1131 = vmatpush1.bf16.xpose.msra.mxu0 %v1114
        %1132 = vmatprep.subr.bf16.mxu0 0
        %1133 = vmatpush2.bf16.xpose.msra.mxu0 0
        %1134 = vmatprep.subr.bf16.mxu0 0
        %1135 = vmatpush2.bf16.xpose.msra.mxu0 0
        %1136 = vmatprep.subr.bf16.mxu0 0
        %1137 = vmatpush2.bf16.xpose.msra.mxu0 0
        %1138 = vmatprep.subr.bf16.mxu0 0
        %1139 = vmatpush2.bf16.xpose.msra.mxu0 0
        %1140 = vmatprep.subr.bf16.mxu0 0
        %1141 = vmatpush2.bf16.xpose.msra.mxu0 0
        %1142 = vmatprep.subr.bf16.mxu0 0
        %1143 = vmatpush2.bf16.xpose.msra.mxu0 0
        %1144 = vmatprep.subr.bf16.mxu0 0
        %1145 = vmatpush2.bf16.xpose.msra.mxu0 0
        %1146 = vmatprep.subr.bf16.mxu0 0
        %1147 = vmatpush2.bf16.xpose.msra.mxu0 0
        %1148 = vmatprep.mubr.bf16.mxu0 0
        %1149 = vmatmul.mubr.bf16.gmra.mxu0 %v1111
        %v1150 = vpop.f32.mrf.mxu0
        %v1151 = vadd.f32 0.0, %v1150
        %v1152 = vpop.f32.mrf.mxu0
        %v1153 = vpop.f32.mrf.mxu0
        %v1154 = vpop.f32.mrf.mxu0
        %1155 = vdwg.mxu0
        %v1158 = vunpack.c.l.b16 %v1074
        %v1159 = vunpack.c.l.b16 %v1075
        %v1160 = vpack.c.b16 %v1159, %v1158
        %v1162 = vsel %vm1109, %v1065, 0
        %v1165 = vsel %vm1109, %v1160, 0
        %1167 = vmatprep.subr.bf16.mxu0 0
        %1168 = vmatpush1.bf16.xpose.msra.mxu0 0
        %1169 = vmatprep.subr.bf16.mxu0 0
        %1170 = vmatpush1.bf16.xpose.msra.mxu0 0
        %1171 = vmatprep.subr.bf16.mxu0 0
        %1172 = vmatpush1.bf16.xpose.msra.mxu0 0
        %1173 = vmatprep.subr.bf16.mxu0 0
        %1174 = vmatpush1.bf16.xpose.msra.mxu0 0
        %1175 = vmatprep.subr.bf16.mxu0 0
        %1176 = vmatpush1.bf16.xpose.msra.mxu0 0
        %1177 = vmatprep.subr.bf16.mxu0 0
        %1178 = vmatpush1.bf16.xpose.msra.mxu0 0
        %1179 = vmatprep.subr.bf16.mxu0 0
        %1180 = vmatpush1.bf16.xpose.msra.mxu0 0
        %1181 = vmatprep.subr.bf16.mxu0 0
        %1182 = vmatpush1.bf16.xpose.msra.mxu0 %v1165
        %1183 = vmatprep.subr.bf16.mxu0 0
        %1184 = vmatpush2.bf16.xpose.msra.mxu0 0
        %1185 = vmatprep.subr.bf16.mxu0 0
        %1186 = vmatpush2.bf16.xpose.msra.mxu0 0
        %1187 = vmatprep.subr.bf16.mxu0 0
        %1188 = vmatpush2.bf16.xpose.msra.mxu0 0
        %1189 = vmatprep.subr.bf16.mxu0 0
        %1190 = vmatpush2.bf16.xpose.msra.mxu0 0
        %1191 = vmatprep.subr.bf16.mxu0 0
        %1192 = vmatpush2.bf16.xpose.msra.mxu0 0
        %1193 = vmatprep.subr.bf16.mxu0 0
        %1194 = vmatpush2.bf16.xpose.msra.mxu0 0
        %1195 = vmatprep.subr.bf16.mxu0 0
        %1196 = vmatpush2.bf16.xpose.msra.mxu0 0
        %1197 = vmatprep.subr.bf16.mxu0 0
        %1198 = vmatpush2.bf16.xpose.msra.mxu0 0
        %1199 = vmatprep.mubr.bf16.mxu0 0
        %1200 = vmatmul.mubr.bf16.gmra.mxu0 %v1162
        %v1201 = vpop.f32.mrf.mxu0
        %v1202 = vadd.f32 0.0, %v1201
        %v1203 = vpop.f32.mrf.mxu0
        %v1204 = vpop.f32.mrf.mxu0
        %v1205 = vpop.f32.mrf.mxu0
        %1206 = vdwg.mxu0
        %v1209 = vunpack.c.l.b16 %v1076
        %v1210 = vunpack.c.l.b16 %v1077
        %v1211 = vpack.c.b16 %v1210, %v1209
        %v1213 = vsel %vm1109, %v1066, 0
        %v1216 = vsel %vm1109, %v1211, 0
        %1218 = vmatprep.subr.bf16.mxu0 0
        %1219 = vmatpush1.bf16.xpose.msra.mxu0 0
        %1220 = vmatprep.subr.bf16.mxu0 0
        %1221 = vmatpush1.bf16.xpose.msra.mxu0 0
        %1222 = vmatprep.subr.bf16.mxu0 0
        %1223 = vmatpush1.bf16.xpose.msra.mxu0 0
        %1224 = vmatprep.subr.bf16.mxu0 0
        %1225 = vmatpush1.bf16.xpose.msra.mxu0 0
        %1226 = vmatprep.subr.bf16.mxu0 0
        %1227 = vmatpush1.bf16.xpose.msra.mxu0 0
        %1228 = vmatprep.subr.bf16.mxu0 0
        %1229 = vmatpush1.bf16.xpose.msra.mxu0 0
        %1230 = vmatprep.subr.bf16.mxu0 0
        %1231 = vmatpush1.bf16.xpose.msra.mxu0 0
        %1232 = vmatprep.subr.bf16.mxu0 0
        %1233 = vmatpush1.bf16.xpose.msra.mxu0 %v1216
        %1234 = vmatprep.subr.bf16.mxu0 0
        %1235 = vmatpush2.bf16.xpose.msra.mxu0 0
        %1236 = vmatprep.subr.bf16.mxu0 0
        %1237 = vmatpush2.bf16.xpose.msra.mxu0 0
        %1238 = vmatprep.subr.bf16.mxu0 0
        %1239 = vmatpush2.bf16.xpose.msra.mxu0 0
        %1240 = vmatprep.subr.bf16.mxu0 0
        %1241 = vmatpush2.bf16.xpose.msra.mxu0 0
        %1242 = vmatprep.subr.bf16.mxu0 0
        %1243 = vmatpush2.bf16.xpose.msra.mxu0 0
        %1244 = vmatprep.subr.bf16.mxu0 0
        %1245 = vmatpush2.bf16.xpose.msra.mxu0 0
        %1246 = vmatprep.subr.bf16.mxu0 0
        %1247 = vmatpush2.bf16.xpose.msra.mxu0 0
        %1248 = vmatprep.subr.bf16.mxu0 0
        %1249 = vmatpush2.bf16.xpose.msra.mxu0 0
        %1250 = vmatprep.mubr.bf16.mxu0 0
        %1251 = vmatmul.mubr.bf16.gmra.mxu0 %v1213
        %v1252 = vpop.f32.mrf.mxu0
        %v1253 = vadd.f32 0.0, %v1252
        %v1254 = vpop.f32.mrf.mxu0
        %v1255 = vpop.f32.mrf.mxu0
        %v1256 = vpop.f32.mrf.mxu0
        %1257 = vdwg.mxu0
        %v1260 = vunpack.c.l.b16 %v1078
        %v1261 = vunpack.c.l.b16 %v1079
        %v1262 = vpack.c.b16 %v1261, %v1260
        %v1264 = vsel %vm1109, %v1067, 0
        %v1267 = vsel %vm1109, %v1262, 0
        %1269 = vmatprep.subr.bf16.mxu0 0
        %1270 = vmatpush1.bf16.xpose.msra.mxu0 0
        %1271 = vmatprep.subr.bf16.mxu0 0
        %1272 = vmatpush1.bf16.xpose.msra.mxu0 0
        %1273 = vmatprep.subr.bf16.mxu0 0
        %1274 = vmatpush1.bf16.xpose.msra.mxu0 0
        %1275 = vmatprep.subr.bf16.mxu0 0
        %1276 = vmatpush1.bf16.xpose.msra.mxu0 0
        %1277 = vmatprep.subr.bf16.mxu0 0
        %1278 = vmatpush1.bf16.xpose.msra.mxu0 0
        %1279 = vmatprep.subr.bf16.mxu0 0
        %1280 = vmatpush1.bf16.xpose.msra.mxu0 0
        %1281 = vmatprep.subr.bf16.mxu0 0
        %1282 = vmatpush1.bf16.xpose.msra.mxu0 0
        %1283 = vmatprep.subr.bf16.mxu0 0
        %1284 = vmatpush1.bf16.xpose.msra.mxu0 %v1267
        %1285 = vmatprep.subr.bf16.mxu0 0
        %1286 = vmatpush2.bf16.xpose.msra.mxu0 0
        %1287 = vmatprep.subr.bf16.mxu0 0
        %1288 = vmatpush2.bf16.xpose.msra.mxu0 0
        %1289 = vmatprep.subr.bf16.mxu0 0
        %1290 = vmatpush2.bf16.xpose.msra.mxu0 0
        %1291 = vmatprep.subr.bf16.mxu0 0
        %1292 = vmatpush2.bf16.xpose.msra.mxu0 0
        %1293 = vmatprep.subr.bf16.mxu0 0
        %1294 = vmatpush2.bf16.xpose.msra.mxu0 0
        %1295 = vmatprep.subr.bf16.mxu0 0
        %1296 = vmatpush2.bf16.xpose.msra.mxu0 0
        %1297 = vmatprep.subr.bf16.mxu0 0
        %1298 = vmatpush2.bf16.xpose.msra.mxu0 0
        %1299 = vmatprep.subr.bf16.mxu0 0
        %1300 = vmatpush2.bf16.xpose.msra.mxu0 0
        %1301 = vmatprep.mubr.bf16.mxu0 0
        %1302 = vmatmul.mubr.bf16.gmra.mxu0 %v1264
        %v1303 = vpop.f32.mrf.mxu0
        %v1304 = vadd.f32 0.0, %v1303
        %v1305 = vpop.f32.mrf.mxu0
        %v1306 = vpop.f32.mrf.mxu0
        %v1307 = vpop.f32.mrf.mxu0
        %1308 = vdwg.mxu0
        %v1311 = vunpack.c.l.b16 %v1080
        %v1312 = vunpack.c.l.b16 %v1081
        %v1313 = vpack.c.b16 %v1312, %v1311
        %v1315 = vsel %vm1109, %v1068, 0
        %v1318 = vsel %vm1109, %v1313, 0
        %1320 = vmatprep.subr.bf16.mxu0 0
        %1321 = vmatpush1.bf16.xpose.msra.mxu0 0
        %1322 = vmatprep.subr.bf16.mxu0 0
        %1323 = vmatpush1.bf16.xpose.msra.mxu0 0
        %1324 = vmatprep.subr.bf16.mxu0 0
        %1325 = vmatpush1.bf16.xpose.msra.mxu0 0
        %1326 = vmatprep.subr.bf16.mxu0 0
        %1327 = vmatpush1.bf16.xpose.msra.mxu0 0
        %1328 = vmatprep.subr.bf16.mxu0 0
        %1329 = vmatpush1.bf16.xpose.msra.mxu0 0
        %1330 = vmatprep.subr.bf16.mxu0 0
        %1331 = vmatpush1.bf16.xpose.msra.mxu0 0
        %1332 = vmatprep.subr.bf16.mxu0 0
        %1333 = vmatpush1.bf16.xpose.msra.mxu0 0
        %1334 = vmatprep.subr.bf16.mxu0 0
        %1335 = vmatpush1.bf16.xpose.msra.mxu0 %v1318
        %1336 = vmatprep.subr.bf16.mxu0 0
        %1337 = vmatpush2.bf16.xpose.msra.mxu0 0
        %1338 = vmatprep.subr.bf16.mxu0 0
        %1339 = vmatpush2.bf16.xpose.msra.mxu0 0
        %1340 = vmatprep.subr.bf16.mxu0 0
        %1341 = vmatpush2.bf16.xpose.msra.mxu0 0
        %1342 = vmatprep.subr.bf16.mxu0 0
        %1343 = vmatpush2.bf16.xpose.msra.mxu0 0
        %1344 = vmatprep.subr.bf16.mxu0 0
        %1345 = vmatpush2.bf16.xpose.msra.mxu0 0
        %1346 = vmatprep.subr.bf16.mxu0 0
        %1347 = vmatpush2.bf16.xpose.msra.mxu0 0
        %1348 = vmatprep.subr.bf16.mxu0 0
        %1349 = vmatpush2.bf16.xpose.msra.mxu0 0
        %1350 = vmatprep.subr.bf16.mxu0 0
        %1351 = vmatpush2.bf16.xpose.msra.mxu0 0
        %1352 = vmatprep.mubr.bf16.mxu0 0
        %1353 = vmatmul.mubr.bf16.gmra.mxu0 %v1315
        %v1354 = vpop.f32.mrf.mxu0
        %v1355 = vadd.f32 0.0, %v1354
        %v1356 = vpop.f32.mrf.mxu0
        %v1357 = vpop.f32.mrf.mxu0
        %v1358 = vpop.f32.mrf.mxu0
        %1359 = vdwg.mxu0
        %v1362 = vunpack.c.l.b16 %v1082
        %v1363 = vunpack.c.l.b16 %v1083
        %v1364 = vpack.c.b16 %v1363, %v1362
        %v1366 = vsel %vm1109, %v1069, 0
        %v1369 = vsel %vm1109, %v1364, 0
        %1371 = vmatprep.subr.bf16.mxu0 0
        %1372 = vmatpush1.bf16.xpose.msra.mxu0 0
        %1373 = vmatprep.subr.bf16.mxu0 0
        %1374 = vmatpush1.bf16.xpose.msra.mxu0 0
        %1375 = vmatprep.subr.bf16.mxu0 0
        %1376 = vmatpush1.bf16.xpose.msra.mxu0 0
        %1377 = vmatprep.subr.bf16.mxu0 0
        %1378 = vmatpush1.bf16.xpose.msra.mxu0 0
        %1379 = vmatprep.subr.bf16.mxu0 0
        %1380 = vmatpush1.bf16.xpose.msra.mxu0 0
        %1381 = vmatprep.subr.bf16.mxu0 0
        %1382 = vmatpush1.bf16.xpose.msra.mxu0 0
        %1383 = vmatprep.subr.bf16.mxu0 0
        %1384 = vmatpush1.bf16.xpose.msra.mxu0 0
        %1385 = vmatprep.subr.bf16.mxu0 0
        %1386 = vmatpush1.bf16.xpose.msra.mxu0 %v1369
        %1387 = vmatprep.subr.bf16.mxu0 0
        %1388 = vmatpush2.bf16.xpose.msra.mxu0 0
        %1389 = vmatprep.subr.bf16.mxu0 0
        %1390 = vmatpush2.bf16.xpose.msra.mxu0 0
        %1391 = vmatprep.subr.bf16.mxu0 0
        %1392 = vmatpush2.bf16.xpose.msra.mxu0 0
        %1393 = vmatprep.subr.bf16.mxu0 0
        %1394 = vmatpush2.bf16.xpose.msra.mxu0 0
        %1395 = vmatprep.subr.bf16.mxu0 0
        %1396 = vmatpush2.bf16.xpose.msra.mxu0 0
        %1397 = vmatprep.subr.bf16.mxu0 0
        %1398 = vmatpush2.bf16.xpose.msra.mxu0 0
        %1399 = vmatprep.subr.bf16.mxu0 0
        %1400 = vmatpush2.bf16.xpose.msra.mxu0 0
        %1401 = vmatprep.subr.bf16.mxu0 0
        %1402 = vmatpush2.bf16.xpose.msra.mxu0 0
        %1403 = vmatprep.mubr.bf16.mxu0 0
        %1404 = vmatmul.mubr.bf16.gmra.mxu0 %v1366
        %v1405 = vpop.f32.mrf.mxu0
        %v1406 = vadd.f32 0.0, %v1405
        %v1407 = vpop.f32.mrf.mxu0
        %v1408 = vpop.f32.mrf.mxu0
        %v1409 = vpop.f32.mrf.mxu0
        %1410 = vdwg.mxu0
        %v1413 = vunpack.c.l.b16 %v1084
        %v1414 = vunpack.c.l.b16 %v1085
        %v1415 = vpack.c.b16 %v1414, %v1413
        %v1417 = vsel %vm1109, %v1070, 0
        %v1420 = vsel %vm1109, %v1415, 0
        %1422 = vmatprep.subr.bf16.mxu0 0
        %1423 = vmatpush1.bf16.xpose.msra.mxu0 0
        %1424 = vmatprep.subr.bf16.mxu0 0
        %1425 = vmatpush1.bf16.xpose.msra.mxu0 0
        %1426 = vmatprep.subr.bf16.mxu0 0
        %1427 = vmatpush1.bf16.xpose.msra.mxu0 0
        %1428 = vmatprep.subr.bf16.mxu0 0
        %1429 = vmatpush1.bf16.xpose.msra.mxu0 0
        %1430 = vmatprep.subr.bf16.mxu0 0
        %1431 = vmatpush1.bf16.xpose.msra.mxu0 0
        %1432 = vmatprep.subr.bf16.mxu0 0
        %1433 = vmatpush1.bf16.xpose.msra.mxu0 0
        %1434 = vmatprep.subr.bf16.mxu0 0
        %1435 = vmatpush1.bf16.xpose.msra.mxu0 0
        %1436 = vmatprep.subr.bf16.mxu0 0
        %1437 = vmatpush1.bf16.xpose.msra.mxu0 %v1420
        %1438 = vmatprep.subr.bf16.mxu0 0
        %1439 = vmatpush2.bf16.xpose.msra.mxu0 0
        %1440 = vmatprep.subr.bf16.mxu0 0
        %1441 = vmatpush2.bf16.xpose.msra.mxu0 0
        %1442 = vmatprep.subr.bf16.mxu0 0
        %1443 = vmatpush2.bf16.xpose.msra.mxu0 0
        %1444 = vmatprep.subr.bf16.mxu0 0
        %1445 = vmatpush2.bf16.xpose.msra.mxu0 0
        %1446 = vmatprep.subr.bf16.mxu0 0
        %1447 = vmatpush2.bf16.xpose.msra.mxu0 0
        %1448 = vmatprep.subr.bf16.mxu0 0
        %1449 = vmatpush2.bf16.xpose.msra.mxu0 0
        %1450 = vmatprep.subr.bf16.mxu0 0
        %1451 = vmatpush2.bf16.xpose.msra.mxu0 0
        %1452 = vmatprep.subr.bf16.mxu0 0
        %1453 = vmatpush2.bf16.xpose.msra.mxu0 0
        %1454 = vmatprep.mubr.bf16.mxu0 0
        %1455 = vmatmul.mubr.bf16.gmra.mxu0 %v1417
        %v1456 = vpop.f32.mrf.mxu0
        %v1457 = vadd.f32 0.0, %v1456
        %v1458 = vpop.f32.mrf.mxu0
        %v1459 = vpop.f32.mrf.mxu0
        %v1460 = vpop.f32.mrf.mxu0
        %1461 = vdwg.mxu0
        %v1464 = vunpack.c.l.b16 %v1086
        %v1465 = vunpack.c.l.b16 %v1087
        %v1466 = vpack.c.b16 %v1465, %v1464
        %v1468 = vsel %vm1109, %v1071, 0
        %v1471 = vsel %vm1109, %v1466, 0
        %1473 = vmatprep.subr.bf16.mxu0 0
        %1474 = vmatpush1.bf16.xpose.msra.mxu0 0
        %1475 = vmatprep.subr.bf16.mxu0 0
        %1476 = vmatpush1.bf16.xpose.msra.mxu0 0
        %1477 = vmatprep.subr.bf16.mxu0 0
        %1478 = vmatpush1.bf16.xpose.msra.mxu0 0
        %1479 = vmatprep.subr.bf16.mxu0 0
        %1480 = vmatpush1.bf16.xpose.msra.mxu0 0
        %1481 = vmatprep.subr.bf16.mxu0 0
        %1482 = vmatpush1.bf16.xpose.msra.mxu0 0
        %1483 = vmatprep.subr.bf16.mxu0 0
        %1484 = vmatpush1.bf16.xpose.msra.mxu0 0
        %1485 = vmatprep.subr.bf16.mxu0 0
        %1486 = vmatpush1.bf16.xpose.msra.mxu0 0
        %1487 = vmatprep.subr.bf16.mxu0 0
        %1488 = vmatpush1.bf16.xpose.msra.mxu0 %v1471
        %1489 = vmatprep.subr.bf16.mxu0 0
        %1490 = vmatpush2.bf16.xpose.msra.mxu0 0
        %1491 = vmatprep.subr.bf16.mxu0 0
        %1492 = vmatpush2.bf16.xpose.msra.mxu0 0
        %1493 = vmatprep.subr.bf16.mxu0 0
        %1494 = vmatpush2.bf16.xpose.msra.mxu0 0
        %1495 = vmatprep.subr.bf16.mxu0 0
        %1496 = vmatpush2.bf16.xpose.msra.mxu0 0
        %1497 = vmatprep.subr.bf16.mxu0 0
        %1498 = vmatpush2.bf16.xpose.msra.mxu0 0
        %1499 = vmatprep.subr.bf16.mxu0 0
        %1500 = vmatpush2.bf16.xpose.msra.mxu0 0
        %1501 = vmatprep.subr.bf16.mxu0 0
        %1502 = vmatpush2.bf16.xpose.msra.mxu0 0
        %1503 = vmatprep.subr.bf16.mxu0 0
        %1504 = vmatpush2.bf16.xpose.msra.mxu0 0
        %1505 = vmatprep.mubr.bf16.mxu0 0
        %1506 = vmatmul.mubr.bf16.gmra.mxu0 %v1468
        %v1507 = vpop.f32.mrf.mxu0
        %v1508 = vadd.f32 0.0, %v1507
        %v1509 = vpop.f32.mrf.mxu0
        %v1510 = vpop.f32.mrf.mxu0
        %v1511 = vpop.f32.mrf.mxu0
        %1512 = vdwg.mxu0
        %v1513 = vsel %vm1109, %v1151, -inf
        %1514 = vmax.xlane.f32.xlu0 %v1513
        %v1515 = vpop.xlane.xlu0 %1514
        %v1516 = vsel %vm1109, %v1202, -inf
        %1517 = vmax.xlane.f32.xlu0 %v1516
        %v1518 = vpop.xlane.xlu0 %1517
        %v1519 = vsel %vm1109, %v1253, -inf
        %1520 = vmax.xlane.f32.xlu0 %v1519
        %v1521 = vpop.xlane.xlu0 %1520
        %v1522 = vsel %vm1109, %v1304, -inf
        %1523 = vmax.xlane.f32.xlu0 %v1522
        %v1524 = vpop.xlane.xlu0 %1523
        %v1525 = vsel %vm1109, %v1355, -inf
        %1526 = vmax.xlane.f32.xlu0 %v1525
        %v1527 = vpop.xlane.xlu0 %1526
        %v1528 = vsel %vm1109, %v1406, -inf
        %1529 = vmax.xlane.f32.xlu0 %v1528
        %v1530 = vpop.xlane.xlu0 %1529
        %v1531 = vsel %vm1109, %v1457, -inf
        %1532 = vmax.xlane.f32.xlu0 %v1531
        %v1533 = vpop.xlane.xlu0 %1532
        %v1534 = vsel %vm1109, %v1508, -inf
        %1535 = vmax.xlane.f32.xlu0 %v1534
        %v1536 = vpop.xlane.xlu0 %1535
        %v1537 = vsub.f32 %v1151, %v1515
        %v1538 = vsub.f32 %v1202, %v1518
        %v1539 = vsub.f32 %v1253, %v1521
        %v1540 = vsub.f32 %v1304, %v1524
        %v1541 = vsub.f32 %v1355, %v1527
        %v1542 = vsub.f32 %v1406, %v1530
        %v1543 = vsub.f32 %v1457, %v1533
        %v1544 = vsub.f32 %v1508, %v1536
        %v1545 = vmul.f32 %v1537, 1.442695
        %v1546 = vpow.pop %v1545
        %v1547 = vmul.f32 %v1538, 1.442695
        %v1548 = vpow.pop %v1547
        %v1549 = vmul.f32 %v1539, 1.442695
        %v1550 = vpow.pop %v1549
        %v1551 = vmul.f32 %v1540, 1.442695
        %v1552 = vpow.pop %v1551
        %v1553 = vmul.f32 %v1541, 1.442695
        %v1554 = vpow.pop %v1553
        %v1555 = vmul.f32 %v1542, 1.442695
        %v1556 = vpow.pop %v1555
        %v1557 = vmul.f32 %v1543, 1.442695
        %v1558 = vpow.pop %v1557
        %v1559 = vmul.f32 %v1544, 1.442695
        %v1560 = vpow.pop %v1559
        %v1561 = vsel %vm1109, %v1546, 0.0
        %1562 = vadd.xlane.f32.xlu0 %v1561
        %v1563 = vpop.xlane.xlu0 %1562
        %v1564 = vsel %vm1109, %v1548, 0.0
        %1565 = vadd.xlane.f32.xlu0 %v1564
        %v1566 = vpop.xlane.xlu0 %1565
        %v1567 = vsel %vm1109, %v1550, 0.0
        %1568 = vadd.xlane.f32.xlu0 %v1567
        %v1569 = vpop.xlane.xlu0 %1568
        %v1570 = vsel %vm1109, %v1552, 0.0
        %1571 = vadd.xlane.f32.xlu0 %v1570
        %v1572 = vpop.xlane.xlu0 %1571
        %v1573 = vsel %vm1109, %v1554, 0.0
        %1574 = vadd.xlane.f32.xlu0 %v1573
        %v1575 = vpop.xlane.xlu0 %1574
        %v1576 = vsel %vm1109, %v1556, 0.0
        %1577 = vadd.xlane.f32.xlu0 %v1576
        %v1578 = vpop.xlane.xlu0 %1577
        %v1579 = vsel %vm1109, %v1558, 0.0
        %1580 = vadd.xlane.f32.xlu0 %v1579
        %v1581 = vpop.xlane.xlu0 %1580
        %v1582 = vsel %vm1109, %v1560, 0.0
        %1583 = vadd.xlane.f32.xlu0 %v1582
        %v1584 = vpop.xlane.xlu0 %1583
        %v1585 = vrcp.pop %v1563
        %v1586 = vrcp.pop %v1566
        %v1587 = vrcp.pop %v1569
        %v1588 = vrcp.pop %v1572
        %v1589 = vrcp.pop %v1575
        %v1590 = vrcp.pop %v1578
        %v1591 = vrcp.pop %v1581
        %v1592 = vrcp.pop %v1584
        %v1593 = vmul.f32 %v1546, %v1585
        %v1594 = vmul.f32 %v1548, %v1586
        %v1595 = vmul.f32 %v1550, %v1587
        %v1596 = vmul.f32 %v1552, %v1588
        %v1597 = vmul.f32 %v1554, %v1589
        %v1598 = vmul.f32 %v1556, %v1590
        %v1599 = vmul.f32 %v1558, %v1591
        %v1600 = vmul.f32 %v1560, %v1592
        %v1601 = vpack.c.bf16 %v1593, %v1593
        %v1602 = vpack.c.bf16 %v1594, %v1594
        %v1603 = vpack.c.bf16 %v1595, %v1595
        %v1604 = vpack.c.bf16 %v1596, %v1596
        %v1605 = vpack.c.bf16 %v1597, %v1597
        %v1606 = vpack.c.bf16 %v1598, %v1598
        %v1607 = vpack.c.bf16 %v1599, %v1599
        %v1608 = vpack.c.bf16 %v1600, %v1600
        %v1611 = vunpack.c.l.b16 %v1088
        %v1612 = vunpack.c.l.b16 %v1089
        %v1613 = vpack.c.b16 %v1612, %v1611
        %v1616 = vsel %vm1109, %v1601, 0
        %1618 = vmatprep.subr.bf16.mxu0 0
        %1619 = vmatpush1.bf16.msra.mxu0 0
        %1620 = vmatprep.subr.bf16.mxu0 0
        %1621 = vmatpush1.bf16.msra.mxu0 0
        %1622 = vmatprep.subr.bf16.mxu0 0
        %1623 = vmatpush1.bf16.msra.mxu0 0
        %1624 = vmatprep.subr.bf16.mxu0 0
        %1625 = vmatpush1.bf16.msra.mxu0 0
        %1626 = vmatprep.subr.bf16.mxu0 0
        %1627 = vmatpush1.bf16.msra.mxu0 0
        %1628 = vmatprep.subr.bf16.mxu0 0
        %1629 = vmatpush1.bf16.msra.mxu0 0
        %1630 = vmatprep.subr.bf16.mxu0 0
        %1631 = vmatpush1.bf16.msra.mxu0 0
        %1632 = vmatprep.subr.bf16.mxu0 0
        %1633 = vmatpush1.bf16.msra.mxu0 %v1613
        %1634 = vmatprep.subr.bf16.mxu0 0
        %1635 = vmatpush2.bf16.msra.mxu0 0
        %1636 = vmatprep.subr.bf16.mxu0 0
        %1637 = vmatpush2.bf16.msra.mxu0 0
        %1638 = vmatprep.subr.bf16.mxu0 0
        %1639 = vmatpush2.bf16.msra.mxu0 0
        %1640 = vmatprep.subr.bf16.mxu0 0
        %1641 = vmatpush2.bf16.msra.mxu0 0
        %1642 = vmatprep.subr.bf16.mxu0 0
        %1643 = vmatpush2.bf16.msra.mxu0 0
        %1644 = vmatprep.subr.bf16.mxu0 0
        %1645 = vmatpush2.bf16.msra.mxu0 0
        %1646 = vmatprep.subr.bf16.mxu0 0
        %1647 = vmatpush2.bf16.msra.mxu0 0
        %1648 = vmatprep.subr.bf16.mxu0 0
        %1649 = vmatpush2.bf16.msra.mxu0 0
        %1650 = vmatprep.mubr.bf16.mxu0 0
        %1651 = vmatmul.mubr.bf16.gmra.mxu0 %v1616
        %v1652 = vpop.f32.mrf.mxu0
        %v1653 = vadd.f32 0.0, %v1652
        %v1654 = vpop.f32.mrf.mxu0
        %v1655 = vpop.f32.mrf.mxu0
        %v1656 = vpop.f32.mrf.mxu0
        %1657 = vdwg.mxu0
        %v1660 = vunpack.c.l.b16 %v1090
        %v1661 = vunpack.c.l.b16 %v1091
        %v1662 = vpack.c.b16 %v1661, %v1660
        %v1665 = vsel %vm1109, %v1602, 0
        %1667 = vmatprep.subr.bf16.mxu0 0
        %1668 = vmatpush1.bf16.msra.mxu0 0
        %1669 = vmatprep.subr.bf16.mxu0 0
        %1670 = vmatpush1.bf16.msra.mxu0 0
        %1671 = vmatprep.subr.bf16.mxu0 0
        %1672 = vmatpush1.bf16.msra.mxu0 0
        %1673 = vmatprep.subr.bf16.mxu0 0
        %1674 = vmatpush1.bf16.msra.mxu0 0
        %1675 = vmatprep.subr.bf16.mxu0 0
        %1676 = vmatpush1.bf16.msra.mxu0 0
        %1677 = vmatprep.subr.bf16.mxu0 0
        %1678 = vmatpush1.bf16.msra.mxu0 0
        %1679 = vmatprep.subr.bf16.mxu0 0
        %1680 = vmatpush1.bf16.msra.mxu0 0
        %1681 = vmatprep.subr.bf16.mxu0 0
        %1682 = vmatpush1.bf16.msra.mxu0 %v1662
        %1683 = vmatprep.subr.bf16.mxu0 0
        %1684 = vmatpush2.bf16.msra.mxu0 0
        %1685 = vmatprep.subr.bf16.mxu0 0
        %1686 = vmatpush2.bf16.msra.mxu0 0
        %1687 = vmatprep.subr.bf16.mxu0 0
        %1688 = vmatpush2.bf16.msra.mxu0 0
        %1689 = vmatprep.subr.bf16.mxu0 0
        %1690 = vmatpush2.bf16.msra.mxu0 0
        %1691 = vmatprep.subr.bf16.mxu0 0
        %1692 = vmatpush2.bf16.msra.mxu0 0
        %1693 = vmatprep.subr.bf16.mxu0 0
        %1694 = vmatpush2.bf16.msra.mxu0 0
        %1695 = vmatprep.subr.bf16.mxu0 0
        %1696 = vmatpush2.bf16.msra.mxu0 0
        %1697 = vmatprep.subr.bf16.mxu0 0
        %1698 = vmatpush2.bf16.msra.mxu0 0
        %1699 = vmatprep.mubr.bf16.mxu0 0
        %1700 = vmatmul.mubr.bf16.gmra.mxu0 %v1665
        %v1701 = vpop.f32.mrf.mxu0
        %v1702 = vadd.f32 0.0, %v1701
        %v1703 = vpop.f32.mrf.mxu0
        %v1704 = vpop.f32.mrf.mxu0
        %v1705 = vpop.f32.mrf.mxu0
        %1706 = vdwg.mxu0
        %v1709 = vunpack.c.l.b16 %v1092
        %v1710 = vunpack.c.l.b16 %v1093
        %v1711 = vpack.c.b16 %v1710, %v1709
        %v1714 = vsel %vm1109, %v1603, 0
        %1716 = vmatprep.subr.bf16.mxu0 0
        %1717 = vmatpush1.bf16.msra.mxu0 0
        %1718 = vmatprep.subr.bf16.mxu0 0
        %1719 = vmatpush1.bf16.msra.mxu0 0
        %1720 = vmatprep.subr.bf16.mxu0 0
        %1721 = vmatpush1.bf16.msra.mxu0 0
        %1722 = vmatprep.subr.bf16.mxu0 0
        %1723 = vmatpush1.bf16.msra.mxu0 0
        %1724 = vmatprep.subr.bf16.mxu0 0
        %1725 = vmatpush1.bf16.msra.mxu0 0
        %1726 = vmatprep.subr.bf16.mxu0 0
        %1727 = vmatpush1.bf16.msra.mxu0 0
        %1728 = vmatprep.subr.bf16.mxu0 0
        %1729 = vmatpush1.bf16.msra.mxu0 0
        %1730 = vmatprep.subr.bf16.mxu0 0
        %1731 = vmatpush1.bf16.msra.mxu0 %v1711
        %1732 = vmatprep.subr.bf16.mxu0 0
        %1733 = vmatpush2.bf16.msra.mxu0 0
        %1734 = vmatprep.subr.bf16.mxu0 0
        %1735 = vmatpush2.bf16.msra.mxu0 0
        %1736 = vmatprep.subr.bf16.mxu0 0
        %1737 = vmatpush2.bf16.msra.mxu0 0
        %1738 = vmatprep.subr.bf16.mxu0 0
        %1739 = vmatpush2.bf16.msra.mxu0 0
        %1740 = vmatprep.subr.bf16.mxu0 0
        %1741 = vmatpush2.bf16.msra.mxu0 0
        %1742 = vmatprep.subr.bf16.mxu0 0
        %1743 = vmatpush2.bf16.msra.mxu0 0
        %1744 = vmatprep.subr.bf16.mxu0 0
        %1745 = vmatpush2.bf16.msra.mxu0 0
        %1746 = vmatprep.subr.bf16.mxu0 0
        %1747 = vmatpush2.bf16.msra.mxu0 0
        %1748 = vmatprep.mubr.bf16.mxu0 0
        %1749 = vmatmul.mubr.bf16.gmra.mxu0 %v1714
        %v1750 = vpop.f32.mrf.mxu0
        %v1751 = vadd.f32 0.0, %v1750
        %v1752 = vpop.f32.mrf.mxu0
        %v1753 = vpop.f32.mrf.mxu0
        %v1754 = vpop.f32.mrf.mxu0
        %1755 = vdwg.mxu0
        %v1758 = vunpack.c.l.b16 %v1094
        %v1759 = vunpack.c.l.b16 %v1095
        %v1760 = vpack.c.b16 %v1759, %v1758
        %v1763 = vsel %vm1109, %v1604, 0
        %1765 = vmatprep.subr.bf16.mxu0 0
        %1766 = vmatpush1.bf16.msra.mxu0 0
        %1767 = vmatprep.subr.bf16.mxu0 0
        %1768 = vmatpush1.bf16.msra.mxu0 0
        %1769 = vmatprep.subr.bf16.mxu0 0
        %1770 = vmatpush1.bf16.msra.mxu0 0
        %1771 = vmatprep.subr.bf16.mxu0 0
        %1772 = vmatpush1.bf16.msra.mxu0 0
        %1773 = vmatprep.subr.bf16.mxu0 0
        %1774 = vmatpush1.bf16.msra.mxu0 0
        %1775 = vmatprep.subr.bf16.mxu0 0
        %1776 = vmatpush1.bf16.msra.mxu0 0
        %1777 = vmatprep.subr.bf16.mxu0 0
        %1778 = vmatpush1.bf16.msra.mxu0 0
        %1779 = vmatprep.subr.bf16.mxu0 0
        %1780 = vmatpush1.bf16.msra.mxu0 %v1760
        %1781 = vmatprep.subr.bf16.mxu0 0
        %1782 = vmatpush2.bf16.msra.mxu0 0
        %1783 = vmatprep.subr.bf16.mxu0 0
        %1784 = vmatpush2.bf16.msra.mxu0 0
        %1785 = vmatprep.subr.bf16.mxu0 0
        %1786 = vmatpush2.bf16.msra.mxu0 0
        %1787 = vmatprep.subr.bf16.mxu0 0
        %1788 = vmatpush2.bf16.msra.mxu0 0
        %1789 = vmatprep.subr.bf16.mxu0 0
        %1790 = vmatpush2.bf16.msra.mxu0 0
        %1791 = vmatprep.subr.bf16.mxu0 0
        %1792 = vmatpush2.bf16.msra.mxu0 0
        %1793 = vmatprep.subr.bf16.mxu0 0
        %1794 = vmatpush2.bf16.msra.mxu0 0
        %1795 = vmatprep.subr.bf16.mxu0 0
        %1796 = vmatpush2.bf16.msra.mxu0 0
        %1797 = vmatprep.mubr.bf16.mxu0 0
        %1798 = vmatmul.mubr.bf16.gmra.mxu0 %v1763
        %v1799 = vpop.f32.mrf.mxu0
        %v1800 = vadd.f32 0.0, %v1799
        %v1801 = vpop.f32.mrf.mxu0
        %v1802 = vpop.f32.mrf.mxu0
        %v1803 = vpop.f32.mrf.mxu0
        %1804 = vdwg.mxu0
        %v1807 = vunpack.c.l.b16 %v1096
        %v1808 = vunpack.c.l.b16 %v1097
        %v1809 = vpack.c.b16 %v1808, %v1807
        %v1812 = vsel %vm1109, %v1605, 0
        %1814 = vmatprep.subr.bf16.mxu0 0
        %1815 = vmatpush1.bf16.msra.mxu0 0
        %1816 = vmatprep.subr.bf16.mxu0 0
        %1817 = vmatpush1.bf16.msra.mxu0 0
        %1818 = vmatprep.subr.bf16.mxu0 0
        %1819 = vmatpush1.bf16.msra.mxu0 0
        %1820 = vmatprep.subr.bf16.mxu0 0
        %1821 = vmatpush1.bf16.msra.mxu0 0
        %1822 = vmatprep.subr.bf16.mxu0 0
        %1823 = vmatpush1.bf16.msra.mxu0 0
        %1824 = vmatprep.subr.bf16.mxu0 0
        %1825 = vmatpush1.bf16.msra.mxu0 0
        %1826 = vmatprep.subr.bf16.mxu0 0
        %1827 = vmatpush1.bf16.msra.mxu0 0
        %1828 = vmatprep.subr.bf16.mxu0 0
        %1829 = vmatpush1.bf16.msra.mxu0 %v1809
        %1830 = vmatprep.subr.bf16.mxu0 0
        %1831 = vmatpush2.bf16.msra.mxu0 0
        %1832 = vmatprep.subr.bf16.mxu0 0
        %1833 = vmatpush2.bf16.msra.mxu0 0
        %1834 = vmatprep.subr.bf16.mxu0 0
        %1835 = vmatpush2.bf16.msra.mxu0 0
        %1836 = vmatprep.subr.bf16.mxu0 0
        %1837 = vmatpush2.bf16.msra.mxu0 0
        %1838 = vmatprep.subr.bf16.mxu0 0
        %1839 = vmatpush2.bf16.msra.mxu0 0
        %1840 = vmatprep.subr.bf16.mxu0 0
        %1841 = vmatpush2.bf16.msra.mxu0 0
        %1842 = vmatprep.subr.bf16.mxu0 0
        %1843 = vmatpush2.bf16.msra.mxu0 0
        %1844 = vmatprep.subr.bf16.mxu0 0
        %1845 = vmatpush2.bf16.msra.mxu0 0
        %1846 = vmatprep.mubr.bf16.mxu0 0
        %1847 = vmatmul.mubr.bf16.gmra.mxu0 %v1812
        %v1848 = vpop.f32.mrf.mxu0
        %v1849 = vadd.f32 0.0, %v1848
        %v1850 = vpop.f32.mrf.mxu0
        %v1851 = vpop.f32.mrf.mxu0
        %v1852 = vpop.f32.mrf.mxu0
        %1853 = vdwg.mxu0
        %v1856 = vunpack.c.l.b16 %v1098
        %v1857 = vunpack.c.l.b16 %v1099
        %v1858 = vpack.c.b16 %v1857, %v1856
        %v1861 = vsel %vm1109, %v1606, 0
        %1863 = vmatprep.subr.bf16.mxu0 0
        %1864 = vmatpush1.bf16.msra.mxu0 0
        %1865 = vmatprep.subr.bf16.mxu0 0
        %1866 = vmatpush1.bf16.msra.mxu0 0
        %1867 = vmatprep.subr.bf16.mxu0 0
        %1868 = vmatpush1.bf16.msra.mxu0 0
        %1869 = vmatprep.subr.bf16.mxu0 0
        %1870 = vmatpush1.bf16.msra.mxu0 0
        %1871 = vmatprep.subr.bf16.mxu0 0
        %1872 = vmatpush1.bf16.msra.mxu0 0
        %1873 = vmatprep.subr.bf16.mxu0 0
        %1874 = vmatpush1.bf16.msra.mxu0 0
        %1875 = vmatprep.subr.bf16.mxu0 0
        %1876 = vmatpush1.bf16.msra.mxu0 0
        %1877 = vmatprep.subr.bf16.mxu0 0
        %1878 = vmatpush1.bf16.msra.mxu0 %v1858
        %1879 = vmatprep.subr.bf16.mxu0 0
        %1880 = vmatpush2.bf16.msra.mxu0 0
        %1881 = vmatprep.subr.bf16.mxu0 0
        %1882 = vmatpush2.bf16.msra.mxu0 0
        %1883 = vmatprep.subr.bf16.mxu0 0
        %1884 = vmatpush2.bf16.msra.mxu0 0
        %1885 = vmatprep.subr.bf16.mxu0 0
        %1886 = vmatpush2.bf16.msra.mxu0 0
        %1887 = vmatprep.subr.bf16.mxu0 0
        %1888 = vmatpush2.bf16.msra.mxu0 0
        %1889 = vmatprep.subr.bf16.mxu0 0
        %1890 = vmatpush2.bf16.msra.mxu0 0
        %1891 = vmatprep.subr.bf16.mxu0 0
        %1892 = vmatpush2.bf16.msra.mxu0 0
        %1893 = vmatprep.subr.bf16.mxu0 0
        %1894 = vmatpush2.bf16.msra.mxu0 0
        %1895 = vmatprep.mubr.bf16.mxu0 0
        %1896 = vmatmul.mubr.bf16.gmra.mxu0 %v1861
        %v1897 = vpop.f32.mrf.mxu0
        %v1898 = vadd.f32 0.0, %v1897
        %v1899 = vpop.f32.mrf.mxu0
        %v1900 = vpop.f32.mrf.mxu0
        %v1901 = vpop.f32.mrf.mxu0
        %1902 = vdwg.mxu0
        %v1905 = vunpack.c.l.b16 %v1100
        %v1906 = vunpack.c.l.b16 %v1101
        %v1907 = vpack.c.b16 %v1906, %v1905
        %v1910 = vsel %vm1109, %v1607, 0
        %1912 = vmatprep.subr.bf16.mxu0 0
        %1913 = vmatpush1.bf16.msra.mxu0 0
        %1914 = vmatprep.subr.bf16.mxu0 0
        %1915 = vmatpush1.bf16.msra.mxu0 0
        %1916 = vmatprep.subr.bf16.mxu0 0
        %1917 = vmatpush1.bf16.msra.mxu0 0
        %1918 = vmatprep.subr.bf16.mxu0 0
        %1919 = vmatpush1.bf16.msra.mxu0 0
        %1920 = vmatprep.subr.bf16.mxu0 0
        %1921 = vmatpush1.bf16.msra.mxu0 0
        %1922 = vmatprep.subr.bf16.mxu0 0
        %1923 = vmatpush1.bf16.msra.mxu0 0
        %1924 = vmatprep.subr.bf16.mxu0 0
        %1925 = vmatpush1.bf16.msra.mxu0 0
        %1926 = vmatprep.subr.bf16.mxu0 0
        %1927 = vmatpush1.bf16.msra.mxu0 %v1907
        %1928 = vmatprep.subr.bf16.mxu0 0
        %1929 = vmatpush2.bf16.msra.mxu0 0
        %1930 = vmatprep.subr.bf16.mxu0 0
        %1931 = vmatpush2.bf16.msra.mxu0 0
        %1932 = vmatprep.subr.bf16.mxu0 0
        %1933 = vmatpush2.bf16.msra.mxu0 0
        %1934 = vmatprep.subr.bf16.mxu0 0
        %1935 = vmatpush2.bf16.msra.mxu0 0
        %1936 = vmatprep.subr.bf16.mxu0 0
        %1937 = vmatpush2.bf16.msra.mxu0 0
        %1938 = vmatprep.subr.bf16.mxu0 0
        %1939 = vmatpush2.bf16.msra.mxu0 0
        %1940 = vmatprep.subr.bf16.mxu0 0
        %1941 = vmatpush2.bf16.msra.mxu0 0
        %1942 = vmatprep.subr.bf16.mxu0 0
        %1943 = vmatpush2.bf16.msra.mxu0 0
        %1944 = vmatprep.mubr.bf16.mxu0 0
        %1945 = vmatmul.mubr.bf16.gmra.mxu0 %v1910
        %v1946 = vpop.f32.mrf.mxu0
        %v1947 = vadd.f32 0.0, %v1946
        %v1948 = vpop.f32.mrf.mxu0
        %v1949 = vpop.f32.mrf.mxu0
        %v1950 = vpop.f32.mrf.mxu0
        %1951 = vdwg.mxu0
        %v1954 = vunpack.c.l.b16 %v1102
        %v1955 = vunpack.c.l.b16 %v1103
        %v1956 = vpack.c.b16 %v1955, %v1954
        %v1959 = vsel %vm1109, %v1608, 0
        %1961 = vmatprep.subr.bf16.mxu0 0
        %1962 = vmatpush1.bf16.msra.mxu0 0
        %1963 = vmatprep.subr.bf16.mxu0 0
        %1964 = vmatpush1.bf16.msra.mxu0 0
        %1965 = vmatprep.subr.bf16.mxu0 0
        %1966 = vmatpush1.bf16.msra.mxu0 0
        %1967 = vmatprep.subr.bf16.mxu0 0
        %1968 = vmatpush1.bf16.msra.mxu0 0
        %1969 = vmatprep.subr.bf16.mxu0 0
        %1970 = vmatpush1.bf16.msra.mxu0 0
        %1971 = vmatprep.subr.bf16.mxu0 0
        %1972 = vmatpush1.bf16.msra.mxu0 0
        %1973 = vmatprep.subr.bf16.mxu0 0
        %1974 = vmatpush1.bf16.msra.mxu0 0
        %1975 = vmatprep.subr.bf16.mxu0 0
        %1976 = vmatpush1.bf16.msra.mxu0 %v1956
        %1977 = vmatprep.subr.bf16.mxu0 0
        %1978 = vmatpush2.bf16.msra.mxu0 0
        %1979 = vmatprep.subr.bf16.mxu0 0
        %1980 = vmatpush2.bf16.msra.mxu0 0
        %1981 = vmatprep.subr.bf16.mxu0 0
        %1982 = vmatpush2.bf16.msra.mxu0 0
        %1983 = vmatprep.subr.bf16.mxu0 0
        %1984 = vmatpush2.bf16.msra.mxu0 0
        %1985 = vmatprep.subr.bf16.mxu0 0
        %1986 = vmatpush2.bf16.msra.mxu0 0
        %1987 = vmatprep.subr.bf16.mxu0 0
        %1988 = vmatpush2.bf16.msra.mxu0 0
        %1989 = vmatprep.subr.bf16.mxu0 0
        %1990 = vmatpush2.bf16.msra.mxu0 0
        %1991 = vmatprep.subr.bf16.mxu0 0
        %1992 = vmatpush2.bf16.msra.mxu0 0
        %1993 = vmatprep.mubr.bf16.mxu0 0
        %1994 = vmatmul.mubr.bf16.gmra.mxu0 %v1959
        %v1995 = vpop.f32.mrf.mxu0
        %v1996 = vadd.f32 0.0, %v1995
        %v1997 = vpop.f32.mrf.mxu0
        %v1998 = vpop.f32.mrf.mxu0
        %v1999 = vpop.f32.mrf.mxu0
        %2000 = vdwg.mxu0
        %v2001 = vcombine.low %v1653, %v1751
        %v2002 = vcombine.high %v1653, %v1751
        %v2004 = vunpack.c.l.s4 1983009808
        %v2005 = vunpack.c.0.s8 %v2004
        %v2006 = vlaneseq
        %v2007 = vshrl.u32 %v2006, 7
        %v2008 = vsub.s32 %v2005, %v2007
        %v2009 = vrot.slane %v2001, %v2008
        %v2011 = vunpack.c.l.s4 1983009808
        %v2012 = vunpack.c.0.s8 %v2011
        %v2013 = vlaneseq
        %v2014 = vshrl.u32 %v2013, 7
        %v2015 = vsub.s32 %v2012, %v2014
        %v2016 = vrot.slane %v2002, %v2015
        %v2017 = vcombine.low %v1702, %v1800
        %v2018 = vcombine.high %v1702, %v1800
        %v2020 = vunpack.c.l.s4 1983009808
        %v2021 = vunpack.c.0.s8 %v2020
        %v2022 = vlaneseq
        %v2023 = vshrl.u32 %v2022, 7
        %v2024 = vsub.s32 %v2021, %v2023
        %v2025 = vrot.slane %v2017, %v2024
        %v2027 = vunpack.c.l.s4 1983009808
        %v2028 = vunpack.c.0.s8 %v2027
        %v2029 = vlaneseq
        %v2030 = vshrl.u32 %v2029, 7
        %v2031 = vsub.s32 %v2028, %v2030
        %v2032 = vrot.slane %v2018, %v2031
        %v2033 = vcombine.low %v1849, %v1947
        %v2034 = vcombine.high %v1849, %v1947
        %v2036 = vunpack.c.l.s4 1983009808
        %v2037 = vunpack.c.0.s8 %v2036
        %v2038 = vlaneseq
        %v2039 = vshrl.u32 %v2038, 7
        %v2040 = vsub.s32 %v2037, %v2039
        %v2041 = vrot.slane %v2033, %v2040
        %v2043 = vunpack.c.l.s4 1983009808
        %v2044 = vunpack.c.0.s8 %v2043
        %v2045 = vlaneseq
        %v2046 = vshrl.u32 %v2045, 7
        %v2047 = vsub.s32 %v2044, %v2046
        %v2048 = vrot.slane %v2034, %v2047
        %v2049 = vcombine.low %v1898, %v1996
        %v2050 = vcombine.high %v1898, %v1996
        %v2052 = vunpack.c.l.s4 1983009808
        %v2053 = vunpack.c.0.s8 %v2052
        %v2054 = vlaneseq
        %v2055 = vshrl.u32 %v2054, 7
        %v2056 = vsub.s32 %v2053, %v2055
        %v2057 = vrot.slane %v2049, %v2056
        %v2059 = vunpack.c.l.s4 1983009808
        %v2060 = vunpack.c.0.s8 %v2059
        %v2061 = vlaneseq
        %v2062 = vshrl.u32 %v2061, 7
        %v2063 = vsub.s32 %v2060, %v2062
        %v2064 = vrot.slane %v2050, %v2063
        %v2065 = vcombine.low %v2009, %v2025
        %v2066 = vcombine.high %v2009, %v2025
        %v2068 = vunpack.c.l.s4 1934713408
        %v2069 = vunpack.c.0.s8 %v2068
        %v2070 = vlaneseq
        %v2071 = vshrl.u32 %v2070, 7
        %v2072 = vsub.s32 %v2069, %v2071
        %v2073 = vrot.slane %v2065, %v2072
        %v2075 = vunpack.c.l.s4 1934713408
        %v2076 = vunpack.c.0.s8 %v2075
        %v2077 = vlaneseq
        %v2078 = vshrl.u32 %v2077, 7
        %v2079 = vsub.s32 %v2076, %v2078
        %v2080 = vrot.slane %v2066, %v2079
        %v2081 = vcombine.low %v2016, %v2032
        %v2082 = vcombine.high %v2016, %v2032
        %v2084 = vunpack.c.l.s4 1934713408
        %v2085 = vunpack.c.0.s8 %v2084
        %v2086 = vlaneseq
        %v2087 = vshrl.u32 %v2086, 7
        %v2088 = vsub.s32 %v2085, %v2087
        %v2089 = vrot.slane %v2081, %v2088
        %v2091 = vunpack.c.l.s4 1934713408
        %v2092 = vunpack.c.0.s8 %v2091
        %v2093 = vlaneseq
        %v2094 = vshrl.u32 %v2093, 7
        %v2095 = vsub.s32 %v2092, %v2094
        %v2096 = vrot.slane %v2082, %v2095
        %v2097 = vcombine.low %v2041, %v2057
        %v2098 = vcombine.high %v2041, %v2057
        %v2100 = vunpack.c.l.s4 1934713408
        %v2101 = vunpack.c.0.s8 %v2100
        %v2102 = vlaneseq
        %v2103 = vshrl.u32 %v2102, 7
        %v2104 = vsub.s32 %v2101, %v2103
        %v2105 = vrot.slane %v2097, %v2104
        %v2107 = vunpack.c.l.s4 1934713408
        %v2108 = vunpack.c.0.s8 %v2107
        %v2109 = vlaneseq
        %v2110 = vshrl.u32 %v2109, 7
        %v2111 = vsub.s32 %v2108, %v2110
        %v2112 = vrot.slane %v2098, %v2111
        %v2113 = vcombine.low %v2048, %v2064
        %v2114 = vcombine.high %v2048, %v2064
        %v2116 = vunpack.c.l.s4 1934713408
        %v2117 = vunpack.c.0.s8 %v2116
        %v2118 = vlaneseq
        %v2119 = vshrl.u32 %v2118, 7
        %v2120 = vsub.s32 %v2117, %v2119
        %v2121 = vrot.slane %v2113, %v2120
        %v2123 = vunpack.c.l.s4 1934713408
        %v2124 = vunpack.c.0.s8 %v2123
        %v2125 = vlaneseq
        %v2126 = vshrl.u32 %v2125, 7
        %v2127 = vsub.s32 %v2124, %v2126
        %v2128 = vrot.slane %v2114, %v2127
        %v2129 = vcombine.low %v2073, %v2105
        %v2130 = vcombine.high %v2073, %v2105
        %v2131 = vcombine.low %v2080, %v2112
        %v2132 = vcombine.high %v2080, %v2112
        %v2133 = vcombine.low %v2089, %v2121
        %v2134 = vcombine.high %v2089, %v2121
        %v2135 = vcombine.low %v2096, %v2128
        %v2136 = vcombine.high %v2096, %v2128
        %v2137 = vcombine.low %v2129, %v2131
        %v2138 = vcombine.high %v2129, %v2131
        %v2140 = vunpack.c.l.s4 1983009808
        %v2141 = vunpack.c.0.s8 %v2140
        %v2142 = vlaneseq
        %v2143 = vshrl.u32 %v2142, 7
        %v2144 = vsub.s32 %v2141, %v2143
        %v2145 = vrot.slane %v2137, %v2144
        %v2147 = vunpack.c.l.s4 1983009808
        %v2148 = vunpack.c.0.s8 %v2147
        %v2149 = vlaneseq
        %v2150 = vshrl.u32 %v2149, 7
        %v2151 = vsub.s32 %v2148, %v2150
        %v2152 = vrot.slane %v2138, %v2151
        %v2153 = vcombine.low %v2130, %v2132
        %v2154 = vcombine.high %v2130, %v2132
        %v2156 = vunpack.c.l.s4 1983009808
        %v2157 = vunpack.c.0.s8 %v2156
        %v2158 = vlaneseq
        %v2159 = vshrl.u32 %v2158, 7
        %v2160 = vsub.s32 %v2157, %v2159
        %v2161 = vrot.slane %v2153, %v2160
        %v2163 = vunpack.c.l.s4 1983009808
        %v2164 = vunpack.c.0.s8 %v2163
        %v2165 = vlaneseq
        %v2166 = vshrl.u32 %v2165, 7
        %v2167 = vsub.s32 %v2164, %v2166
        %v2168 = vrot.slane %v2154, %v2167
        %v2169 = vcombine.low %v2133, %v2135
        %v2170 = vcombine.high %v2133, %v2135
        %v2172 = vunpack.c.l.s4 1983009808
        %v2173 = vunpack.c.0.s8 %v2172
        %v2174 = vlaneseq
        %v2175 = vshrl.u32 %v2174, 7
        %v2176 = vsub.s32 %v2173, %v2175
        %v2177 = vrot.slane %v2169, %v2176
        %v2179 = vunpack.c.l.s4 1983009808
        %v2180 = vunpack.c.0.s8 %v2179
        %v2181 = vlaneseq
        %v2182 = vshrl.u32 %v2181, 7
        %v2183 = vsub.s32 %v2180, %v2182
        %v2184 = vrot.slane %v2170, %v2183
        %v2185 = vcombine.low %v2134, %v2136
        %v2186 = vcombine.high %v2134, %v2136
        %v2188 = vunpack.c.l.s4 1983009808
        %v2189 = vunpack.c.0.s8 %v2188
        %v2190 = vlaneseq
        %v2191 = vshrl.u32 %v2190, 7
        %v2192 = vsub.s32 %v2189, %v2191
        %v2193 = vrot.slane %v2185, %v2192
        %v2195 = vunpack.c.l.s4 1983009808
        %v2196 = vunpack.c.0.s8 %v2195
        %v2197 = vlaneseq
        %v2198 = vshrl.u32 %v2197, 7
        %v2199 = vsub.s32 %v2196, %v2198
        %v2200 = vrot.slane %v2186, %v2199
        %v2201 = vcombine.low %v2145, %v2161
        %v2202 = vcombine.high %v2145, %v2161
        %v2204 = vunpack.c.l.s4 1934713408
        %v2205 = vunpack.c.0.s8 %v2204
        %v2206 = vlaneseq
        %v2207 = vshrl.u32 %v2206, 7
        %v2208 = vsub.s32 %v2205, %v2207
        %v2209 = vrot.slane %v2201, %v2208
        %v2211 = vunpack.c.l.s4 1934713408
        %v2212 = vunpack.c.0.s8 %v2211
        %v2213 = vlaneseq
        %v2214 = vshrl.u32 %v2213, 7
        %v2215 = vsub.s32 %v2212, %v2214
        %v2216 = vrot.slane %v2202, %v2215
        %v2217 = vcombine.low %v2152, %v2168
        %v2218 = vcombine.high %v2152, %v2168
        %v2220 = vunpack.c.l.s4 1934713408
        %v2221 = vunpack.c.0.s8 %v2220
        %v2222 = vlaneseq
        %v2223 = vshrl.u32 %v2222, 7
        %v2224 = vsub.s32 %v2221, %v2223
        %v2225 = vrot.slane %v2217, %v2224
        %v2227 = vunpack.c.l.s4 1934713408
        %v2228 = vunpack.c.0.s8 %v2227
        %v2229 = vlaneseq
        %v2230 = vshrl.u32 %v2229, 7
        %v2231 = vsub.s32 %v2228, %v2230
        %v2232 = vrot.slane %v2218, %v2231
        %v2233 = vcombine.low %v2177, %v2193
        %v2234 = vcombine.high %v2177, %v2193
        %v2236 = vunpack.c.l.s4 1934713408
        %v2237 = vunpack.c.0.s8 %v2236
        %v2238 = vlaneseq
        %v2239 = vshrl.u32 %v2238, 7
        %v2240 = vsub.s32 %v2237, %v2239
        %v2241 = vrot.slane %v2233, %v2240
        %v2243 = vunpack.c.l.s4 1934713408
        %v2244 = vunpack.c.0.s8 %v2243
        %v2245 = vlaneseq
        %v2246 = vshrl.u32 %v2245, 7
        %v2247 = vsub.s32 %v2244, %v2246
        %v2248 = vrot.slane %v2234, %v2247
        %v2249 = vcombine.low %v2184, %v2200
        %v2250 = vcombine.high %v2184, %v2200
        %v2252 = vunpack.c.l.s4 1934713408
        %v2253 = vunpack.c.0.s8 %v2252
        %v2254 = vlaneseq
        %v2255 = vshrl.u32 %v2254, 7
        %v2256 = vsub.s32 %v2253, %v2255
        %v2257 = vrot.slane %v2249, %v2256
        %v2259 = vunpack.c.l.s4 1934713408
        %v2260 = vunpack.c.0.s8 %v2259
        %v2261 = vlaneseq
        %v2262 = vshrl.u32 %v2261, 7
        %v2263 = vsub.s32 %v2260, %v2262
        %v2264 = vrot.slane %v2250, %v2263
        %v2265 = vcombine.low %v2209, %v2241
        %v2266 = vcombine.high %v2209, %v2241
        %v2267 = vcombine.low %v2216, %v2248
        %v2268 = vcombine.high %v2216, %v2248
        %v2269 = vcombine.low %v2225, %v2257
        %v2270 = vcombine.high %v2225, %v2257
        %v2271 = vcombine.low %v2232, %v2264
        %v2272 = vcombine.high %v2232, %v2264
        %2274 = vrot.lane.b32.xlu0 %v2266, 16
        %v2275 = vpop.permute.xlu0 %2274
        %2278 = vrot.lane.b32.xlu0 %v2267, 32
        %v2279 = vpop.permute.xlu0 %2278
        %2282 = vrot.lane.b32.xlu0 %v2268, 48
        %v2283 = vpop.permute.xlu0 %2282
        %2286 = vrot.lane.b32.xlu0 %v2269, 64
        %v2287 = vpop.permute.xlu0 %2286
        %2290 = vrot.lane.b32.xlu0 %v2270, 80
        %v2291 = vpop.permute.xlu0 %2290
        %2294 = vrot.lane.b32.xlu0 %v2271, 96
        %v2295 = vpop.permute.xlu0 %2294
        %2298 = vrot.lane.b32.xlu0 %v2272, 112
        %v2299 = vpop.permute.xlu0 %2298
        %v2301 = vsel %vm1109, %v2265, %v2275
        %vm2302 = vcmask 261120
        %v2303 = vsel %vm2302, %v2301, %v2279
        %vm2304 = vcmask 392192
        %v2305 = vsel %vm2304, %v2303, %v2283
        %vm2306 = vcmask 523264
        %v2307 = vsel %vm2306, %v2305, %v2287
        %vm2308 = vcmask 654336
        %v2309 = vsel %vm2308, %v2307, %v2291
        %vm2310 = vcmask 785408
        %v2311 = vsel %vm2310, %v2309, %v2295
        %vm2312 = vcmask 916480
        %v2313 = vsel %vm2312, %v2311, %v2299
        %v2314 = vpack.c.bf16 %v2313, %v2313
        %v2315 = vld [vmem:[#allocation10] sm:$0xf]
        %v2316 = vld [vmem:[#allocation10 + $0x4] sm:$0xf]
        %v2317 = vld [vmem:[#allocation10 + $0x8] sm:$0xf]
        %v2318 = vld [vmem:[#allocation10 + $0xc] sm:$0xf]
        %v2319 = vld [vmem:[#allocation10 + $0x10] sm:$0xf]
        %v2320 = vld [vmem:[#allocation10 + $0x14] sm:$0xf]
        %v2321 = vld [vmem:[#allocation10 + $0x18] sm:$0xf]
        %v2322 = vld [vmem:[#allocation10 + $0x1c] sm:$0xf]
        %v2323 = vld [vmem:[#allocation10 + $0x20] sm:$0xf]
        %v2324 = vld [vmem:[#allocation10 + $0x24] sm:$0xf]
        %v2325 = vld [vmem:[#allocation10 + $0x28] sm:$0xf]
        %v2326 = vld [vmem:[#allocation10 + $0x2c] sm:$0xf]
        %v2327 = vld [vmem:[#allocation10 + $0x30] sm:$0xf]
        %v2328 = vld [vmem:[#allocation10 + $0x34] sm:$0xf]
        %v2329 = vld [vmem:[#allocation10 + $0x38] sm:$0xf]
        %v2330 = vld [vmem:[#allocation10 + $0x3c] sm:$0xf]
        %v2331 = vld [vmem:[%s5] sm:$0x1]
        %v2333 = vlaneseq
        %v2334 = vshrl.u32 %v2333, 7
        %v2335 = vsub.s32 0, %v2334
        %v2336 = vrot.slane %v2331, %v2335
        %v2354 = vunpack.c.l.b16 %v2315
        %v2355 = vunpack.c.l.b16 %v2316
        %v2356 = vunpack.c.l.b16 %v2317
        %v2357 = vunpack.c.l.b16 %v2318
        %v2358 = vunpack.c.l.b16 %v2319
        %v2359 = vunpack.c.l.b16 %v2320
        %v2360 = vunpack.c.l.b16 %v2321
        %v2361 = vunpack.c.l.b16 %v2322
        %v2362 = vunpack.c.l.b16 %v2323
        %v2363 = vunpack.c.l.b16 %v2324
        %v2364 = vunpack.c.l.b16 %v2325
        %v2365 = vunpack.c.l.b16 %v2326
        %v2366 = vunpack.c.l.b16 %v2327
        %v2367 = vunpack.c.l.b16 %v2328
        %v2368 = vunpack.c.l.b16 %v2329
        %v2369 = vunpack.c.l.b16 %v2330
        %v2370 = vpack.c.b16 %v2355, %v2354
        %v2371 = vpack.c.b16 %v2357, %v2356
        %v2372 = vpack.c.b16 %v2359, %v2358
        %v2373 = vpack.c.b16 %v2361, %v2360
        %v2374 = vpack.c.b16 %v2363, %v2362
        %v2375 = vpack.c.b16 %v2365, %v2364
        %v2376 = vpack.c.b16 %v2367, %v2366
        %v2377 = vpack.c.b16 %v2369, %v2368
        %2386 = vmatprep.subr.bf16.mxu0 0
        %2387 = vmatpush1.bf16.msra.mxu0 %v2377
        %2388 = vmatprep.subr.bf16.mxu0 0
        %2389 = vmatpush1.bf16.msra.mxu0 %v2376
        %2390 = vmatprep.subr.bf16.mxu0 0
        %2391 = vmatpush1.bf16.msra.mxu0 %v2375
        %2392 = vmatprep.subr.bf16.mxu0 0
        %2393 = vmatpush1.bf16.msra.mxu0 %v2374
        %2394 = vmatprep.subr.bf16.mxu0 0
        %2395 = vmatpush1.bf16.msra.mxu0 %v2373
        %2396 = vmatprep.subr.bf16.mxu0 0
        %2397 = vmatpush1.bf16.msra.mxu0 %v2372
        %2398 = vmatprep.subr.bf16.mxu0 0
        %2399 = vmatpush1.bf16.msra.mxu0 %v2371
        %2400 = vmatprep.subr.bf16.mxu0 0
        %2401 = vmatpush1.bf16.msra.mxu0 %v2370
        %2402 = vmatprep.subr.bf16.mxu0 0
        %2403 = vmatpush2.bf16.msra.mxu0 0
        %2404 = vmatprep.subr.bf16.mxu0 0
        %2405 = vmatpush2.bf16.msra.mxu0 0
        %2406 = vmatprep.subr.bf16.mxu0 0
        %2407 = vmatpush2.bf16.msra.mxu0 0
        %2408 = vmatprep.subr.bf16.mxu0 0
        %2409 = vmatpush2.bf16.msra.mxu0 0
        %2410 = vmatprep.subr.bf16.mxu0 0
        %2411 = vmatpush2.bf16.msra.mxu0 0
        %2412 = vmatprep.subr.bf16.mxu0 0
        %2413 = vmatpush2.bf16.msra.mxu0 0
        %2414 = vmatprep.subr.bf16.mxu0 0
        %2415 = vmatpush2.bf16.msra.mxu0 0
        %2416 = vmatprep.subr.bf16.mxu0 0
        %2417 = vmatpush2.bf16.msra.mxu0 0
        %2418 = vmatprep.mubr.bf16.mxu0 0
        %2419 = vmatmul.mubr.bf16.gmra.mxu0 %v2314
        %v2420 = vpop.f32.mrf.mxu0
        %v2421 = vadd.f32 %v2336, %v2420
        %v2422 = vpop.f32.mrf.mxu0
        %v2423 = vpop.f32.mrf.mxu0
        %v2424 = vpop.f32.mrf.mxu0
        %2425 = vdwg.mxu0
        %v2426 = vadd.f32 %v636, %v2421
        %v2427 = vld [vmem:[%s8] sm:$0x1]
        %v2428 = vld [vmem:[%s9] sm:$0x1]
        %2429 = vadd.xlane.f32.xlu0 %v2426
        %v2430 = vpop.xlane.xlu0 %2429
        %v2431 = vmul.f32 %v2430, %v641
        %v2432 = vsub.f32 %v2426, %v2431
        %v2433 = vmul.f32 %v2432, %v2432
        %2434 = vadd.xlane.f32.xlu0 %v2433
        %v2435 = vpop.xlane.xlu0 %2434
        %v2436 = vmul.f32 %v2435, %v641
        %v2437 = vadd.f32 %v2436, 1e-05
        %v2438 = vrsqrt.pop %v2437
        %v2439 = vmul.f32 %v2432, %v2438
        %v2441 = vlaneseq
        %v2442 = vshrl.u32 %v2441, 7
        %v2443 = vsub.s32 0, %v2442
        %v2444 = vrot.slane %v2427, %v2443
        %v2446 = vmul.f32 %v2439, %v2444
        %v2448 = vlaneseq
        %v2449 = vshrl.u32 %v2448, 7
        %v2450 = vsub.s32 0, %v2449
        %v2451 = vrot.slane %v2428, %v2450
        %v2453 = vadd.f32 %v2446, %v2451
        %v2454 = vpack.c.bf16 %v2453, %v2453
        %v2455 = vld [vmem:[#allocation11] sm:$0xff]
        %v2456 = vld [vmem:[#allocation11 + $0x8] sm:$0xff]
        %v2457 = vld [vmem:[#allocation11 + $0x10] sm:$0xff]
        %v2458 = vld [vmem:[#allocation11 + $0x18] sm:$0xff]
        %v2459 = vld [vmem:[#allocation11 + $0x20] sm:$0xff]
        %v2460 = vld [vmem:[#allocation11 + $0x28] sm:$0xff]
        %v2461 = vld [vmem:[#allocation11 + $0x30] sm:$0xff]
        %v2462 = vld [vmem:[#allocation11 + $0x38] sm:$0xff]
        %v2463 = vld [vmem:[#allocation11 + $0x40] sm:$0xff]
        %v2464 = vld [vmem:[#allocation11 + $0x48] sm:$0xff]
        %v2465 = vld [vmem:[#allocation11 + $0x50] sm:$0xff]
        %v2466 = vld [vmem:[#allocation11 + $0x58] sm:$0xff]
        %v2467 = vld [vmem:[#allocation11 + $0x60] sm:$0xff]
        %v2468 = vld [vmem:[#allocation11 + $0x68] sm:$0xff]
        %v2469 = vld [vmem:[#allocation11 + $0x70] sm:$0xff]
        %v2470 = vld [vmem:[#allocation11 + $0x78] sm:$0xff]
        %v2471 = vld [vmem:[#allocation11 + $0x80] sm:$0xff]
        %v2472 = vld [vmem:[#allocation11 + $0x88] sm:$0xff]
        %v2473 = vld [vmem:[#allocation11 + $0x90] sm:$0xff]
        %v2474 = vld [vmem:[#allocation11 + $0x98] sm:$0xff]
        %v2475 = vld [vmem:[#allocation11 + $0xa0] sm:$0xff]
        %v2476 = vld [vmem:[#allocation11 + $0xa8] sm:$0xff]
        %v2477 = vld [vmem:[#allocation11 + $0xb0] sm:$0xff]
        %v2478 = vld [vmem:[#allocation11 + $0xb8] sm:$0xff]
        %v2479 = vld [vmem:[#allocation11 + $0xc0] sm:$0xff]
        %v2480 = vld [vmem:[#allocation11 + $0xc8] sm:$0xff]
        %v2481 = vld [vmem:[#allocation11 + $0xd0] sm:$0xff]
        %v2482 = vld [vmem:[#allocation11 + $0xd8] sm:$0xff]
        %v2483 = vld [vmem:[#allocation11 + $0xe0] sm:$0xff]
        %v2484 = vld [vmem:[#allocation11 + $0xe8] sm:$0xff]
        %v2485 = vld [vmem:[#allocation11 + $0xf0] sm:$0xff]
        %v2486 = vld [vmem:[#allocation11 + $0xf8] sm:$0xff]
        %v2487 = vld [vmem:[%s11] sm:$0xf]
        %v2489 = vlaneseq
        %v2490 = vshrl.u32 %v2489, 7
        %v2491 = vsub.s32 0, %v2490
        %v2492 = vrot.slane %v2487, %v2491
        %v2493 = vlaneseq
        %v2494 = vshrl.u32 %v2493, 7
        %v2495 = vsub.s32 1, %v2494
        %v2496 = vrot.slane %v2487, %v2495
        %v2497 = vlaneseq
        %v2498 = vshrl.u32 %v2497, 7
        %v2499 = vsub.s32 2, %v2498
        %v2500 = vrot.slane %v2487, %v2499
        %v2501 = vlaneseq
        %v2502 = vshrl.u32 %v2501, 7
        %v2503 = vsub.s32 3, %v2502
        %v2504 = vrot.slane %v2487, %v2503
        %v2541 = vunpack.c.l.b16 %v2455
        %v2542 = vunpack.c.h.b16 %v2455
        %v2543 = vunpack.c.l.b16 %v2456
        %v2544 = vunpack.c.h.b16 %v2456
        %v2545 = vunpack.c.l.b16 %v2457
        %v2546 = vunpack.c.h.b16 %v2457
        %v2547 = vunpack.c.l.b16 %v2458
        %v2548 = vunpack.c.h.b16 %v2458
        %v2549 = vunpack.c.l.b16 %v2459
        %v2550 = vunpack.c.h.b16 %v2459
        %v2551 = vunpack.c.l.b16 %v2460
        %v2552 = vunpack.c.h.b16 %v2460
        %v2553 = vunpack.c.l.b16 %v2461
        %v2554 = vunpack.c.h.b16 %v2461
        %v2555 = vunpack.c.l.b16 %v2462
        %v2556 = vunpack.c.h.b16 %v2462
        %v2557 = vunpack.c.l.b16 %v2463
        %v2558 = vunpack.c.h.b16 %v2463
        %v2559 = vunpack.c.l.b16 %v2464
        %v2560 = vunpack.c.h.b16 %v2464
        %v2561 = vunpack.c.l.b16 %v2465
        %v2562 = vunpack.c.h.b16 %v2465
        %v2563 = vunpack.c.l.b16 %v2466
        %v2564 = vunpack.c.h.b16 %v2466
        %v2565 = vunpack.c.l.b16 %v2467
        %v2566 = vunpack.c.h.b16 %v2467
        %v2567 = vunpack.c.l.b16 %v2468
        %v2568 = vunpack.c.h.b16 %v2468
        %v2569 = vunpack.c.l.b16 %v2469
        %v2570 = vunpack.c.h.b16 %v2469
        %v2571 = vunpack.c.l.b16 %v2470
        %v2572 = vunpack.c.h.b16 %v2470
        %v2573 = vunpack.c.l.b16 %v2471
        %v2574 = vunpack.c.h.b16 %v2471
        %v2575 = vunpack.c.l.b16 %v2472
        %v2576 = vunpack.c.h.b16 %v2472
        %v2577 = vunpack.c.l.b16 %v2473
        %v2578 = vunpack.c.h.b16 %v2473
        %v2579 = vunpack.c.l.b16 %v2474
        %v2580 = vunpack.c.h.b16 %v2474
        %v2581 = vunpack.c.l.b16 %v2475
        %v2582 = vunpack.c.h.b16 %v2475
        %v2583 = vunpack.c.l.b16 %v2476
        %v2584 = vunpack.c.h.b16 %v2476
        %v2585 = vunpack.c.l.b16 %v2477
        %v2586 = vunpack.c.h.b16 %v2477
        %v2587 = vunpack.c.l.b16 %v2478
        %v2588 = vunpack.c.h.b16 %v2478
        %v2589 = vunpack.c.l.b16 %v2479
        %v2590 = vunpack.c.h.b16 %v2479
        %v2591 = vunpack.c.l.b16 %v2480
        %v2592 = vunpack.c.h.b16 %v2480
        %v2593 = vunpack.c.l.b16 %v2481
        %v2594 = vunpack.c.h.b16 %v2481
        %v2595 = vunpack.c.l.b16 %v2482
        %v2596 = vunpack.c.h.b16 %v2482
        %v2597 = vunpack.c.l.b16 %v2483
        %v2598 = vunpack.c.h.b16 %v2483
        %v2599 = vunpack.c.l.b16 %v2484
        %v2600 = vunpack.c.h.b16 %v2484
        %v2601 = vunpack.c.l.b16 %v2485
        %v2602 = vunpack.c.h.b16 %v2485
        %v2603 = vunpack.c.l.b16 %v2486
        %v2604 = vunpack.c.h.b16 %v2486
        %v2605 = vpack.c.b16 %v2545, %v2541
        %v2606 = vpack.c.b16 %v2546, %v2542
        %v2607 = vpack.c.b16 %v2547, %v2543
        %v2608 = vpack.c.b16 %v2548, %v2544
        %v2609 = vpack.c.b16 %v2553, %v2549
        %v2610 = vpack.c.b16 %v2554, %v2550
        %v2611 = vpack.c.b16 %v2555, %v2551
        %v2612 = vpack.c.b16 %v2556, %v2552
        %v2613 = vpack.c.b16 %v2561, %v2557
        %v2614 = vpack.c.b16 %v2562, %v2558
        %v2615 = vpack.c.b16 %v2563, %v2559
        %v2616 = vpack.c.b16 %v2564, %v2560
        %v2617 = vpack.c.b16 %v2569, %v2565
        %v2618 = vpack.c.b16 %v2570, %v2566
        %v2619 = vpack.c.b16 %v2571, %v2567
        %v2620 = vpack.c.b16 %v2572, %v2568
        %v2621 = vpack.c.b16 %v2577, %v2573
        %v2622 = vpack.c.b16 %v2578, %v2574
        %v2623 = vpack.c.b16 %v2579, %v2575
        %v2624 = vpack.c.b16 %v2580, %v2576
        %v2625 = vpack.c.b16 %v2585, %v2581
        %v2626 = vpack.c.b16 %v2586, %v2582
        %v2627 = vpack.c.b16 %v2587, %v2583
        %v2628 = vpack.c.b16 %v2588, %v2584
        %v2629 = vpack.c.b16 %v2593, %v2589
        %v2630 = vpack.c.b16 %v2594, %v2590
        %v2631 = vpack.c.b16 %v2595, %v2591
        %v2632 = vpack.c.b16 %v2596, %v2592
        %v2633 = vpack.c.b16 %v2601, %v2597
        %v2634 = vpack.c.b16 %v2602, %v2598
        %v2635 = vpack.c.b16 %v2603, %v2599
        %v2636 = vpack.c.b16 %v2604, %v2600
        %2669 = vmatprep.subr.bf16.mxu0 %v2634
        %2670 = vmatpush1.bf16.msra.mxu0 %v2633
        %2671 = vmatprep.subr.bf16.mxu0 %v2630
        %2672 = vmatpush1.bf16.msra.mxu0 %v2629
        %2673 = vmatprep.subr.bf16.mxu0 %v2626
        %2674 = vmatpush1.bf16.msra.mxu0 %v2625
        %2675 = vmatprep.subr.bf16.mxu0 %v2622
        %2676 = vmatpush1.bf16.msra.mxu0 %v2621
        %2677 = vmatprep.subr.bf16.mxu0 %v2618
        %2678 = vmatpush1.bf16.msra.mxu0 %v2617
        %2679 = vmatprep.subr.bf16.mxu0 %v2614
        %2680 = vmatpush1.bf16.msra.mxu0 %v2613
        %2681 = vmatprep.subr.bf16.mxu0 %v2610
        %2682 = vmatpush1.bf16.msra.mxu0 %v2609
        %2683 = vmatprep.subr.bf16.mxu0 %v2606
        %2684 = vmatpush1.bf16.msra.mxu0 %v2605
        %2685 = vmatprep.subr.bf16.mxu0 0
        %2686 = vmatpush2.bf16.msra.mxu0 0
        %2687 = vmatprep.subr.bf16.mxu0 0
        %2688 = vmatpush2.bf16.msra.mxu0 0
        %2689 = vmatprep.subr.bf16.mxu0 0
        %2690 = vmatpush2.bf16.msra.mxu0 0
        %2691 = vmatprep.subr.bf16.mxu0 0
        %2692 = vmatpush2.bf16.msra.mxu0 0
        %2693 = vmatprep.subr.bf16.mxu0 0
        %2694 = vmatpush2.bf16.msra.mxu0 0
        %2695 = vmatprep.subr.bf16.mxu0 0
        %2696 = vmatpush2.bf16.msra.mxu0 0
        %2697 = vmatprep.subr.bf16.mxu0 0
        %2698 = vmatpush2.bf16.msra.mxu0 0
        %2699 = vmatprep.subr.bf16.mxu0 0
        %2700 = vmatpush2.bf16.msra.mxu0 0
        %2701 = vmatprep.mubr.bf16.mxu0 0
        %2702 = vmatmul.mubr.bf16.gmra.mxu0 %v2454
        %v2703 = vpop.f32.mrf.mxu0
        %v2704 = vadd.f32 %v2492, %v2703
        %v2705 = vpop.f32.mrf.mxu0
        %v2706 = vadd.f32 %v2496, %v2705
        %v2707 = vpop.f32.mrf.mxu0
        %v2708 = vpop.f32.mrf.mxu0
        %2709 = vdwg.mxu0
        %2710 = vmatprep.subr.bf16.mxu0 %v2636
        %2711 = vmatpush1.bf16.msra.mxu0 %v2635
        %2712 = vmatprep.subr.bf16.mxu0 %v2632
        %2713 = vmatpush1.bf16.msra.mxu0 %v2631
        %2714 = vmatprep.subr.bf16.mxu0 %v2628
        %2715 = vmatpush1.bf16.msra.mxu0 %v2627
        %2716 = vmatprep.subr.bf16.mxu0 %v2624
        %2717 = vmatpush1.bf16.msra.mxu0 %v2623
        %2718 = vmatprep.subr.bf16.mxu0 %v2620
        %2719 = vmatpush1.bf16.msra.mxu0 %v2619
        %2720 = vmatprep.subr.bf16.mxu0 %v2616
        %2721 = vmatpush1.bf16.msra.mxu0 %v2615
        %2722 = vmatprep.subr.bf16.mxu0 %v2612
        %2723 = vmatpush1.bf16.msra.mxu0 %v2611
        %2724 = vmatprep.subr.bf16.mxu0 %v2608
        %2725 = vmatpush1.bf16.msra.mxu0 %v2607
        %2726 = vmatprep.subr.bf16.mxu0 0
        %2727 = vmatpush2.bf16.msra.mxu0 0
        %2728 = vmatprep.subr.bf16.mxu0 0
        %2729 = vmatpush2.bf16.msra.mxu0 0
        %2730 = vmatprep.subr.bf16.mxu0 0
        %2731 = vmatpush2.bf16.msra.mxu0 0
        %2732 = vmatprep.subr.bf16.mxu0 0
        %2733 = vmatpush2.bf16.msra.mxu0 0
        %2734 = vmatprep.subr.bf16.mxu0 0
        %2735 = vmatpush2.bf16.msra.mxu0 0
        %2736 = vmatprep.subr.bf16.mxu0 0
        %2737 = vmatpush2.bf16.msra.mxu0 0
        %2738 = vmatprep.subr.bf16.mxu0 0
        %2739 = vmatpush2.bf16.msra.mxu0 0
        %2740 = vmatprep.subr.bf16.mxu0 0
        %2741 = vmatpush2.bf16.msra.mxu0 0
        %2742 = vmatprep.mubr.bf16.mxu0 0
        %2743 = vmatmul.mubr.bf16.gmra.mxu0 %v2454
        %v2744 = vpop.f32.mrf.mxu0
        %v2745 = vadd.f32 %v2500, %v2744
        %v2746 = vpop.f32.mrf.mxu0
        %v2747 = vadd.f32 %v2504, %v2746
        %v2748 = vpop.f32.mrf.mxu0
        %v2749 = vpop.f32.mrf.mxu0
        %2750 = vdwg.mxu0
        %v2751 = vmul.f32 %v2704, 0.5
        %v2752 = vmul.f32 %v2706, 0.5
        %v2753 = vmul.f32 %v2745, 0.5
        %v2754 = vmul.f32 %v2747, 0.5
        %v2755 = vmul.f32 %v2704, 0.044715
        %v2756 = vmul.f32 %v2706, 0.044715
        %v2757 = vmul.f32 %v2745, 0.044715
        %v2758 = vmul.f32 %v2747, 0.044715
        %v2759 = vmul.f32 %v2755, %v2704
        %v2760 = vmul.f32 %v2756, %v2706
        %v2761 = vmul.f32 %v2757, %v2745
        %v2762 = vmul.f32 %v2758, %v2747
        %v2763 = vmul.f32 %v2759, %v2704
        %v2764 = vmul.f32 %v2760, %v2706
        %v2765 = vmul.f32 %v2761, %v2745
        %v2766 = vmul.f32 %v2762, %v2747
        %v2767 = vadd.f32 %v2704, %v2763
        %v2768 = vadd.f32 %v2706, %v2764
        %v2769 = vadd.f32 %v2745, %v2765
        %v2770 = vadd.f32 %v2747, %v2766
        %v2771 = vmul.f32 %v2767, 0.7978846
        %v2772 = vmul.f32 %v2768, 0.7978846
        %v2773 = vmul.f32 %v2769, 0.7978846
        %v2774 = vmul.f32 %v2770, 0.7978846
        %v2775 = vtanh.pop %v2771
        %v2776 = vtanh.pop %v2772
        %v2777 = vtanh.pop %v2773
        %v2778 = vtanh.pop %v2774
        %v2779 = vadd.f32 %v2775, 1.0
        %v2780 = vadd.f32 %v2776, 1.0
        %v2781 = vadd.f32 %v2777, 1.0
        %v2782 = vadd.f32 %v2778, 1.0
        %v2783 = vmul.f32 %v2751, %v2779
        %v2784 = vmul.f32 %v2752, %v2780
        %v2785 = vmul.f32 %v2753, %v2781
        %v2786 = vmul.f32 %v2754, %v2782
        %v2787 = vpack.c.bf16 %v2783, %v2783
        %v2788 = vpack.c.bf16 %v2784, %v2784
        %v2789 = vpack.c.bf16 %v2785, %v2785
        %v2790 = vpack.c.bf16 %v2786, %v2786
        %v2791 = vld [vmem:[#allocation13] sm:$0xf]
        %v2792 = vld [vmem:[#allocation13 + $0x4] sm:$0xf]
        %v2793 = vld [vmem:[#allocation13 + $0x8] sm:$0xf]
        %v2794 = vld [vmem:[#allocation13 + $0xc] sm:$0xf]
        %v2795 = vld [vmem:[#allocation13 + $0x10] sm:$0xf]
        %v2796 = vld [vmem:[#allocation13 + $0x14] sm:$0xf]
        %v2797 = vld [vmem:[#allocation13 + $0x18] sm:$0xf]
        %v2798 = vld [vmem:[#allocation13 + $0x1c] sm:$0xf]
        %v2799 = vld [vmem:[#allocation13 + $0x20] sm:$0xf]
        %v2800 = vld [vmem:[#allocation13 + $0x24] sm:$0xf]
        %v2801 = vld [vmem:[#allocation13 + $0x28] sm:$0xf]
        %v2802 = vld [vmem:[#allocation13 + $0x2c] sm:$0xf]
        %v2803 = vld [vmem:[#allocation13 + $0x30] sm:$0xf]
        %v2804 = vld [vmem:[#allocation13 + $0x34] sm:$0xf]
        %v2805 = vld [vmem:[#allocation13 + $0x38] sm:$0xf]
        %v2806 = vld [vmem:[#allocation13 + $0x3c] sm:$0xf]
        %v2807 = vld [vmem:[#allocation13 + $0x40] sm:$0xf]
        %v2808 = vld [vmem:[#allocation13 + $0x44] sm:$0xf]
        %v2809 = vld [vmem:[#allocation13 + $0x48] sm:$0xf]
        %v2810 = vld [vmem:[#allocation13 + $0x4c] sm:$0xf]
        %v2811 = vld [vmem:[#allocation13 + $0x50] sm:$0xf]
        %v2812 = vld [vmem:[#allocation13 + $0x54] sm:$0xf]
        %v2813 = vld [vmem:[#allocation13 + $0x58] sm:$0xf]
        %v2814 = vld [vmem:[#allocation13 + $0x5c] sm:$0xf]
        %v2815 = vld [vmem:[#allocation13 + $0x60] sm:$0xf]
        %v2816 = vld [vmem:[#allocation13 + $0x64] sm:$0xf]
        %v2817 = vld [vmem:[#allocation13 + $0x68] sm:$0xf]
        %v2818 = vld [vmem:[#allocation13 + $0x6c] sm:$0xf]
        %v2819 = vld [vmem:[#allocation13 + $0x70] sm:$0xf]
        %v2820 = vld [vmem:[#allocation13 + $0x74] sm:$0xf]
        %v2821 = vld [vmem:[#allocation13 + $0x78] sm:$0xf]
        %v2822 = vld [vmem:[#allocation13 + $0x7c] sm:$0xf]
        %v2823 = vld [vmem:[#allocation13 + $0x80] sm:$0xf]
        %v2824 = vld [vmem:[#allocation13 + $0x84] sm:$0xf]
        %v2825 = vld [vmem:[#allocation13 + $0x88] sm:$0xf]
        %v2826 = vld [vmem:[#allocation13 + $0x8c] sm:$0xf]
        %v2827 = vld [vmem:[#allocation13 + $0x90] sm:$0xf]
        %v2828 = vld [vmem:[#allocation13 + $0x94] sm:$0xf]
        %v2829 = vld [vmem:[#allocation13 + $0x98] sm:$0xf]
        %v2830 = vld [vmem:[#allocation13 + $0x9c] sm:$0xf]
        %v2831 = vld [vmem:[#allocation13 + $0xa0] sm:$0xf]
        %v2832 = vld [vmem:[#allocation13 + $0xa4] sm:$0xf]
        %v2833 = vld [vmem:[#allocation13 + $0xa8] sm:$0xf]
        %v2834 = vld [vmem:[#allocation13 + $0xac] sm:$0xf]
        %v2835 = vld [vmem:[#allocation13 + $0xb0] sm:$0xf]
        %v2836 = vld [vmem:[#allocation13 + $0xb4] sm:$0xf]
        %v2837 = vld [vmem:[#allocation13 + $0xb8] sm:$0xf]
        %v2838 = vld [vmem:[#allocation13 + $0xbc] sm:$0xf]
        %v2839 = vld [vmem:[#allocation13 + $0xc0] sm:$0xf]
        %v2840 = vld [vmem:[#allocation13 + $0xc4] sm:$0xf]
        %v2841 = vld [vmem:[#allocation13 + $0xc8] sm:$0xf]
        %v2842 = vld [vmem:[#allocation13 + $0xcc] sm:$0xf]
        %v2843 = vld [vmem:[#allocation13 + $0xd0] sm:$0xf]
        %v2844 = vld [vmem:[#allocation13 + $0xd4] sm:$0xf]
        %v2845 = vld [vmem:[#allocation13 + $0xd8] sm:$0xf]
        %v2846 = vld [vmem:[#allocation13 + $0xdc] sm:$0xf]
        %v2847 = vld [vmem:[#allocation13 + $0xe0] sm:$0xf]
        %v2848 = vld [vmem:[#allocation13 + $0xe4] sm:$0xf]
        %v2849 = vld [vmem:[#allocation13 + $0xe8] sm:$0xf]
        %v2850 = vld [vmem:[#allocation13 + $0xec] sm:$0xf]
        %v2851 = vld [vmem:[#allocation13 + $0xf0] sm:$0xf]
        %v2852 = vld [vmem:[#allocation13 + $0xf4] sm:$0xf]
        %v2853 = vld [vmem:[#allocation13 + $0xf8] sm:$0xf]
        %v2854 = vld [vmem:[#allocation13 + $0xfc] sm:$0xf]
        %v2855 = vld [vmem:[%s13] sm:$0x1]
        %v2857 = vlaneseq
        %v2858 = vshrl.u32 %v2857, 7
        %v2859 = vsub.s32 0, %v2858
        %v2860 = vrot.slane %v2855, %v2859
        %v2926 = vunpack.c.l.b16 %v2791
        %v2927 = vunpack.c.l.b16 %v2792
        %v2928 = vunpack.c.l.b16 %v2793
        %v2929 = vunpack.c.l.b16 %v2794
        %v2930 = vunpack.c.l.b16 %v2795
        %v2931 = vunpack.c.l.b16 %v2796
        %v2932 = vunpack.c.l.b16 %v2797
        %v2933 = vunpack.c.l.b16 %v2798
        %v2934 = vunpack.c.l.b16 %v2799
        %v2935 = vunpack.c.l.b16 %v2800
        %v2936 = vunpack.c.l.b16 %v2801
        %v2937 = vunpack.c.l.b16 %v2802
        %v2938 = vunpack.c.l.b16 %v2803
        %v2939 = vunpack.c.l.b16 %v2804
        %v2940 = vunpack.c.l.b16 %v2805
        %v2941 = vunpack.c.l.b16 %v2806
        %v2942 = vunpack.c.l.b16 %v2807
        %v2943 = vunpack.c.l.b16 %v2808
        %v2944 = vunpack.c.l.b16 %v2809
        %v2945 = vunpack.c.l.b16 %v2810
        %v2946 = vunpack.c.l.b16 %v2811
        %v2947 = vunpack.c.l.b16 %v2812
        %v2948 = vunpack.c.l.b16 %v2813
        %v2949 = vunpack.c.l.b16 %v2814
        %v2950 = vunpack.c.l.b16 %v2815
        %v2951 = vunpack.c.l.b16 %v2816
        %v2952 = vunpack.c.l.b16 %v2817
        %v2953 = vunpack.c.l.b16 %v2818
        %v2954 = vunpack.c.l.b16 %v2819
        %v2955 = vunpack.c.l.b16 %v2820
        %v2956 = vunpack.c.l.b16 %v2821
        %v2957 = vunpack.c.l.b16 %v2822
        %v2958 = vunpack.c.l.b16 %v2823
        %v2959 = vunpack.c.l.b16 %v2824
        %v2960 = vunpack.c.l.b16 %v2825
        %v2961 = vunpack.c.l.b16 %v2826
        %v2962 = vunpack.c.l.b16 %v2827
        %v2963 = vunpack.c.l.b16 %v2828
        %v2964 = vunpack.c.l.b16 %v2829
        %v2965 = vunpack.c.l.b16 %v2830
        %v2966 = vunpack.c.l.b16 %v2831
        %v2967 = vunpack.c.l.b16 %v2832
        %v2968 = vunpack.c.l.b16 %v2833
        %v2969 = vunpack.c.l.b16 %v2834
        %v2970 = vunpack.c.l.b16 %v2835
        %v2971 = vunpack.c.l.b16 %v2836
        %v2972 = vunpack.c.l.b16 %v2837
        %v2973 = vunpack.c.l.b16 %v2838
        %v2974 = vunpack.c.l.b16 %v2839
        %v2975 = vunpack.c.l.b16 %v2840
        %v2976 = vunpack.c.l.b16 %v2841
        %v2977 = vunpack.c.l.b16 %v2842
        %v2978 = vunpack.c.l.b16 %v2843
        %v2979 = vunpack.c.l.b16 %v2844
        %v2980 = vunpack.c.l.b16 %v2845
        %v2981 = vunpack.c.l.b16 %v2846
        %v2982 = vunpack.c.l.b16 %v2847
        %v2983 = vunpack.c.l.b16 %v2848
        %v2984 = vunpack.c.l.b16 %v2849
        %v2985 = vunpack.c.l.b16 %v2850
        %v2986 = vunpack.c.l.b16 %v2851
        %v2987 = vunpack.c.l.b16 %v2852
        %v2988 = vunpack.c.l.b16 %v2853
        %v2989 = vunpack.c.l.b16 %v2854
        %v2990 = vpack.c.b16 %v2927, %v2926
        %v2991 = vpack.c.b16 %v2929, %v2928
        %v2992 = vpack.c.b16 %v2931, %v2930
        %v2993 = vpack.c.b16 %v2933, %v2932
        %v2994 = vpack.c.b16 %v2935, %v2934
        %v2995 = vpack.c.b16 %v2937, %v2936
        %v2996 = vpack.c.b16 %v2939, %v2938
        %v2997 = vpack.c.b16 %v2941, %v2940
        %v2998 = vpack.c.b16 %v2943, %v2942
        %v2999 = vpack.c.b16 %v2945, %v2944
        %v3000 = vpack.c.b16 %v2947, %v2946
        %v3001 = vpack.c.b16 %v2949, %v2948
        %v3002 = vpack.c.b16 %v2951, %v2950
        %v3003 = vpack.c.b16 %v2953, %v2952
        %v3004 = vpack.c.b16 %v2955, %v2954
        %v3005 = vpack.c.b16 %v2957, %v2956
        %v3006 = vpack.c.b16 %v2959, %v2958
        %v3007 = vpack.c.b16 %v2961, %v2960
        %v3008 = vpack.c.b16 %v2963, %v2962
        %v3009 = vpack.c.b16 %v2965, %v2964
        %v3010 = vpack.c.b16 %v2967, %v2966
        %v3011 = vpack.c.b16 %v2969, %v2968
        %v3012 = vpack.c.b16 %v2971, %v2970
        %v3013 = vpack.c.b16 %v2973, %v2972
        %v3014 = vpack.c.b16 %v2975, %v2974
        %v3015 = vpack.c.b16 %v2977, %v2976
        %v3016 = vpack.c.b16 %v2979, %v2978
        %v3017 = vpack.c.b16 %v2981, %v2980
        %v3018 = vpack.c.b16 %v2983, %v2982
        %v3019 = vpack.c.b16 %v2985, %v2984
        %v3020 = vpack.c.b16 %v2987, %v2986
        %v3021 = vpack.c.b16 %v2989, %v2988
        %3054 = vmatprep.subr.bf16.mxu0 0
        %3055 = vmatpush1.bf16.msra.mxu0 %v2997
        %3056 = vmatprep.subr.bf16.mxu0 0
        %3057 = vmatpush1.bf16.msra.mxu0 %v2996
        %3058 = vmatprep.subr.bf16.mxu0 0
        %3059 = vmatpush1.bf16.msra.mxu0 %v2995
        %3060 = vmatprep.subr.bf16.mxu0 0
        %3061 = vmatpush1.bf16.msra.mxu0 %v2994
        %3062 = vmatprep.subr.bf16.mxu0 0
        %3063 = vmatpush1.bf16.msra.mxu0 %v2993
        %3064 = vmatprep.subr.bf16.mxu0 0
        %3065 = vmatpush1.bf16.msra.mxu0 %v2992
        %3066 = vmatprep.subr.bf16.mxu0 0
        %3067 = vmatpush1.bf16.msra.mxu0 %v2991
        %3068 = vmatprep.subr.bf16.mxu0 0
        %3069 = vmatpush1.bf16.msra.mxu0 %v2990
        %3070 = vmatprep.subr.bf16.mxu0 0
        %3071 = vmatpush2.bf16.msra.mxu0 %v3005
        %3072 = vmatprep.subr.bf16.mxu0 0
        %3073 = vmatpush2.bf16.msra.mxu0 %v3004
        %3074 = vmatprep.subr.bf16.mxu0 0
        %3075 = vmatpush2.bf16.msra.mxu0 %v3003
        %3076 = vmatprep.subr.bf16.mxu0 0
        %3077 = vmatpush2.bf16.msra.mxu0 %v3002
        %3078 = vmatprep.subr.bf16.mxu0 0
        %3079 = vmatpush2.bf16.msra.mxu0 %v3001
        %3080 = vmatprep.subr.bf16.mxu0 0
        %3081 = vmatpush2.bf16.msra.mxu0 %v3000
        %3082 = vmatprep.subr.bf16.mxu0 0
        %3083 = vmatpush2.bf16.msra.mxu0 %v2999
        %3084 = vmatprep.subr.bf16.mxu0 0
        %3085 = vmatpush2.bf16.msra.mxu0 %v2998
        %3086 = vmatprep.mubr.bf16.mxu0 %v2788
        %3087 = vmatmul.mubr.bf16.gmra.mxu0 %v2787
        %v3088 = vpop.f32.mrf.mxu0
        %v3089 = vadd.f32 %v2860, %v3088
        %v3090 = vpop.f32.mrf.mxu0
        %v3091 = vpop.f32.mrf.mxu0
        %v3092 = vpop.f32.mrf.mxu0
        %3093 = vdwg.mxu0
        %3094 = vmatprep.subr.bf16.mxu0 0
        %3095 = vmatpush1.bf16.msra.mxu0 %v3013
        %3096 = vmatprep.subr.bf16.mxu0 0
        %3097 = vmatpush1.bf16.msra.mxu0 %v3012
        %3098 = vmatprep.subr.bf16.mxu0 0
        %3099 = vmatpush1.bf16.msra.mxu0 %v3011
        %3100 = vmatprep.subr.bf16.mxu0 0
        %3101 = vmatpush1.bf16.msra.mxu0 %v3010
        %3102 = vmatprep.subr.bf16.mxu0 0
        %3103 = vmatpush1.bf16.msra.mxu0 %v3009
        %3104 = vmatprep.subr.bf16.mxu0 0
        %3105 = vmatpush1.bf16.msra.mxu0 %v3008
        %3106 = vmatprep.subr.bf16.mxu0 0
        %3107 = vmatpush1.bf16.msra.mxu0 %v3007
        %3108 = vmatprep.subr.bf16.mxu0 0
        %3109 = vmatpush1.bf16.msra.mxu0 %v3006
        %3110 = vmatprep.subr.bf16.mxu0 0
        %3111 = vmatpush2.bf16.msra.mxu0 %v3021
        %3112 = vmatprep.subr.bf16.mxu0 0
        %3113 = vmatpush2.bf16.msra.mxu0 %v3020
        %3114 = vmatprep.subr.bf16.mxu0 0
        %3115 = vmatpush2.bf16.msra.mxu0 %v3019
        %3116 = vmatprep.subr.bf16.mxu0 0
        %3117 = vmatpush2.bf16.msra.mxu0 %v3018
        %3118 = vmatprep.subr.bf16.mxu0 0
        %3119 = vmatpush2.bf16.msra.mxu0 %v3017
        %3120 = vmatprep.subr.bf16.mxu0 0
        %3121 = vmatpush2.bf16.msra.mxu0 %v3016
        %3122 = vmatprep.subr.bf16.mxu0 0
        %3123 = vmatpush2.bf16.msra.mxu0 %v3015
        %3124 = vmatprep.subr.bf16.mxu0 0
        %3125 = vmatpush2.bf16.msra.mxu0 %v3014
        %3126 = vmatprep.mubr.bf16.mxu0 %v2790
        %3127 = vmatmul.mubr.bf16.gmra.mxu0 %v2789
        %v3128 = vpop.f32.mrf.mxu0
        %v3129 = vadd.f32 %v3089, %v3128
        %v3130 = vpop.f32.mrf.mxu0
        %v3131 = vpop.f32.mrf.mxu0
        %v3132 = vpop.f32.mrf.mxu0
        %3133 = vdwg.mxu0
        %v3134 = vadd.f32 %v2426, %v3129
        %3135 = vst [vmem:[%s634] sm:$0xff] %v3134
        %s3136 = sand.u32 %s369, 1
        %s3137 = scalar_lea.sflag [#allocation4], %s3136
        %s3138 = sand.u32 %s369, 1
        %s3139 = smul.addr %s3138, 8
        %s3140 = scalar_lea.vmem [#allocation14], %s3139
        // Predicated region
        $region105: #{tpu_custom_call.1} parent=75 // pred_check
          %p3141 = pneg %p379
        $region106: #{tpu_custom_call.1} parent=75 // pred_check_branch
          %3143 = sbr.rel (%p3141) target = $region108
        $region107: #{tpu_custom_call.1} parent=75 // pred_region
          %s3145 = ssub.s32 128, 128
          %3146 = vsyncadd %s3137, %s3145
          %s3147 = sadd.s32 %s41, %s40
          %s3148 = smul.addr %s3147, 128
          %s3149 = scalar_lea.hbm %s14, %s3148
          %s3151 = sshll.u32 %s3140, 4
          %s3152 = int_to_ptr.vmem [resolvable:$true] %s3151
          %3154 = dma.vmem_to_hbm [thread:$0]  %s3152, 128, %s3149, %s3137
        $region108: #{tpu_custom_call.1} parent=75 // pred_fallthru
          _
      $region76: #{tpu_custom_call.1} parent=5 // pred_fallthru
        _
      %p3155 = scmp.le.s32.totalorder 2, %s31
      // Predicated region
      $region109: #{tpu_custom_call.1} parent=5 // pred_check
        %p3156 = pneg %p3155
      $region110: #{tpu_custom_call.1} parent=5 // pred_check_branch
        %3158 = sbr.rel (%p3156) target = $region112
      $region111: #{tpu_custom_call.1} parent=5 // pred_region
        %s3159 = ssub.s32 %s31, 2
        // Predicated region
        $region113: #{tpu_custom_call.1} parent=111 // pred_check
          %p3160 = pneg %p385
        $region114: #{tpu_custom_call.1} parent=111 // pred_check_branch
          %3162 = sbr.rel (%p3160) target = $region116
        $region115: #{tpu_custom_call.1} parent=111 // pred_region
          %s3163 = sand.u32 %s370, 1
          %s3164 = scalar_lea.sflag [#allocation4], %s3163
          %s3165 = sand.u32 %s370, 1
          %s3166 = smul.addr %s3165, 8
          %s3167 = scalar_lea.vmem [#allocation14], %s3166
          %3168 = dma.done %s3164, 128
        $region116: #{tpu_custom_call.1} parent=111 // pred_fallthru
          _
      $region112: #{tpu_custom_call.1} parent=5 // pred_fallthru
        _
    $region6: #{tpu_custom_call.1} parent=1 // loop_footer
      %s35 = sadd.s32 1, %s31
    $region7: #{tpu_custom_call.1} parent=1 // loop_footer_branch
      %30 = sbr.rel target = $region3
    $region8: #{tpu_custom_call.1} parent=1 // loop_exit
      _
    %3169 = vsyncpa [#allocation3], 1
    %s3170 = scalar_lea.sflag [#allocation3], 1
    %3171 = vsyncpa %s3170, 1
    %3172 = vsyncpa [#allocation6], 1
    %s3173 = scalar_lea.sflag [#allocation6], 1
    %3174 = vsyncpa %s3173, 1
    %3175 = vsyncpa [#allocation9], 1
    %3176 = vsyncpa [#allocation12], 1
    %3177 = vsyncpa [#allocation4], 1
    %s3178 = scalar_lea.sflag [#allocation4], 1
    %3179 = vsyncpa %s3178, 1

</llo_original>
